<compile_context>
chip_gen: v7x
topology: tpu7x:2x2x1
jax: 0.10.0
libtpu: 0.0.40
codegen_flags: <defaults>
</compile_context>

<pallas_src>
import math

import jax
import jax.numpy as jnp
from jax import lax
from jax.experimental import pallas as pl
from jax.experimental.pallas import tpu as pltpu


# ----------------------------- small helpers (usable inside kernels) ----------

def _elu1(x):
    # ELU(alpha=1) with ops that lower cleanly in Mosaic.
    return jnp.where(x > 0, x, jnp.exp(jnp.minimum(x, 0.0)) - 1.0)


def _gelu_tanh(x):
    c = math.sqrt(2.0 / math.pi)
    return 0.5 * x * (1.0 + jnp.tanh(c * (x + 0.044715 * x * x * x)))


def _layer_norm(y, gamma, beta, eps=1e-12):
    mu = jnp.mean(y, axis=-1, keepdims=True)
    var = jnp.mean((y - mu) ** 2, axis=-1, keepdims=True)
    return gamma * (y - mu) / jnp.sqrt(var + eps) + beta


def _rcp(x):
    # EUP approximate reciprocal (free slot under the MXU work).
    return pl.reciprocal(x, approx=True)


# ----------------------------- kernel 1: fused attention + dense + LN ---------

def _attn_block_kernel(xm_ref, xc_ref, bm_ref, bc_ref,
                       wxm_ref, wxc_ref, wbm_ref, wbc_ref,
                       pm_ref, pc_ref,
                       t1q_ref, t2q_ref, t1k_ref, t2k_ref,
                       oh_ref, ohT_ref, mq_ref, mk_ref,
                       smw2_ref, smb2_ref,
                       mw_ref, mb_ref, cw_ref, cb_ref, g_ref, beta_ref,
                       hm_ref, hc_ref, probs_ref):
    f32 = jnp.float32
    bf16 = jnp.bfloat16
    H = probs_ref.shape[1]
    dk = smw2_ref.shape[-1]
    n_b = oh_ref.shape[-1]
    inv_sqrt_dk = 1.0 / math.sqrt(dk)
    eps_c = 1e-6  # covariance clamp (reviewer-requested numerical guard)

    xm = xm_ref[0]                      # [N, D]
    xc = xc_ref[0]
    xm_b = xm.astype(bf16)
    xc_b = xc.astype(bf16)
    bm_b = bm_ref[0].astype(bf16)
    bc_b = bc_ref[0].astype(bf16)

    def proj(xb, bb, wx, wb):
        return (jnp.dot(xb, wx, preferred_element_type=f32) +
                jnp.dot(bb, wb, preferred_element_type=f32))

    # q/k/v projections for ALL heads at once: [N,D]@[D,D] MXU matmuls.
    q1a = proj(xm_b, bm_b, wxm_ref[0], wbm_ref[0])
    k1a = proj(xm_b, bm_b, wxm_ref[1], wbm_ref[1])
    v1a = proj(xm_b, bm_b, wxm_ref[2], wbm_ref[2])
    q2a = _elu1(proj(xc_b, bc_b, wxc_ref[0], wbc_ref[0])) + 1.0
    k2a = _elu1(proj(xc_b, bc_b, wxc_ref[1], wbc_ref[1])) + 1.0
    v2a = _elu1(proj(xc_b, bc_b, wxc_ref[2], wbc_ref[2])) + 1.0

    pm_all = pm_ref[0]                                    # [N, D]
    pcE_all = jnp.maximum(_elu1(pc_ref[0]) + 1.0, eps_c)
    inv_pcE_all = _rcp(pcE_all)

    oh = oh_ref[0]                                        # [N, n_b]
    ohT = ohT_ref[0]                                      # [n_b, N]
    pair_mask = mq_ref[0] * mk_ref[0]                     # [N,1]*[1,N] -> [N,N]
    neg = jnp.float32(-1e30)

    ctx_m_heads = []
    ctx_c_heads = []

    for h in range(H):
        sl = slice(h * dk, (h + 1) * dk)
        q1 = q1a[:, sl]
        k1 = k1a[:, sl]
        v1 = v1a[:, sl]
        q2 = jnp.maximum(q2a[:, sl], eps_c)
        k2 = jnp.maximum(k2a[:, sl], eps_c)
        v2 = v2a[:, sl]
        pm_h = pm_all[:, sl]
        inv_pcE = inv_pcE_all[:, sl]

        # Wq2(p_m) / Wk2(p_m) for this head -- MXU dots (review item 1).
        pm_q = jnp.dot(pm_h, smw2_ref[0], preferred_element_type=f32) + smb2_ref[0]
        pm_k = jnp.dot(pm_h, smw2_ref[1], preferred_element_type=f32) + smb2_ref[1]

        inv_q2 = _rcp(q2)
        inv_k2 = _rcp(k2)

        # Tiny per-head behavior tables [n_b, n_b*dk]; one-hot row selection.
        t1q = t1q_ref[0, h]     # inv(elu(bb_c)+1), rows = query behavior p
        t2q = t2q_ref[0, h]     # Wq1(bb_m)*inv,   rows = query behavior p
        t1k = t1k_ref[0, h]     # inv(elu(bb_c)+1), rows = key behavior q
        t2k = t2k_ref[0, h]     # Wk1(bb_m)*inv,   rows = key behavior q

        def sel_rows(tbl):
            acc = oh[:, 0:1] * tbl[0:1, :]
            for p in range(1, n_b):
                acc = acc + oh[:, p:p + 1] * tbl[p:p + 1, :]
            return acc

        G1 = sel_rows(t1q)      # [N, n_b*dk] : inv_bbcE[b_i, q]
        G2 = sel_rows(t2q)      # [N, n_b*dk] : (Wq1(bb)*inv)[b_i, q]
        H1 = sel_rows(t1k)      # [N, n_b*dk] : inv_bbcE[p, b_j]
        H2 = sel_rows(t2k)      # [N, n_b*dk] : (Wk1(bb)*inv)[p, b_j]

        # TODO(synk): TriSAGP source not provided; Gaussian-product fusion
        # reconstruction, here in factorized (token, behavior) form.
        base_den_q = inv_q2 + inv_pcE                     # [N, dk] (per-i, hoisted)
        base_num_q = q1 * inv_q2 + pm_q * inv_pcE
        den_q = jnp.concatenate([base_den_q] * n_b, axis=1) + G1
        fcq = _rcp(den_q)                                 # [N, n_b*dk]
        fmq = fcq * (jnp.concatenate([base_num_q] * n_b, axis=1) + G2)
        sfcq = jnp.sqrt(jnp.maximum(fcq, 1e-24))

        base_den_k = inv_k2 + inv_pcE                     # [N, dk] (per-j, hoisted)
        base_num_k = k1 * inv_k2 + pm_k * inv_pcE

        # Q-side per (i, candidate key behavior q): norms and matmul operands.
        sq_cols = []
        L_list = []
        for q in range(n_b):
            seg = slice(q * dk, (q + 1) * dk)
            fmq_q = fmq[:, seg]
            fcq_q = fcq[:, seg]
            sq_cols.append(jnp.sum(fmq_q * fmq_q + fcq_q, axis=1, keepdims=True))
            L_list.append(jnp.concatenate([fmq_q, sfcq[:, seg]], axis=1))
        sq_q = jnp.concatenate(sq_cols, axis=1)           # [N, n_b]

        # K-side per (candidate query behavior p, j).
        R_list = []
        sk_cols = []
        for p in range(n_b):
            seg = slice(p * dk, (p + 1) * dk)
            fck_p = _rcp(base_den_k + H1[:, seg])         # [N, dk]
            fmk_p = fck_p * (base_num_k + H2[:, seg])
            sfck_p = jnp.sqrt(jnp.maximum(fck_p, 1e-24))
            sk_cols.append(jnp.sum(fmk_p * fmk_p + fck_p, axis=1, keepdims=True))
            R_list.append(-2.0 * jnp.concatenate([fmk_p, sfck_p], axis=1))
        SK = jnp.concatenate(sk_cols, axis=1)             # [N, n_b]

        # Squared-norm terms selected by (b_i, b_j):
        #   wdist[i,j] = sq_q[i, b_j] + SK[j, b_i]   (one tiny NT matmul)
        LA = jnp.concatenate([sq_q, oh], axis=1)          # [N, 2*n_b]
        RA = jnp.concatenate([oh, SK], axis=1)            # [N, 2*n_b]
        wdist = lax.dot_general(LA, RA, (((1,), (1,)), ((), ())),
                                preferred_element_type=f32)

        # Cross terms: one [N,2dk]x[N,2dk]^T MXU matmul per (p, q) behavior pair,
        # masked by the one-hot selection (the -2 factor is folded into R).
        for p in range(n_b):
            rowmask_p = oh[:, p:p + 1]                    # [N, 1]
            Rp = R_list[p]
            for q in range(n_b):
                cross = lax.dot_general(L_list[q], Rp, (((1,), (1,)), ((), ())),
                                        preferred_element_type=f32)
                sel = rowmask_p * ohT[q:q + 1, :]         # [N, N]
                wdist = wdist + sel * cross

        # -wasserstein_distance_matmul(...) -> scores; mask; softmax.
        scores = wdist * (-inv_sqrt_dk)
        scores = jnp.where(pair_mask > 0, scores, neg)
        scores = scores - jnp.max(scores, axis=-1, keepdims=True)
        e = jnp.exp(scores)
        probs = e * _rcp(jnp.sum(e, axis=-1, keepdims=True))
        probs_ref[0, h] = probs                           # attention dropout: identity

        ctx_m_heads.append(jnp.dot(probs.astype(bf16), v1.astype(bf16),
                                   preferred_element_type=f32))
        ctx_c_heads.append(jnp.dot((probs * probs).astype(bf16), v2.astype(bf16),
                                   preferred_element_type=f32))

    # Lane-dense [N, D] context (head-major column layout == torch view).
    ctx_m = jnp.concatenate(ctx_m_heads, axis=1)
    ctx_c = jnp.concatenate(ctx_c_heads, axis=1)

    # Fused output dense + residual + LayerNorm (out_dropout: identity).
    hm = jnp.dot(ctx_m.astype(bf16), mw_ref[...], preferred_element_type=f32) + mb_ref[...]
    hc = jnp.dot(ctx_c.astype(bf16), cw_ref[...], preferred_element_type=f32) + cb_ref[...]
    g = g_ref[...]
    beta = beta_ref[...]
    hm_ref[0] = _layer_norm(hm + xm, g, beta)
    hc_ref[0] = _layer_norm(hc + xc, g, beta)


def attention_block(x_m, x_c, b_m, b_c, wxm, wxc, wbm, wbc, p_m, p_c,
                    t1q, t2q, t1k, t2k, oh, ohT, mq, mk, smw2, smb2,
                    mean_wT, mean_b, cov_wT, cov_b, ln_g, ln_b):
    B, N, D = x_m.shape
    dk = smw2.shape[-1]
    H = D // dk
    n_b = oh.shape[-1]

    bnd = pl.BlockSpec((1, N, D), lambda b: (b, 0, 0))
    tsp = pl.BlockSpec((1, H, n_b, n_b * dk), lambda b: (b, 0, 0, 0))
    ohsp = pl.BlockSpec((1, N, n_b), lambda b: (b, 0, 0))
    ohTsp = pl.BlockSpec((1, n_b, N), lambda b: (b, 0, 0))
    mqsp = pl.BlockSpec((1, N, 1), lambda b: (b, 0, 0))
    mksp = pl.BlockSpec((1, 1, N), lambda b: (b, 0, 0))

    def full(shape):
        return pl.BlockSpec(shape, lambda b, _n=len(shape): (0,) * _n)

    return pl.pallas_call(
        _attn_block_kernel,
        grid=(B,),
        in_specs=[bnd, bnd, bnd, bnd,
                  full((3, D, D)), full((3, D, D)), full((3, D, D)), full((3, D, D)),
                  bnd, bnd,
                  tsp, tsp, tsp, tsp,
                  ohsp, ohTsp, mqsp, mksp,
                  full((2, dk, dk)), full((2, 1, dk)),
                  full((D, D)), full((1, D)), full((D, D)), full((1, D)),
                  full((1, D)), full((1, D))],
        out_specs=[bnd, bnd, pl.BlockSpec((1, H, N, N), lambda b: (b, 0, 0, 0))],
        out_shape=(jax.ShapeDtypeStruct((B, N, D), jnp.float32),
                   jax.ShapeDtypeStruct((B, N, D), jnp.float32),
                   jax.ShapeDtypeStruct((B, H, N, N), jnp.float32)),
        compiler_params=pltpu.CompilerParams(dimension_semantics=("parallel",)),
    )(x_m, x_c, b_m, b_c, wxm, wxc, wbm, wbc, p_m, p_c,
      t1q, t2q, t1k, t2k, oh, ohT, mq, mk, smw2, smb2,
      mean_wT, mean_b, cov_wT, cov_b, ln_g, ln_b)


# ----------------------------- kernel 2: behavior-specific FFN (BSFFL) --------

def _bsffl_kernel(xm_ref, xc_ref, oh_ref, w1_ref, b1_ref, w2_ref, b2_ref,
                  g_ref, beta_ref, om_ref, oc_ref):
    # TODO(synk): BSFFL source not provided; reconstructed as a behavior-specific
    # position-wise FFN LayerNorm(x + W2_b GELU(W1_b x + b1_b) + b2_b).  All n_b
    # experts run as dense MXU matmuls; the per-token behavior is selected with a
    # one-hot mask (no per-token weight gather).
    f32 = jnp.float32
    bf16 = jnp.bfloat16
    n_b = oh_ref.shape[-1]

    xm = xm_ref[0]                          # [N, D] (mean path)
    xc = xc_ref[0]                          # [N, D] (cov path)
    oh = oh_ref[0]                          # [N, n_b]
    xm_b = xm.astype(bf16)
    xc_b = xc.astype(bf16)

    acc_m = jnp.zeros(xm.shape, f32)
    acc_c = jnp.zeros(xc.shape, f32)
    for e in range(n_b):
        w1 = w1_ref[e]                      # [D, F] bf16
        w2 = w2_ref[e]                      # [F, D] bf16
        b1 = b1_ref[e]                      # [1, F]
        b2 = b2_ref[e]                      # [1, D]
        sel = oh[:, e:e + 1]                # [N, 1]
        hm = _gelu_tanh(jnp.dot(xm_b, w1, preferred_element_type=f32) + b1)
        om = jnp.dot(hm.astype(bf16), w2, preferred_element_type=f32) + b2
        acc_m = acc_m + sel * om
        hc = _gelu_tanh(jnp.dot(xc_b, w1, preferred_element_type=f32) + b1)
        oc = jnp.dot(hc.astype(bf16), w2, preferred_element_type=f32) + b2
        acc_c = acc_c + sel * oc

    g = g_ref[...]
    beta = beta_ref[...]
    ym = _layer_norm(acc_m + xm, g, beta)       # dropout: identity (eval)
    yc = _layer_norm(acc_c + xc, g, beta)
    om_ref[0] = ym
    oc_ref[0] = _elu1(yc) + 1.0                 # activation_func(ff(x_c)) + 1


def bsffl(hm, hc, oh, w1, b1, w2, b2, g, beta):
    B, N, D = hm.shape
    n_b, _, F = w1.shape
    bnd = pl.BlockSpec((1, N, D), lambda b: (b, 0, 0))
    ohsp = pl.BlockSpec((1, N, n_b), lambda b: (b, 0, 0))

    def full(shape):
        return pl.BlockSpec(shape, lambda b, _n=len(shape): (0,) * _n)

    return pl.pallas_call(
        _bsffl_kernel,
        grid=(B,),
        in_specs=[bnd, bnd, ohsp,
                  full((n_b, D, F)), full((n_b, 1, F)),
                  full((n_b, F, D)), full((n_b, 1, D)),
                  full((1, D)), full((1, D))],
        out_specs=[bnd, bnd],
        out_shape=(jax.ShapeDtypeStruct((B, N, D), jnp.float32),
                   jax.ShapeDtypeStruct((B, N, D), jnp.float32)),
        compiler_params=pltpu.CompilerParams(dimension_semantics=("parallel",)),
    )(hm, hc, oh, w1, b1, w2, b2, g, beta)


# ----------------------------- full TransformerBlock forward ------------------

def transformer_block(params, x_m, x_c, b_seq, b_m, b_c, bb_m, bb_c, p_m, p_c, mask):
    B, N, D = x_m.shape
    H = params['h']
    dk = D // H
    n_b = bb_m.shape[1]
    f32 = jnp.float32
    bf16 = jnp.bfloat16

    # --- tiny glue: one-hot / mask vectors (no [B,N,N] or [B,H,N,N,dk] tensors) --
    oh = jax.nn.one_hot(b_seq, n_b, dtype=f32)               # [B, N, n_b]
    ohT = jnp.transpose(oh, (0, 2, 1))                       # [B, n_b, N]
    mq = mask.astype(f32)[:, :, None]                        # [B, N, 1]
    mk = mask.astype(f32)[:, None, :]                        # [B, 1, N]

    # --- behavior-pair precompute: O(B*H*n_b^2*dk) elements (tiny) ---------------
    bbm_h = jnp.transpose(bb_m.reshape(B, n_b, n_b, H, dk), (0, 3, 1, 2, 4))
    bbc_h = jnp.transpose(bb_c.reshape(B, n_b, n_b, H, dk), (0, 3, 1, 2, 4))
    bbcE = jnp.maximum(jax.nn.elu(bbc_h) + 1.0, 1e-6)
    inv_bbcE = 1.0 / bbcE
    Wq1, Wq2, Wk1, Wk2 = params['smw']
    bq1, bq2, bk1, bk2 = params['smb']
    bbm_q = jnp.einsum('bhpqk,ck->bhpqc', bbm_h, Wq1) + bq1  # Wq1(bb_m)
    bbm_k = jnp.einsum('bhpqk,ck->bhpqc', bbm_h, Wk1) + bk1  # Wk1(bb_m)
    # Q layout: rows = query behavior p, lane segments = key behavior q.
    t1q = inv_bbcE.reshape(B, H, n_b, n_b * dk)
    t2q = (bbm_q * inv_bbcE).reshape(B, H, n_b, n_b * dk)
    # K layout: rows = key behavior q, lane segments = query behavior p.
    t1k = jnp.transpose(inv_bbcE, (0, 1, 3, 2, 4)).reshape(B, H, n_b, n_b * dk)
    t2k = jnp.transpose(bbm_k * inv_bbcE, (0, 1, 3, 2, 4)).reshape(B, H, n_b, n_b * dk)

    smw2 = jnp.stack([Wq2.T, Wk2.T])                         # [2, dk, dk]
    smb2 = jnp.stack([bq2, bk2])                             # [2, 1, dk]

    # --- weights: head-merged, bf16 for the MXU ---------------------------------
    wxm = params['Wxm'].reshape(3, D, D).astype(bf16)
    wxc = params['Wxc'].reshape(3, D, D).astype(bf16)
    wbm = params['Wbm'].reshape(3, D, D).astype(bf16)
    wbc = params['Wbc'].reshape(3, D, D).astype(bf16)
    mean_wT = params['mean_w'].T.astype(bf16)
    cov_wT = params['cov_w'].T.astype(bf16)

    mean_hidden, cov_hidden, probs = attention_block(
        x_m, x_c, b_m, b_c, wxm, wxc, wbm, wbc, p_m, p_c,
        t1q, t2q, t1k, t2k, oh, ohT, mq, mk, smw2, smb2,
        mean_wT, params['mean_b'], cov_wT, params['cov_b'],
        params['ln_g'], params['ln_b'])

    x_m_out, x_c_out = bsffl(
        mean_hidden, cov_hidden, oh,
        params['ffn_w1'].astype(bf16), params['ffn_b1'][:, None, :],
        params['ffn_w2'].astype(bf16), params['ffn_b2'][:, None, :],
        params['ffn_ln_g'], params['ffn_ln_b'])
    return x_m_out, x_c_out, probs


def init_params(key, D, H, n_b, dff):
    dk = D // H
    ks = list(jax.random.split(key, 12))
    std = 0.02
    f32 = jnp.float32
    p = {'h': H}
    p['Wxm'] = std * jax.random.normal(ks[0], (3, D, H, dk), f32)
    p['Wxc'] = std * jax.random.normal(ks[1], (3, D, H, dk), f32)
    p['Wbm'] = std * jax.random.normal(ks[2], (3, D, H, dk), f32)
    p['Wbc'] = std * jax.random.normal(ks[3], (3, D, H, dk), f32)
    p['mean_w'] = std * jax.random.normal(ks[4], (D, D), f32)
    p['mean_b'] = jnp.zeros((1, D), f32)
    p['cov_w'] = std * jax.random.normal(ks[5], (D, D), f32)
    p['cov_b'] = jnp.zeros((1, D), f32)
    p['ln_g'] = jnp.ones((1, D), f32)
    p['ln_b'] = jnp.zeros((1, D), f32)
    p['smw'] = std * jax.random.normal(ks[6], (4, dk, dk), f32)   # Wq1, Wq2, Wk1, Wk2
    p['smb'] = jnp.zeros((4, 1, dk), f32)
    p['ffn_w1'] = std * jax.random.normal(ks[7], (n_b, D, dff), f32)
    p['ffn_b1'] = jnp.zeros((n_b, dff), f32)
    p['ffn_w2'] = std * jax.random.normal(ks[8], (n_b, dff, D), f32)
    p['ffn_b2'] = jnp.zeros((n_b, D), f32)
    p['ffn_ln_g'] = jnp.ones((1, D), f32)
    p['ffn_ln_b'] = jnp.zeros((1, D), f32)
    return p


if __name__ == "__main__":
    B, N, D, H, n_b = 2, 8, 32, 4, 3
    dff = 4 * D
    key = jax.random.PRNGKey(0)
    kp, kx = jax.random.split(key)
    params = init_params(kp, D, H, n_b, dff)

    ks = list(jax.random.split(kx, 10))
    x_m = jax.random.normal(ks[0], (B, N, D), jnp.float32)
    x_c = jax.random.normal(ks[1], (B, N, D), jnp.float32)
    b_m = jax.random.normal(ks[2], (B, N, D), jnp.float32)
    b_c = jax.random.normal(ks[3], (B, N, D), jnp.float32)
    bb_m = jax.random.normal(ks[4], (B, n_b, n_b, D), jnp.float32)
    bb_c = jax.random.normal(ks[5], (B, n_b, n_b, D), jnp.float32)
    p_m = jax.random.normal(ks[6], (B, N, D), jnp.float32)
    p_c = jax.random.normal(ks[7], (B, N, D), jnp.float32)
    b_seq = jax.random.randint(ks[8], (B, N), 0, n_b)
    # batch 0 fully valid, batch 1 has the last 2 positions padded out
    mask = jnp.arange(N)[None, :] < jnp.array([[N], [N - 2]])

    x_m_out, x_c_out, probs = transformer_block(
        params, x_m, x_c, b_seq, b_m, b_c, bb_m, bb_c, p_m, p_c, mask)
    jax.block_until_ready((x_m_out, x_c_out, probs))

    assert x_m_out.shape == (B, N, D)
    assert x_c_out.shape == (B, N, D)
    assert probs.shape == (B, H, N, N)
    assert bool(jnp.all(jnp.isfinite(x_m_out)))
    assert bool(jnp.all(jnp.isfinite(x_c_out)))
    assert bool(jnp.all(jnp.isfinite(probs)))
    print("KERNEL_OK")
</pallas_src>

<mosaic_0001>
module attributes {stable_mosaic.version = 11 : i64} {
  func.func @_attn_block_kernel(%arg0: i32, %arg1: memref<1x8x32xf32, #tpu.memory_space<vmem>>, %arg2: memref<1x8x32xf32, #tpu.memory_space<vmem>>, %arg3: memref<1x8x32xf32, #tpu.memory_space<vmem>>, %arg4: memref<1x8x32xf32, #tpu.memory_space<vmem>>, %arg5: memref<3x32x32xbf16, #tpu.memory_space<vmem>>, %arg6: memref<3x32x32xbf16, #tpu.memory_space<vmem>>, %arg7: memref<3x32x32xbf16, #tpu.memory_space<vmem>>, %arg8: memref<3x32x32xbf16, #tpu.memory_space<vmem>>, %arg9: memref<1x8x32xf32, #tpu.memory_space<vmem>>, %arg10: memref<1x8x32xf32, #tpu.memory_space<vmem>>, %arg11: memref<1x4x3x24xf32, #tpu.memory_space<vmem>>, %arg12: memref<1x4x3x24xf32, #tpu.memory_space<vmem>>, %arg13: memref<1x4x3x24xf32, #tpu.memory_space<vmem>>, %arg14: memref<1x4x3x24xf32, #tpu.memory_space<vmem>>, %arg15: memref<1x8x3xf32, #tpu.memory_space<vmem>>, %arg16: memref<1x3x8xf32, #tpu.memory_space<vmem>>, %arg17: memref<1x8x1xf32, #tpu.memory_space<vmem>>, %arg18: memref<1x1x8xf32, #tpu.memory_space<vmem>>, %arg19: memref<2x8x8xf32, #tpu.memory_space<vmem>>, %arg20: memref<2x1x8xf32, #tpu.memory_space<vmem>>, %arg21: memref<32x32xbf16, #tpu.memory_space<vmem>>, %arg22: memref<1x32xf32, #tpu.memory_space<vmem>>, %arg23: memref<32x32xbf16, #tpu.memory_space<vmem>>, %arg24: memref<1x32xf32, #tpu.memory_space<vmem>>, %arg25: memref<1x32xf32, #tpu.memory_space<vmem>>, %arg26: memref<1x32xf32, #tpu.memory_space<vmem>>, %arg27: memref<1x8x32xf32, #tpu.memory_space<vmem>>, %arg28: memref<1x8x32xf32, #tpu.memory_space<vmem>>, %arg29: memref<1x4x8x8xf32, #tpu.memory_space<vmem>>) attributes {dimension_semantics = [#tpu.dimension_semantics<parallel>], iteration_bounds = array<i64: 2>, scalar_prefetch = 0 : i64, scratch_operands = 0 : i64, tpu.core_type = #tpu.core_type<tc>, window_params = [{transform_indices = @transform_0, window_bounds = array<i64: 1, 8, 32>}, {transform_indices = @transform_1, window_bounds = array<i64: 1, 8, 32>}, {transform_indices = @transform_2, window_bounds = array<i64: 1, 8, 32>}, {transform_indices = @transform_3, window_bounds = array<i64: 1, 8, 32>}, {pipeline_mode = #tpu.pipeline_mode<synchronous>, transform_indices = @transform_4, window_bounds = array<i64: 3, 32, 32>}, {pipeline_mode = #tpu.pipeline_mode<synchronous>, transform_indices = @transform_5, window_bounds = array<i64: 3, 32, 32>}, {pipeline_mode = #tpu.pipeline_mode<synchronous>, transform_indices = @transform_6, window_bounds = array<i64: 3, 32, 32>}, {pipeline_mode = #tpu.pipeline_mode<synchronous>, transform_indices = @transform_7, window_bounds = array<i64: 3, 32, 32>}, {transform_indices = @transform_8, window_bounds = array<i64: 1, 8, 32>}, {transform_indices = @transform_9, window_bounds = array<i64: 1, 8, 32>}, {transform_indices = @transform_10, window_bounds = array<i64: 1, 4, 3, 24>}, {transform_indices = @transform_11, window_bounds = array<i64: 1, 4, 3, 24>}, {transform_indices = @transform_12, window_bounds = array<i64: 1, 4, 3, 24>}, {transform_indices = @transform_13, window_bounds = array<i64: 1, 4, 3, 24>}, {transform_indices = @transform_14, window_bounds = array<i64: 1, 8, 3>}, {transform_indices = @transform_15, window_bounds = array<i64: 1, 3, 8>}, {transform_indices = @transform_16, window_bounds = array<i64: 1, 8, 1>}, {transform_indices = @transform_17, window_bounds = array<i64: 1, 1, 8>}, {pipeline_mode = #tpu.pipeline_mode<synchronous>, transform_indices = @transform_18, window_bounds = array<i64: 2, 8, 8>}, {pipeline_mode = #tpu.pipeline_mode<synchronous>, transform_indices = @transform_19, window_bounds = array<i64: 2, 1, 8>}, {pipeline_mode = #tpu.pipeline_mode<synchronous>, transform_indices = @transform_20, window_bounds = array<i64: 32, 32>}, {pipeline_mode = #tpu.pipeline_mode<synchronous>, transform_indices = @transform_21, window_bounds = array<i64: 1, 32>}, {pipeline_mode = #tpu.pipeline_mode<synchronous>, transform_indices = @transform_22, window_bounds = array<i64: 32, 32>}, {pipeline_mode = #tpu.pipeline_mode<synchronous>, transform_indices = @transform_23, window_bounds = array<i64: 1, 32>}, {pipeline_mode = #tpu.pipeline_mode<synchronous>, transform_indices = @transform_24, window_bounds = array<i64: 1, 32>}, {pipeline_mode = #tpu.pipeline_mode<synchronous>, transform_indices = @transform_25, window_bounds = array<i64: 1, 32>}, {transform_indices = @transform_26, window_bounds = array<i64: 1, 8, 32>}, {transform_indices = @transform_27, window_bounds = array<i64: 1, 8, 32>}, {transform_indices = @transform_28, window_bounds = array<i64: 1, 4, 8, 8>}]} {
    %c0 = arith.constant 0 : index
    %c0_0 = arith.constant 0 : index
    %c0_1 = arith.constant 0 : index
    %0 = vector.load %arg1[%c0, %c0_0, %c0_1] : memref<1x8x32xf32, #tpu.memory_space<vmem>>, vector<1x8x32xf32>
    %1 = vector.shape_cast %0 : vector<1x8x32xf32> to vector<8x32xf32>
    %c0_2 = arith.constant 0 : index
    %c0_3 = arith.constant 0 : index
    %c0_4 = arith.constant 0 : index
    %2 = vector.load %arg2[%c0_2, %c0_3, %c0_4] : memref<1x8x32xf32, #tpu.memory_space<vmem>>, vector<1x8x32xf32>
    %3 = vector.shape_cast %2 : vector<1x8x32xf32> to vector<8x32xf32>
    %4 = arith.truncf %1 : vector<8x32xf32> to vector<8x32xbf16>
    %5 = arith.truncf %3 : vector<8x32xf32> to vector<8x32xbf16>
    %c0_5 = arith.constant 0 : index
    %c0_6 = arith.constant 0 : index
    %c0_7 = arith.constant 0 : index
    %6 = vector.load %arg3[%c0_5, %c0_6, %c0_7] : memref<1x8x32xf32, #tpu.memory_space<vmem>>, vector<1x8x32xf32>
    %7 = vector.shape_cast %6 : vector<1x8x32xf32> to vector<8x32xf32>
    %8 = arith.truncf %7 : vector<8x32xf32> to vector<8x32xbf16>
    %c0_8 = arith.constant 0 : index
    %c0_9 = arith.constant 0 : index
    %c0_10 = arith.constant 0 : index
    %9 = vector.load %arg4[%c0_8, %c0_9, %c0_10] : memref<1x8x32xf32, #tpu.memory_space<vmem>>, vector<1x8x32xf32>
    %10 = vector.shape_cast %9 : vector<1x8x32xf32> to vector<8x32xf32>
    %11 = arith.truncf %10 : vector<8x32xf32> to vector<8x32xbf16>
    %c0_11 = arith.constant 0 : index
    %c0_12 = arith.constant 0 : index
    %c0_13 = arith.constant 0 : index
    %12 = vector.load %arg5[%c0_11, %c0_12, %c0_13] : memref<3x32x32xbf16, #tpu.memory_space<vmem>>, vector<1x32x32xbf16>
    %13 = vector.shape_cast %12 : vector<1x32x32xbf16> to vector<32x32xbf16>
    %c0_14 = arith.constant 0 : index
    %c0_15 = arith.constant 0 : index
    %c0_16 = arith.constant 0 : index
    %14 = vector.load %arg7[%c0_14, %c0_15, %c0_16] : memref<3x32x32xbf16, #tpu.memory_space<vmem>>, vector<1x32x32xbf16>
    %15 = vector.shape_cast %14 : vector<1x32x32xbf16> to vector<32x32xbf16>
    %cst = arith.constant dense<0.000000e+00> : vector<8x32xf32>
    %16 = tpu.matmul %4, %13, %cst {dimension_numbers = #tpu.dot_dimension_numbers<[1], [0], [0], [1], [0, 0, 1, 1], [], []>} : vector<8x32xbf16>, vector<32x32xbf16>, vector<8x32xf32> -> vector<8x32xf32>
    %cst_17 = arith.constant dense<0.000000e+00> : vector<8x32xf32>
    %17 = tpu.matmul %8, %15, %cst_17 {dimension_numbers = #tpu.dot_dimension_numbers<[1], [0], [0], [1], [0, 0, 1, 1], [], []>} : vector<8x32xbf16>, vector<32x32xbf16>, vector<8x32xf32> -> vector<8x32xf32>
    %18 = arith.addf %16, %17 : vector<8x32xf32>
    %c1 = arith.constant 1 : index
    %c0_18 = arith.constant 0 : index
    %c0_19 = arith.constant 0 : index
    %19 = vector.load %arg5[%c1, %c0_18, %c0_19] : memref<3x32x32xbf16, #tpu.memory_space<vmem>>, vector<1x32x32xbf16>
    %20 = vector.shape_cast %19 : vector<1x32x32xbf16> to vector<32x32xbf16>
    %c1_20 = arith.constant 1 : index
    %c0_21 = arith.constant 0 : index
    %c0_22 = arith.constant 0 : index
    %21 = vector.load %arg7[%c1_20, %c0_21, %c0_22] : memref<3x32x32xbf16, #tpu.memory_space<vmem>>, vector<1x32x32xbf16>
    %22 = vector.shape_cast %21 : vector<1x32x32xbf16> to vector<32x32xbf16>
    %cst_23 = arith.constant dense<0.000000e+00> : vector<8x32xf32>
    %23 = tpu.matmul %4, %20, %cst_23 {dimension_numbers = #tpu.dot_dimension_numbers<[1], [0], [0], [1], [0, 0, 1, 1], [], []>} : vector<8x32xbf16>, vector<32x32xbf16>, vector<8x32xf32> -> vector<8x32xf32>
    %cst_24 = arith.constant dense<0.000000e+00> : vector<8x32xf32>
    %24 = tpu.matmul %8, %22, %cst_24 {dimension_numbers = #tpu.dot_dimension_numbers<[1], [0], [0], [1], [0, 0, 1, 1], [], []>} : vector<8x32xbf16>, vector<32x32xbf16>, vector<8x32xf32> -> vector<8x32xf32>
    %25 = arith.addf %23, %24 : vector<8x32xf32>
    %c2 = arith.constant 2 : index
    %c0_25 = arith.constant 0 : index
    %c0_26 = arith.constant 0 : index
    %26 = vector.load %arg5[%c2, %c0_25, %c0_26] : memref<3x32x32xbf16, #tpu.memory_space<vmem>>, vector<1x32x32xbf16>
    %27 = vector.shape_cast %26 : vector<1x32x32xbf16> to vector<32x32xbf16>
    %c2_27 = arith.constant 2 : index
    %c0_28 = arith.constant 0 : index
    %c0_29 = arith.constant 0 : index
    %28 = vector.load %arg7[%c2_27, %c0_28, %c0_29] : memref<3x32x32xbf16, #tpu.memory_space<vmem>>, vector<1x32x32xbf16>
    %29 = vector.shape_cast %28 : vector<1x32x32xbf16> to vector<32x32xbf16>
    %cst_30 = arith.constant dense<0.000000e+00> : vector<8x32xf32>
    %30 = tpu.matmul %4, %27, %cst_30 {dimension_numbers = #tpu.dot_dimension_numbers<[1], [0], [0], [1], [0, 0, 1, 1], [], []>} : vector<8x32xbf16>, vector<32x32xbf16>, vector<8x32xf32> -> vector<8x32xf32>
    %cst_31 = arith.constant dense<0.000000e+00> : vector<8x32xf32>
    %31 = tpu.matmul %8, %29, %cst_31 {dimension_numbers = #tpu.dot_dimension_numbers<[1], [0], [0], [1], [0, 0, 1, 1], [], []>} : vector<8x32xbf16>, vector<32x32xbf16>, vector<8x32xf32> -> vector<8x32xf32>
    %32 = arith.addf %30, %31 : vector<8x32xf32>
    %c0_32 = arith.constant 0 : index
    %c0_33 = arith.constant 0 : index
    %c0_34 = arith.constant 0 : index
    %33 = vector.load %arg6[%c0_32, %c0_33, %c0_34] : memref<3x32x32xbf16, #tpu.memory_space<vmem>>, vector<1x32x32xbf16>
    %34 = vector.shape_cast %33 : vector<1x32x32xbf16> to vector<32x32xbf16>
    %c0_35 = arith.constant 0 : index
    %c0_36 = arith.constant 0 : index
    %c0_37 = arith.constant 0 : index
    %35 = vector.load %arg8[%c0_35, %c0_36, %c0_37] : memref<3x32x32xbf16, #tpu.memory_space<vmem>>, vector<1x32x32xbf16>
    %36 = vector.shape_cast %35 : vector<1x32x32xbf16> to vector<32x32xbf16>
    %cst_38 = arith.constant dense<0.000000e+00> : vector<8x32xf32>
    %37 = tpu.matmul %5, %34, %cst_38 {dimension_numbers = #tpu.dot_dimension_numbers<[1], [0], [0], [1], [0, 0, 1, 1], [], []>} : vector<8x32xbf16>, vector<32x32xbf16>, vector<8x32xf32> -> vector<8x32xf32>
    %cst_39 = arith.constant dense<0.000000e+00> : vector<8x32xf32>
    %38 = tpu.matmul %11, %36, %cst_39 {dimension_numbers = #tpu.dot_dimension_numbers<[1], [0], [0], [1], [0, 0, 1, 1], [], []>} : vector<8x32xbf16>, vector<32x32xbf16>, vector<8x32xf32> -> vector<8x32xf32>
    %39 = arith.addf %37, %38 : vector<8x32xf32>
    %cst_40 = arith.constant 0.000000e+00 : f32
    %40 = vector.broadcast %cst_40 : f32 to vector<8x32xf32>
    %41 = arith.cmpf ogt, %39, %40 : vector<8x32xf32>
    %cst_41 = arith.constant 0.000000e+00 : f32
    %42 = vector.broadcast %cst_41 : f32 to vector<8x32xf32>
    %43 = arith.minimumf %39, %42 : vector<8x32xf32>
    %44 = math.exp %43 : vector<8x32xf32>
    %cst_42 = arith.constant 1.000000e+00 : f32
    %45 = vector.broadcast %cst_42 : f32 to vector<8x32xf32>
    %46 = arith.subf %44, %45 : vector<8x32xf32>
    %47 = arith.select %41, %39, %46 : vector<8x32xi1>, vector<8x32xf32>
    %cst_43 = arith.constant 1.000000e+00 : f32
    %48 = vector.broadcast %cst_43 : f32 to vector<8x32xf32>
    %49 = arith.addf %47, %48 : vector<8x32xf32>
    %c1_44 = arith.constant 1 : index
    %c0_45 = arith.constant 0 : index
    %c0_46 = arith.constant 0 : index
    %50 = vector.load %arg6[%c1_44, %c0_45, %c0_46] : memref<3x32x32xbf16, #tpu.memory_space<vmem>>, vector<1x32x32xbf16>
    %51 = vector.shape_cast %50 : vector<1x32x32xbf16> to vector<32x32xbf16>
    %c1_47 = arith.constant 1 : index
    %c0_48 = arith.constant 0 : index
    %c0_49 = arith.constant 0 : index
    %52 = vector.load %arg8[%c1_47, %c0_48, %c0_49] : memref<3x32x32xbf16, #tpu.memory_space<vmem>>, vector<1x32x32xbf16>
    %53 = vector.shape_cast %52 : vector<1x32x32xbf16> to vector<32x32xbf16>
    %cst_50 = arith.constant dense<0.000000e+00> : vector<8x32xf32>
    %54 = tpu.matmul %5, %51, %cst_50 {dimension_numbers = #tpu.dot_dimension_numbers<[1], [0], [0], [1], [0, 0, 1, 1], [], []>} : vector<8x32xbf16>, vector<32x32xbf16>, vector<8x32xf32> -> vector<8x32xf32>
    %cst_51 = arith.constant dense<0.000000e+00> : vector<8x32xf32>
    %55 = tpu.matmul %11, %53, %cst_51 {dimension_numbers = #tpu.dot_dimension_numbers<[1], [0], [0], [1], [0, 0, 1, 1], [], []>} : vector<8x32xbf16>, vector<32x32xbf16>, vector<8x32xf32> -> vector<8x32xf32>
    %56 = arith.addf %54, %55 : vector<8x32xf32>
    %cst_52 = arith.constant 0.000000e+00 : f32
    %57 = vector.broadcast %cst_52 : f32 to vector<8x32xf32>
    %58 = arith.cmpf ogt, %56, %57 : vector<8x32xf32>
    %cst_53 = arith.constant 0.000000e+00 : f32
    %59 = vector.broadcast %cst_53 : f32 to vector<8x32xf32>
    %60 = arith.minimumf %56, %59 : vector<8x32xf32>
    %61 = math.exp %60 : vector<8x32xf32>
    %cst_54 = arith.constant 1.000000e+00 : f32
    %62 = vector.broadcast %cst_54 : f32 to vector<8x32xf32>
    %63 = arith.subf %61, %62 : vector<8x32xf32>
    %64 = arith.select %58, %56, %63 : vector<8x32xi1>, vector<8x32xf32>
    %cst_55 = arith.constant 1.000000e+00 : f32
    %65 = vector.broadcast %cst_55 : f32 to vector<8x32xf32>
    %66 = arith.addf %64, %65 : vector<8x32xf32>
    %c2_56 = arith.constant 2 : index
    %c0_57 = arith.constant 0 : index
    %c0_58 = arith.constant 0 : index
    %67 = vector.load %arg6[%c2_56, %c0_57, %c0_58] : memref<3x32x32xbf16, #tpu.memory_space<vmem>>, vector<1x32x32xbf16>
    %68 = vector.shape_cast %67 : vector<1x32x32xbf16> to vector<32x32xbf16>
    %c2_59 = arith.constant 2 : index
    %c0_60 = arith.constant 0 : index
    %c0_61 = arith.constant 0 : index
    %69 = vector.load %arg8[%c2_59, %c0_60, %c0_61] : memref<3x32x32xbf16, #tpu.memory_space<vmem>>, vector<1x32x32xbf16>
    %70 = vector.shape_cast %69 : vector<1x32x32xbf16> to vector<32x32xbf16>
    %cst_62 = arith.constant dense<0.000000e+00> : vector<8x32xf32>
    %71 = tpu.matmul %5, %68, %cst_62 {dimension_numbers = #tpu.dot_dimension_numbers<[1], [0], [0], [1], [0, 0, 1, 1], [], []>} : vector<8x32xbf16>, vector<32x32xbf16>, vector<8x32xf32> -> vector<8x32xf32>
    %cst_63 = arith.constant dense<0.000000e+00> : vector<8x32xf32>
    %72 = tpu.matmul %11, %70, %cst_63 {dimension_numbers = #tpu.dot_dimension_numbers<[1], [0], [0], [1], [0, 0, 1, 1], [], []>} : vector<8x32xbf16>, vector<32x32xbf16>, vector<8x32xf32> -> vector<8x32xf32>
    %73 = arith.addf %71, %72 : vector<8x32xf32>
    %cst_64 = arith.constant 0.000000e+00 : f32
    %74 = vector.broadcast %cst_64 : f32 to vector<8x32xf32>
    %75 = arith.cmpf ogt, %73, %74 : vector<8x32xf32>
    %cst_65 = arith.constant 0.000000e+00 : f32
    %76 = vector.broadcast %cst_65 : f32 to vector<8x32xf32>
    %77 = arith.minimumf %73, %76 : vector<8x32xf32>
    %78 = math.exp %77 : vector<8x32xf32>
    %cst_66 = arith.constant 1.000000e+00 : f32
    %79 = vector.broadcast %cst_66 : f32 to vector<8x32xf32>
    %80 = arith.subf %78, %79 : vector<8x32xf32>
    %81 = arith.select %75, %73, %80 : vector<8x32xi1>, vector<8x32xf32>
    %cst_67 = arith.constant 1.000000e+00 : f32
    %82 = vector.broadcast %cst_67 : f32 to vector<8x32xf32>
    %83 = arith.addf %81, %82 : vector<8x32xf32>
    %c0_68 = arith.constant 0 : index
    %c0_69 = arith.constant 0 : index
    %c0_70 = arith.constant 0 : index
    %84 = vector.load %arg9[%c0_68, %c0_69, %c0_70] : memref<1x8x32xf32, #tpu.memory_space<vmem>>, vector<1x8x32xf32>
    %85 = vector.shape_cast %84 : vector<1x8x32xf32> to vector<8x32xf32>
    %c0_71 = arith.constant 0 : index
    %c0_72 = arith.constant 0 : index
    %c0_73 = arith.constant 0 : index
    %86 = vector.load %arg10[%c0_71, %c0_72, %c0_73] : memref<1x8x32xf32, #tpu.memory_space<vmem>>, vector<1x8x32xf32>
    %87 = vector.shape_cast %86 : vector<1x8x32xf32> to vector<8x32xf32>
    %cst_74 = arith.constant 0.000000e+00 : f32
    %88 = vector.broadcast %cst_74 : f32 to vector<8x32xf32>
    %89 = arith.cmpf ogt, %87, %88 : vector<8x32xf32>
    %cst_75 = arith.constant 0.000000e+00 : f32
    %90 = vector.broadcast %cst_75 : f32 to vector<8x32xf32>
    %91 = arith.minimumf %87, %90 : vector<8x32xf32>
    %92 = math.exp %91 : vector<8x32xf32>
    %cst_76 = arith.constant 1.000000e+00 : f32
    %93 = vector.broadcast %cst_76 : f32 to vector<8x32xf32>
    %94 = arith.subf %92, %93 : vector<8x32xf32>
    %95 = arith.select %89, %87, %94 : vector<8x32xi1>, vector<8x32xf32>
    %cst_77 = arith.constant 1.000000e+00 : f32
    %96 = vector.broadcast %cst_77 : f32 to vector<8x32xf32>
    %97 = arith.addf %95, %96 : vector<8x32xf32>
    %cst_78 = arith.constant 9.99999997E-7 : f32
    %98 = vector.broadcast %cst_78 : f32 to vector<8x32xf32>
    %99 = arith.maximumf %97, %98 : vector<8x32xf32>
    %100 = tpu.reciprocal %99 {approx = true} : vector<8x32xf32> -> vector<8x32xf32>
    %c0_79 = arith.constant 0 : index
    %c0_80 = arith.constant 0 : index
    %c0_81 = arith.constant 0 : index
    %101 = vector.load %arg15[%c0_79, %c0_80, %c0_81] : memref<1x8x3xf32, #tpu.memory_space<vmem>>, vector<1x8x3xf32>
    %102 = vector.shape_cast %101 : vector<1x8x3xf32> to vector<8x3xf32>
    %c0_82 = arith.constant 0 : index
    %c0_83 = arith.constant 0 : index
    %c0_84 = arith.constant 0 : index
    %103 = vector.load %arg16[%c0_82, %c0_83, %c0_84] : memref<1x3x8xf32, #tpu.memory_space<vmem>>, vector<1x3x8xf32>
    %104 = vector.shape_cast %103 : vector<1x3x8xf32> to vector<3x8xf32>
    %c0_85 = arith.constant 0 : index
    %c0_86 = arith.constant 0 : index
    %c0_87 = arith.constant 0 : index
    %105 = vector.load %arg17[%c0_85, %c0_86, %c0_87] : memref<1x8x1xf32, #tpu.memory_space<vmem>>, vector<1x8x1xf32>
    %106 = vector.shape_cast %105 : vector<1x8x1xf32> to vector<8x1xf32>
    %c0_88 = arith.constant 0 : index
    %c0_89 = arith.constant 0 : index
    %c0_90 = arith.constant 0 : index
    %107 = vector.load %arg18[%c0_88, %c0_89, %c0_90] : memref<1x1x8xf32, #tpu.memory_space<vmem>>, vector<1x1x8xf32>
    %108 = vector.shape_cast %107 : vector<1x1x8xf32> to vector<1x8xf32>
    %109 = vector.broadcast %106 : vector<8x1xf32> to vector<8x8xf32>
    %110 = vector.broadcast %108 : vector<1x8xf32> to vector<8x8xf32>
    %111 = arith.mulf %109, %110 : vector<8x8xf32>
    %112 = vector.extract_strided_slice %18 {offsets = [0, 0], sizes = [8, 8], strides = [1, 1]} : vector<8x32xf32> to vector<8x8xf32>
    %113 = vector.extract_strided_slice %25 {offsets = [0, 0], sizes = [8, 8], strides = [1, 1]} : vector<8x32xf32> to vector<8x8xf32>
    %114 = vector.extract_strided_slice %32 {offsets = [0, 0], sizes = [8, 8], strides = [1, 1]} : vector<8x32xf32> to vector<8x8xf32>
    %115 = vector.extract_strided_slice %49 {offsets = [0, 0], sizes = [8, 8], strides = [1, 1]} : vector<8x32xf32> to vector<8x8xf32>
    %cst_91 = arith.constant 9.99999997E-7 : f32
    %116 = vector.broadcast %cst_91 : f32 to vector<8x8xf32>
    %117 = arith.maximumf %115, %116 : vector<8x8xf32>
    %118 = vector.extract_strided_slice %66 {offsets = [0, 0], sizes = [8, 8], strides = [1, 1]} : vector<8x32xf32> to vector<8x8xf32>
    %cst_92 = arith.constant 9.99999997E-7 : f32
    %119 = vector.broadcast %cst_92 : f32 to vector<8x8xf32>
    %120 = arith.maximumf %118, %119 : vector<8x8xf32>
    %121 = vector.extract_strided_slice %83 {offsets = [0, 0], sizes = [8, 8], strides = [1, 1]} : vector<8x32xf32> to vector<8x8xf32>
    %122 = vector.extract_strided_slice %85 {offsets = [0, 0], sizes = [8, 8], strides = [1, 1]} : vector<8x32xf32> to vector<8x8xf32>
    %123 = vector.extract_strided_slice %100 {offsets = [0, 0], sizes = [8, 8], strides = [1, 1]} : vector<8x32xf32> to vector<8x8xf32>
    %c0_93 = arith.constant 0 : index
    %c0_94 = arith.constant 0 : index
    %c0_95 = arith.constant 0 : index
    %124 = vector.load %arg19[%c0_93, %c0_94, %c0_95] : memref<2x8x8xf32, #tpu.memory_space<vmem>>, vector<1x8x8xf32>
    %125 = vector.shape_cast %124 : vector<1x8x8xf32> to vector<8x8xf32>
    %cst_96 = arith.constant dense<0.000000e+00> : vector<8x8xf32>
    %126 = tpu.matmul %122, %125, %cst_96 {dimension_numbers = #tpu.dot_dimension_numbers<[1], [0], [0], [1], [0, 0, 1, 1], [], []>} : vector<8x8xf32>, vector<8x8xf32>, vector<8x8xf32> -> vector<8x8xf32>
    %c0_97 = arith.constant 0 : index
    %c0_98 = arith.constant 0 : index
    %c0_99 = arith.constant 0 : index
    %127 = vector.load %arg20[%c0_97, %c0_98, %c0_99] : memref<2x1x8xf32, #tpu.memory_space<vmem>>, vector<1x1x8xf32>
    %128 = vector.shape_cast %127 : vector<1x1x8xf32> to vector<1x8xf32>
    %129 = vector.broadcast %128 : vector<1x8xf32> to vector<8x8xf32>
    %130 = arith.addf %126, %129 : vector<8x8xf32>
    %c1_100 = arith.constant 1 : index
    %c0_101 = arith.constant 0 : index
    %c0_102 = arith.constant 0 : index
    %131 = vector.load %arg19[%c1_100, %c0_101, %c0_102] : memref<2x8x8xf32, #tpu.memory_space<vmem>>, vector<1x8x8xf32>
    %132 = vector.shape_cast %131 : vector<1x8x8xf32> to vector<8x8xf32>
    %cst_103 = arith.constant dense<0.000000e+00> : vector<8x8xf32>
    %133 = tpu.matmul %122, %132, %cst_103 {dimension_numbers = #tpu.dot_dimension_numbers<[1], [0], [0], [1], [0, 0, 1, 1], [], []>} : vector<8x8xf32>, vector<8x8xf32>, vector<8x8xf32> -> vector<8x8xf32>
    %c1_104 = arith.constant 1 : index
    %c0_105 = arith.constant 0 : index
    %c0_106 = arith.constant 0 : index
    %134 = vector.load %arg20[%c1_104, %c0_105, %c0_106] : memref<2x1x8xf32, #tpu.memory_space<vmem>>, vector<1x1x8xf32>
    %135 = vector.shape_cast %134 : vector<1x1x8xf32> to vector<1x8xf32>
    %136 = vector.broadcast %135 : vector<1x8xf32> to vector<8x8xf32>
    %137 = arith.addf %133, %136 : vector<8x8xf32>
    %138 = tpu.reciprocal %117 {approx = true} : vector<8x8xf32> -> vector<8x8xf32>
    %139 = tpu.reciprocal %120 {approx = true} : vector<8x8xf32> -> vector<8x8xf32>
    %c0_107 = arith.constant 0 : index
    %c0_108 = arith.constant 0 : index
    %c0_109 = arith.constant 0 : index
    %c0_110 = arith.constant 0 : index
    %140 = vector.load %arg11[%c0_107, %c0_108, %c0_109, %c0_110] : memref<1x4x3x24xf32, #tpu.memory_space<vmem>>, vector<1x1x3x24xf32>
    %141 = vector.shape_cast %140 : vector<1x1x3x24xf32> to vector<3x24xf32>
    %c0_111 = arith.constant 0 : index
    %c0_112 = arith.constant 0 : index
    %c0_113 = arith.constant 0 : index
    %c0_114 = arith.constant 0 : index
    %142 = vector.load %arg12[%c0_111, %c0_112, %c0_113, %c0_114] : memref<1x4x3x24xf32, #tpu.memory_space<vmem>>, vector<1x1x3x24xf32>
    %143 = vector.shape_cast %142 : vector<1x1x3x24xf32> to vector<3x24xf32>
    %c0_115 = arith.constant 0 : index
    %c0_116 = arith.constant 0 : index
    %c0_117 = arith.constant 0 : index
    %c0_118 = arith.constant 0 : index
    %144 = vector.load %arg13[%c0_115, %c0_116, %c0_117, %c0_118] : memref<1x4x3x24xf32, #tpu.memory_space<vmem>>, vector<1x1x3x24xf32>
    %145 = vector.shape_cast %144 : vector<1x1x3x24xf32> to vector<3x24xf32>
    %c0_119 = arith.constant 0 : index
    %c0_120 = arith.constant 0 : index
    %c0_121 = arith.constant 0 : index
    %c0_122 = arith.constant 0 : index
    %146 = vector.load %arg14[%c0_119, %c0_120, %c0_121, %c0_122] : memref<1x4x3x24xf32, #tpu.memory_space<vmem>>, vector<1x1x3x24xf32>
    %147 = vector.shape_cast %146 : vector<1x1x3x24xf32> to vector<3x24xf32>
    %148 = vector.extract_strided_slice %102 {offsets = [0, 0], sizes = [8, 1], strides = [1, 1]} : vector<8x3xf32> to vector<8x1xf32>
    %149 = vector.extract_strided_slice %141 {offsets = [0, 0], sizes = [1, 24], strides = [1, 1]} : vector<3x24xf32> to vector<1x24xf32>
    %150 = vector.broadcast %148 : vector<8x1xf32> to vector<8x24xf32>
    %151 = vector.broadcast %149 : vector<1x24xf32> to vector<8x24xf32>
    %152 = arith.mulf %150, %151 : vector<8x24xf32>
    %153 = vector.extract_strided_slice %102 {offsets = [0, 1], sizes = [8, 1], strides = [1, 1]} : vector<8x3xf32> to vector<8x1xf32>
    %154 = vector.extract_strided_slice %141 {offsets = [1, 0], sizes = [1, 24], strides = [1, 1]} : vector<3x24xf32> to vector<1x24xf32>
    %155 = vector.broadcast %153 : vector<8x1xf32> to vector<8x24xf32>
    %156 = vector.broadcast %154 : vector<1x24xf32> to vector<8x24xf32>
    %157 = arith.mulf %155, %156 : vector<8x24xf32>
    %158 = arith.addf %152, %157 : vector<8x24xf32>
    %159 = vector.extract_strided_slice %102 {offsets = [0, 2], sizes = [8, 1], strides = [1, 1]} : vector<8x3xf32> to vector<8x1xf32>
    %160 = vector.extract_strided_slice %141 {offsets = [2, 0], sizes = [1, 24], strides = [1, 1]} : vector<3x24xf32> to vector<1x24xf32>
    %161 = vector.broadcast %159 : vector<8x1xf32> to vector<8x24xf32>
    %162 = vector.broadcast %160 : vector<1x24xf32> to vector<8x24xf32>
    %163 = arith.mulf %161, %162 : vector<8x24xf32>
    %164 = arith.addf %158, %163 : vector<8x24xf32>
    %165 = vector.extract_strided_slice %102 {offsets = [0, 0], sizes = [8, 1], strides = [1, 1]} : vector<8x3xf32> to vector<8x1xf32>
    %166 = vector.extract_strided_slice %143 {offsets = [0, 0], sizes = [1, 24], strides = [1, 1]} : vector<3x24xf32> to vector<1x24xf32>
    %167 = vector.broadcast %165 : vector<8x1xf32> to vector<8x24xf32>
    %168 = vector.broadcast %166 : vector<1x24xf32> to vector<8x24xf32>
    %169 = arith.mulf %167, %168 : vector<8x24xf32>
    %170 = vector.extract_strided_slice %102 {offsets = [0, 1], sizes = [8, 1], strides = [1, 1]} : vector<8x3xf32> to vector<8x1xf32>
    %171 = vector.extract_strided_slice %143 {offsets = [1, 0], sizes = [1, 24], strides = [1, 1]} : vector<3x24xf32> to vector<1x24xf32>
    %172 = vector.broadcast %170 : vector<8x1xf32> to vector<8x24xf32>
    %173 = vector.broadcast %171 : vector<1x24xf32> to vector<8x24xf32>
    %174 = arith.mulf %172, %173 : vector<8x24xf32>
    %175 = arith.addf %169, %174 : vector<8x24xf32>
    %176 = vector.extract_strided_slice %102 {offsets = [0, 2], sizes = [8, 1], strides = [1, 1]} : vector<8x3xf32> to vector<8x1xf32>
    %177 = vector.extract_strided_slice %143 {offsets = [2, 0], sizes = [1, 24], strides = [1, 1]} : vector<3x24xf32> to vector<1x24xf32>
    %178 = vector.broadcast %176 : vector<8x1xf32> to vector<8x24xf32>
    %179 = vector.broadcast %177 : vector<1x24xf32> to vector<8x24xf32>
    %180 = arith.mulf %178, %179 : vector<8x24xf32>
    %181 = arith.addf %175, %180 : vector<8x24xf32>
    %182 = vector.extract_strided_slice %102 {offsets = [0, 0], sizes = [8, 1], strides = [1, 1]} : vector<8x3xf32> to vector<8x1xf32>
    %183 = vector.extract_strided_slice %145 {offsets = [0, 0], sizes = [1, 24], strides = [1, 1]} : vector<3x24xf32> to vector<1x24xf32>
    %184 = vector.broadcast %182 : vector<8x1xf32> to vector<8x24xf32>
    %185 = vector.broadcast %183 : vector<1x24xf32> to vector<8x24xf32>
    %186 = arith.mulf %184, %185 : vector<8x24xf32>
    %187 = vector.extract_strided_slice %102 {offsets = [0, 1], sizes = [8, 1], strides = [1, 1]} : vector<8x3xf32> to vector<8x1xf32>
    %188 = vector.extract_strided_slice %145 {offsets = [1, 0], sizes = [1, 24], strides = [1, 1]} : vector<3x24xf32> to vector<1x24xf32>
    %189 = vector.broadcast %187 : vector<8x1xf32> to vector<8x24xf32>
    %190 = vector.broadcast %188 : vector<1x24xf32> to vector<8x24xf32>
    %191 = arith.mulf %189, %190 : vector<8x24xf32>
    %192 = arith.addf %186, %191 : vector<8x24xf32>
    %193 = vector.extract_strided_slice %102 {offsets = [0, 2], sizes = [8, 1], strides = [1, 1]} : vector<8x3xf32> to vector<8x1xf32>
    %194 = vector.extract_strided_slice %145 {offsets = [2, 0], sizes = [1, 24], strides = [1, 1]} : vector<3x24xf32> to vector<1x24xf32>
    %195 = vector.broadcast %193 : vector<8x1xf32> to vector<8x24xf32>
    %196 = vector.broadcast %194 : vector<1x24xf32> to vector<8x24xf32>
    %197 = arith.mulf %195, %196 : vector<8x24xf32>
    %198 = arith.addf %192, %197 : vector<8x24xf32>
    %199 = vector.extract_strided_slice %102 {offsets = [0, 0], sizes = [8, 1], strides = [1, 1]} : vector<8x3xf32> to vector<8x1xf32>
    %200 = vector.extract_strided_slice %147 {offsets = [0, 0], sizes = [1, 24], strides = [1, 1]} : vector<3x24xf32> to vector<1x24xf32>
    %201 = vector.broadcast %199 : vector<8x1xf32> to vector<8x24xf32>
    %202 = vector.broadcast %200 : vector<1x24xf32> to vector<8x24xf32>
    %203 = arith.mulf %201, %202 : vector<8x24xf32>
    %204 = vector.extract_strided_slice %102 {offsets = [0, 1], sizes = [8, 1], strides = [1, 1]} : vector<8x3xf32> to vector<8x1xf32>
    %205 = vector.extract_strided_slice %147 {offsets = [1, 0], sizes = [1, 24], strides = [1, 1]} : vector<3x24xf32> to vector<1x24xf32>
    %206 = vector.broadcast %204 : vector<8x1xf32> to vector<8x24xf32>
    %207 = vector.broadcast %205 : vector<1x24xf32> to vector<8x24xf32>
    %208 = arith.mulf %206, %207 : vector<8x24xf32>
    %209 = arith.addf %203, %208 : vector<8x24xf32>
    %210 = vector.extract_strided_slice %102 {offsets = [0, 2], sizes = [8, 1], strides = [1, 1]} : vector<8x3xf32> to vector<8x1xf32>
    %211 = vector.extract_strided_slice %147 {offsets = [2, 0], sizes = [1, 24], strides = [1, 1]} : vector<3x24xf32> to vector<1x24xf32>
    %212 = vector.broadcast %210 : vector<8x1xf32> to vector<8x24xf32>
    %213 = vector.broadcast %211 : vector<1x24xf32> to vector<8x24xf32>
    %214 = arith.mulf %212, %213 : vector<8x24xf32>
    %215 = arith.addf %209, %214 : vector<8x24xf32>
    %216 = arith.addf %138, %123 : vector<8x8xf32>
    %217 = arith.mulf %112, %138 : vector<8x8xf32>
    %218 = arith.mulf %130, %123 : vector<8x8xf32>
    %219 = arith.addf %217, %218 : vector<8x8xf32>
    %220 = tpu.concatenate %216, %216, %216 in 1 : vector<8x8xf32>, vector<8x8xf32>, vector<8x8xf32> -> vector<8x24xf32>
    %221 = arith.addf %220, %164 : vector<8x24xf32>
    %222 = tpu.reciprocal %221 {approx = true} : vector<8x24xf32> -> vector<8x24xf32>
    %223 = tpu.concatenate %219, %219, %219 in 1 : vector<8x8xf32>, vector<8x8xf32>, vector<8x8xf32> -> vector<8x24xf32>
    %224 = arith.addf %223, %181 : vector<8x24xf32>
    %225 = arith.mulf %222, %224 : vector<8x24xf32>
    %cst_123 = arith.constant 1.000000e-24 : f32
    %226 = vector.broadcast %cst_123 : f32 to vector<8x24xf32>
    %227 = arith.maximumf %222, %226 : vector<8x24xf32>
    %228 = math.sqrt %227 : vector<8x24xf32>
    %229 = arith.addf %139, %123 : vector<8x8xf32>
    %230 = arith.mulf %113, %139 : vector<8x8xf32>
    %231 = arith.mulf %137, %123 : vector<8x8xf32>
    %232 = arith.addf %230, %231 : vector<8x8xf32>
    %233 = vector.extract_strided_slice %225 {offsets = [0, 0], sizes = [8, 8], strides = [1, 1]} : vector<8x24xf32> to vector<8x8xf32>
    %234 = vector.extract_strided_slice %222 {offsets = [0, 0], sizes = [8, 8], strides = [1, 1]} : vector<8x24xf32> to vector<8x8xf32>
    %235 = arith.mulf %233, %233 : vector<8x8xf32>
    %236 = arith.addf %235, %234 : vector<8x8xf32>
    %cst_124 = arith.constant dense<0.000000e+00> : vector<8xf32>
    %237 = vector.multi_reduction <add>, %236, %cst_124 [1] : vector<8x8xf32> to vector<8xf32>
    %238 = vector.shape_cast %237 : vector<8xf32> to vector<8x1xf32>
    %239 = vector.extract_strided_slice %228 {offsets = [0, 0], sizes = [8, 8], strides = [1, 1]} : vector<8x24xf32> to vector<8x8xf32>
    %240 = tpu.concatenate %233, %239 in 1 : vector<8x8xf32>, vector<8x8xf32> -> vector<8x16xf32>
    %241 = vector.extract_strided_slice %225 {offsets = [0, 8], sizes = [8, 8], strides = [1, 1]} : vector<8x24xf32> to vector<8x8xf32>
    %242 = vector.extract_strided_slice %222 {offsets = [0, 8], sizes = [8, 8], strides = [1, 1]} : vector<8x24xf32> to vector<8x8xf32>
    %243 = arith.mulf %241, %241 : vector<8x8xf32>
    %244 = arith.addf %243, %242 : vector<8x8xf32>
    %cst_125 = arith.constant dense<0.000000e+00> : vector<8xf32>
    %245 = vector.multi_reduction <add>, %244, %cst_125 [1] : vector<8x8xf32> to vector<8xf32>
    %246 = vector.shape_cast %245 : vector<8xf32> to vector<8x1xf32>
    %247 = vector.extract_strided_slice %228 {offsets = [0, 8], sizes = [8, 8], strides = [1, 1]} : vector<8x24xf32> to vector<8x8xf32>
    %248 = tpu.concatenate %241, %247 in 1 : vector<8x8xf32>, vector<8x8xf32> -> vector<8x16xf32>
    %249 = vector.extract_strided_slice %225 {offsets = [0, 16], sizes = [8, 8], strides = [1, 1]} : vector<8x24xf32> to vector<8x8xf32>
    %250 = vector.extract_strided_slice %222 {offsets = [0, 16], sizes = [8, 8], strides = [1, 1]} : vector<8x24xf32> to vector<8x8xf32>
    %251 = arith.mulf %249, %249 : vector<8x8xf32>
    %252 = arith.addf %251, %250 : vector<8x8xf32>
    %cst_126 = arith.constant dense<0.000000e+00> : vector<8xf32>
    %253 = vector.multi_reduction <add>, %252, %cst_126 [1] : vector<8x8xf32> to vector<8xf32>
    %254 = vector.shape_cast %253 : vector<8xf32> to vector<8x1xf32>
    %255 = vector.extract_strided_slice %228 {offsets = [0, 16], sizes = [8, 8], strides = [1, 1]} : vector<8x24xf32> to vector<8x8xf32>
    %256 = tpu.concatenate %249, %255 in 1 : vector<8x8xf32>, vector<8x8xf32> -> vector<8x16xf32>
    %257 = tpu.concatenate %238, %246, %254 in 1 : vector<8x1xf32>, vector<8x1xf32>, vector<8x1xf32> -> vector<8x3xf32>
    %258 = vector.extract_strided_slice %198 {offsets = [0, 0], sizes = [8, 8], strides = [1, 1]} : vector<8x24xf32> to vector<8x8xf32>
    %259 = arith.addf %229, %258 : vector<8x8xf32>
    %260 = tpu.reciprocal %259 {approx = true} : vector<8x8xf32> -> vector<8x8xf32>
    %261 = vector.extract_strided_slice %215 {offsets = [0, 0], sizes = [8, 8], strides = [1, 1]} : vector<8x24xf32> to vector<8x8xf32>
    %262 = arith.addf %232, %261 : vector<8x8xf32>
    %263 = arith.mulf %260, %262 : vector<8x8xf32>
    %cst_127 = arith.constant 1.000000e-24 : f32
    %264 = vector.broadcast %cst_127 : f32 to vector<8x8xf32>
    %265 = arith.maximumf %260, %264 : vector<8x8xf32>
    %266 = math.sqrt %265 : vector<8x8xf32>
    %267 = arith.mulf %263, %263 : vector<8x8xf32>
    %268 = arith.addf %267, %260 : vector<8x8xf32>
    %cst_128 = arith.constant dense<0.000000e+00> : vector<8xf32>
    %269 = vector.multi_reduction <add>, %268, %cst_128 [1] : vector<8x8xf32> to vector<8xf32>
    %270 = vector.shape_cast %269 : vector<8xf32> to vector<8x1xf32>
    %271 = tpu.concatenate %263, %266 in 1 : vector<8x8xf32>, vector<8x8xf32> -> vector<8x16xf32>
    %cst_129 = arith.constant -2.000000e+00 : f32
    %272 = vector.broadcast %cst_129 : f32 to vector<8x16xf32>
    %273 = arith.mulf %272, %271 : vector<8x16xf32>
    %274 = vector.extract_strided_slice %198 {offsets = [0, 8], sizes = [8, 8], strides = [1, 1]} : vector<8x24xf32> to vector<8x8xf32>
    %275 = arith.addf %229, %274 : vector<8x8xf32>
    %276 = tpu.reciprocal %275 {approx = true} : vector<8x8xf32> -> vector<8x8xf32>
    %277 = vector.extract_strided_slice %215 {offsets = [0, 8], sizes = [8, 8], strides = [1, 1]} : vector<8x24xf32> to vector<8x8xf32>
    %278 = arith.addf %232, %277 : vector<8x8xf32>
    %279 = arith.mulf %276, %278 : vector<8x8xf32>
    %cst_130 = arith.constant 1.000000e-24 : f32
    %280 = vector.broadcast %cst_130 : f32 to vector<8x8xf32>
    %281 = arith.maximumf %276, %280 : vector<8x8xf32>
    %282 = math.sqrt %281 : vector<8x8xf32>
    %283 = arith.mulf %279, %279 : vector<8x8xf32>
    %284 = arith.addf %283, %276 : vector<8x8xf32>
    %cst_131 = arith.constant dense<0.000000e+00> : vector<8xf32>
    %285 = vector.multi_reduction <add>, %284, %cst_131 [1] : vector<8x8xf32> to vector<8xf32>
    %286 = vector.shape_cast %285 : vector<8xf32> to vector<8x1xf32>
    %287 = tpu.concatenate %279, %282 in 1 : vector<8x8xf32>, vector<8x8xf32> -> vector<8x16xf32>
    %cst_132 = arith.constant -2.000000e+00 : f32
    %288 = vector.broadcast %cst_132 : f32 to vector<8x16xf32>
    %289 = arith.mulf %288, %287 : vector<8x16xf32>
    %290 = vector.extract_strided_slice %198 {offsets = [0, 16], sizes = [8, 8], strides = [1, 1]} : vector<8x24xf32> to vector<8x8xf32>
    %291 = arith.addf %229, %290 : vector<8x8xf32>
    %292 = tpu.reciprocal %291 {approx = true} : vector<8x8xf32> -> vector<8x8xf32>
    %293 = vector.extract_strided_slice %215 {offsets = [0, 16], sizes = [8, 8], strides = [1, 1]} : vector<8x24xf32> to vector<8x8xf32>
    %294 = arith.addf %232, %293 : vector<8x8xf32>
    %295 = arith.mulf %292, %294 : vector<8x8xf32>
    %cst_133 = arith.constant 1.000000e-24 : f32
    %296 = vector.broadcast %cst_133 : f32 to vector<8x8xf32>
    %297 = arith.maximumf %292, %296 : vector<8x8xf32>
    %298 = math.sqrt %297 : vector<8x8xf32>
    %299 = arith.mulf %295, %295 : vector<8x8xf32>
    %300 = arith.addf %299, %292 : vector<8x8xf32>
    %cst_134 = arith.constant dense<0.000000e+00> : vector<8xf32>
    %301 = vector.multi_reduction <add>, %300, %cst_134 [1] : vector<8x8xf32> to vector<8xf32>
    %302 = vector.shape_cast %301 : vector<8xf32> to vector<8x1xf32>
    %303 = tpu.concatenate %295, %298 in 1 : vector<8x8xf32>, vector<8x8xf32> -> vector<8x16xf32>
    %cst_135 = arith.constant -2.000000e+00 : f32
    %304 = vector.broadcast %cst_135 : f32 to vector<8x16xf32>
    %305 = arith.mulf %304, %303 : vector<8x16xf32>
    %306 = tpu.concatenate %270, %286, %302 in 1 : vector<8x1xf32>, vector<8x1xf32>, vector<8x1xf32> -> vector<8x3xf32>
    %307 = tpu.concatenate %257, %102 in 1 : vector<8x3xf32>, vector<8x3xf32> -> vector<8x6xf32>
    %308 = tpu.concatenate %102, %306 in 1 : vector<8x3xf32>, vector<8x3xf32> -> vector<8x6xf32>
    %cst_136 = arith.constant dense<0.000000e+00> : vector<8x8xf32>
    %309 = tpu.matmul %307, %308, %cst_136 {dimension_numbers = #tpu.dot_dimension_numbers<[1], [1], [0], [0], [0, 0, 1, 0], [], []>} : vector<8x6xf32>, vector<8x6xf32>, vector<8x8xf32> -> vector<8x8xf32>
    %310 = vector.extract_strided_slice %102 {offsets = [0, 0], sizes = [8, 1], strides = [1, 1]} : vector<8x3xf32> to vector<8x1xf32>
    %cst_137 = arith.constant dense<0.000000e+00> : vector<8x8xf32>
    %311 = tpu.matmul %240, %273, %cst_137 {dimension_numbers = #tpu.dot_dimension_numbers<[1], [1], [0], [0], [0, 0, 1, 0], [], []>} : vector<8x16xf32>, vector<8x16xf32>, vector<8x8xf32> -> vector<8x8xf32>
    %312 = vector.extract_strided_slice %104 {offsets = [0, 0], sizes = [1, 8], strides = [1, 1]} : vector<3x8xf32> to vector<1x8xf32>
    %313 = vector.broadcast %310 : vector<8x1xf32> to vector<8x8xf32>
    %314 = vector.broadcast %312 : vector<1x8xf32> to vector<8x8xf32>
    %315 = arith.mulf %313, %314 : vector<8x8xf32>
    %316 = arith.mulf %315, %311 : vector<8x8xf32>
    %317 = arith.addf %309, %316 : vector<8x8xf32>
    %cst_138 = arith.constant dense<0.000000e+00> : vector<8x8xf32>
    %318 = tpu.matmul %248, %273, %cst_138 {dimension_numbers = #tpu.dot_dimension_numbers<[1], [1], [0], [0], [0, 0, 1, 0], [], []>} : vector<8x16xf32>, vector<8x16xf32>, vector<8x8xf32> -> vector<8x8xf32>
    %319 = vector.extract_strided_slice %104 {offsets = [1, 0], sizes = [1, 8], strides = [1, 1]} : vector<3x8xf32> to vector<1x8xf32>
    %320 = vector.broadcast %310 : vector<8x1xf32> to vector<8x8xf32>
    %321 = vector.broadcast %319 : vector<1x8xf32> to vector<8x8xf32>
    %322 = arith.mulf %320, %321 : vector<8x8xf32>
    %323 = arith.mulf %322, %318 : vector<8x8xf32>
    %324 = arith.addf %317, %323 : vector<8x8xf32>
    %cst_139 = arith.constant dense<0.000000e+00> : vector<8x8xf32>
    %325 = tpu.matmul %256, %273, %cst_139 {dimension_numbers = #tpu.dot_dimension_numbers<[1], [1], [0], [0], [0, 0, 1, 0], [], []>} : vector<8x16xf32>, vector<8x16xf32>, vector<8x8xf32> -> vector<8x8xf32>
    %326 = vector.extract_strided_slice %104 {offsets = [2, 0], sizes = [1, 8], strides = [1, 1]} : vector<3x8xf32> to vector<1x8xf32>
    %327 = vector.broadcast %310 : vector<8x1xf32> to vector<8x8xf32>
    %328 = vector.broadcast %326 : vector<1x8xf32> to vector<8x8xf32>
    %329 = arith.mulf %327, %328 : vector<8x8xf32>
    %330 = arith.mulf %329, %325 : vector<8x8xf32>
    %331 = arith.addf %324, %330 : vector<8x8xf32>
    %332 = vector.extract_strided_slice %102 {offsets = [0, 1], sizes = [8, 1], strides = [1, 1]} : vector<8x3xf32> to vector<8x1xf32>
    %cst_140 = arith.constant dense<0.000000e+00> : vector<8x8xf32>
    %333 = tpu.matmul %240, %289, %cst_140 {dimension_numbers = #tpu.dot_dimension_numbers<[1], [1], [0], [0], [0, 0, 1, 0], [], []>} : vector<8x16xf32>, vector<8x16xf32>, vector<8x8xf32> -> vector<8x8xf32>
    %334 = vector.extract_strided_slice %104 {offsets = [0, 0], sizes = [1, 8], strides = [1, 1]} : vector<3x8xf32> to vector<1x8xf32>
    %335 = vector.broadcast %332 : vector<8x1xf32> to vector<8x8xf32>
    %336 = vector.broadcast %334 : vector<1x8xf32> to vector<8x8xf32>
    %337 = arith.mulf %335, %336 : vector<8x8xf32>
    %338 = arith.mulf %337, %333 : vector<8x8xf32>
    %339 = arith.addf %331, %338 : vector<8x8xf32>
    %cst_141 = arith.constant dense<0.000000e+00> : vector<8x8xf32>
    %340 = tpu.matmul %248, %289, %cst_141 {dimension_numbers = #tpu.dot_dimension_numbers<[1], [1], [0], [0], [0, 0, 1, 0], [], []>} : vector<8x16xf32>, vector<8x16xf32>, vector<8x8xf32> -> vector<8x8xf32>
    %341 = vector.extract_strided_slice %104 {offsets = [1, 0], sizes = [1, 8], strides = [1, 1]} : vector<3x8xf32> to vector<1x8xf32>
    %342 = vector.broadcast %332 : vector<8x1xf32> to vector<8x8xf32>
    %343 = vector.broadcast %341 : vector<1x8xf32> to vector<8x8xf32>
    %344 = arith.mulf %342, %343 : vector<8x8xf32>
    %345 = arith.mulf %344, %340 : vector<8x8xf32>
    %346 = arith.addf %339, %345 : vector<8x8xf32>
    %cst_142 = arith.constant dense<0.000000e+00> : vector<8x8xf32>
    %347 = tpu.matmul %256, %289, %cst_142 {dimension_numbers = #tpu.dot_dimension_numbers<[1], [1], [0], [0], [0, 0, 1, 0], [], []>} : vector<8x16xf32>, vector<8x16xf32>, vector<8x8xf32> -> vector<8x8xf32>
    %348 = vector.extract_strided_slice %104 {offsets = [2, 0], sizes = [1, 8], strides = [1, 1]} : vector<3x8xf32> to vector<1x8xf32>
    %349 = vector.broadcast %332 : vector<8x1xf32> to vector<8x8xf32>
    %350 = vector.broadcast %348 : vector<1x8xf32> to vector<8x8xf32>
    %351 = arith.mulf %349, %350 : vector<8x8xf32>
    %352 = arith.mulf %351, %347 : vector<8x8xf32>
    %353 = arith.addf %346, %352 : vector<8x8xf32>
    %354 = vector.extract_strided_slice %102 {offsets = [0, 2], sizes = [8, 1], strides = [1, 1]} : vector<8x3xf32> to vector<8x1xf32>
    %cst_143 = arith.constant dense<0.000000e+00> : vector<8x8xf32>
    %355 = tpu.matmul %240, %305, %cst_143 {dimension_numbers = #tpu.dot_dimension_numbers<[1], [1], [0], [0], [0, 0, 1, 0], [], []>} : vector<8x16xf32>, vector<8x16xf32>, vector<8x8xf32> -> vector<8x8xf32>
    %356 = vector.extract_strided_slice %104 {offsets = [0, 0], sizes = [1, 8], strides = [1, 1]} : vector<3x8xf32> to vector<1x8xf32>
    %357 = vector.broadcast %354 : vector<8x1xf32> to vector<8x8xf32>
    %358 = vector.broadcast %356 : vector<1x8xf32> to vector<8x8xf32>
    %359 = arith.mulf %357, %358 : vector<8x8xf32>
    %360 = arith.mulf %359, %355 : vector<8x8xf32>
    %361 = arith.addf %353, %360 : vector<8x8xf32>
    %cst_144 = arith.constant dense<0.000000e+00> : vector<8x8xf32>
    %362 = tpu.matmul %248, %305, %cst_144 {dimension_numbers = #tpu.dot_dimension_numbers<[1], [1], [0], [0], [0, 0, 1, 0], [], []>} : vector<8x16xf32>, vector<8x16xf32>, vector<8x8xf32> -> vector<8x8xf32>
    %363 = vector.extract_strided_slice %104 {offsets = [1, 0], sizes = [1, 8], strides = [1, 1]} : vector<3x8xf32> to vector<1x8xf32>
    %364 = vector.broadcast %354 : vector<8x1xf32> to vector<8x8xf32>
    %365 = vector.broadcast %363 : vector<1x8xf32> to vector<8x8xf32>
    %366 = arith.mulf %364, %365 : vector<8x8xf32>
    %367 = arith.mulf %366, %362 : vector<8x8xf32>
    %368 = arith.addf %361, %367 : vector<8x8xf32>
    %cst_145 = arith.constant dense<0.000000e+00> : vector<8x8xf32>
    %369 = tpu.matmul %256, %305, %cst_145 {dimension_numbers = #tpu.dot_dimension_numbers<[1], [1], [0], [0], [0, 0, 1, 0], [], []>} : vector<8x16xf32>, vector<8x16xf32>, vector<8x8xf32> -> vector<8x8xf32>
    %370 = vector.extract_strided_slice %104 {offsets = [2, 0], sizes = [1, 8], strides = [1, 1]} : vector<3x8xf32> to vector<1x8xf32>
    %371 = vector.broadcast %354 : vector<8x1xf32> to vector<8x8xf32>
    %372 = vector.broadcast %370 : vector<1x8xf32> to vector<8x8xf32>
    %373 = arith.mulf %371, %372 : vector<8x8xf32>
    %374 = arith.mulf %373, %369 : vector<8x8xf32>
    %375 = arith.addf %368, %374 : vector<8x8xf32>
    %cst_146 = arith.constant -0.353553385 : f32
    %376 = vector.broadcast %cst_146 : f32 to vector<8x8xf32>
    %377 = arith.mulf %375, %376 : vector<8x8xf32>
    %cst_147 = arith.constant 0.000000e+00 : f32
    %378 = vector.broadcast %cst_147 : f32 to vector<8x8xf32>
    %379 = arith.cmpf ogt, %111, %378 : vector<8x8xf32>
    %cst_148 = arith.constant -1.000000e+30 : f32
    %380 = vector.broadcast %cst_148 : f32 to vector<8x8xf32>
    %381 = arith.select %379, %377, %380 : vector<8x8xi1>, vector<8x8xf32>
    %cst_149 = arith.constant dense<0xFF800000> : vector<8xf32>
    %382 = vector.multi_reduction <maximumf>, %381, %cst_149 [1] : vector<8x8xf32> to vector<8xf32>
    %383 = vector.shape_cast %382 : vector<8xf32> to vector<8x1xf32>
    %384 = vector.broadcast %383 : vector<8x1xf32> to vector<8x8xf32>
    %385 = arith.subf %381, %384 : vector<8x8xf32>
    %386 = math.exp %385 : vector<8x8xf32>
    %cst_150 = arith.constant dense<0.000000e+00> : vector<8xf32>
    %387 = vector.multi_reduction <add>, %386, %cst_150 [1] : vector<8x8xf32> to vector<8xf32>
    %388 = vector.shape_cast %387 : vector<8xf32> to vector<8x1xf32>
    %389 = tpu.reciprocal %388 {approx = true} : vector<8x1xf32> -> vector<8x1xf32>
    %390 = vector.broadcast %389 : vector<8x1xf32> to vector<8x8xf32>
    %391 = arith.mulf %386, %390 : vector<8x8xf32>
    %c0_151 = arith.constant 0 : index
    %c0_152 = arith.constant 0 : index
    %c0_153 = arith.constant 0 : index
    %c0_154 = arith.constant 0 : index
    %392 = vector.load %arg29[%c0_151, %c0_152, %c0_153, %c0_154] : memref<1x4x8x8xf32, #tpu.memory_space<vmem>>, vector<1x1x8x8xf32>
    %393 = vector.shape_cast %392 : vector<1x1x8x8xf32> to vector<8x8xf32>
    %394 = vector.shape_cast %391 : vector<8x8xf32> to vector<1x1x8x8xf32>
    tpu.vector_store %arg29[%c0_151, %c0_152, %c0_153, %c0_154], %394 {strides = array<i32>} : memref<1x4x8x8xf32, #tpu.memory_space<vmem>>, vector<1x1x8x8xf32>,
    %395 = arith.truncf %391 : vector<8x8xf32> to vector<8x8xbf16>
    %396 = arith.truncf %114 : vector<8x8xf32> to vector<8x8xbf16>
    %cst_155 = arith.constant dense<0.000000e+00> : vector<8x8xf32>
    %397 = tpu.matmul %395, %396, %cst_155 {dimension_numbers = #tpu.dot_dimension_numbers<[1], [0], [0], [1], [0, 0, 1, 1], [], []>} : vector<8x8xbf16>, vector<8x8xbf16>, vector<8x8xf32> -> vector<8x8xf32>
    %398 = arith.mulf %391, %391 : vector<8x8xf32>
    %399 = arith.truncf %398 : vector<8x8xf32> to vector<8x8xbf16>
    %400 = arith.truncf %121 : vector<8x8xf32> to vector<8x8xbf16>
    %cst_156 = arith.constant dense<0.000000e+00> : vector<8x8xf32>
    %401 = tpu.matmul %399, %400, %cst_156 {dimension_numbers = #tpu.dot_dimension_numbers<[1], [0], [0], [1], [0, 0, 1, 1], [], []>} : vector<8x8xbf16>, vector<8x8xbf16>, vector<8x8xf32> -> vector<8x8xf32>
    %402 = vector.extract_strided_slice %18 {offsets = [0, 8], sizes = [8, 8], strides = [1, 1]} : vector<8x32xf32> to vector<8x8xf32>
    %403 = vector.extract_strided_slice %25 {offsets = [0, 8], sizes = [8, 8], strides = [1, 1]} : vector<8x32xf32> to vector<8x8xf32>
    %404 = vector.extract_strided_slice %32 {offsets = [0, 8], sizes = [8, 8], strides = [1, 1]} : vector<8x32xf32> to vector<8x8xf32>
    %405 = vector.extract_strided_slice %49 {offsets = [0, 8], sizes = [8, 8], strides = [1, 1]} : vector<8x32xf32> to vector<8x8xf32>
    %cst_157 = arith.constant 9.99999997E-7 : f32
    %406 = vector.broadcast %cst_157 : f32 to vector<8x8xf32>
    %407 = arith.maximumf %405, %406 : vector<8x8xf32>
    %408 = vector.extract_strided_slice %66 {offsets = [0, 8], sizes = [8, 8], strides = [1, 1]} : vector<8x32xf32> to vector<8x8xf32>
    %cst_158 = arith.constant 9.99999997E-7 : f32
    %409 = vector.broadcast %cst_158 : f32 to vector<8x8xf32>
    %410 = arith.maximumf %408, %409 : vector<8x8xf32>
    %411 = vector.extract_strided_slice %83 {offsets = [0, 8], sizes = [8, 8], strides = [1, 1]} : vector<8x32xf32> to vector<8x8xf32>
    %412 = vector.extract_strided_slice %85 {offsets = [0, 8], sizes = [8, 8], strides = [1, 1]} : vector<8x32xf32> to vector<8x8xf32>
    %413 = vector.extract_strided_slice %100 {offsets = [0, 8], sizes = [8, 8], strides = [1, 1]} : vector<8x32xf32> to vector<8x8xf32>
    %c0_159 = arith.constant 0 : index
    %c0_160 = arith.constant 0 : index
    %c0_161 = arith.constant 0 : index
    %414 = vector.load %arg19[%c0_159, %c0_160, %c0_161] : memref<2x8x8xf32, #tpu.memory_space<vmem>>, vector<1x8x8xf32>
    %415 = vector.shape_cast %414 : vector<1x8x8xf32> to vector<8x8xf32>
    %cst_162 = arith.constant dense<0.000000e+00> : vector<8x8xf32>
    %416 = tpu.matmul %412, %415, %cst_162 {dimension_numbers = #tpu.dot_dimension_numbers<[1], [0], [0], [1], [0, 0, 1, 1], [], []>} : vector<8x8xf32>, vector<8x8xf32>, vector<8x8xf32> -> vector<8x8xf32>
    %c0_163 = arith.constant 0 : index
    %c0_164 = arith.constant 0 : index
    %c0_165 = arith.constant 0 : index
    %417 = vector.load %arg20[%c0_163, %c0_164, %c0_165] : memref<2x1x8xf32, #tpu.memory_space<vmem>>, vector<1x1x8xf32>
    %418 = vector.shape_cast %417 : vector<1x1x8xf32> to vector<1x8xf32>
    %419 = vector.broadcast %418 : vector<1x8xf32> to vector<8x8xf32>
    %420 = arith.addf %416, %419 : vector<8x8xf32>
    %c1_166 = arith.constant 1 : index
    %c0_167 = arith.constant 0 : index
    %c0_168 = arith.constant 0 : index
    %421 = vector.load %arg19[%c1_166, %c0_167, %c0_168] : memref<2x8x8xf32, #tpu.memory_space<vmem>>, vector<1x8x8xf32>
    %422 = vector.shape_cast %421 : vector<1x8x8xf32> to vector<8x8xf32>
    %cst_169 = arith.constant dense<0.000000e+00> : vector<8x8xf32>
    %423 = tpu.matmul %412, %422, %cst_169 {dimension_numbers = #tpu.dot_dimension_numbers<[1], [0], [0], [1], [0, 0, 1, 1], [], []>} : vector<8x8xf32>, vector<8x8xf32>, vector<8x8xf32> -> vector<8x8xf32>
    %c1_170 = arith.constant 1 : index
    %c0_171 = arith.constant 0 : index
    %c0_172 = arith.constant 0 : index
    %424 = vector.load %arg20[%c1_170, %c0_171, %c0_172] : memref<2x1x8xf32, #tpu.memory_space<vmem>>, vector<1x1x8xf32>
    %425 = vector.shape_cast %424 : vector<1x1x8xf32> to vector<1x8xf32>
    %426 = vector.broadcast %425 : vector<1x8xf32> to vector<8x8xf32>
    %427 = arith.addf %423, %426 : vector<8x8xf32>
    %428 = tpu.reciprocal %407 {approx = true} : vector<8x8xf32> -> vector<8x8xf32>
    %429 = tpu.reciprocal %410 {approx = true} : vector<8x8xf32> -> vector<8x8xf32>
    %c0_173 = arith.constant 0 : index
    %c1_174 = arith.constant 1 : index
    %c0_175 = arith.constant 0 : index
    %c0_176 = arith.constant 0 : index
    %430 = vector.load %arg11[%c0_173, %c1_174, %c0_175, %c0_176] : memref<1x4x3x24xf32, #tpu.memory_space<vmem>>, vector<1x1x3x24xf32>
    %431 = vector.shape_cast %430 : vector<1x1x3x24xf32> to vector<3x24xf32>
    %c0_177 = arith.constant 0 : index
    %c1_178 = arith.constant 1 : index
    %c0_179 = arith.constant 0 : index
    %c0_180 = arith.constant 0 : index
    %432 = vector.load %arg12[%c0_177, %c1_178, %c0_179, %c0_180] : memref<1x4x3x24xf32, #tpu.memory_space<vmem>>, vector<1x1x3x24xf32>
    %433 = vector.shape_cast %432 : vector<1x1x3x24xf32> to vector<3x24xf32>
    %c0_181 = arith.constant 0 : index
    %c1_182 = arith.constant 1 : index
    %c0_183 = arith.constant 0 : index
    %c0_184 = arith.constant 0 : index
    %434 = vector.load %arg13[%c0_181, %c1_182, %c0_183, %c0_184] : memref<1x4x3x24xf32, #tpu.memory_space<vmem>>, vector<1x1x3x24xf32>
    %435 = vector.shape_cast %434 : vector<1x1x3x24xf32> to vector<3x24xf32>
    %c0_185 = arith.constant 0 : index
    %c1_186 = arith.constant 1 : index
    %c0_187 = arith.constant 0 : index
    %c0_188 = arith.constant 0 : index
    %436 = vector.load %arg14[%c0_185, %c1_186, %c0_187, %c0_188] : memref<1x4x3x24xf32, #tpu.memory_space<vmem>>, vector<1x1x3x24xf32>
    %437 = vector.shape_cast %436 : vector<1x1x3x24xf32> to vector<3x24xf32>
    %438 = vector.extract_strided_slice %102 {offsets = [0, 0], sizes = [8, 1], strides = [1, 1]} : vector<8x3xf32> to vector<8x1xf32>
    %439 = vector.extract_strided_slice %431 {offsets = [0, 0], sizes = [1, 24], strides = [1, 1]} : vector<3x24xf32> to vector<1x24xf32>
    %440 = vector.broadcast %438 : vector<8x1xf32> to vector<8x24xf32>
    %441 = vector.broadcast %439 : vector<1x24xf32> to vector<8x24xf32>
    %442 = arith.mulf %440, %441 : vector<8x24xf32>
    %443 = vector.extract_strided_slice %102 {offsets = [0, 1], sizes = [8, 1], strides = [1, 1]} : vector<8x3xf32> to vector<8x1xf32>
    %444 = vector.extract_strided_slice %431 {offsets = [1, 0], sizes = [1, 24], strides = [1, 1]} : vector<3x24xf32> to vector<1x24xf32>
    %445 = vector.broadcast %443 : vector<8x1xf32> to vector<8x24xf32>
    %446 = vector.broadcast %444 : vector<1x24xf32> to vector<8x24xf32>
    %447 = arith.mulf %445, %446 : vector<8x24xf32>
    %448 = arith.addf %442, %447 : vector<8x24xf32>
    %449 = vector.extract_strided_slice %102 {offsets = [0, 2], sizes = [8, 1], strides = [1, 1]} : vector<8x3xf32> to vector<8x1xf32>
    %450 = vector.extract_strided_slice %431 {offsets = [2, 0], sizes = [1, 24], strides = [1, 1]} : vector<3x24xf32> to vector<1x24xf32>
    %451 = vector.broadcast %449 : vector<8x1xf32> to vector<8x24xf32>
    %452 = vector.broadcast %450 : vector<1x24xf32> to vector<8x24xf32>
    %453 = arith.mulf %451, %452 : vector<8x24xf32>
    %454 = arith.addf %448, %453 : vector<8x24xf32>
    %455 = vector.extract_strided_slice %102 {offsets = [0, 0], sizes = [8, 1], strides = [1, 1]} : vector<8x3xf32> to vector<8x1xf32>
    %456 = vector.extract_strided_slice %433 {offsets = [0, 0], sizes = [1, 24], strides = [1, 1]} : vector<3x24xf32> to vector<1x24xf32>
    %457 = vector.broadcast %455 : vector<8x1xf32> to vector<8x24xf32>
    %458 = vector.broadcast %456 : vector<1x24xf32> to vector<8x24xf32>
    %459 = arith.mulf %457, %458 : vector<8x24xf32>
    %460 = vector.extract_strided_slice %102 {offsets = [0, 1], sizes = [8, 1], strides = [1, 1]} : vector<8x3xf32> to vector<8x1xf32>
    %461 = vector.extract_strided_slice %433 {offsets = [1, 0], sizes = [1, 24], strides = [1, 1]} : vector<3x24xf32> to vector<1x24xf32>
    %462 = vector.broadcast %460 : vector<8x1xf32> to vector<8x24xf32>
    %463 = vector.broadcast %461 : vector<1x24xf32> to vector<8x24xf32>
    %464 = arith.mulf %462, %463 : vector<8x24xf32>
    %465 = arith.addf %459, %464 : vector<8x24xf32>
    %466 = vector.extract_strided_slice %102 {offsets = [0, 2], sizes = [8, 1], strides = [1, 1]} : vector<8x3xf32> to vector<8x1xf32>
    %467 = vector.extract_strided_slice %433 {offsets = [2, 0], sizes = [1, 24], strides = [1, 1]} : vector<3x24xf32> to vector<1x24xf32>
    %468 = vector.broadcast %466 : vector<8x1xf32> to vector<8x24xf32>
    %469 = vector.broadcast %467 : vector<1x24xf32> to vector<8x24xf32>
    %470 = arith.mulf %468, %469 : vector<8x24xf32>
    %471 = arith.addf %465, %470 : vector<8x24xf32>
    %472 = vector.extract_strided_slice %102 {offsets = [0, 0], sizes = [8, 1], strides = [1, 1]} : vector<8x3xf32> to vector<8x1xf32>
    %473 = vector.extract_strided_slice %435 {offsets = [0, 0], sizes = [1, 24], strides = [1, 1]} : vector<3x24xf32> to vector<1x24xf32>
    %474 = vector.broadcast %472 : vector<8x1xf32> to vector<8x24xf32>
    %475 = vector.broadcast %473 : vector<1x24xf32> to vector<8x24xf32>
    %476 = arith.mulf %474, %475 : vector<8x24xf32>
    %477 = vector.extract_strided_slice %102 {offsets = [0, 1], sizes = [8, 1], strides = [1, 1]} : vector<8x3xf32> to vector<8x1xf32>
    %478 = vector.extract_strided_slice %435 {offsets = [1, 0], sizes = [1, 24], strides = [1, 1]} : vector<3x24xf32> to vector<1x24xf32>
    %479 = vector.broadcast %477 : vector<8x1xf32> to vector<8x24xf32>
    %480 = vector.broadcast %478 : vector<1x24xf32> to vector<8x24xf32>
    %481 = arith.mulf %479, %480 : vector<8x24xf32>
    %482 = arith.addf %476, %481 : vector<8x24xf32>
    %483 = vector.extract_strided_slice %102 {offsets = [0, 2], sizes = [8, 1], strides = [1, 1]} : vector<8x3xf32> to vector<8x1xf32>
    %484 = vector.extract_strided_slice %435 {offsets = [2, 0], sizes = [1, 24], strides = [1, 1]} : vector<3x24xf32> to vector<1x24xf32>
    %485 = vector.broadcast %483 : vector<8x1xf32> to vector<8x24xf32>
    %486 = vector.broadcast %484 : vector<1x24xf32> to vector<8x24xf32>
    %487 = arith.mulf %485, %486 : vector<8x24xf32>
    %488 = arith.addf %482, %487 : vector<8x24xf32>
    %489 = vector.extract_strided_slice %102 {offsets = [0, 0], sizes = [8, 1], strides = [1, 1]} : vector<8x3xf32> to vector<8x1xf32>
    %490 = vector.extract_strided_slice %437 {offsets = [0, 0], sizes = [1, 24], strides = [1, 1]} : vector<3x24xf32> to vector<1x24xf32>
    %491 = vector.broadcast %489 : vector<8x1xf32> to vector<8x24xf32>
    %492 = vector.broadcast %490 : vector<1x24xf32> to vector<8x24xf32>
    %493 = arith.mulf %491, %492 : vector<8x24xf32>
    %494 = vector.extract_strided_slice %102 {offsets = [0, 1], sizes = [8, 1], strides = [1, 1]} : vector<8x3xf32> to vector<8x1xf32>
    %495 = vector.extract_strided_slice %437 {offsets = [1, 0], sizes = [1, 24], strides = [1, 1]} : vector<3x24xf32> to vector<1x24xf32>
    %496 = vector.broadcast %494 : vector<8x1xf32> to vector<8x24xf32>
    %497 = vector.broadcast %495 : vector<1x24xf32> to vector<8x24xf32>
    %498 = arith.mulf %496, %497 : vector<8x24xf32>
    %499 = arith.addf %493, %498 : vector<8x24xf32>
    %500 = vector.extract_strided_slice %102 {offsets = [0, 2], sizes = [8, 1], strides = [1, 1]} : vector<8x3xf32> to vector<8x1xf32>
    %501 = vector.extract_strided_slice %437 {offsets = [2, 0], sizes = [1, 24], strides = [1, 1]} : vector<3x24xf32> to vector<1x24xf32>
    %502 = vector.broadcast %500 : vector<8x1xf32> to vector<8x24xf32>
    %503 = vector.broadcast %501 : vector<1x24xf32> to vector<8x24xf32>
    %504 = arith.mulf %502, %503 : vector<8x24xf32>
    %505 = arith.addf %499, %504 : vector<8x24xf32>
    %506 = arith.addf %428, %413 : vector<8x8xf32>
    %507 = arith.mulf %402, %428 : vector<8x8xf32>
    %508 = arith.mulf %420, %413 : vector<8x8xf32>
    %509 = arith.addf %507, %508 : vector<8x8xf32>
    %510 = tpu.concatenate %506, %506, %506 in 1 : vector<8x8xf32>, vector<8x8xf32>, vector<8x8xf32> -> vector<8x24xf32>
    %511 = arith.addf %510, %454 : vector<8x24xf32>
    %512 = tpu.reciprocal %511 {approx = true} : vector<8x24xf32> -> vector<8x24xf32>
    %513 = tpu.concatenate %509, %509, %509 in 1 : vector<8x8xf32>, vector<8x8xf32>, vector<8x8xf32> -> vector<8x24xf32>
    %514 = arith.addf %513, %471 : vector<8x24xf32>
    %515 = arith.mulf %512, %514 : vector<8x24xf32>
    %cst_189 = arith.constant 1.000000e-24 : f32
    %516 = vector.broadcast %cst_189 : f32 to vector<8x24xf32>
    %517 = arith.maximumf %512, %516 : vector<8x24xf32>
    %518 = math.sqrt %517 : vector<8x24xf32>
    %519 = arith.addf %429, %413 : vector<8x8xf32>
    %520 = arith.mulf %403, %429 : vector<8x8xf32>
    %521 = arith.mulf %427, %413 : vector<8x8xf32>
    %522 = arith.addf %520, %521 : vector<8x8xf32>
    %523 = vector.extract_strided_slice %515 {offsets = [0, 0], sizes = [8, 8], strides = [1, 1]} : vector<8x24xf32> to vector<8x8xf32>
    %524 = vector.extract_strided_slice %512 {offsets = [0, 0], sizes = [8, 8], strides = [1, 1]} : vector<8x24xf32> to vector<8x8xf32>
    %525 = arith.mulf %523, %523 : vector<8x8xf32>
    %526 = arith.addf %525, %524 : vector<8x8xf32>
    %cst_190 = arith.constant dense<0.000000e+00> : vector<8xf32>
    %527 = vector.multi_reduction <add>, %526, %cst_190 [1] : vector<8x8xf32> to vector<8xf32>
    %528 = vector.shape_cast %527 : vector<8xf32> to vector<8x1xf32>
    %529 = vector.extract_strided_slice %518 {offsets = [0, 0], sizes = [8, 8], strides = [1, 1]} : vector<8x24xf32> to vector<8x8xf32>
    %530 = tpu.concatenate %523, %529 in 1 : vector<8x8xf32>, vector<8x8xf32> -> vector<8x16xf32>
    %531 = vector.extract_strided_slice %515 {offsets = [0, 8], sizes = [8, 8], strides = [1, 1]} : vector<8x24xf32> to vector<8x8xf32>
    %532 = vector.extract_strided_slice %512 {offsets = [0, 8], sizes = [8, 8], strides = [1, 1]} : vector<8x24xf32> to vector<8x8xf32>
    %533 = arith.mulf %531, %531 : vector<8x8xf32>
    %534 = arith.addf %533, %532 : vector<8x8xf32>
    %cst_191 = arith.constant dense<0.000000e+00> : vector<8xf32>
    %535 = vector.multi_reduction <add>, %534, %cst_191 [1] : vector<8x8xf32> to vector<8xf32>
    %536 = vector.shape_cast %535 : vector<8xf32> to vector<8x1xf32>
    %537 = vector.extract_strided_slice %518 {offsets = [0, 8], sizes = [8, 8], strides = [1, 1]} : vector<8x24xf32> to vector<8x8xf32>
    %538 = tpu.concatenate %531, %537 in 1 : vector<8x8xf32>, vector<8x8xf32> -> vector<8x16xf32>
    %539 = vector.extract_strided_slice %515 {offsets = [0, 16], sizes = [8, 8], strides = [1, 1]} : vector<8x24xf32> to vector<8x8xf32>
    %540 = vector.extract_strided_slice %512 {offsets = [0, 16], sizes = [8, 8], strides = [1, 1]} : vector<8x24xf32> to vector<8x8xf32>
    %541 = arith.mulf %539, %539 : vector<8x8xf32>
    %542 = arith.addf %541, %540 : vector<8x8xf32>
    %cst_192 = arith.constant dense<0.000000e+00> : vector<8xf32>
    %543 = vector.multi_reduction <add>, %542, %cst_192 [1] : vector<8x8xf32> to vector<8xf32>
    %544 = vector.shape_cast %543 : vector<8xf32> to vector<8x1xf32>
    %545 = vector.extract_strided_slice %518 {offsets = [0, 16], sizes = [8, 8], strides = [1, 1]} : vector<8x24xf32> to vector<8x8xf32>
    %546 = tpu.concatenate %539, %545 in 1 : vector<8x8xf32>, vector<8x8xf32> -> vector<8x16xf32>
    %547 = tpu.concatenate %528, %536, %544 in 1 : vector<8x1xf32>, vector<8x1xf32>, vector<8x1xf32> -> vector<8x3xf32>
    %548 = vector.extract_strided_slice %488 {offsets = [0, 0], sizes = [8, 8], strides = [1, 1]} : vector<8x24xf32> to vector<8x8xf32>
    %549 = arith.addf %519, %548 : vector<8x8xf32>
    %550 = tpu.reciprocal %549 {approx = true} : vector<8x8xf32> -> vector<8x8xf32>
    %551 = vector.extract_strided_slice %505 {offsets = [0, 0], sizes = [8, 8], strides = [1, 1]} : vector<8x24xf32> to vector<8x8xf32>
    %552 = arith.addf %522, %551 : vector<8x8xf32>
    %553 = arith.mulf %550, %552 : vector<8x8xf32>
    %cst_193 = arith.constant 1.000000e-24 : f32
    %554 = vector.broadcast %cst_193 : f32 to vector<8x8xf32>
    %555 = arith.maximumf %550, %554 : vector<8x8xf32>
    %556 = math.sqrt %555 : vector<8x8xf32>
    %557 = arith.mulf %553, %553 : vector<8x8xf32>
    %558 = arith.addf %557, %550 : vector<8x8xf32>
    %cst_194 = arith.constant dense<0.000000e+00> : vector<8xf32>
    %559 = vector.multi_reduction <add>, %558, %cst_194 [1] : vector<8x8xf32> to vector<8xf32>
    %560 = vector.shape_cast %559 : vector<8xf32> to vector<8x1xf32>
    %561 = tpu.concatenate %553, %556 in 1 : vector<8x8xf32>, vector<8x8xf32> -> vector<8x16xf32>
    %cst_195 = arith.constant -2.000000e+00 : f32
    %562 = vector.broadcast %cst_195 : f32 to vector<8x16xf32>
    %563 = arith.mulf %562, %561 : vector<8x16xf32>
    %564 = vector.extract_strided_slice %488 {offsets = [0, 8], sizes = [8, 8], strides = [1, 1]} : vector<8x24xf32> to vector<8x8xf32>
    %565 = arith.addf %519, %564 : vector<8x8xf32>
    %566 = tpu.reciprocal %565 {approx = true} : vector<8x8xf32> -> vector<8x8xf32>
    %567 = vector.extract_strided_slice %505 {offsets = [0, 8], sizes = [8, 8], strides = [1, 1]} : vector<8x24xf32> to vector<8x8xf32>
    %568 = arith.addf %522, %567 : vector<8x8xf32>
    %569 = arith.mulf %566, %568 : vector<8x8xf32>
    %cst_196 = arith.constant 1.000000e-24 : f32
    %570 = vector.broadcast %cst_196 : f32 to vector<8x8xf32>
    %571 = arith.maximumf %566, %570 : vector<8x8xf32>
    %572 = math.sqrt %571 : vector<8x8xf32>
    %573 = arith.mulf %569, %569 : vector<8x8xf32>
    %574 = arith.addf %573, %566 : vector<8x8xf32>
    %cst_197 = arith.constant dense<0.000000e+00> : vector<8xf32>
    %575 = vector.multi_reduction <add>, %574, %cst_197 [1] : vector<8x8xf32> to vector<8xf32>
    %576 = vector.shape_cast %575 : vector<8xf32> to vector<8x1xf32>
    %577 = tpu.concatenate %569, %572 in 1 : vector<8x8xf32>, vector<8x8xf32> -> vector<8x16xf32>
    %cst_198 = arith.constant -2.000000e+00 : f32
    %578 = vector.broadcast %cst_198 : f32 to vector<8x16xf32>
    %579 = arith.mulf %578, %577 : vector<8x16xf32>
    %580 = vector.extract_strided_slice %488 {offsets = [0, 16], sizes = [8, 8], strides = [1, 1]} : vector<8x24xf32> to vector<8x8xf32>
    %581 = arith.addf %519, %580 : vector<8x8xf32>
    %582 = tpu.reciprocal %581 {approx = true} : vector<8x8xf32> -> vector<8x8xf32>
    %583 = vector.extract_strided_slice %505 {offsets = [0, 16], sizes = [8, 8], strides = [1, 1]} : vector<8x24xf32> to vector<8x8xf32>
    %584 = arith.addf %522, %583 : vector<8x8xf32>
    %585 = arith.mulf %582, %584 : vector<8x8xf32>
    %cst_199 = arith.constant 1.000000e-24 : f32
    %586 = vector.broadcast %cst_199 : f32 to vector<8x8xf32>
    %587 = arith.maximumf %582, %586 : vector<8x8xf32>
    %588 = math.sqrt %587 : vector<8x8xf32>
    %589 = arith.mulf %585, %585 : vector<8x8xf32>
    %590 = arith.addf %589, %582 : vector<8x8xf32>
    %cst_200 = arith.constant dense<0.000000e+00> : vector<8xf32>
    %591 = vector.multi_reduction <add>, %590, %cst_200 [1] : vector<8x8xf32> to vector<8xf32>
    %592 = vector.shape_cast %591 : vector<8xf32> to vector<8x1xf32>
    %593 = tpu.concatenate %585, %588 in 1 : vector<8x8xf32>, vector<8x8xf32> -> vector<8x16xf32>
    %cst_201 = arith.constant -2.000000e+00 : f32
    %594 = vector.broadcast %cst_201 : f32 to vector<8x16xf32>
    %595 = arith.mulf %594, %593 : vector<8x16xf32>
    %596 = tpu.concatenate %560, %576, %592 in 1 : vector<8x1xf32>, vector<8x1xf32>, vector<8x1xf32> -> vector<8x3xf32>
    %597 = tpu.concatenate %547, %102 in 1 : vector<8x3xf32>, vector<8x3xf32> -> vector<8x6xf32>
    %598 = tpu.concatenate %102, %596 in 1 : vector<8x3xf32>, vector<8x3xf32> -> vector<8x6xf32>
    %cst_202 = arith.constant dense<0.000000e+00> : vector<8x8xf32>
    %599 = tpu.matmul %597, %598, %cst_202 {dimension_numbers = #tpu.dot_dimension_numbers<[1], [1], [0], [0], [0, 0, 1, 0], [], []>} : vector<8x6xf32>, vector<8x6xf32>, vector<8x8xf32> -> vector<8x8xf32>
    %600 = vector.extract_strided_slice %102 {offsets = [0, 0], sizes = [8, 1], strides = [1, 1]} : vector<8x3xf32> to vector<8x1xf32>
    %cst_203 = arith.constant dense<0.000000e+00> : vector<8x8xf32>
    %601 = tpu.matmul %530, %563, %cst_203 {dimension_numbers = #tpu.dot_dimension_numbers<[1], [1], [0], [0], [0, 0, 1, 0], [], []>} : vector<8x16xf32>, vector<8x16xf32>, vector<8x8xf32> -> vector<8x8xf32>
    %602 = vector.extract_strided_slice %104 {offsets = [0, 0], sizes = [1, 8], strides = [1, 1]} : vector<3x8xf32> to vector<1x8xf32>
    %603 = vector.broadcast %600 : vector<8x1xf32> to vector<8x8xf32>
    %604 = vector.broadcast %602 : vector<1x8xf32> to vector<8x8xf32>
    %605 = arith.mulf %603, %604 : vector<8x8xf32>
    %606 = arith.mulf %605, %601 : vector<8x8xf32>
    %607 = arith.addf %599, %606 : vector<8x8xf32>
    %cst_204 = arith.constant dense<0.000000e+00> : vector<8x8xf32>
    %608 = tpu.matmul %538, %563, %cst_204 {dimension_numbers = #tpu.dot_dimension_numbers<[1], [1], [0], [0], [0, 0, 1, 0], [], []>} : vector<8x16xf32>, vector<8x16xf32>, vector<8x8xf32> -> vector<8x8xf32>
    %609 = vector.extract_strided_slice %104 {offsets = [1, 0], sizes = [1, 8], strides = [1, 1]} : vector<3x8xf32> to vector<1x8xf32>
    %610 = vector.broadcast %600 : vector<8x1xf32> to vector<8x8xf32>
    %611 = vector.broadcast %609 : vector<1x8xf32> to vector<8x8xf32>
    %612 = arith.mulf %610, %611 : vector<8x8xf32>
    %613 = arith.mulf %612, %608 : vector<8x8xf32>
    %614 = arith.addf %607, %613 : vector<8x8xf32>
    %cst_205 = arith.constant dense<0.000000e+00> : vector<8x8xf32>
    %615 = tpu.matmul %546, %563, %cst_205 {dimension_numbers = #tpu.dot_dimension_numbers<[1], [1], [0], [0], [0, 0, 1, 0], [], []>} : vector<8x16xf32>, vector<8x16xf32>, vector<8x8xf32> -> vector<8x8xf32>
    %616 = vector.extract_strided_slice %104 {offsets = [2, 0], sizes = [1, 8], strides = [1, 1]} : vector<3x8xf32> to vector<1x8xf32>
    %617 = vector.broadcast %600 : vector<8x1xf32> to vector<8x8xf32>
    %618 = vector.broadcast %616 : vector<1x8xf32> to vector<8x8xf32>
    %619 = arith.mulf %617, %618 : vector<8x8xf32>
    %620 = arith.mulf %619, %615 : vector<8x8xf32>
    %621 = arith.addf %614, %620 : vector<8x8xf32>
    %622 = vector.extract_strided_slice %102 {offsets = [0, 1], sizes = [8, 1], strides = [1, 1]} : vector<8x3xf32> to vector<8x1xf32>
    %cst_206 = arith.constant dense<0.000000e+00> : vector<8x8xf32>
    %623 = tpu.matmul %530, %579, %cst_206 {dimension_numbers = #tpu.dot_dimension_numbers<[1], [1], [0], [0], [0, 0, 1, 0], [], []>} : vector<8x16xf32>, vector<8x16xf32>, vector<8x8xf32> -> vector<8x8xf32>
    %624 = vector.extract_strided_slice %104 {offsets = [0, 0], sizes = [1, 8], strides = [1, 1]} : vector<3x8xf32> to vector<1x8xf32>
    %625 = vector.broadcast %622 : vector<8x1xf32> to vector<8x8xf32>
    %626 = vector.broadcast %624 : vector<1x8xf32> to vector<8x8xf32>
    %627 = arith.mulf %625, %626 : vector<8x8xf32>
    %628 = arith.mulf %627, %623 : vector<8x8xf32>
    %629 = arith.addf %621, %628 : vector<8x8xf32>
    %cst_207 = arith.constant dense<0.000000e+00> : vector<8x8xf32>
    %630 = tpu.matmul %538, %579, %cst_207 {dimension_numbers = #tpu.dot_dimension_numbers<[1], [1], [0], [0], [0, 0, 1, 0], [], []>} : vector<8x16xf32>, vector<8x16xf32>, vector<8x8xf32> -> vector<8x8xf32>
    %631 = vector.extract_strided_slice %104 {offsets = [1, 0], sizes = [1, 8], strides = [1, 1]} : vector<3x8xf32> to vector<1x8xf32>
    %632 = vector.broadcast %622 : vector<8x1xf32> to vector<8x8xf32>
    %633 = vector.broadcast %631 : vector<1x8xf32> to vector<8x8xf32>
    %634 = arith.mulf %632, %633 : vector<8x8xf32>
    %635 = arith.mulf %634, %630 : vector<8x8xf32>
    %636 = arith.addf %629, %635 : vector<8x8xf32>
    %cst_208 = arith.constant dense<0.000000e+00> : vector<8x8xf32>
    %637 = tpu.matmul %546, %579, %cst_208 {dimension_numbers = #tpu.dot_dimension_numbers<[1], [1], [0], [0], [0, 0, 1, 0], [], []>} : vector<8x16xf32>, vector<8x16xf32>, vector<8x8xf32> -> vector<8x8xf32>
    %638 = vector.extract_strided_slice %104 {offsets = [2, 0], sizes = [1, 8], strides = [1, 1]} : vector<3x8xf32> to vector<1x8xf32>
    %639 = vector.broadcast %622 : vector<8x1xf32> to vector<8x8xf32>
    %640 = vector.broadcast %638 : vector<1x8xf32> to vector<8x8xf32>
    %641 = arith.mulf %639, %640 : vector<8x8xf32>
    %642 = arith.mulf %641, %637 : vector<8x8xf32>
    %643 = arith.addf %636, %642 : vector<8x8xf32>
    %644 = vector.extract_strided_slice %102 {offsets = [0, 2], sizes = [8, 1], strides = [1, 1]} : vector<8x3xf32> to vector<8x1xf32>
    %cst_209 = arith.constant dense<0.000000e+00> : vector<8x8xf32>
    %645 = tpu.matmul %530, %595, %cst_209 {dimension_numbers = #tpu.dot_dimension_numbers<[1], [1], [0], [0], [0, 0, 1, 0], [], []>} : vector<8x16xf32>, vector<8x16xf32>, vector<8x8xf32> -> vector<8x8xf32>
    %646 = vector.extract_strided_slice %104 {offsets = [0, 0], sizes = [1, 8], strides = [1, 1]} : vector<3x8xf32> to vector<1x8xf32>
    %647 = vector.broadcast %644 : vector<8x1xf32> to vector<8x8xf32>
    %648 = vector.broadcast %646 : vector<1x8xf32> to vector<8x8xf32>
    %649 = arith.mulf %647, %648 : vector<8x8xf32>
    %650 = arith.mulf %649, %645 : vector<8x8xf32>
    %651 = arith.addf %643, %650 : vector<8x8xf32>
    %cst_210 = arith.constant dense<0.000000e+00> : vector<8x8xf32>
    %652 = tpu.matmul %538, %595, %cst_210 {dimension_numbers = #tpu.dot_dimension_numbers<[1], [1], [0], [0], [0, 0, 1, 0], [], []>} : vector<8x16xf32>, vector<8x16xf32>, vector<8x8xf32> -> vector<8x8xf32>
    %653 = vector.extract_strided_slice %104 {offsets = [1, 0], sizes = [1, 8], strides = [1, 1]} : vector<3x8xf32> to vector<1x8xf32>
    %654 = vector.broadcast %644 : vector<8x1xf32> to vector<8x8xf32>
    %655 = vector.broadcast %653 : vector<1x8xf32> to vector<8x8xf32>
    %656 = arith.mulf %654, %655 : vector<8x8xf32>
    %657 = arith.mulf %656, %652 : vector<8x8xf32>
    %658 = arith.addf %651, %657 : vector<8x8xf32>
    %cst_211 = arith.constant dense<0.000000e+00> : vector<8x8xf32>
    %659 = tpu.matmul %546, %595, %cst_211 {dimension_numbers = #tpu.dot_dimension_numbers<[1], [1], [0], [0], [0, 0, 1, 0], [], []>} : vector<8x16xf32>, vector<8x16xf32>, vector<8x8xf32> -> vector<8x8xf32>
    %660 = vector.extract_strided_slice %104 {offsets = [2, 0], sizes = [1, 8], strides = [1, 1]} : vector<3x8xf32> to vector<1x8xf32>
    %661 = vector.broadcast %644 : vector<8x1xf32> to vector<8x8xf32>
    %662 = vector.broadcast %660 : vector<1x8xf32> to vector<8x8xf32>
    %663 = arith.mulf %661, %662 : vector<8x8xf32>
    %664 = arith.mulf %663, %659 : vector<8x8xf32>
    %665 = arith.addf %658, %664 : vector<8x8xf32>
    %cst_212 = arith.constant -0.353553385 : f32
    %666 = vector.broadcast %cst_212 : f32 to vector<8x8xf32>
    %667 = arith.mulf %665, %666 : vector<8x8xf32>
    %cst_213 = arith.constant 0.000000e+00 : f32
    %668 = vector.broadcast %cst_213 : f32 to vector<8x8xf32>
    %669 = arith.cmpf ogt, %111, %668 : vector<8x8xf32>
    %cst_214 = arith.constant -1.000000e+30 : f32
    %670 = vector.broadcast %cst_214 : f32 to vector<8x8xf32>
    %671 = arith.select %669, %667, %670 : vector<8x8xi1>, vector<8x8xf32>
    %cst_215 = arith.constant dense<0xFF800000> : vector<8xf32>
    %672 = vector.multi_reduction <maximumf>, %671, %cst_215 [1] : vector<8x8xf32> to vector<8xf32>
    %673 = vector.shape_cast %672 : vector<8xf32> to vector<8x1xf32>
    %674 = vector.broadcast %673 : vector<8x1xf32> to vector<8x8xf32>
    %675 = arith.subf %671, %674 : vector<8x8xf32>
    %676 = math.exp %675 : vector<8x8xf32>
    %cst_216 = arith.constant dense<0.000000e+00> : vector<8xf32>
    %677 = vector.multi_reduction <add>, %676, %cst_216 [1] : vector<8x8xf32> to vector<8xf32>
    %678 = vector.shape_cast %677 : vector<8xf32> to vector<8x1xf32>
    %679 = tpu.reciprocal %678 {approx = true} : vector<8x1xf32> -> vector<8x1xf32>
    %680 = vector.broadcast %679 : vector<8x1xf32> to vector<8x8xf32>
    %681 = arith.mulf %676, %680 : vector<8x8xf32>
    %c0_217 = arith.constant 0 : index
    %c1_218 = arith.constant 1 : index
    %c0_219 = arith.constant 0 : index
    %c0_220 = arith.constant 0 : index
    %682 = vector.load %arg29[%c0_217, %c1_218, %c0_219, %c0_220] : memref<1x4x8x8xf32, #tpu.memory_space<vmem>>, vector<1x1x8x8xf32>
    %683 = vector.shape_cast %682 : vector<1x1x8x8xf32> to vector<8x8xf32>
    %684 = vector.shape_cast %681 : vector<8x8xf32> to vector<1x1x8x8xf32>
    tpu.vector_store %arg29[%c0_217, %c1_218, %c0_219, %c0_220], %684 {strides = array<i32>} : memref<1x4x8x8xf32, #tpu.memory_space<vmem>>, vector<1x1x8x8xf32>,
    %685 = arith.truncf %681 : vector<8x8xf32> to vector<8x8xbf16>
    %686 = arith.truncf %404 : vector<8x8xf32> to vector<8x8xbf16>
    %cst_221 = arith.constant dense<0.000000e+00> : vector<8x8xf32>
    %687 = tpu.matmul %685, %686, %cst_221 {dimension_numbers = #tpu.dot_dimension_numbers<[1], [0], [0], [1], [0, 0, 1, 1], [], []>} : vector<8x8xbf16>, vector<8x8xbf16>, vector<8x8xf32> -> vector<8x8xf32>
    %688 = arith.mulf %681, %681 : vector<8x8xf32>
    %689 = arith.truncf %688 : vector<8x8xf32> to vector<8x8xbf16>
    %690 = arith.truncf %411 : vector<8x8xf32> to vector<8x8xbf16>
    %cst_222 = arith.constant dense<0.000000e+00> : vector<8x8xf32>
    %691 = tpu.matmul %689, %690, %cst_222 {dimension_numbers = #tpu.dot_dimension_numbers<[1], [0], [0], [1], [0, 0, 1, 1], [], []>} : vector<8x8xbf16>, vector<8x8xbf16>, vector<8x8xf32> -> vector<8x8xf32>
    %692 = vector.extract_strided_slice %18 {offsets = [0, 16], sizes = [8, 8], strides = [1, 1]} : vector<8x32xf32> to vector<8x8xf32>
    %693 = vector.extract_strided_slice %25 {offsets = [0, 16], sizes = [8, 8], strides = [1, 1]} : vector<8x32xf32> to vector<8x8xf32>
    %694 = vector.extract_strided_slice %32 {offsets = [0, 16], sizes = [8, 8], strides = [1, 1]} : vector<8x32xf32> to vector<8x8xf32>
    %695 = vector.extract_strided_slice %49 {offsets = [0, 16], sizes = [8, 8], strides = [1, 1]} : vector<8x32xf32> to vector<8x8xf32>
    %cst_223 = arith.constant 9.99999997E-7 : f32
    %696 = vector.broadcast %cst_223 : f32 to vector<8x8xf32>
    %697 = arith.maximumf %695, %696 : vector<8x8xf32>
    %698 = vector.extract_strided_slice %66 {offsets = [0, 16], sizes = [8, 8], strides = [1, 1]} : vector<8x32xf32> to vector<8x8xf32>
    %cst_224 = arith.constant 9.99999997E-7 : f32
    %699 = vector.broadcast %cst_224 : f32 to vector<8x8xf32>
    %700 = arith.maximumf %698, %699 : vector<8x8xf32>
    %701 = vector.extract_strided_slice %83 {offsets = [0, 16], sizes = [8, 8], strides = [1, 1]} : vector<8x32xf32> to vector<8x8xf32>
    %702 = vector.extract_strided_slice %85 {offsets = [0, 16], sizes = [8, 8], strides = [1, 1]} : vector<8x32xf32> to vector<8x8xf32>
    %703 = vector.extract_strided_slice %100 {offsets = [0, 16], sizes = [8, 8], strides = [1, 1]} : vector<8x32xf32> to vector<8x8xf32>
    %c0_225 = arith.constant 0 : index
    %c0_226 = arith.constant 0 : index
    %c0_227 = arith.constant 0 : index
    %704 = vector.load %arg19[%c0_225, %c0_226, %c0_227] : memref<2x8x8xf32, #tpu.memory_space<vmem>>, vector<1x8x8xf32>
    %705 = vector.shape_cast %704 : vector<1x8x8xf32> to vector<8x8xf32>
    %cst_228 = arith.constant dense<0.000000e+00> : vector<8x8xf32>
    %706 = tpu.matmul %702, %705, %cst_228 {dimension_numbers = #tpu.dot_dimension_numbers<[1], [0], [0], [1], [0, 0, 1, 1], [], []>} : vector<8x8xf32>, vector<8x8xf32>, vector<8x8xf32> -> vector<8x8xf32>
    %c0_229 = arith.constant 0 : index
    %c0_230 = arith.constant 0 : index
    %c0_231 = arith.constant 0 : index
    %707 = vector.load %arg20[%c0_229, %c0_230, %c0_231] : memref<2x1x8xf32, #tpu.memory_space<vmem>>, vector<1x1x8xf32>
    %708 = vector.shape_cast %707 : vector<1x1x8xf32> to vector<1x8xf32>
    %709 = vector.broadcast %708 : vector<1x8xf32> to vector<8x8xf32>
    %710 = arith.addf %706, %709 : vector<8x8xf32>
    %c1_232 = arith.constant 1 : index
    %c0_233 = arith.constant 0 : index
    %c0_234 = arith.constant 0 : index
    %711 = vector.load %arg19[%c1_232, %c0_233, %c0_234] : memref<2x8x8xf32, #tpu.memory_space<vmem>>, vector<1x8x8xf32>
    %712 = vector.shape_cast %711 : vector<1x8x8xf32> to vector<8x8xf32>
    %cst_235 = arith.constant dense<0.000000e+00> : vector<8x8xf32>
    %713 = tpu.matmul %702, %712, %cst_235 {dimension_numbers = #tpu.dot_dimension_numbers<[1], [0], [0], [1], [0, 0, 1, 1], [], []>} : vector<8x8xf32>, vector<8x8xf32>, vector<8x8xf32> -> vector<8x8xf32>
    %c1_236 = arith.constant 1 : index
    %c0_237 = arith.constant 0 : index
    %c0_238 = arith.constant 0 : index
    %714 = vector.load %arg20[%c1_236, %c0_237, %c0_238] : memref<2x1x8xf32, #tpu.memory_space<vmem>>, vector<1x1x8xf32>
    %715 = vector.shape_cast %714 : vector<1x1x8xf32> to vector<1x8xf32>
    %716 = vector.broadcast %715 : vector<1x8xf32> to vector<8x8xf32>
    %717 = arith.addf %713, %716 : vector<8x8xf32>
    %718 = tpu.reciprocal %697 {approx = true} : vector<8x8xf32> -> vector<8x8xf32>
    %719 = tpu.reciprocal %700 {approx = true} : vector<8x8xf32> -> vector<8x8xf32>
    %c0_239 = arith.constant 0 : index
    %c2_240 = arith.constant 2 : index
    %c0_241 = arith.constant 0 : index
    %c0_242 = arith.constant 0 : index
    %720 = vector.load %arg11[%c0_239, %c2_240, %c0_241, %c0_242] : memref<1x4x3x24xf32, #tpu.memory_space<vmem>>, vector<1x1x3x24xf32>
    %721 = vector.shape_cast %720 : vector<1x1x3x24xf32> to vector<3x24xf32>
    %c0_243 = arith.constant 0 : index
    %c2_244 = arith.constant 2 : index
    %c0_245 = arith.constant 0 : index
    %c0_246 = arith.constant 0 : index
    %722 = vector.load %arg12[%c0_243, %c2_244, %c0_245, %c0_246] : memref<1x4x3x24xf32, #tpu.memory_space<vmem>>, vector<1x1x3x24xf32>
    %723 = vector.shape_cast %722 : vector<1x1x3x24xf32> to vector<3x24xf32>
    %c0_247 = arith.constant 0 : index
    %c2_248 = arith.constant 2 : index
    %c0_249 = arith.constant 0 : index
    %c0_250 = arith.constant 0 : index
    %724 = vector.load %arg13[%c0_247, %c2_248, %c0_249, %c0_250] : memref<1x4x3x24xf32, #tpu.memory_space<vmem>>, vector<1x1x3x24xf32>
    %725 = vector.shape_cast %724 : vector<1x1x3x24xf32> to vector<3x24xf32>
    %c0_251 = arith.constant 0 : index
    %c2_252 = arith.constant 2 : index
    %c0_253 = arith.constant 0 : index
    %c0_254 = arith.constant 0 : index
    %726 = vector.load %arg14[%c0_251, %c2_252, %c0_253, %c0_254] : memref<1x4x3x24xf32, #tpu.memory_space<vmem>>, vector<1x1x3x24xf32>
    %727 = vector.shape_cast %726 : vector<1x1x3x24xf32> to vector<3x24xf32>
    %728 = vector.extract_strided_slice %102 {offsets = [0, 0], sizes = [8, 1], strides = [1, 1]} : vector<8x3xf32> to vector<8x1xf32>
    %729 = vector.extract_strided_slice %721 {offsets = [0, 0], sizes = [1, 24], strides = [1, 1]} : vector<3x24xf32> to vector<1x24xf32>
    %730 = vector.broadcast %728 : vector<8x1xf32> to vector<8x24xf32>
    %731 = vector.broadcast %729 : vector<1x24xf32> to vector<8x24xf32>
    %732 = arith.mulf %730, %731 : vector<8x24xf32>
    %733 = vector.extract_strided_slice %102 {offsets = [0, 1], sizes = [8, 1], strides = [1, 1]} : vector<8x3xf32> to vector<8x1xf32>
    %734 = vector.extract_strided_slice %721 {offsets = [1, 0], sizes = [1, 24], strides = [1, 1]} : vector<3x24xf32> to vector<1x24xf32>
    %735 = vector.broadcast %733 : vector<8x1xf32> to vector<8x24xf32>
    %736 = vector.broadcast %734 : vector<1x24xf32> to vector<8x24xf32>
    %737 = arith.mulf %735, %736 : vector<8x24xf32>
    %738 = arith.addf %732, %737 : vector<8x24xf32>
    %739 = vector.extract_strided_slice %102 {offsets = [0, 2], sizes = [8, 1], strides = [1, 1]} : vector<8x3xf32> to vector<8x1xf32>
    %740 = vector.extract_strided_slice %721 {offsets = [2, 0], sizes = [1, 24], strides = [1, 1]} : vector<3x24xf32> to vector<1x24xf32>
    %741 = vector.broadcast %739 : vector<8x1xf32> to vector<8x24xf32>
    %742 = vector.broadcast %740 : vector<1x24xf32> to vector<8x24xf32>
    %743 = arith.mulf %741, %742 : vector<8x24xf32>
    %744 = arith.addf %738, %743 : vector<8x24xf32>
    %745 = vector.extract_strided_slice %102 {offsets = [0, 0], sizes = [8, 1], strides = [1, 1]} : vector<8x3xf32> to vector<8x1xf32>
    %746 = vector.extract_strided_slice %723 {offsets = [0, 0], sizes = [1, 24], strides = [1, 1]} : vector<3x24xf32> to vector<1x24xf32>
    %747 = vector.broadcast %745 : vector<8x1xf32> to vector<8x24xf32>
    %748 = vector.broadcast %746 : vector<1x24xf32> to vector<8x24xf32>
    %749 = arith.mulf %747, %748 : vector<8x24xf32>
    %750 = vector.extract_strided_slice %102 {offsets = [0, 1], sizes = [8, 1], strides = [1, 1]} : vector<8x3xf32> to vector<8x1xf32>
    %751 = vector.extract_strided_slice %723 {offsets = [1, 0], sizes = [1, 24], strides = [1, 1]} : vector<3x24xf32> to vector<1x24xf32>
    %752 = vector.broadcast %750 : vector<8x1xf32> to vector<8x24xf32>
    %753 = vector.broadcast %751 : vector<1x24xf32> to vector<8x24xf32>
    %754 = arith.mulf %752, %753 : vector<8x24xf32>
    %755 = arith.addf %749, %754 : vector<8x24xf32>
    %756 = vector.extract_strided_slice %102 {offsets = [0, 2], sizes = [8, 1], strides = [1, 1]} : vector<8x3xf32> to vector<8x1xf32>
    %757 = vector.extract_strided_slice %723 {offsets = [2, 0], sizes = [1, 24], strides = [1, 1]} : vector<3x24xf32> to vector<1x24xf32>
    %758 = vector.broadcast %756 : vector<8x1xf32> to vector<8x24xf32>
    %759 = vector.broadcast %757 : vector<1x24xf32> to vector<8x24xf32>
    %760 = arith.mulf %758, %759 : vector<8x24xf32>
    %761 = arith.addf %755, %760 : vector<8x24xf32>
    %762 = vector.extract_strided_slice %102 {offsets = [0, 0], sizes = [8, 1], strides = [1, 1]} : vector<8x3xf32> to vector<8x1xf32>
    %763 = vector.extract_strided_slice %725 {offsets = [0, 0], sizes = [1, 24], strides = [1, 1]} : vector<3x24xf32> to vector<1x24xf32>
    %764 = vector.broadcast %762 : vector<8x1xf32> to vector<8x24xf32>
    %765 = vector.broadcast %763 : vector<1x24xf32> to vector<8x24xf32>
    %766 = arith.mulf %764, %765 : vector<8x24xf32>
    %767 = vector.extract_strided_slice %102 {offsets = [0, 1], sizes = [8, 1], strides = [1, 1]} : vector<8x3xf32> to vector<8x1xf32>
    %768 = vector.extract_strided_slice %725 {offsets = [1, 0], sizes = [1, 24], strides = [1, 1]} : vector<3x24xf32> to vector<1x24xf32>
    %769 = vector.broadcast %767 : vector<8x1xf32> to vector<8x24xf32>
    %770 = vector.broadcast %768 : vector<1x24xf32> to vector<8x24xf32>
    %771 = arith.mulf %769, %770 : vector<8x24xf32>
    %772 = arith.addf %766, %771 : vector<8x24xf32>
    %773 = vector.extract_strided_slice %102 {offsets = [0, 2], sizes = [8, 1], strides = [1, 1]} : vector<8x3xf32> to vector<8x1xf32>
    %774 = vector.extract_strided_slice %725 {offsets = [2, 0], sizes = [1, 24], strides = [1, 1]} : vector<3x24xf32> to vector<1x24xf32>
    %775 = vector.broadcast %773 : vector<8x1xf32> to vector<8x24xf32>
    %776 = vector.broadcast %774 : vector<1x24xf32> to vector<8x24xf32>
    %777 = arith.mulf %775, %776 : vector<8x24xf32>
    %778 = arith.addf %772, %777 : vector<8x24xf32>
    %779 = vector.extract_strided_slice %102 {offsets = [0, 0], sizes = [8, 1], strides = [1, 1]} : vector<8x3xf32> to vector<8x1xf32>
    %780 = vector.extract_strided_slice %727 {offsets = [0, 0], sizes = [1, 24], strides = [1, 1]} : vector<3x24xf32> to vector<1x24xf32>
    %781 = vector.broadcast %779 : vector<8x1xf32> to vector<8x24xf32>
    %782 = vector.broadcast %780 : vector<1x24xf32> to vector<8x24xf32>
    %783 = arith.mulf %781, %782 : vector<8x24xf32>
    %784 = vector.extract_strided_slice %102 {offsets = [0, 1], sizes = [8, 1], strides = [1, 1]} : vector<8x3xf32> to vector<8x1xf32>
    %785 = vector.extract_strided_slice %727 {offsets = [1, 0], sizes = [1, 24], strides = [1, 1]} : vector<3x24xf32> to vector<1x24xf32>
    %786 = vector.broadcast %784 : vector<8x1xf32> to vector<8x24xf32>
    %787 = vector.broadcast %785 : vector<1x24xf32> to vector<8x24xf32>
    %788 = arith.mulf %786, %787 : vector<8x24xf32>
    %789 = arith.addf %783, %788 : vector<8x24xf32>
    %790 = vector.extract_strided_slice %102 {offsets = [0, 2], sizes = [8, 1], strides = [1, 1]} : vector<8x3xf32> to vector<8x1xf32>
    %791 = vector.extract_strided_slice %727 {offsets = [2, 0], sizes = [1, 24], strides = [1, 1]} : vector<3x24xf32> to vector<1x24xf32>
    %792 = vector.broadcast %790 : vector<8x1xf32> to vector<8x24xf32>
    %793 = vector.broadcast %791 : vector<1x24xf32> to vector<8x24xf32>
    %794 = arith.mulf %792, %793 : vector<8x24xf32>
    %795 = arith.addf %789, %794 : vector<8x24xf32>
    %796 = arith.addf %718, %703 : vector<8x8xf32>
    %797 = arith.mulf %692, %718 : vector<8x8xf32>
    %798 = arith.mulf %710, %703 : vector<8x8xf32>
    %799 = arith.addf %797, %798 : vector<8x8xf32>
    %800 = tpu.concatenate %796, %796, %796 in 1 : vector<8x8xf32>, vector<8x8xf32>, vector<8x8xf32> -> vector<8x24xf32>
    %801 = arith.addf %800, %744 : vector<8x24xf32>
    %802 = tpu.reciprocal %801 {approx = true} : vector<8x24xf32> -> vector<8x24xf32>
    %803 = tpu.concatenate %799, %799, %799 in 1 : vector<8x8xf32>, vector<8x8xf32>, vector<8x8xf32> -> vector<8x24xf32>
    %804 = arith.addf %803, %761 : vector<8x24xf32>
    %805 = arith.mulf %802, %804 : vector<8x24xf32>
    %cst_255 = arith.constant 1.000000e-24 : f32
    %806 = vector.broadcast %cst_255 : f32 to vector<8x24xf32>
    %807 = arith.maximumf %802, %806 : vector<8x24xf32>
    %808 = math.sqrt %807 : vector<8x24xf32>
    %809 = arith.addf %719, %703 : vector<8x8xf32>
    %810 = arith.mulf %693, %719 : vector<8x8xf32>
    %811 = arith.mulf %717, %703 : vector<8x8xf32>
    %812 = arith.addf %810, %811 : vector<8x8xf32>
    %813 = vector.extract_strided_slice %805 {offsets = [0, 0], sizes = [8, 8], strides = [1, 1]} : vector<8x24xf32> to vector<8x8xf32>
    %814 = vector.extract_strided_slice %802 {offsets = [0, 0], sizes = [8, 8], strides = [1, 1]} : vector<8x24xf32> to vector<8x8xf32>
    %815 = arith.mulf %813, %813 : vector<8x8xf32>
    %816 = arith.addf %815, %814 : vector<8x8xf32>
    %cst_256 = arith.constant dense<0.000000e+00> : vector<8xf32>
    %817 = vector.multi_reduction <add>, %816, %cst_256 [1] : vector<8x8xf32> to vector<8xf32>
    %818 = vector.shape_cast %817 : vector<8xf32> to vector<8x1xf32>
    %819 = vector.extract_strided_slice %808 {offsets = [0, 0], sizes = [8, 8], strides = [1, 1]} : vector<8x24xf32> to vector<8x8xf32>
    %820 = tpu.concatenate %813, %819 in 1 : vector<8x8xf32>, vector<8x8xf32> -> vector<8x16xf32>
    %821 = vector.extract_strided_slice %805 {offsets = [0, 8], sizes = [8, 8], strides = [1, 1]} : vector<8x24xf32> to vector<8x8xf32>
    %822 = vector.extract_strided_slice %802 {offsets = [0, 8], sizes = [8, 8], strides = [1, 1]} : vector<8x24xf32> to vector<8x8xf32>
    %823 = arith.mulf %821, %821 : vector<8x8xf32>
    %824 = arith.addf %823, %822 : vector<8x8xf32>
    %cst_257 = arith.constant dense<0.000000e+00> : vector<8xf32>
    %825 = vector.multi_reduction <add>, %824, %cst_257 [1] : vector<8x8xf32> to vector<8xf32>
    %826 = vector.shape_cast %825 : vector<8xf32> to vector<8x1xf32>
    %827 = vector.extract_strided_slice %808 {offsets = [0, 8], sizes = [8, 8], strides = [1, 1]} : vector<8x24xf32> to vector<8x8xf32>
    %828 = tpu.concatenate %821, %827 in 1 : vector<8x8xf32>, vector<8x8xf32> -> vector<8x16xf32>
    %829 = vector.extract_strided_slice %805 {offsets = [0, 16], sizes = [8, 8], strides = [1, 1]} : vector<8x24xf32> to vector<8x8xf32>
    %830 = vector.extract_strided_slice %802 {offsets = [0, 16], sizes = [8, 8], strides = [1, 1]} : vector<8x24xf32> to vector<8x8xf32>
    %831 = arith.mulf %829, %829 : vector<8x8xf32>
    %832 = arith.addf %831, %830 : vector<8x8xf32>
    %cst_258 = arith.constant dense<0.000000e+00> : vector<8xf32>
    %833 = vector.multi_reduction <add>, %832, %cst_258 [1] : vector<8x8xf32> to vector<8xf32>
    %834 = vector.shape_cast %833 : vector<8xf32> to vector<8x1xf32>
    %835 = vector.extract_strided_slice %808 {offsets = [0, 16], sizes = [8, 8], strides = [1, 1]} : vector<8x24xf32> to vector<8x8xf32>
    %836 = tpu.concatenate %829, %835 in 1 : vector<8x8xf32>, vector<8x8xf32> -> vector<8x16xf32>
    %837 = tpu.concatenate %818, %826, %834 in 1 : vector<8x1xf32>, vector<8x1xf32>, vector<8x1xf32> -> vector<8x3xf32>
    %838 = vector.extract_strided_slice %778 {offsets = [0, 0], sizes = [8, 8], strides = [1, 1]} : vector<8x24xf32> to vector<8x8xf32>
    %839 = arith.addf %809, %838 : vector<8x8xf32>
    %840 = tpu.reciprocal %839 {approx = true} : vector<8x8xf32> -> vector<8x8xf32>
    %841 = vector.extract_strided_slice %795 {offsets = [0, 0], sizes = [8, 8], strides = [1, 1]} : vector<8x24xf32> to vector<8x8xf32>
    %842 = arith.addf %812, %841 : vector<8x8xf32>
    %843 = arith.mulf %840, %842 : vector<8x8xf32>
    %cst_259 = arith.constant 1.000000e-24 : f32
    %844 = vector.broadcast %cst_259 : f32 to vector<8x8xf32>
    %845 = arith.maximumf %840, %844 : vector<8x8xf32>
    %846 = math.sqrt %845 : vector<8x8xf32>
    %847 = arith.mulf %843, %843 : vector<8x8xf32>
    %848 = arith.addf %847, %840 : vector<8x8xf32>
    %cst_260 = arith.constant dense<0.000000e+00> : vector<8xf32>
    %849 = vector.multi_reduction <add>, %848, %cst_260 [1] : vector<8x8xf32> to vector<8xf32>
    %850 = vector.shape_cast %849 : vector<8xf32> to vector<8x1xf32>
    %851 = tpu.concatenate %843, %846 in 1 : vector<8x8xf32>, vector<8x8xf32> -> vector<8x16xf32>
    %cst_261 = arith.constant -2.000000e+00 : f32
    %852 = vector.broadcast %cst_261 : f32 to vector<8x16xf32>
    %853 = arith.mulf %852, %851 : vector<8x16xf32>
    %854 = vector.extract_strided_slice %778 {offsets = [0, 8], sizes = [8, 8], strides = [1, 1]} : vector<8x24xf32> to vector<8x8xf32>
    %855 = arith.addf %809, %854 : vector<8x8xf32>
    %856 = tpu.reciprocal %855 {approx = true} : vector<8x8xf32> -> vector<8x8xf32>
    %857 = vector.extract_strided_slice %795 {offsets = [0, 8], sizes = [8, 8], strides = [1, 1]} : vector<8x24xf32> to vector<8x8xf32>
    %858 = arith.addf %812, %857 : vector<8x8xf32>
    %859 = arith.mulf %856, %858 : vector<8x8xf32>
    %cst_262 = arith.constant 1.000000e-24 : f32
    %860 = vector.broadcast %cst_262 : f32 to vector<8x8xf32>
    %861 = arith.maximumf %856, %860 : vector<8x8xf32>
    %862 = math.sqrt %861 : vector<8x8xf32>
    %863 = arith.mulf %859, %859 : vector<8x8xf32>
    %864 = arith.addf %863, %856 : vector<8x8xf32>
    %cst_263 = arith.constant dense<0.000000e+00> : vector<8xf32>
    %865 = vector.multi_reduction <add>, %864, %cst_263 [1] : vector<8x8xf32> to vector<8xf32>
    %866 = vector.shape_cast %865 : vector<8xf32> to vector<8x1xf32>
    %867 = tpu.concatenate %859, %862 in 1 : vector<8x8xf32>, vector<8x8xf32> -> vector<8x16xf32>
    %cst_264 = arith.constant -2.000000e+00 : f32
    %868 = vector.broadcast %cst_264 : f32 to vector<8x16xf32>
    %869 = arith.mulf %868, %867 : vector<8x16xf32>
    %870 = vector.extract_strided_slice %778 {offsets = [0, 16], sizes = [8, 8], strides = [1, 1]} : vector<8x24xf32> to vector<8x8xf32>
    %871 = arith.addf %809, %870 : vector<8x8xf32>
    %872 = tpu.reciprocal %871 {approx = true} : vector<8x8xf32> -> vector<8x8xf32>
    %873 = vector.extract_strided_slice %795 {offsets = [0, 16], sizes = [8, 8], strides = [1, 1]} : vector<8x24xf32> to vector<8x8xf32>
    %874 = arith.addf %812, %873 : vector<8x8xf32>
    %875 = arith.mulf %872, %874 : vector<8x8xf32>
    %cst_265 = arith.constant 1.000000e-24 : f32
    %876 = vector.broadcast %cst_265 : f32 to vector<8x8xf32>
    %877 = arith.maximumf %872, %876 : vector<8x8xf32>
    %878 = math.sqrt %877 : vector<8x8xf32>
    %879 = arith.mulf %875, %875 : vector<8x8xf32>
    %880 = arith.addf %879, %872 : vector<8x8xf32>
    %cst_266 = arith.constant dense<0.000000e+00> : vector<8xf32>
    %881 = vector.multi_reduction <add>, %880, %cst_266 [1] : vector<8x8xf32> to vector<8xf32>
    %882 = vector.shape_cast %881 : vector<8xf32> to vector<8x1xf32>
    %883 = tpu.concatenate %875, %878 in 1 : vector<8x8xf32>, vector<8x8xf32> -> vector<8x16xf32>
    %cst_267 = arith.constant -2.000000e+00 : f32
    %884 = vector.broadcast %cst_267 : f32 to vector<8x16xf32>
    %885 = arith.mulf %884, %883 : vector<8x16xf32>
    %886 = tpu.concatenate %850, %866, %882 in 1 : vector<8x1xf32>, vector<8x1xf32>, vector<8x1xf32> -> vector<8x3xf32>
    %887 = tpu.concatenate %837, %102 in 1 : vector<8x3xf32>, vector<8x3xf32> -> vector<8x6xf32>
    %888 = tpu.concatenate %102, %886 in 1 : vector<8x3xf32>, vector<8x3xf32> -> vector<8x6xf32>
    %cst_268 = arith.constant dense<0.000000e+00> : vector<8x8xf32>
    %889 = tpu.matmul %887, %888, %cst_268 {dimension_numbers = #tpu.dot_dimension_numbers<[1], [1], [0], [0], [0, 0, 1, 0], [], []>} : vector<8x6xf32>, vector<8x6xf32>, vector<8x8xf32> -> vector<8x8xf32>
    %890 = vector.extract_strided_slice %102 {offsets = [0, 0], sizes = [8, 1], strides = [1, 1]} : vector<8x3xf32> to vector<8x1xf32>
    %cst_269 = arith.constant dense<0.000000e+00> : vector<8x8xf32>
    %891 = tpu.matmul %820, %853, %cst_269 {dimension_numbers = #tpu.dot_dimension_numbers<[1], [1], [0], [0], [0, 0, 1, 0], [], []>} : vector<8x16xf32>, vector<8x16xf32>, vector<8x8xf32> -> vector<8x8xf32>
    %892 = vector.extract_strided_slice %104 {offsets = [0, 0], sizes = [1, 8], strides = [1, 1]} : vector<3x8xf32> to vector<1x8xf32>
    %893 = vector.broadcast %890 : vector<8x1xf32> to vector<8x8xf32>
    %894 = vector.broadcast %892 : vector<1x8xf32> to vector<8x8xf32>
    %895 = arith.mulf %893, %894 : vector<8x8xf32>
    %896 = arith.mulf %895, %891 : vector<8x8xf32>
    %897 = arith.addf %889, %896 : vector<8x8xf32>
    %cst_270 = arith.constant dense<0.000000e+00> : vector<8x8xf32>
    %898 = tpu.matmul %828, %853, %cst_270 {dimension_numbers = #tpu.dot_dimension_numbers<[1], [1], [0], [0], [0, 0, 1, 0], [], []>} : vector<8x16xf32>, vector<8x16xf32>, vector<8x8xf32> -> vector<8x8xf32>
    %899 = vector.extract_strided_slice %104 {offsets = [1, 0], sizes = [1, 8], strides = [1, 1]} : vector<3x8xf32> to vector<1x8xf32>
    %900 = vector.broadcast %890 : vector<8x1xf32> to vector<8x8xf32>
    %901 = vector.broadcast %899 : vector<1x8xf32> to vector<8x8xf32>
    %902 = arith.mulf %900, %901 : vector<8x8xf32>
    %903 = arith.mulf %902, %898 : vector<8x8xf32>
    %904 = arith.addf %897, %903 : vector<8x8xf32>
    %cst_271 = arith.constant dense<0.000000e+00> : vector<8x8xf32>
    %905 = tpu.matmul %836, %853, %cst_271 {dimension_numbers = #tpu.dot_dimension_numbers<[1], [1], [0], [0], [0, 0, 1, 0], [], []>} : vector<8x16xf32>, vector<8x16xf32>, vector<8x8xf32> -> vector<8x8xf32>
    %906 = vector.extract_strided_slice %104 {offsets = [2, 0], sizes = [1, 8], strides = [1, 1]} : vector<3x8xf32> to vector<1x8xf32>
    %907 = vector.broadcast %890 : vector<8x1xf32> to vector<8x8xf32>
    %908 = vector.broadcast %906 : vector<1x8xf32> to vector<8x8xf32>
    %909 = arith.mulf %907, %908 : vector<8x8xf32>
    %910 = arith.mulf %909, %905 : vector<8x8xf32>
    %911 = arith.addf %904, %910 : vector<8x8xf32>
    %912 = vector.extract_strided_slice %102 {offsets = [0, 1], sizes = [8, 1], strides = [1, 1]} : vector<8x3xf32> to vector<8x1xf32>
    %cst_272 = arith.constant dense<0.000000e+00> : vector<8x8xf32>
    %913 = tpu.matmul %820, %869, %cst_272 {dimension_numbers = #tpu.dot_dimension_numbers<[1], [1], [0], [0], [0, 0, 1, 0], [], []>} : vector<8x16xf32>, vector<8x16xf32>, vector<8x8xf32> -> vector<8x8xf32>
    %914 = vector.extract_strided_slice %104 {offsets = [0, 0], sizes = [1, 8], strides = [1, 1]} : vector<3x8xf32> to vector<1x8xf32>
    %915 = vector.broadcast %912 : vector<8x1xf32> to vector<8x8xf32>
    %916 = vector.broadcast %914 : vector<1x8xf32> to vector<8x8xf32>
    %917 = arith.mulf %915, %916 : vector<8x8xf32>
    %918 = arith.mulf %917, %913 : vector<8x8xf32>
    %919 = arith.addf %911, %918 : vector<8x8xf32>
    %cst_273 = arith.constant dense<0.000000e+00> : vector<8x8xf32>
    %920 = tpu.matmul %828, %869, %cst_273 {dimension_numbers = #tpu.dot_dimension_numbers<[1], [1], [0], [0], [0, 0, 1, 0], [], []>} : vector<8x16xf32>, vector<8x16xf32>, vector<8x8xf32> -> vector<8x8xf32>
    %921 = vector.extract_strided_slice %104 {offsets = [1, 0], sizes = [1, 8], strides = [1, 1]} : vector<3x8xf32> to vector<1x8xf32>
    %922 = vector.broadcast %912 : vector<8x1xf32> to vector<8x8xf32>
    %923 = vector.broadcast %921 : vector<1x8xf32> to vector<8x8xf32>
    %924 = arith.mulf %922, %923 : vector<8x8xf32>
    %925 = arith.mulf %924, %920 : vector<8x8xf32>
    %926 = arith.addf %919, %925 : vector<8x8xf32>
    %cst_274 = arith.constant dense<0.000000e+00> : vector<8x8xf32>
    %927 = tpu.matmul %836, %869, %cst_274 {dimension_numbers = #tpu.dot_dimension_numbers<[1], [1], [0], [0], [0, 0, 1, 0], [], []>} : vector<8x16xf32>, vector<8x16xf32>, vector<8x8xf32> -> vector<8x8xf32>
    %928 = vector.extract_strided_slice %104 {offsets = [2, 0], sizes = [1, 8], strides = [1, 1]} : vector<3x8xf32> to vector<1x8xf32>
    %929 = vector.broadcast %912 : vector<8x1xf32> to vector<8x8xf32>
    %930 = vector.broadcast %928 : vector<1x8xf32> to vector<8x8xf32>
    %931 = arith.mulf %929, %930 : vector<8x8xf32>
    %932 = arith.mulf %931, %927 : vector<8x8xf32>
    %933 = arith.addf %926, %932 : vector<8x8xf32>
    %934 = vector.extract_strided_slice %102 {offsets = [0, 2], sizes = [8, 1], strides = [1, 1]} : vector<8x3xf32> to vector<8x1xf32>
    %cst_275 = arith.constant dense<0.000000e+00> : vector<8x8xf32>
    %935 = tpu.matmul %820, %885, %cst_275 {dimension_numbers = #tpu.dot_dimension_numbers<[1], [1], [0], [0], [0, 0, 1, 0], [], []>} : vector<8x16xf32>, vector<8x16xf32>, vector<8x8xf32> -> vector<8x8xf32>
    %936 = vector.extract_strided_slice %104 {offsets = [0, 0], sizes = [1, 8], strides = [1, 1]} : vector<3x8xf32> to vector<1x8xf32>
    %937 = vector.broadcast %934 : vector<8x1xf32> to vector<8x8xf32>
    %938 = vector.broadcast %936 : vector<1x8xf32> to vector<8x8xf32>
    %939 = arith.mulf %937, %938 : vector<8x8xf32>
    %940 = arith.mulf %939, %935 : vector<8x8xf32>
    %941 = arith.addf %933, %940 : vector<8x8xf32>
    %cst_276 = arith.constant dense<0.000000e+00> : vector<8x8xf32>
    %942 = tpu.matmul %828, %885, %cst_276 {dimension_numbers = #tpu.dot_dimension_numbers<[1], [1], [0], [0], [0, 0, 1, 0], [], []>} : vector<8x16xf32>, vector<8x16xf32>, vector<8x8xf32> -> vector<8x8xf32>
    %943 = vector.extract_strided_slice %104 {offsets = [1, 0], sizes = [1, 8], strides = [1, 1]} : vector<3x8xf32> to vector<1x8xf32>
    %944 = vector.broadcast %934 : vector<8x1xf32> to vector<8x8xf32>
    %945 = vector.broadcast %943 : vector<1x8xf32> to vector<8x8xf32>
    %946 = arith.mulf %944, %945 : vector<8x8xf32>
    %947 = arith.mulf %946, %942 : vector<8x8xf32>
    %948 = arith.addf %941, %947 : vector<8x8xf32>
    %cst_277 = arith.constant dense<0.000000e+00> : vector<8x8xf32>
    %949 = tpu.matmul %836, %885, %cst_277 {dimension_numbers = #tpu.dot_dimension_numbers<[1], [1], [0], [0], [0, 0, 1, 0], [], []>} : vector<8x16xf32>, vector<8x16xf32>, vector<8x8xf32> -> vector<8x8xf32>
    %950 = vector.extract_strided_slice %104 {offsets = [2, 0], sizes = [1, 8], strides = [1, 1]} : vector<3x8xf32> to vector<1x8xf32>
    %951 = vector.broadcast %934 : vector<8x1xf32> to vector<8x8xf32>
    %952 = vector.broadcast %950 : vector<1x8xf32> to vector<8x8xf32>
    %953 = arith.mulf %951, %952 : vector<8x8xf32>
    %954 = arith.mulf %953, %949 : vector<8x8xf32>
    %955 = arith.addf %948, %954 : vector<8x8xf32>
    %cst_278 = arith.constant -0.353553385 : f32
    %956 = vector.broadcast %cst_278 : f32 to vector<8x8xf32>
    %957 = arith.mulf %955, %956 : vector<8x8xf32>
    %cst_279 = arith.constant 0.000000e+00 : f32
    %958 = vector.broadcast %cst_279 : f32 to vector<8x8xf32>
    %959 = arith.cmpf ogt, %111, %958 : vector<8x8xf32>
    %cst_280 = arith.constant -1.000000e+30 : f32
    %960 = vector.broadcast %cst_280 : f32 to vector<8x8xf32>
    %961 = arith.select %959, %957, %960 : vector<8x8xi1>, vector<8x8xf32>
    %cst_281 = arith.constant dense<0xFF800000> : vector<8xf32>
    %962 = vector.multi_reduction <maximumf>, %961, %cst_281 [1] : vector<8x8xf32> to vector<8xf32>
    %963 = vector.shape_cast %962 : vector<8xf32> to vector<8x1xf32>
    %964 = vector.broadcast %963 : vector<8x1xf32> to vector<8x8xf32>
    %965 = arith.subf %961, %964 : vector<8x8xf32>
    %966 = math.exp %965 : vector<8x8xf32>
    %cst_282 = arith.constant dense<0.000000e+00> : vector<8xf32>
    %967 = vector.multi_reduction <add>, %966, %cst_282 [1] : vector<8x8xf32> to vector<8xf32>
    %968 = vector.shape_cast %967 : vector<8xf32> to vector<8x1xf32>
    %969 = tpu.reciprocal %968 {approx = true} : vector<8x1xf32> -> vector<8x1xf32>
    %970 = vector.broadcast %969 : vector<8x1xf32> to vector<8x8xf32>
    %971 = arith.mulf %966, %970 : vector<8x8xf32>
    %c0_283 = arith.constant 0 : index
    %c2_284 = arith.constant 2 : index
    %c0_285 = arith.constant 0 : index
    %c0_286 = arith.constant 0 : index
    %972 = vector.load %arg29[%c0_283, %c2_284, %c0_285, %c0_286] : memref<1x4x8x8xf32, #tpu.memory_space<vmem>>, vector<1x1x8x8xf32>
    %973 = vector.shape_cast %972 : vector<1x1x8x8xf32> to vector<8x8xf32>
    %974 = vector.shape_cast %971 : vector<8x8xf32> to vector<1x1x8x8xf32>
    tpu.vector_store %arg29[%c0_283, %c2_284, %c0_285, %c0_286], %974 {strides = array<i32>} : memref<1x4x8x8xf32, #tpu.memory_space<vmem>>, vector<1x1x8x8xf32>,
    %975 = arith.truncf %971 : vector<8x8xf32> to vector<8x8xbf16>
    %976 = arith.truncf %694 : vector<8x8xf32> to vector<8x8xbf16>
    %cst_287 = arith.constant dense<0.000000e+00> : vector<8x8xf32>
    %977 = tpu.matmul %975, %976, %cst_287 {dimension_numbers = #tpu.dot_dimension_numbers<[1], [0], [0], [1], [0, 0, 1, 1], [], []>} : vector<8x8xbf16>, vector<8x8xbf16>, vector<8x8xf32> -> vector<8x8xf32>
    %978 = arith.mulf %971, %971 : vector<8x8xf32>
    %979 = arith.truncf %978 : vector<8x8xf32> to vector<8x8xbf16>
    %980 = arith.truncf %701 : vector<8x8xf32> to vector<8x8xbf16>
    %cst_288 = arith.constant dense<0.000000e+00> : vector<8x8xf32>
    %981 = tpu.matmul %979, %980, %cst_288 {dimension_numbers = #tpu.dot_dimension_numbers<[1], [0], [0], [1], [0, 0, 1, 1], [], []>} : vector<8x8xbf16>, vector<8x8xbf16>, vector<8x8xf32> -> vector<8x8xf32>
    %982 = vector.extract_strided_slice %18 {offsets = [0, 24], sizes = [8, 8], strides = [1, 1]} : vector<8x32xf32> to vector<8x8xf32>
    %983 = vector.extract_strided_slice %25 {offsets = [0, 24], sizes = [8, 8], strides = [1, 1]} : vector<8x32xf32> to vector<8x8xf32>
    %984 = vector.extract_strided_slice %32 {offsets = [0, 24], sizes = [8, 8], strides = [1, 1]} : vector<8x32xf32> to vector<8x8xf32>
    %985 = vector.extract_strided_slice %49 {offsets = [0, 24], sizes = [8, 8], strides = [1, 1]} : vector<8x32xf32> to vector<8x8xf32>
    %cst_289 = arith.constant 9.99999997E-7 : f32
    %986 = vector.broadcast %cst_289 : f32 to vector<8x8xf32>
    %987 = arith.maximumf %985, %986 : vector<8x8xf32>
    %988 = vector.extract_strided_slice %66 {offsets = [0, 24], sizes = [8, 8], strides = [1, 1]} : vector<8x32xf32> to vector<8x8xf32>
    %cst_290 = arith.constant 9.99999997E-7 : f32
    %989 = vector.broadcast %cst_290 : f32 to vector<8x8xf32>
    %990 = arith.maximumf %988, %989 : vector<8x8xf32>
    %991 = vector.extract_strided_slice %83 {offsets = [0, 24], sizes = [8, 8], strides = [1, 1]} : vector<8x32xf32> to vector<8x8xf32>
    %992 = vector.extract_strided_slice %85 {offsets = [0, 24], sizes = [8, 8], strides = [1, 1]} : vector<8x32xf32> to vector<8x8xf32>
    %993 = vector.extract_strided_slice %100 {offsets = [0, 24], sizes = [8, 8], strides = [1, 1]} : vector<8x32xf32> to vector<8x8xf32>
    %c0_291 = arith.constant 0 : index
    %c0_292 = arith.constant 0 : index
    %c0_293 = arith.constant 0 : index
    %994 = vector.load %arg19[%c0_291, %c0_292, %c0_293] : memref<2x8x8xf32, #tpu.memory_space<vmem>>, vector<1x8x8xf32>
    %995 = vector.shape_cast %994 : vector<1x8x8xf32> to vector<8x8xf32>
    %cst_294 = arith.constant dense<0.000000e+00> : vector<8x8xf32>
    %996 = tpu.matmul %992, %995, %cst_294 {dimension_numbers = #tpu.dot_dimension_numbers<[1], [0], [0], [1], [0, 0, 1, 1], [], []>} : vector<8x8xf32>, vector<8x8xf32>, vector<8x8xf32> -> vector<8x8xf32>
    %c0_295 = arith.constant 0 : index
    %c0_296 = arith.constant 0 : index
    %c0_297 = arith.constant 0 : index
    %997 = vector.load %arg20[%c0_295, %c0_296, %c0_297] : memref<2x1x8xf32, #tpu.memory_space<vmem>>, vector<1x1x8xf32>
    %998 = vector.shape_cast %997 : vector<1x1x8xf32> to vector<1x8xf32>
    %999 = vector.broadcast %998 : vector<1x8xf32> to vector<8x8xf32>
    %1000 = arith.addf %996, %999 : vector<8x8xf32>
    %c1_298 = arith.constant 1 : index
    %c0_299 = arith.constant 0 : index
    %c0_300 = arith.constant 0 : index
    %1001 = vector.load %arg19[%c1_298, %c0_299, %c0_300] : memref<2x8x8xf32, #tpu.memory_space<vmem>>, vector<1x8x8xf32>
    %1002 = vector.shape_cast %1001 : vector<1x8x8xf32> to vector<8x8xf32>
    %cst_301 = arith.constant dense<0.000000e+00> : vector<8x8xf32>
    %1003 = tpu.matmul %992, %1002, %cst_301 {dimension_numbers = #tpu.dot_dimension_numbers<[1], [0], [0], [1], [0, 0, 1, 1], [], []>} : vector<8x8xf32>, vector<8x8xf32>, vector<8x8xf32> -> vector<8x8xf32>
    %c1_302 = arith.constant 1 : index
    %c0_303 = arith.constant 0 : index
    %c0_304 = arith.constant 0 : index
    %1004 = vector.load %arg20[%c1_302, %c0_303, %c0_304] : memref<2x1x8xf32, #tpu.memory_space<vmem>>, vector<1x1x8xf32>
    %1005 = vector.shape_cast %1004 : vector<1x1x8xf32> to vector<1x8xf32>
    %1006 = vector.broadcast %1005 : vector<1x8xf32> to vector<8x8xf32>
    %1007 = arith.addf %1003, %1006 : vector<8x8xf32>
    %1008 = tpu.reciprocal %987 {approx = true} : vector<8x8xf32> -> vector<8x8xf32>
    %1009 = tpu.reciprocal %990 {approx = true} : vector<8x8xf32> -> vector<8x8xf32>
    %c0_305 = arith.constant 0 : index
    %c3 = arith.constant 3 : index
    %c0_306 = arith.constant 0 : index
    %c0_307 = arith.constant 0 : index
    %1010 = vector.load %arg11[%c0_305, %c3, %c0_306, %c0_307] : memref<1x4x3x24xf32, #tpu.memory_space<vmem>>, vector<1x1x3x24xf32>
    %1011 = vector.shape_cast %1010 : vector<1x1x3x24xf32> to vector<3x24xf32>
    %c0_308 = arith.constant 0 : index
    %c3_309 = arith.constant 3 : index
    %c0_310 = arith.constant 0 : index
    %c0_311 = arith.constant 0 : index
    %1012 = vector.load %arg12[%c0_308, %c3_309, %c0_310, %c0_311] : memref<1x4x3x24xf32, #tpu.memory_space<vmem>>, vector<1x1x3x24xf32>
    %1013 = vector.shape_cast %1012 : vector<1x1x3x24xf32> to vector<3x24xf32>
    %c0_312 = arith.constant 0 : index
    %c3_313 = arith.constant 3 : index
    %c0_314 = arith.constant 0 : index
    %c0_315 = arith.constant 0 : index
    %1014 = vector.load %arg13[%c0_312, %c3_313, %c0_314, %c0_315] : memref<1x4x3x24xf32, #tpu.memory_space<vmem>>, vector<1x1x3x24xf32>
    %1015 = vector.shape_cast %1014 : vector<1x1x3x24xf32> to vector<3x24xf32>
    %c0_316 = arith.constant 0 : index
    %c3_317 = arith.constant 3 : index
    %c0_318 = arith.constant 0 : index
    %c0_319 = arith.constant 0 : index
    %1016 = vector.load %arg14[%c0_316, %c3_317, %c0_318, %c0_319] : memref<1x4x3x24xf32, #tpu.memory_space<vmem>>, vector<1x1x3x24xf32>
    %1017 = vector.shape_cast %1016 : vector<1x1x3x24xf32> to vector<3x24xf32>
    %1018 = vector.extract_strided_slice %102 {offsets = [0, 0], sizes = [8, 1], strides = [1, 1]} : vector<8x3xf32> to vector<8x1xf32>
    %1019 = vector.extract_strided_slice %1011 {offsets = [0, 0], sizes = [1, 24], strides = [1, 1]} : vector<3x24xf32> to vector<1x24xf32>
    %1020 = vector.broadcast %1018 : vector<8x1xf32> to vector<8x24xf32>
    %1021 = vector.broadcast %1019 : vector<1x24xf32> to vector<8x24xf32>
    %1022 = arith.mulf %1020, %1021 : vector<8x24xf32>
    %1023 = vector.extract_strided_slice %102 {offsets = [0, 1], sizes = [8, 1], strides = [1, 1]} : vector<8x3xf32> to vector<8x1xf32>
    %1024 = vector.extract_strided_slice %1011 {offsets = [1, 0], sizes = [1, 24], strides = [1, 1]} : vector<3x24xf32> to vector<1x24xf32>
    %1025 = vector.broadcast %1023 : vector<8x1xf32> to vector<8x24xf32>
    %1026 = vector.broadcast %1024 : vector<1x24xf32> to vector<8x24xf32>
    %1027 = arith.mulf %1025, %1026 : vector<8x24xf32>
    %1028 = arith.addf %1022, %1027 : vector<8x24xf32>
    %1029 = vector.extract_strided_slice %102 {offsets = [0, 2], sizes = [8, 1], strides = [1, 1]} : vector<8x3xf32> to vector<8x1xf32>
    %1030 = vector.extract_strided_slice %1011 {offsets = [2, 0], sizes = [1, 24], strides = [1, 1]} : vector<3x24xf32> to vector<1x24xf32>
    %1031 = vector.broadcast %1029 : vector<8x1xf32> to vector<8x24xf32>
    %1032 = vector.broadcast %1030 : vector<1x24xf32> to vector<8x24xf32>
    %1033 = arith.mulf %1031, %1032 : vector<8x24xf32>
    %1034 = arith.addf %1028, %1033 : vector<8x24xf32>
    %1035 = vector.extract_strided_slice %102 {offsets = [0, 0], sizes = [8, 1], strides = [1, 1]} : vector<8x3xf32> to vector<8x1xf32>
    %1036 = vector.extract_strided_slice %1013 {offsets = [0, 0], sizes = [1, 24], strides = [1, 1]} : vector<3x24xf32> to vector<1x24xf32>
    %1037 = vector.broadcast %1035 : vector<8x1xf32> to vector<8x24xf32>
    %1038 = vector.broadcast %1036 : vector<1x24xf32> to vector<8x24xf32>
    %1039 = arith.mulf %1037, %1038 : vector<8x24xf32>
    %1040 = vector.extract_strided_slice %102 {offsets = [0, 1], sizes = [8, 1], strides = [1, 1]} : vector<8x3xf32> to vector<8x1xf32>
    %1041 = vector.extract_strided_slice %1013 {offsets = [1, 0], sizes = [1, 24], strides = [1, 1]} : vector<3x24xf32> to vector<1x24xf32>
    %1042 = vector.broadcast %1040 : vector<8x1xf32> to vector<8x24xf32>
    %1043 = vector.broadcast %1041 : vector<1x24xf32> to vector<8x24xf32>
    %1044 = arith.mulf %1042, %1043 : vector<8x24xf32>
    %1045 = arith.addf %1039, %1044 : vector<8x24xf32>
    %1046 = vector.extract_strided_slice %102 {offsets = [0, 2], sizes = [8, 1], strides = [1, 1]} : vector<8x3xf32> to vector<8x1xf32>
    %1047 = vector.extract_strided_slice %1013 {offsets = [2, 0], sizes = [1, 24], strides = [1, 1]} : vector<3x24xf32> to vector<1x24xf32>
    %1048 = vector.broadcast %1046 : vector<8x1xf32> to vector<8x24xf32>
    %1049 = vector.broadcast %1047 : vector<1x24xf32> to vector<8x24xf32>
    %1050 = arith.mulf %1048, %1049 : vector<8x24xf32>
    %1051 = arith.addf %1045, %1050 : vector<8x24xf32>
    %1052 = vector.extract_strided_slice %102 {offsets = [0, 0], sizes = [8, 1], strides = [1, 1]} : vector<8x3xf32> to vector<8x1xf32>
    %1053 = vector.extract_strided_slice %1015 {offsets = [0, 0], sizes = [1, 24], strides = [1, 1]} : vector<3x24xf32> to vector<1x24xf32>
    %1054 = vector.broadcast %1052 : vector<8x1xf32> to vector<8x24xf32>
    %1055 = vector.broadcast %1053 : vector<1x24xf32> to vector<8x24xf32>
    %1056 = arith.mulf %1054, %1055 : vector<8x24xf32>
    %1057 = vector.extract_strided_slice %102 {offsets = [0, 1], sizes = [8, 1], strides = [1, 1]} : vector<8x3xf32> to vector<8x1xf32>
    %1058 = vector.extract_strided_slice %1015 {offsets = [1, 0], sizes = [1, 24], strides = [1, 1]} : vector<3x24xf32> to vector<1x24xf32>
    %1059 = vector.broadcast %1057 : vector<8x1xf32> to vector<8x24xf32>
    %1060 = vector.broadcast %1058 : vector<1x24xf32> to vector<8x24xf32>
    %1061 = arith.mulf %1059, %1060 : vector<8x24xf32>
    %1062 = arith.addf %1056, %1061 : vector<8x24xf32>
    %1063 = vector.extract_strided_slice %102 {offsets = [0, 2], sizes = [8, 1], strides = [1, 1]} : vector<8x3xf32> to vector<8x1xf32>
    %1064 = vector.extract_strided_slice %1015 {offsets = [2, 0], sizes = [1, 24], strides = [1, 1]} : vector<3x24xf32> to vector<1x24xf32>
    %1065 = vector.broadcast %1063 : vector<8x1xf32> to vector<8x24xf32>
    %1066 = vector.broadcast %1064 : vector<1x24xf32> to vector<8x24xf32>
    %1067 = arith.mulf %1065, %1066 : vector<8x24xf32>
    %1068 = arith.addf %1062, %1067 : vector<8x24xf32>
    %1069 = vector.extract_strided_slice %102 {offsets = [0, 0], sizes = [8, 1], strides = [1, 1]} : vector<8x3xf32> to vector<8x1xf32>
    %1070 = vector.extract_strided_slice %1017 {offsets = [0, 0], sizes = [1, 24], strides = [1, 1]} : vector<3x24xf32> to vector<1x24xf32>
    %1071 = vector.broadcast %1069 : vector<8x1xf32> to vector<8x24xf32>
    %1072 = vector.broadcast %1070 : vector<1x24xf32> to vector<8x24xf32>
    %1073 = arith.mulf %1071, %1072 : vector<8x24xf32>
    %1074 = vector.extract_strided_slice %102 {offsets = [0, 1], sizes = [8, 1], strides = [1, 1]} : vector<8x3xf32> to vector<8x1xf32>
    %1075 = vector.extract_strided_slice %1017 {offsets = [1, 0], sizes = [1, 24], strides = [1, 1]} : vector<3x24xf32> to vector<1x24xf32>
    %1076 = vector.broadcast %1074 : vector<8x1xf32> to vector<8x24xf32>
    %1077 = vector.broadcast %1075 : vector<1x24xf32> to vector<8x24xf32>
    %1078 = arith.mulf %1076, %1077 : vector<8x24xf32>
    %1079 = arith.addf %1073, %1078 : vector<8x24xf32>
    %1080 = vector.extract_strided_slice %102 {offsets = [0, 2], sizes = [8, 1], strides = [1, 1]} : vector<8x3xf32> to vector<8x1xf32>
    %1081 = vector.extract_strided_slice %1017 {offsets = [2, 0], sizes = [1, 24], strides = [1, 1]} : vector<3x24xf32> to vector<1x24xf32>
    %1082 = vector.broadcast %1080 : vector<8x1xf32> to vector<8x24xf32>
    %1083 = vector.broadcast %1081 : vector<1x24xf32> to vector<8x24xf32>
    %1084 = arith.mulf %1082, %1083 : vector<8x24xf32>
    %1085 = arith.addf %1079, %1084 : vector<8x24xf32>
    %1086 = arith.addf %1008, %993 : vector<8x8xf32>
    %1087 = arith.mulf %982, %1008 : vector<8x8xf32>
    %1088 = arith.mulf %1000, %993 : vector<8x8xf32>
    %1089 = arith.addf %1087, %1088 : vector<8x8xf32>
    %1090 = tpu.concatenate %1086, %1086, %1086 in 1 : vector<8x8xf32>, vector<8x8xf32>, vector<8x8xf32> -> vector<8x24xf32>
    %1091 = arith.addf %1090, %1034 : vector<8x24xf32>
    %1092 = tpu.reciprocal %1091 {approx = true} : vector<8x24xf32> -> vector<8x24xf32>
    %1093 = tpu.concatenate %1089, %1089, %1089 in 1 : vector<8x8xf32>, vector<8x8xf32>, vector<8x8xf32> -> vector<8x24xf32>
    %1094 = arith.addf %1093, %1051 : vector<8x24xf32>
    %1095 = arith.mulf %1092, %1094 : vector<8x24xf32>
    %cst_320 = arith.constant 1.000000e-24 : f32
    %1096 = vector.broadcast %cst_320 : f32 to vector<8x24xf32>
    %1097 = arith.maximumf %1092, %1096 : vector<8x24xf32>
    %1098 = math.sqrt %1097 : vector<8x24xf32>
    %1099 = arith.addf %1009, %993 : vector<8x8xf32>
    %1100 = arith.mulf %983, %1009 : vector<8x8xf32>
    %1101 = arith.mulf %1007, %993 : vector<8x8xf32>
    %1102 = arith.addf %1100, %1101 : vector<8x8xf32>
    %1103 = vector.extract_strided_slice %1095 {offsets = [0, 0], sizes = [8, 8], strides = [1, 1]} : vector<8x24xf32> to vector<8x8xf32>
    %1104 = vector.extract_strided_slice %1092 {offsets = [0, 0], sizes = [8, 8], strides = [1, 1]} : vector<8x24xf32> to vector<8x8xf32>
    %1105 = arith.mulf %1103, %1103 : vector<8x8xf32>
    %1106 = arith.addf %1105, %1104 : vector<8x8xf32>
    %cst_321 = arith.constant dense<0.000000e+00> : vector<8xf32>
    %1107 = vector.multi_reduction <add>, %1106, %cst_321 [1] : vector<8x8xf32> to vector<8xf32>
    %1108 = vector.shape_cast %1107 : vector<8xf32> to vector<8x1xf32>
    %1109 = vector.extract_strided_slice %1098 {offsets = [0, 0], sizes = [8, 8], strides = [1, 1]} : vector<8x24xf32> to vector<8x8xf32>
    %1110 = tpu.concatenate %1103, %1109 in 1 : vector<8x8xf32>, vector<8x8xf32> -> vector<8x16xf32>
    %1111 = vector.extract_strided_slice %1095 {offsets = [0, 8], sizes = [8, 8], strides = [1, 1]} : vector<8x24xf32> to vector<8x8xf32>
    %1112 = vector.extract_strided_slice %1092 {offsets = [0, 8], sizes = [8, 8], strides = [1, 1]} : vector<8x24xf32> to vector<8x8xf32>
    %1113 = arith.mulf %1111, %1111 : vector<8x8xf32>
    %1114 = arith.addf %1113, %1112 : vector<8x8xf32>
    %cst_322 = arith.constant dense<0.000000e+00> : vector<8xf32>
    %1115 = vector.multi_reduction <add>, %1114, %cst_322 [1] : vector<8x8xf32> to vector<8xf32>
    %1116 = vector.shape_cast %1115 : vector<8xf32> to vector<8x1xf32>
    %1117 = vector.extract_strided_slice %1098 {offsets = [0, 8], sizes = [8, 8], strides = [1, 1]} : vector<8x24xf32> to vector<8x8xf32>
    %1118 = tpu.concatenate %1111, %1117 in 1 : vector<8x8xf32>, vector<8x8xf32> -> vector<8x16xf32>
    %1119 = vector.extract_strided_slice %1095 {offsets = [0, 16], sizes = [8, 8], strides = [1, 1]} : vector<8x24xf32> to vector<8x8xf32>
    %1120 = vector.extract_strided_slice %1092 {offsets = [0, 16], sizes = [8, 8], strides = [1, 1]} : vector<8x24xf32> to vector<8x8xf32>
    %1121 = arith.mulf %1119, %1119 : vector<8x8xf32>
    %1122 = arith.addf %1121, %1120 : vector<8x8xf32>
    %cst_323 = arith.constant dense<0.000000e+00> : vector<8xf32>
    %1123 = vector.multi_reduction <add>, %1122, %cst_323 [1] : vector<8x8xf32> to vector<8xf32>
    %1124 = vector.shape_cast %1123 : vector<8xf32> to vector<8x1xf32>
    %1125 = vector.extract_strided_slice %1098 {offsets = [0, 16], sizes = [8, 8], strides = [1, 1]} : vector<8x24xf32> to vector<8x8xf32>
    %1126 = tpu.concatenate %1119, %1125 in 1 : vector<8x8xf32>, vector<8x8xf32> -> vector<8x16xf32>
    %1127 = tpu.concatenate %1108, %1116, %1124 in 1 : vector<8x1xf32>, vector<8x1xf32>, vector<8x1xf32> -> vector<8x3xf32>
    %1128 = vector.extract_strided_slice %1068 {offsets = [0, 0], sizes = [8, 8], strides = [1, 1]} : vector<8x24xf32> to vector<8x8xf32>
    %1129 = arith.addf %1099, %1128 : vector<8x8xf32>
    %1130 = tpu.reciprocal %1129 {approx = true} : vector<8x8xf32> -> vector<8x8xf32>
    %1131 = vector.extract_strided_slice %1085 {offsets = [0, 0], sizes = [8, 8], strides = [1, 1]} : vector<8x24xf32> to vector<8x8xf32>
    %1132 = arith.addf %1102, %1131 : vector<8x8xf32>
    %1133 = arith.mulf %1130, %1132 : vector<8x8xf32>
    %cst_324 = arith.constant 1.000000e-24 : f32
    %1134 = vector.broadcast %cst_324 : f32 to vector<8x8xf32>
    %1135 = arith.maximumf %1130, %1134 : vector<8x8xf32>
    %1136 = math.sqrt %1135 : vector<8x8xf32>
    %1137 = arith.mulf %1133, %1133 : vector<8x8xf32>
    %1138 = arith.addf %1137, %1130 : vector<8x8xf32>
    %cst_325 = arith.constant dense<0.000000e+00> : vector<8xf32>
    %1139 = vector.multi_reduction <add>, %1138, %cst_325 [1] : vector<8x8xf32> to vector<8xf32>
    %1140 = vector.shape_cast %1139 : vector<8xf32> to vector<8x1xf32>
    %1141 = tpu.concatenate %1133, %1136 in 1 : vector<8x8xf32>, vector<8x8xf32> -> vector<8x16xf32>
    %cst_326 = arith.constant -2.000000e+00 : f32
    %1142 = vector.broadcast %cst_326 : f32 to vector<8x16xf32>
    %1143 = arith.mulf %1142, %1141 : vector<8x16xf32>
    %1144 = vector.extract_strided_slice %1068 {offsets = [0, 8], sizes = [8, 8], strides = [1, 1]} : vector<8x24xf32> to vector<8x8xf32>
    %1145 = arith.addf %1099, %1144 : vector<8x8xf32>
    %1146 = tpu.reciprocal %1145 {approx = true} : vector<8x8xf32> -> vector<8x8xf32>
    %1147 = vector.extract_strided_slice %1085 {offsets = [0, 8], sizes = [8, 8], strides = [1, 1]} : vector<8x24xf32> to vector<8x8xf32>
    %1148 = arith.addf %1102, %1147 : vector<8x8xf32>
    %1149 = arith.mulf %1146, %1148 : vector<8x8xf32>
    %cst_327 = arith.constant 1.000000e-24 : f32
    %1150 = vector.broadcast %cst_327 : f32 to vector<8x8xf32>
    %1151 = arith.maximumf %1146, %1150 : vector<8x8xf32>
    %1152 = math.sqrt %1151 : vector<8x8xf32>
    %1153 = arith.mulf %1149, %1149 : vector<8x8xf32>
    %1154 = arith.addf %1153, %1146 : vector<8x8xf32>
    %cst_328 = arith.constant dense<0.000000e+00> : vector<8xf32>
    %1155 = vector.multi_reduction <add>, %1154, %cst_328 [1] : vector<8x8xf32> to vector<8xf32>
    %1156 = vector.shape_cast %1155 : vector<8xf32> to vector<8x1xf32>
    %1157 = tpu.concatenate %1149, %1152 in 1 : vector<8x8xf32>, vector<8x8xf32> -> vector<8x16xf32>
    %cst_329 = arith.constant -2.000000e+00 : f32
    %1158 = vector.broadcast %cst_329 : f32 to vector<8x16xf32>
    %1159 = arith.mulf %1158, %1157 : vector<8x16xf32>
    %1160 = vector.extract_strided_slice %1068 {offsets = [0, 16], sizes = [8, 8], strides = [1, 1]} : vector<8x24xf32> to vector<8x8xf32>
    %1161 = arith.addf %1099, %1160 : vector<8x8xf32>
    %1162 = tpu.reciprocal %1161 {approx = true} : vector<8x8xf32> -> vector<8x8xf32>
    %1163 = vector.extract_strided_slice %1085 {offsets = [0, 16], sizes = [8, 8], strides = [1, 1]} : vector<8x24xf32> to vector<8x8xf32>
    %1164 = arith.addf %1102, %1163 : vector<8x8xf32>
    %1165 = arith.mulf %1162, %1164 : vector<8x8xf32>
    %cst_330 = arith.constant 1.000000e-24 : f32
    %1166 = vector.broadcast %cst_330 : f32 to vector<8x8xf32>
    %1167 = arith.maximumf %1162, %1166 : vector<8x8xf32>
    %1168 = math.sqrt %1167 : vector<8x8xf32>
    %1169 = arith.mulf %1165, %1165 : vector<8x8xf32>
    %1170 = arith.addf %1169, %1162 : vector<8x8xf32>
    %cst_331 = arith.constant dense<0.000000e+00> : vector<8xf32>
    %1171 = vector.multi_reduction <add>, %1170, %cst_331 [1] : vector<8x8xf32> to vector<8xf32>
    %1172 = vector.shape_cast %1171 : vector<8xf32> to vector<8x1xf32>
    %1173 = tpu.concatenate %1165, %1168 in 1 : vector<8x8xf32>, vector<8x8xf32> -> vector<8x16xf32>
    %cst_332 = arith.constant -2.000000e+00 : f32
    %1174 = vector.broadcast %cst_332 : f32 to vector<8x16xf32>
    %1175 = arith.mulf %1174, %1173 : vector<8x16xf32>
    %1176 = tpu.concatenate %1140, %1156, %1172 in 1 : vector<8x1xf32>, vector<8x1xf32>, vector<8x1xf32> -> vector<8x3xf32>
    %1177 = tpu.concatenate %1127, %102 in 1 : vector<8x3xf32>, vector<8x3xf32> -> vector<8x6xf32>
    %1178 = tpu.concatenate %102, %1176 in 1 : vector<8x3xf32>, vector<8x3xf32> -> vector<8x6xf32>
    %cst_333 = arith.constant dense<0.000000e+00> : vector<8x8xf32>
    %1179 = tpu.matmul %1177, %1178, %cst_333 {dimension_numbers = #tpu.dot_dimension_numbers<[1], [1], [0], [0], [0, 0, 1, 0], [], []>} : vector<8x6xf32>, vector<8x6xf32>, vector<8x8xf32> -> vector<8x8xf32>
    %1180 = vector.extract_strided_slice %102 {offsets = [0, 0], sizes = [8, 1], strides = [1, 1]} : vector<8x3xf32> to vector<8x1xf32>
    %cst_334 = arith.constant dense<0.000000e+00> : vector<8x8xf32>
    %1181 = tpu.matmul %1110, %1143, %cst_334 {dimension_numbers = #tpu.dot_dimension_numbers<[1], [1], [0], [0], [0, 0, 1, 0], [], []>} : vector<8x16xf32>, vector<8x16xf32>, vector<8x8xf32> -> vector<8x8xf32>
    %1182 = vector.extract_strided_slice %104 {offsets = [0, 0], sizes = [1, 8], strides = [1, 1]} : vector<3x8xf32> to vector<1x8xf32>
    %1183 = vector.broadcast %1180 : vector<8x1xf32> to vector<8x8xf32>
    %1184 = vector.broadcast %1182 : vector<1x8xf32> to vector<8x8xf32>
    %1185 = arith.mulf %1183, %1184 : vector<8x8xf32>
    %1186 = arith.mulf %1185, %1181 : vector<8x8xf32>
    %1187 = arith.addf %1179, %1186 : vector<8x8xf32>
    %cst_335 = arith.constant dense<0.000000e+00> : vector<8x8xf32>
    %1188 = tpu.matmul %1118, %1143, %cst_335 {dimension_numbers = #tpu.dot_dimension_numbers<[1], [1], [0], [0], [0, 0, 1, 0], [], []>} : vector<8x16xf32>, vector<8x16xf32>, vector<8x8xf32> -> vector<8x8xf32>
    %1189 = vector.extract_strided_slice %104 {offsets = [1, 0], sizes = [1, 8], strides = [1, 1]} : vector<3x8xf32> to vector<1x8xf32>
    %1190 = vector.broadcast %1180 : vector<8x1xf32> to vector<8x8xf32>
    %1191 = vector.broadcast %1189 : vector<1x8xf32> to vector<8x8xf32>
    %1192 = arith.mulf %1190, %1191 : vector<8x8xf32>
    %1193 = arith.mulf %1192, %1188 : vector<8x8xf32>
    %1194 = arith.addf %1187, %1193 : vector<8x8xf32>
    %cst_336 = arith.constant dense<0.000000e+00> : vector<8x8xf32>
    %1195 = tpu.matmul %1126, %1143, %cst_336 {dimension_numbers = #tpu.dot_dimension_numbers<[1], [1], [0], [0], [0, 0, 1, 0], [], []>} : vector<8x16xf32>, vector<8x16xf32>, vector<8x8xf32> -> vector<8x8xf32>
    %1196 = vector.extract_strided_slice %104 {offsets = [2, 0], sizes = [1, 8], strides = [1, 1]} : vector<3x8xf32> to vector<1x8xf32>
    %1197 = vector.broadcast %1180 : vector<8x1xf32> to vector<8x8xf32>
    %1198 = vector.broadcast %1196 : vector<1x8xf32> to vector<8x8xf32>
    %1199 = arith.mulf %1197, %1198 : vector<8x8xf32>
    %1200 = arith.mulf %1199, %1195 : vector<8x8xf32>
    %1201 = arith.addf %1194, %1200 : vector<8x8xf32>
    %1202 = vector.extract_strided_slice %102 {offsets = [0, 1], sizes = [8, 1], strides = [1, 1]} : vector<8x3xf32> to vector<8x1xf32>
    %cst_337 = arith.constant dense<0.000000e+00> : vector<8x8xf32>
    %1203 = tpu.matmul %1110, %1159, %cst_337 {dimension_numbers = #tpu.dot_dimension_numbers<[1], [1], [0], [0], [0, 0, 1, 0], [], []>} : vector<8x16xf32>, vector<8x16xf32>, vector<8x8xf32> -> vector<8x8xf32>
    %1204 = vector.extract_strided_slice %104 {offsets = [0, 0], sizes = [1, 8], strides = [1, 1]} : vector<3x8xf32> to vector<1x8xf32>
    %1205 = vector.broadcast %1202 : vector<8x1xf32> to vector<8x8xf32>
    %1206 = vector.broadcast %1204 : vector<1x8xf32> to vector<8x8xf32>
    %1207 = arith.mulf %1205, %1206 : vector<8x8xf32>
    %1208 = arith.mulf %1207, %1203 : vector<8x8xf32>
    %1209 = arith.addf %1201, %1208 : vector<8x8xf32>
    %cst_338 = arith.constant dense<0.000000e+00> : vector<8x8xf32>
    %1210 = tpu.matmul %1118, %1159, %cst_338 {dimension_numbers = #tpu.dot_dimension_numbers<[1], [1], [0], [0], [0, 0, 1, 0], [], []>} : vector<8x16xf32>, vector<8x16xf32>, vector<8x8xf32> -> vector<8x8xf32>
    %1211 = vector.extract_strided_slice %104 {offsets = [1, 0], sizes = [1, 8], strides = [1, 1]} : vector<3x8xf32> to vector<1x8xf32>
    %1212 = vector.broadcast %1202 : vector<8x1xf32> to vector<8x8xf32>
    %1213 = vector.broadcast %1211 : vector<1x8xf32> to vector<8x8xf32>
    %1214 = arith.mulf %1212, %1213 : vector<8x8xf32>
    %1215 = arith.mulf %1214, %1210 : vector<8x8xf32>
    %1216 = arith.addf %1209, %1215 : vector<8x8xf32>
    %cst_339 = arith.constant dense<0.000000e+00> : vector<8x8xf32>
    %1217 = tpu.matmul %1126, %1159, %cst_339 {dimension_numbers = #tpu.dot_dimension_numbers<[1], [1], [0], [0], [0, 0, 1, 0], [], []>} : vector<8x16xf32>, vector<8x16xf32>, vector<8x8xf32> -> vector<8x8xf32>
    %1218 = vector.extract_strided_slice %104 {offsets = [2, 0], sizes = [1, 8], strides = [1, 1]} : vector<3x8xf32> to vector<1x8xf32>
    %1219 = vector.broadcast %1202 : vector<8x1xf32> to vector<8x8xf32>
    %1220 = vector.broadcast %1218 : vector<1x8xf32> to vector<8x8xf32>
    %1221 = arith.mulf %1219, %1220 : vector<8x8xf32>
    %1222 = arith.mulf %1221, %1217 : vector<8x8xf32>
    %1223 = arith.addf %1216, %1222 : vector<8x8xf32>
    %1224 = vector.extract_strided_slice %102 {offsets = [0, 2], sizes = [8, 1], strides = [1, 1]} : vector<8x3xf32> to vector<8x1xf32>
    %cst_340 = arith.constant dense<0.000000e+00> : vector<8x8xf32>
    %1225 = tpu.matmul %1110, %1175, %cst_340 {dimension_numbers = #tpu.dot_dimension_numbers<[1], [1], [0], [0], [0, 0, 1, 0], [], []>} : vector<8x16xf32>, vector<8x16xf32>, vector<8x8xf32> -> vector<8x8xf32>
    %1226 = vector.extract_strided_slice %104 {offsets = [0, 0], sizes = [1, 8], strides = [1, 1]} : vector<3x8xf32> to vector<1x8xf32>
    %1227 = vector.broadcast %1224 : vector<8x1xf32> to vector<8x8xf32>
    %1228 = vector.broadcast %1226 : vector<1x8xf32> to vector<8x8xf32>
    %1229 = arith.mulf %1227, %1228 : vector<8x8xf32>
    %1230 = arith.mulf %1229, %1225 : vector<8x8xf32>
    %1231 = arith.addf %1223, %1230 : vector<8x8xf32>
    %cst_341 = arith.constant dense<0.000000e+00> : vector<8x8xf32>
    %1232 = tpu.matmul %1118, %1175, %cst_341 {dimension_numbers = #tpu.dot_dimension_numbers<[1], [1], [0], [0], [0, 0, 1, 0], [], []>} : vector<8x16xf32>, vector<8x16xf32>, vector<8x8xf32> -> vector<8x8xf32>
    %1233 = vector.extract_strided_slice %104 {offsets = [1, 0], sizes = [1, 8], strides = [1, 1]} : vector<3x8xf32> to vector<1x8xf32>
    %1234 = vector.broadcast %1224 : vector<8x1xf32> to vector<8x8xf32>
    %1235 = vector.broadcast %1233 : vector<1x8xf32> to vector<8x8xf32>
    %1236 = arith.mulf %1234, %1235 : vector<8x8xf32>
    %1237 = arith.mulf %1236, %1232 : vector<8x8xf32>
    %1238 = arith.addf %1231, %1237 : vector<8x8xf32>
    %cst_342 = arith.constant dense<0.000000e+00> : vector<8x8xf32>
    %1239 = tpu.matmul %1126, %1175, %cst_342 {dimension_numbers = #tpu.dot_dimension_numbers<[1], [1], [0], [0], [0, 0, 1, 0], [], []>} : vector<8x16xf32>, vector<8x16xf32>, vector<8x8xf32> -> vector<8x8xf32>
    %1240 = vector.extract_strided_slice %104 {offsets = [2, 0], sizes = [1, 8], strides = [1, 1]} : vector<3x8xf32> to vector<1x8xf32>
    %1241 = vector.broadcast %1224 : vector<8x1xf32> to vector<8x8xf32>
    %1242 = vector.broadcast %1240 : vector<1x8xf32> to vector<8x8xf32>
    %1243 = arith.mulf %1241, %1242 : vector<8x8xf32>
    %1244 = arith.mulf %1243, %1239 : vector<8x8xf32>
    %1245 = arith.addf %1238, %1244 : vector<8x8xf32>
    %cst_343 = arith.constant -0.353553385 : f32
    %1246 = vector.broadcast %cst_343 : f32 to vector<8x8xf32>
    %1247 = arith.mulf %1245, %1246 : vector<8x8xf32>
    %cst_344 = arith.constant 0.000000e+00 : f32
    %1248 = vector.broadcast %cst_344 : f32 to vector<8x8xf32>
    %1249 = arith.cmpf ogt, %111, %1248 : vector<8x8xf32>
    %cst_345 = arith.constant -1.000000e+30 : f32
    %1250 = vector.broadcast %cst_345 : f32 to vector<8x8xf32>
    %1251 = arith.select %1249, %1247, %1250 : vector<8x8xi1>, vector<8x8xf32>
    %cst_346 = arith.constant dense<0xFF800000> : vector<8xf32>
    %1252 = vector.multi_reduction <maximumf>, %1251, %cst_346 [1] : vector<8x8xf32> to vector<8xf32>
    %1253 = vector.shape_cast %1252 : vector<8xf32> to vector<8x1xf32>
    %1254 = vector.broadcast %1253 : vector<8x1xf32> to vector<8x8xf32>
    %1255 = arith.subf %1251, %1254 : vector<8x8xf32>
    %1256 = math.exp %1255 : vector<8x8xf32>
    %cst_347 = arith.constant dense<0.000000e+00> : vector<8xf32>
    %1257 = vector.multi_reduction <add>, %1256, %cst_347 [1] : vector<8x8xf32> to vector<8xf32>
    %1258 = vector.shape_cast %1257 : vector<8xf32> to vector<8x1xf32>
    %1259 = tpu.reciprocal %1258 {approx = true} : vector<8x1xf32> -> vector<8x1xf32>
    %1260 = vector.broadcast %1259 : vector<8x1xf32> to vector<8x8xf32>
    %1261 = arith.mulf %1256, %1260 : vector<8x8xf32>
    %c0_348 = arith.constant 0 : index
    %c3_349 = arith.constant 3 : index
    %c0_350 = arith.constant 0 : index
    %c0_351 = arith.constant 0 : index
    %1262 = vector.load %arg29[%c0_348, %c3_349, %c0_350, %c0_351] : memref<1x4x8x8xf32, #tpu.memory_space<vmem>>, vector<1x1x8x8xf32>
    %1263 = vector.shape_cast %1262 : vector<1x1x8x8xf32> to vector<8x8xf32>
    %1264 = vector.shape_cast %1261 : vector<8x8xf32> to vector<1x1x8x8xf32>
    tpu.vector_store %arg29[%c0_348, %c3_349, %c0_350, %c0_351], %1264 {strides = array<i32>} : memref<1x4x8x8xf32, #tpu.memory_space<vmem>>, vector<1x1x8x8xf32>,
    %1265 = arith.truncf %1261 : vector<8x8xf32> to vector<8x8xbf16>
    %1266 = arith.truncf %984 : vector<8x8xf32> to vector<8x8xbf16>
    %cst_352 = arith.constant dense<0.000000e+00> : vector<8x8xf32>
    %1267 = tpu.matmul %1265, %1266, %cst_352 {dimension_numbers = #tpu.dot_dimension_numbers<[1], [0], [0], [1], [0, 0, 1, 1], [], []>} : vector<8x8xbf16>, vector<8x8xbf16>, vector<8x8xf32> -> vector<8x8xf32>
    %1268 = arith.mulf %1261, %1261 : vector<8x8xf32>
    %1269 = arith.truncf %1268 : vector<8x8xf32> to vector<8x8xbf16>
    %1270 = arith.truncf %991 : vector<8x8xf32> to vector<8x8xbf16>
    %cst_353 = arith.constant dense<0.000000e+00> : vector<8x8xf32>
    %1271 = tpu.matmul %1269, %1270, %cst_353 {dimension_numbers = #tpu.dot_dimension_numbers<[1], [0], [0], [1], [0, 0, 1, 1], [], []>} : vector<8x8xbf16>, vector<8x8xbf16>, vector<8x8xf32> -> vector<8x8xf32>
    %1272 = tpu.concatenate %397, %687, %977, %1267 in 1 : vector<8x8xf32>, vector<8x8xf32>, vector<8x8xf32>, vector<8x8xf32> -> vector<8x32xf32>
    %1273 = tpu.concatenate %401, %691, %981, %1271 in 1 : vector<8x8xf32>, vector<8x8xf32>, vector<8x8xf32>, vector<8x8xf32> -> vector<8x32xf32>
    %1274 = arith.truncf %1272 : vector<8x32xf32> to vector<8x32xbf16>
    %c0_354 = arith.constant 0 : index
    %c0_355 = arith.constant 0 : index
    %1275 = vector.load %arg21[%c0_354, %c0_355] : memref<32x32xbf16, #tpu.memory_space<vmem>>, vector<32x32xbf16>
    %cst_356 = arith.constant dense<0.000000e+00> : vector<8x32xf32>
    %1276 = tpu.matmul %1274, %1275, %cst_356 {dimension_numbers = #tpu.dot_dimension_numbers<[1], [0], [0], [1], [0, 0, 1, 1], [], []>} : vector<8x32xbf16>, vector<32x32xbf16>, vector<8x32xf32> -> vector<8x32xf32>
    %c0_357 = arith.constant 0 : index
    %c0_358 = arith.constant 0 : index
    %1277 = vector.load %arg22[%c0_357, %c0_358] : memref<1x32xf32, #tpu.memory_space<vmem>>, vector<1x32xf32>
    %1278 = vector.broadcast %1277 : vector<1x32xf32> to vector<8x32xf32>
    %1279 = arith.addf %1276, %1278 : vector<8x32xf32>
    %1280 = arith.truncf %1273 : vector<8x32xf32> to vector<8x32xbf16>
    %c0_359 = arith.constant 0 : index
    %c0_360 = arith.constant 0 : index
    %1281 = vector.load %arg23[%c0_359, %c0_360] : memref<32x32xbf16, #tpu.memory_space<vmem>>, vector<32x32xbf16>
    %cst_361 = arith.constant dense<0.000000e+00> : vector<8x32xf32>
    %1282 = tpu.matmul %1280, %1281, %cst_361 {dimension_numbers = #tpu.dot_dimension_numbers<[1], [0], [0], [1], [0, 0, 1, 1], [], []>} : vector<8x32xbf16>, vector<32x32xbf16>, vector<8x32xf32> -> vector<8x32xf32>
    %c0_362 = arith.constant 0 : index
    %c0_363 = arith.constant 0 : index
    %1283 = vector.load %arg24[%c0_362, %c0_363] : memref<1x32xf32, #tpu.memory_space<vmem>>, vector<1x32xf32>
    %1284 = vector.broadcast %1283 : vector<1x32xf32> to vector<8x32xf32>
    %1285 = arith.addf %1282, %1284 : vector<8x32xf32>
    %c0_364 = arith.constant 0 : index
    %c0_365 = arith.constant 0 : index
    %1286 = vector.load %arg25[%c0_364, %c0_365] : memref<1x32xf32, #tpu.memory_space<vmem>>, vector<1x32xf32>
    %c0_366 = arith.constant 0 : index
    %c0_367 = arith.constant 0 : index
    %1287 = vector.load %arg26[%c0_366, %c0_367] : memref<1x32xf32, #tpu.memory_space<vmem>>, vector<1x32xf32>
    %1288 = arith.addf %1279, %1 : vector<8x32xf32>
    %cst_368 = arith.constant dense<0.000000e+00> : vector<8xf32>
    %1289 = vector.multi_reduction <add>, %1288, %cst_368 [1] : vector<8x32xf32> to vector<8xf32>
    %1290 = vector.shape_cast %1289 : vector<8xf32> to vector<8x1xf32>
    %cst_369 = arith.constant 3.200000e+01 : f32
    %1291 = vector.broadcast %cst_369 : f32 to vector<8x1xf32>
    %1292 = arith.divf %1290, %1291 : vector<8x1xf32>
    %1293 = vector.broadcast %1292 : vector<8x1xf32> to vector<8x32xf32>
    %1294 = arith.subf %1288, %1293 : vector<8x32xf32>
    %1295 = arith.mulf %1294, %1294 : vector<8x32xf32>
    %cst_370 = arith.constant dense<0.000000e+00> : vector<8xf32>
    %1296 = vector.multi_reduction <add>, %1295, %cst_370 [1] : vector<8x32xf32> to vector<8xf32>
    %1297 = vector.shape_cast %1296 : vector<8xf32> to vector<8x1xf32>
    %cst_371 = arith.constant 3.200000e+01 : f32
    %1298 = vector.broadcast %cst_371 : f32 to vector<8x1xf32>
    %1299 = arith.divf %1297, %1298 : vector<8x1xf32>
    %1300 = vector.broadcast %1292 : vector<8x1xf32> to vector<8x32xf32>
    %1301 = arith.subf %1288, %1300 : vector<8x32xf32>
    %1302 = vector.broadcast %1286 : vector<1x32xf32> to vector<8x32xf32>
    %1303 = arith.mulf %1302, %1301 : vector<8x32xf32>
    %cst_372 = arith.constant 9.99999996E-13 : f32
    %1304 = vector.broadcast %cst_372 : f32 to vector<8x1xf32>
    %1305 = arith.addf %1299, %1304 : vector<8x1xf32>
    %1306 = math.sqrt %1305 : vector<8x1xf32>
    %1307 = vector.broadcast %1306 : vector<8x1xf32> to vector<8x32xf32>
    %1308 = arith.divf %1303, %1307 : vector<8x32xf32>
    %1309 = vector.broadcast %1287 : vector<1x32xf32> to vector<8x32xf32>
    %1310 = arith.addf %1308, %1309 : vector<8x32xf32>
    %c0_373 = arith.constant 0 : index
    %c0_374 = arith.constant 0 : index
    %c0_375 = arith.constant 0 : index
    %1311 = vector.load %arg27[%c0_373, %c0_374, %c0_375] : memref<1x8x32xf32, #tpu.memory_space<vmem>>, vector<1x8x32xf32>
    %1312 = vector.shape_cast %1311 : vector<1x8x32xf32> to vector<8x32xf32>
    %1313 = vector.shape_cast %1310 : vector<8x32xf32> to vector<1x8x32xf32>
    tpu.vector_store %arg27[%c0_373, %c0_374, %c0_375], %1313 {strides = array<i32>} : memref<1x8x32xf32, #tpu.memory_space<vmem>>, vector<1x8x32xf32>,
    %1314 = arith.addf %1285, %3 : vector<8x32xf32>
    %cst_376 = arith.constant dense<0.000000e+00> : vector<8xf32>
    %1315 = vector.multi_reduction <add>, %1314, %cst_376 [1] : vector<8x32xf32> to vector<8xf32>
    %1316 = vector.shape_cast %1315 : vector<8xf32> to vector<8x1xf32>
    %cst_377 = arith.constant 3.200000e+01 : f32
    %1317 = vector.broadcast %cst_377 : f32 to vector<8x1xf32>
    %1318 = arith.divf %1316, %1317 : vector<8x1xf32>
    %1319 = vector.broadcast %1318 : vector<8x1xf32> to vector<8x32xf32>
    %1320 = arith.subf %1314, %1319 : vector<8x32xf32>
    %1321 = arith.mulf %1320, %1320 : vector<8x32xf32>
    %cst_378 = arith.constant dense<0.000000e+00> : vector<8xf32>
    %1322 = vector.multi_reduction <add>, %1321, %cst_378 [1] : vector<8x32xf32> to vector<8xf32>
    %1323 = vector.shape_cast %1322 : vector<8xf32> to vector<8x1xf32>
    %cst_379 = arith.constant 3.200000e+01 : f32
    %1324 = vector.broadcast %cst_379 : f32 to vector<8x1xf32>
    %1325 = arith.divf %1323, %1324 : vector<8x1xf32>
    %1326 = vector.broadcast %1318 : vector<8x1xf32> to vector<8x32xf32>
    %1327 = arith.subf %1314, %1326 : vector<8x32xf32>
    %1328 = vector.broadcast %1286 : vector<1x32xf32> to vector<8x32xf32>
    %1329 = arith.mulf %1328, %1327 : vector<8x32xf32>
    %cst_380 = arith.constant 9.99999996E-13 : f32
    %1330 = vector.broadcast %cst_380 : f32 to vector<8x1xf32>
    %1331 = arith.addf %1325, %1330 : vector<8x1xf32>
    %1332 = math.sqrt %1331 : vector<8x1xf32>
    %1333 = vector.broadcast %1332 : vector<8x1xf32> to vector<8x32xf32>
    %1334 = arith.divf %1329, %1333 : vector<8x32xf32>
    %1335 = vector.broadcast %1287 : vector<1x32xf32> to vector<8x32xf32>
    %1336 = arith.addf %1334, %1335 : vector<8x32xf32>
    %c0_381 = arith.constant 0 : index
    %c0_382 = arith.constant 0 : index
    %c0_383 = arith.constant 0 : index
    %1337 = vector.load %arg28[%c0_381, %c0_382, %c0_383] : memref<1x8x32xf32, #tpu.memory_space<vmem>>, vector<1x8x32xf32>
    %1338 = vector.shape_cast %1337 : vector<1x8x32xf32> to vector<8x32xf32>
    %1339 = vector.shape_cast %1336 : vector<8x32xf32> to vector<1x8x32xf32>
    tpu.vector_store %arg28[%c0_381, %c0_382, %c0_383], %1339 {strides = array<i32>} : memref<1x8x32xf32, #tpu.memory_space<vmem>>, vector<1x8x32xf32>,
    return
  }
  func.func @transform_0(%arg0: i32) -> (i32, i32, i32) {
    %c0_i32 = arith.constant 0 : i32
    %c0_i32_0 = arith.constant 0 : i32
    %c0_i32_1 = arith.constant 0 : i32
    return %arg0, %c0_i32, %c0_i32_0 : i32, i32, i32
  }
  func.func @transform_1(%arg0: i32) -> (i32, i32, i32) {
    %c0_i32 = arith.constant 0 : i32
    %c0_i32_0 = arith.constant 0 : i32
    %c0_i32_1 = arith.constant 0 : i32
    return %arg0, %c0_i32, %c0_i32_0 : i32, i32, i32
  }
  func.func @transform_2(%arg0: i32) -> (i32, i32, i32) {
    %c0_i32 = arith.constant 0 : i32
    %c0_i32_0 = arith.constant 0 : i32
    %c0_i32_1 = arith.constant 0 : i32
    return %arg0, %c0_i32, %c0_i32_0 : i32, i32, i32
  }
  func.func @transform_3(%arg0: i32) -> (i32, i32, i32) {
    %c0_i32 = arith.constant 0 : i32
    %c0_i32_0 = arith.constant 0 : i32
    %c0_i32_1 = arith.constant 0 : i32
    return %arg0, %c0_i32, %c0_i32_0 : i32, i32, i32
  }
  func.func @transform_4(%arg0: i32) -> (i32, i32, i32) {
    %c0_i32 = arith.constant 0 : i32
    %c0_i32_0 = arith.constant 0 : i32
    %c0_i32_1 = arith.constant 0 : i32
    %c0_i32_2 = arith.constant 0 : i32
    return %c0_i32, %c0_i32_0, %c0_i32_1 : i32, i32, i32
  }
  func.func @transform_5(%arg0: i32) -> (i32, i32, i32) {
    %c0_i32 = arith.constant 0 : i32
    %c0_i32_0 = arith.constant 0 : i32
    %c0_i32_1 = arith.constant 0 : i32
    %c0_i32_2 = arith.constant 0 : i32
    return %c0_i32, %c0_i32_0, %c0_i32_1 : i32, i32, i32
  }
  func.func @transform_6(%arg0: i32) -> (i32, i32, i32) {
    %c0_i32 = arith.constant 0 : i32
    %c0_i32_0 = arith.constant 0 : i32
    %c0_i32_1 = arith.constant 0 : i32
    %c0_i32_2 = arith.constant 0 : i32
    return %c0_i32, %c0_i32_0, %c0_i32_1 : i32, i32, i32
  }
  func.func @transform_7(%arg0: i32) -> (i32, i32, i32) {
    %c0_i32 = arith.constant 0 : i32
    %c0_i32_0 = arith.constant 0 : i32
    %c0_i32_1 = arith.constant 0 : i32
    %c0_i32_2 = arith.constant 0 : i32
    return %c0_i32, %c0_i32_0, %c0_i32_1 : i32, i32, i32
  }
  func.func @transform_8(%arg0: i32) -> (i32, i32, i32) {
    %c0_i32 = arith.constant 0 : i32
    %c0_i32_0 = arith.constant 0 : i32
    %c0_i32_1 = arith.constant 0 : i32
    return %arg0, %c0_i32, %c0_i32_0 : i32, i32, i32
  }
  func.func @transform_9(%arg0: i32) -> (i32, i32, i32) {
    %c0_i32 = arith.constant 0 : i32
    %c0_i32_0 = arith.constant 0 : i32
    %c0_i32_1 = arith.constant 0 : i32
    return %arg0, %c0_i32, %c0_i32_0 : i32, i32, i32
  }
  func.func @transform_10(%arg0: i32) -> (i32, i32, i32, i32) {
    %c0_i32 = arith.constant 0 : i32
    %c0_i32_0 = arith.constant 0 : i32
    %c0_i32_1 = arith.constant 0 : i32
    %c0_i32_2 = arith.constant 0 : i32
    return %arg0, %c0_i32, %c0_i32_0, %c0_i32_1 : i32, i32, i32, i32
  }
  func.func @transform_11(%arg0: i32) -> (i32, i32, i32, i32) {
    %c0_i32 = arith.constant 0 : i32
    %c0_i32_0 = arith.constant 0 : i32
    %c0_i32_1 = arith.constant 0 : i32
    %c0_i32_2 = arith.constant 0 : i32
    return %arg0, %c0_i32, %c0_i32_0, %c0_i32_1 : i32, i32, i32, i32
  }
  func.func @transform_12(%arg0: i32) -> (i32, i32, i32, i32) {
    %c0_i32 = arith.constant 0 : i32
    %c0_i32_0 = arith.constant 0 : i32
    %c0_i32_1 = arith.constant 0 : i32
    %c0_i32_2 = arith.constant 0 : i32
    return %arg0, %c0_i32, %c0_i32_0, %c0_i32_1 : i32, i32, i32, i32
  }
  func.func @transform_13(%arg0: i32) -> (i32, i32, i32, i32) {
    %c0_i32 = arith.constant 0 : i32
    %c0_i32_0 = arith.constant 0 : i32
    %c0_i32_1 = arith.constant 0 : i32
    %c0_i32_2 = arith.constant 0 : i32
    return %arg0, %c0_i32, %c0_i32_0, %c0_i32_1 : i32, i32, i32, i32
  }
  func.func @transform_14(%arg0: i32) -> (i32, i32, i32) {
    %c0_i32 = arith.constant 0 : i32
    %c0_i32_0 = arith.constant 0 : i32
    %c0_i32_1 = arith.constant 0 : i32
    return %arg0, %c0_i32, %c0_i32_0 : i32, i32, i32
  }
  func.func @transform_15(%arg0: i32) -> (i32, i32, i32) {
    %c0_i32 = arith.constant 0 : i32
    %c0_i32_0 = arith.constant 0 : i32
    %c0_i32_1 = arith.constant 0 : i32
    return %arg0, %c0_i32, %c0_i32_0 : i32, i32, i32
  }
  func.func @transform_16(%arg0: i32) -> (i32, i32, i32) {
    %c0_i32 = arith.constant 0 : i32
    %c0_i32_0 = arith.constant 0 : i32
    %c0_i32_1 = arith.constant 0 : i32
    return %arg0, %c0_i32, %c0_i32_0 : i32, i32, i32
  }
  func.func @transform_17(%arg0: i32) -> (i32, i32, i32) {
    %c0_i32 = arith.constant 0 : i32
    %c0_i32_0 = arith.constant 0 : i32
    %c0_i32_1 = arith.constant 0 : i32
    return %arg0, %c0_i32, %c0_i32_0 : i32, i32, i32
  }
  func.func @transform_18(%arg0: i32) -> (i32, i32, i32) {
    %c0_i32 = arith.constant 0 : i32
    %c0_i32_0 = arith.constant 0 : i32
    %c0_i32_1 = arith.constant 0 : i32
    %c0_i32_2 = arith.constant 0 : i32
    return %c0_i32, %c0_i32_0, %c0_i32_1 : i32, i32, i32
  }
  func.func @transform_19(%arg0: i32) -> (i32, i32, i32) {
    %c0_i32 = arith.constant 0 : i32
    %c0_i32_0 = arith.constant 0 : i32
    %c0_i32_1 = arith.constant 0 : i32
    %c0_i32_2 = arith.constant 0 : i32
    return %c0_i32, %c0_i32_0, %c0_i32_1 : i32, i32, i32
  }
  func.func @transform_20(%arg0: i32) -> (i32, i32) {
    %c0_i32 = arith.constant 0 : i32
    %c0_i32_0 = arith.constant 0 : i32
    %c0_i32_1 = arith.constant 0 : i32
    return %c0_i32, %c0_i32_0 : i32, i32
  }
  func.func @transform_21(%arg0: i32) -> (i32, i32) {
    %c0_i32 = arith.constant 0 : i32
    %c0_i32_0 = arith.constant 0 : i32
    %c0_i32_1 = arith.constant 0 : i32
    return %c0_i32, %c0_i32_0 : i32, i32
  }
  func.func @transform_22(%arg0: i32) -> (i32, i32) {
    %c0_i32 = arith.constant 0 : i32
    %c0_i32_0 = arith.constant 0 : i32
    %c0_i32_1 = arith.constant 0 : i32
    return %c0_i32, %c0_i32_0 : i32, i32
  }
  func.func @transform_23(%arg0: i32) -> (i32, i32) {
    %c0_i32 = arith.constant 0 : i32
    %c0_i32_0 = arith.constant 0 : i32
    %c0_i32_1 = arith.constant 0 : i32
    return %c0_i32, %c0_i32_0 : i32, i32
  }
  func.func @transform_24(%arg0: i32) -> (i32, i32) {
    %c0_i32 = arith.constant 0 : i32
    %c0_i32_0 = arith.constant 0 : i32
    %c0_i32_1 = arith.constant 0 : i32
    return %c0_i32, %c0_i32_0 : i32, i32
  }
  func.func @transform_25(%arg0: i32) -> (i32, i32) {
    %c0_i32 = arith.constant 0 : i32
    %c0_i32_0 = arith.constant 0 : i32
    %c0_i32_1 = arith.constant 0 : i32
    return %c0_i32, %c0_i32_0 : i32, i32
  }
  func.func @transform_26(%arg0: i32) -> (i32, i32, i32) {
    %c0_i32 = arith.constant 0 : i32
    %c0_i32_0 = arith.constant 0 : i32
    %c0_i32_1 = arith.constant 0 : i32
    return %arg0, %c0_i32, %c0_i32_0 : i32, i32, i32
  }
  func.func @transform_27(%arg0: i32) -> (i32, i32, i32) {
    %c0_i32 = arith.constant 0 : i32
    %c0_i32_0 = arith.constant 0 : i32
    %c0_i32_1 = arith.constant 0 : i32
    return %arg0, %c0_i32, %c0_i32_0 : i32, i32, i32
  }
  func.func @transform_28(%arg0: i32) -> (i32, i32, i32, i32) {
    %c0_i32 = arith.constant 0 : i32
    %c0_i32_0 = arith.constant 0 : i32
    %c0_i32_1 = arith.constant 0 : i32
    %c0_i32_2 = arith.constant 0 : i32
    return %arg0, %c0_i32, %c0_i32_0, %c0_i32_1 : i32, i32, i32, i32
  }
}

</mosaic_0001>

<llo_original>
// kernel: tpu_custom_call.1
$region0: #{tpu_custom_call.1}
  #allocation0 [shape = 'u32[]', space=smem, size = 0x4, offset = 0x4, fixed_abs, tag = 'smem constant byte address 0x4 - core index']
  #allocation1 [shape = 'u32[144,128]{1,0:T(1,128)}', space=vmem, size = 0x12000, scoped, tag = 'internal scratch']
  %s0 = inlined_call_operand.hbm [shape: f32[2,8,32], index: 0, kind: input, shape index: {}]
  %s1 = inlined_call_operand.hbm [shape: f32[2,8,32], index: 1, kind: input, shape index: {}]
  %s2 = inlined_call_operand.hbm [shape: f32[2,8,32], index: 2, kind: input, shape index: {}]
  %s3 = inlined_call_operand.hbm [shape: f32[2,8,32], index: 3, kind: input, shape index: {}]
  %s4 = inlined_call_operand.vmem [shape: bf16[3,32,32], index: 4, kind: input, shape index: {}]
  %s5 = inlined_call_operand.vmem [shape: bf16[3,32,32], index: 5, kind: input, shape index: {}]
  %s6 = inlined_call_operand.vmem [shape: bf16[3,32,32], index: 6, kind: input, shape index: {}]
  %s7 = inlined_call_operand.vmem [shape: bf16[3,32,32], index: 7, kind: input, shape index: {}]
  %s8 = inlined_call_operand.vmem [shape: f32[2,8,32], index: 8, kind: input, shape index: {}]
  %s9 = inlined_call_operand.hbm [shape: f32[2,8,32], index: 9, kind: input, shape index: {}]
  %s10 = inlined_call_operand.vmem [shape: f32[2,4,3,24], index: 10, kind: input, shape index: {}]
  %s11 = inlined_call_operand.vmem [shape: f32[2,4,3,24], index: 11, kind: input, shape index: {}]
  %s12 = inlined_call_operand.vmem [shape: f32[2,4,3,24], index: 12, kind: input, shape index: {}]
  %s13 = inlined_call_operand.vmem [shape: f32[2,4,3,24], index: 13, kind: input, shape index: {}]
  %s14 = inlined_call_operand.vmem [shape: f32[2,8,3], index: 14, kind: input, shape index: {}]
  %s15 = inlined_call_operand.vmem [shape: f32[2,3,8], index: 15, kind: input, shape index: {}]
  %s16 = inlined_call_operand.vmem [shape: f32[2,8,1], index: 16, kind: input, shape index: {}]
  %s17 = inlined_call_operand.hbm [shape: f32[2,1,8], index: 17, kind: input, shape index: {}]
  %s18 = inlined_call_operand.vmem [shape: f32[2,8,8], index: 18, kind: input, shape index: {}]
  %s19 = inlined_call_operand.hbm [shape: f32[2,1,8], index: 19, kind: input, shape index: {}]
  %s20 = inlined_call_operand.vmem [shape: bf16[32,32], index: 20, kind: input, shape index: {}]
  %s21 = inlined_call_operand.vmem [shape: f32[1,32], index: 21, kind: input, shape index: {}]
  %s22 = inlined_call_operand.vmem [shape: bf16[32,32], index: 22, kind: input, shape index: {}]
  %s23 = inlined_call_operand.vmem [shape: f32[1,32], index: 23, kind: input, shape index: {}]
  %s24 = inlined_call_operand.vmem [shape: f32[1,32], index: 24, kind: input, shape index: {}]
  %s25 = inlined_call_operand.vmem [shape: f32[1,32], index: 25, kind: input, shape index: {}]
  %s26 = inlined_call_operand.hbm [shape: f32[2,8,32], index: 26, kind: output, shape index: {0}]
  %s27 = inlined_call_operand.hbm [shape: f32[2,8,32], index: 27, kind: output, shape index: {1}]
  %s28 = inlined_call_operand.hbm [shape: f32[2,4,8,8], index: 28, kind: output, shape index: {2}]
  %29 = xla_tuple %s26, %s27, %s28
  %s30 = sld [smem:[#allocation0]]
  $region181: #{tpu_custom_call.1} parent=0
    _
  %s32 = ssub.s32 1, %s30
  %s33 = scalar_select 0, %s32, %s30
  $region1: #{tpu_custom_call.1} parent=0
    #allocation2 [shape = 'u8[8192]{0}', space=vmem, size = 0x2000, scoped, tag = 'input window, operand 0']
    #allocation3 [shape = 's32[2]{0}', space=sflag, size = 0x8, scoped, tag = 'scoped memory for tpu_custom_call.1']
    #allocation4 [shape = 's32[2]{0}', space=sflag, size = 0x8, scoped, tag = 'scoped memory for tpu_custom_call.1']
    #allocation5 [shape = 'u8[8192]{0}', space=vmem, size = 0x2000, scoped, tag = 'input window, operand 1']
    #allocation6 [shape = 's32[2]{0}', space=sflag, size = 0x8, scoped, tag = 'scoped memory for tpu_custom_call.1']
    #allocation7 [shape = 'u8[8192]{0}', space=vmem, size = 0x2000, scoped, tag = 'input window, operand 2']
    #allocation8 [shape = 'u8[8192]{0}', space=vmem, size = 0x2000, scoped, tag = 'input window, operand 3']
    #allocation9 [shape = 's32[2]{0}', space=sflag, size = 0x8, scoped, tag = 'scoped memory for tpu_custom_call.1']
    #allocation10 [shape = 'u8[8192]{0}', space=vmem, size = 0x2000, scoped, tag = 'input window, operand 9']
    #allocation11 [shape = 'u8[1024]{0}', space=vmem, size = 0x400, scoped, tag = 'input window, operand 17']
    #allocation12 [shape = 's32[2]{0}', space=sflag, size = 0x8, scoped, tag = 'scoped memory for tpu_custom_call.1']
    #allocation13 [shape = 'u8[1024]{0}', space=vmem, size = 0x400, scoped, tag = 'input window, operand 19, single buffered']
    #allocation14 [shape = 'u8[8192]{0}', space=vmem, size = 0x2000, scoped, tag = 'output window, operand 0']
    #allocation15 [shape = 'u8[8192]{0}', space=vmem, size = 0x2000, scoped, tag = 'output window, operand 1']
    #allocation16 [shape = 's32[2]{0}', space=sflag, size = 0x8, scoped, tag = 'scoped memory for tpu_custom_call.1']
    #allocation17 [shape = 'u8[32768]{0}', space=vmem, size = 0x8000, scoped, tag = 'output window, operand 2']
    %34 = vsyncpa [#allocation3], 0
    %s35 = scalar_lea.sflag [#allocation3], 1
    %36 = vsyncpa %s35, 0
    %37 = vsyncpa [#allocation6], 0
    %s38 = scalar_lea.sflag [#allocation6], 1
    %39 = vsyncpa %s38, 0
    %40 = vsyncpa [#allocation9], 0
    %s41 = scalar_lea.sflag [#allocation9], 1
    %42 = vsyncpa %s41, 0
    %43 = vsyncpa [#allocation12], 0
    %s44 = scalar_lea.sflag [#allocation12], 1
    %45 = vsyncpa %s44, 0
    %46 = vsyncpa [#allocation4], 0
    %s47 = scalar_lea.sflag [#allocation4], 1
    %48 = vsyncpa %s47, 0
    %49 = vsyncpa [#allocation16], 0
    %s50 = scalar_lea.sflag [#allocation16], 1
    %51 = vsyncpa %s50, 0
    loop: start=0, step=1, limit=4
    $region2: #{tpu_custom_call.1} parent=1 // loop_pre_header
      _
    $region3: #{tpu_custom_call.1} parent=1 // loop_header
      %s53 = sphi 0, %s57
      %p54 = scmp.ge.s32.totalorder %s53, 4
      %s63 = sphi 0, %s65
      %s66 = sphi 0, %s63
      %s67 = sphi 0, %s66
      %s83 = sphi 0, %s67
      %s89 = sphi 0, %s91
      %s92 = sphi 0, %s89
      %s93 = sphi 0, %s92
      %s109 = sphi 0, %s93
      %s115 = sphi 0, %s117
      %s118 = sphi 0, %s115
      %s119 = sphi 0, %s118
      %s135 = sphi 0, %s119
      %s141 = sphi 0, %s143
      %s144 = sphi 0, %s141
      %s145 = sphi 0, %s144
      %s161 = sphi 0, %s145
      %s165 = sphi 0, %s165
      %s167 = sphi 0, %s165
      %s168 = sphi 0, %s167
      %s182 = sphi 0, %s168
      %s186 = sphi 0, %s186
      %s188 = sphi 0, %s186
      %s189 = sphi 0, %s188
      %s203 = sphi 0, %s189
      %s207 = sphi 0, %s207
      %s209 = sphi 0, %s207
      %s210 = sphi 0, %s209
      %s224 = sphi 0, %s210
      %s228 = sphi 0, %s228
      %s230 = sphi 0, %s228
      %s231 = sphi 0, %s230
      %s245 = sphi 0, %s231
      %s251 = sphi 0, %s253
      %s254 = sphi 0, %s251
      %s255 = sphi 0, %s254
      %s271 = sphi 0, %s255
      %s277 = sphi 0, %s279
      %s280 = sphi 0, %s277
      %s281 = sphi 0, %s280
      %s297 = sphi 0, %s281
      %s303 = sphi 0, %s305
      %s306 = sphi 0, %s303
      %s307 = sphi 0, %s306
      %s323 = sphi 0, %s307
      %s329 = sphi 0, %s331
      %s332 = sphi 0, %s329
      %s333 = sphi 0, %s332
      %s349 = sphi 0, %s333
      %s355 = sphi 0, %s357
      %s358 = sphi 0, %s355
      %s359 = sphi 0, %s358
      %s375 = sphi 0, %s359
      %s381 = sphi 0, %s383
      %s384 = sphi 0, %s381
      %s385 = sphi 0, %s384
      %s401 = sphi 0, %s385
      %s407 = sphi 0, %s409
      %s410 = sphi 0, %s407
      %s411 = sphi 0, %s410
      %s427 = sphi 0, %s411
      %s433 = sphi 0, %s435
      %s436 = sphi 0, %s433
      %s437 = sphi 0, %s436
      %s453 = sphi 0, %s437
      %s459 = sphi 0, %s461
      %s462 = sphi 0, %s459
      %s463 = sphi 0, %s462
      %s479 = sphi 0, %s463
      %s485 = sphi 0, %s487
      %s488 = sphi 0, %s485
      %s489 = sphi 0, %s488
      %s505 = sphi 0, %s489
      %s509 = sphi 0, %s509
      %s511 = sphi 0, %s509
      %s512 = sphi 0, %s511
      %s526 = sphi 0, %s512
      %s530 = sphi 0, %s530
      %s532 = sphi 0, %s530
      %s533 = sphi 0, %s532
      %s547 = sphi 0, %s533
      %s551 = sphi 0, %s551
      %s553 = sphi 0, %s551
      %s554 = sphi 0, %s553
      %s568 = sphi 0, %s554
      %s572 = sphi 0, %s572
      %s574 = sphi 0, %s572
      %s575 = sphi 0, %s574
      %s589 = sphi 0, %s575
      %s593 = sphi 0, %s593
      %s595 = sphi 0, %s593
      %s596 = sphi 0, %s595
      %s610 = sphi 0, %s596
      %s614 = sphi 0, %s614
      %s616 = sphi 0, %s614
      %s617 = sphi 0, %s616
      %s631 = sphi 0, %s617
      %s635 = sphi 0, %s635
      %s637 = sphi 0, %s635
      %s638 = sphi 0, %s637
      %s652 = sphi 0, %s638
      %s656 = sphi 0, %s656
      %s658 = sphi 0, %s656
      %s659 = sphi 0, %s658
      %s673 = sphi 0, %s659
      %s679 = sphi 0, %s681
      %s682 = sphi 0, %s679
      %s683 = sphi 0, %s682
      %s699 = sphi 0, %s683
      %s705 = sphi 0, %s707
      %s708 = sphi 0, %s705
      %s709 = sphi 0, %s708
      %s725 = sphi 0, %s709
      %s731 = sphi 0, %s733
      %s734 = sphi 0, %s731
      %s735 = sphi 0, %s734
      %s751 = sphi 0, %s735
    $region4: #{tpu_custom_call.1} parent=1 // loop_header_branch
      %56 = sbr.rel (%p54) target = $region8
    $region5: #{tpu_custom_call.1} parent=1 // loop_body
      %s58 = ssub.s32 %s53, 1
      %s59 = ssub.s32 %s53, 2
      %s60 = sadd.s32 %s53, 1
      %s61 = ssub.s32 %s53, %s60
      %p62 = scmp.eq.s32.totalorder %s61, 0
      %s64 = sadd.s32 %s63, 1
      %s65 = scalar_select %p62, %s63, %s64
      %p68 = pneg %p62
      %p69 = scmp.eq.s32.totalorder %s53, 1
      %p70 = por %p68, %p69
      %p71 = scmp.ne.s32.totalorder %s63, %s66
      %p72 = scmp.eq.s32.totalorder %s53, 0
      %p73 = por %p71, %p72
      %p74 = scmp.ne.s32.totalorder %s63, %s66
      %p75 = scmp.eq.s32.totalorder %s58, 1
      %p76 = por %p74, %p75
      %p77 = scmp.ne.s32.totalorder %s66, %s67
      %p78 = scmp.eq.s32.totalorder %s58, 0
      %p79 = por %p77, %p78
      %p80 = scmp.ne.s32.totalorder %s66, %s67
      %p81 = scmp.eq.s32.totalorder %s59, 1
      %p82 = por %p80, %p81
      %p84 = scmp.ne.s32.totalorder %s67, %s83
      %p85 = scmp.eq.s32.totalorder %s59, 0
      %p86 = por %p84, %p85
      %s87 = ssub.s32 %s53, %s60
      %p88 = scmp.eq.s32.totalorder %s87, 0
      %s90 = sadd.s32 %s89, 1
      %s91 = scalar_select %p88, %s89, %s90
      %p94 = pneg %p88
      %p95 = scmp.eq.s32.totalorder %s53, 1
      %p96 = por %p94, %p95
      %p97 = scmp.ne.s32.totalorder %s89, %s92
      %p98 = scmp.eq.s32.totalorder %s53, 0
      %p99 = por %p97, %p98
      %p100 = scmp.ne.s32.totalorder %s89, %s92
      %p101 = scmp.eq.s32.totalorder %s58, 1
      %p102 = por %p100, %p101
      %p103 = scmp.ne.s32.totalorder %s92, %s93
      %p104 = scmp.eq.s32.totalorder %s58, 0
      %p105 = por %p103, %p104
      %p106 = scmp.ne.s32.totalorder %s92, %s93
      %p107 = scmp.eq.s32.totalorder %s59, 1
      %p108 = por %p106, %p107
      %p110 = scmp.ne.s32.totalorder %s93, %s109
      %p111 = scmp.eq.s32.totalorder %s59, 0
      %p112 = por %p110, %p111
      %s113 = ssub.s32 %s53, %s60
      %p114 = scmp.eq.s32.totalorder %s113, 0
      %s116 = sadd.s32 %s115, 1
      %s117 = scalar_select %p114, %s115, %s116
      %p120 = pneg %p114
      %p121 = scmp.eq.s32.totalorder %s53, 1
      %p122 = por %p120, %p121
      %p123 = scmp.ne.s32.totalorder %s115, %s118
      %p124 = scmp.eq.s32.totalorder %s53, 0
      %p125 = por %p123, %p124
      %p126 = scmp.ne.s32.totalorder %s115, %s118
      %p127 = scmp.eq.s32.totalorder %s58, 1
      %p128 = por %p126, %p127
      %p129 = scmp.ne.s32.totalorder %s118, %s119
      %p130 = scmp.eq.s32.totalorder %s58, 0
      %p131 = por %p129, %p130
      %p132 = scmp.ne.s32.totalorder %s118, %s119
      %p133 = scmp.eq.s32.totalorder %s59, 1
      %p134 = por %p132, %p133
      %p136 = scmp.ne.s32.totalorder %s119, %s135
      %p137 = scmp.eq.s32.totalorder %s59, 0
      %p138 = por %p136, %p137
      %s139 = ssub.s32 %s53, %s60
      %p140 = scmp.eq.s32.totalorder %s139, 0
      %s142 = sadd.s32 %s141, 1
      %s143 = scalar_select %p140, %s141, %s142
      %p146 = pneg %p140
      %p147 = scmp.eq.s32.totalorder %s53, 1
      %p148 = por %p146, %p147
      %p149 = scmp.ne.s32.totalorder %s141, %s144
      %p150 = scmp.eq.s32.totalorder %s53, 0
      %p151 = por %p149, %p150
      %p152 = scmp.ne.s32.totalorder %s141, %s144
      %p153 = scmp.eq.s32.totalorder %s58, 1
      %p154 = por %p152, %p153
      %p155 = scmp.ne.s32.totalorder %s144, %s145
      %p156 = scmp.eq.s32.totalorder %s58, 0
      %p157 = por %p155, %p156
      %p158 = scmp.ne.s32.totalorder %s144, %s145
      %p159 = scmp.eq.s32.totalorder %s59, 1
      %p160 = por %p158, %p159
      %p162 = scmp.ne.s32.totalorder %s145, %s161
      %p163 = scmp.eq.s32.totalorder %s59, 0
      %p164 = por %p162, %p163
      %s166 = sadd.s32 %s165, 1
      %p169 = scmp.eq.s32.totalorder %s53, 1
      %p170 = scmp.ne.s32.totalorder %s165, %s167
      %p171 = scmp.eq.s32.totalorder %s53, 0
      %p172 = por %p170, %p171
      %p173 = scmp.ne.s32.totalorder %s165, %s167
      %p174 = scmp.eq.s32.totalorder %s58, 1
      %p175 = por %p173, %p174
      %p176 = scmp.ne.s32.totalorder %s167, %s168
      %p177 = scmp.eq.s32.totalorder %s58, 0
      %p178 = por %p176, %p177
      %p179 = scmp.ne.s32.totalorder %s167, %s168
      %p180 = scmp.eq.s32.totalorder %s59, 1
      %p181 = por %p179, %p180
      %p183 = scmp.ne.s32.totalorder %s168, %s182
      %p184 = scmp.eq.s32.totalorder %s59, 0
      %p185 = por %p183, %p184
      %s187 = sadd.s32 %s186, 1
      %p190 = scmp.eq.s32.totalorder %s53, 1
      %p191 = scmp.ne.s32.totalorder %s186, %s188
      %p192 = scmp.eq.s32.totalorder %s53, 0
      %p193 = por %p191, %p192
      %p194 = scmp.ne.s32.totalorder %s186, %s188
      %p195 = scmp.eq.s32.totalorder %s58, 1
      %p196 = por %p194, %p195
      %p197 = scmp.ne.s32.totalorder %s188, %s189
      %p198 = scmp.eq.s32.totalorder %s58, 0
      %p199 = por %p197, %p198
      %p200 = scmp.ne.s32.totalorder %s188, %s189
      %p201 = scmp.eq.s32.totalorder %s59, 1
      %p202 = por %p200, %p201
      %p204 = scmp.ne.s32.totalorder %s189, %s203
      %p205 = scmp.eq.s32.totalorder %s59, 0
      %p206 = por %p204, %p205
      %s208 = sadd.s32 %s207, 1
      %p211 = scmp.eq.s32.totalorder %s53, 1
      %p212 = scmp.ne.s32.totalorder %s207, %s209
      %p213 = scmp.eq.s32.totalorder %s53, 0
      %p214 = por %p212, %p213
      %p215 = scmp.ne.s32.totalorder %s207, %s209
      %p216 = scmp.eq.s32.totalorder %s58, 1
      %p217 = por %p215, %p216
      %p218 = scmp.ne.s32.totalorder %s209, %s210
      %p219 = scmp.eq.s32.totalorder %s58, 0
      %p220 = por %p218, %p219
      %p221 = scmp.ne.s32.totalorder %s209, %s210
      %p222 = scmp.eq.s32.totalorder %s59, 1
      %p223 = por %p221, %p222
      %p225 = scmp.ne.s32.totalorder %s210, %s224
      %p226 = scmp.eq.s32.totalorder %s59, 0
      %p227 = por %p225, %p226
      %s229 = sadd.s32 %s228, 1
      %p232 = scmp.eq.s32.totalorder %s53, 1
      %p233 = scmp.ne.s32.totalorder %s228, %s230
      %p234 = scmp.eq.s32.totalorder %s53, 0
      %p235 = por %p233, %p234
      %p236 = scmp.ne.s32.totalorder %s228, %s230
      %p237 = scmp.eq.s32.totalorder %s58, 1
      %p238 = por %p236, %p237
      %p239 = scmp.ne.s32.totalorder %s230, %s231
      %p240 = scmp.eq.s32.totalorder %s58, 0
      %p241 = por %p239, %p240
      %p242 = scmp.ne.s32.totalorder %s230, %s231
      %p243 = scmp.eq.s32.totalorder %s59, 1
      %p244 = por %p242, %p243
      %p246 = scmp.ne.s32.totalorder %s231, %s245
      %p247 = scmp.eq.s32.totalorder %s59, 0
      %p248 = por %p246, %p247
      %s249 = ssub.s32 %s53, %s60
      %p250 = scmp.eq.s32.totalorder %s249, 0
      %s252 = sadd.s32 %s251, 1
      %s253 = scalar_select %p250, %s251, %s252
      %p256 = pneg %p250
      %p257 = scmp.eq.s32.totalorder %s53, 1
      %p258 = por %p256, %p257
      %p259 = scmp.ne.s32.totalorder %s251, %s254
      %p260 = scmp.eq.s32.totalorder %s53, 0
      %p261 = por %p259, %p260
      %p262 = scmp.ne.s32.totalorder %s251, %s254
      %p263 = scmp.eq.s32.totalorder %s58, 1
      %p264 = por %p262, %p263
      %p265 = scmp.ne.s32.totalorder %s254, %s255
      %p266 = scmp.eq.s32.totalorder %s58, 0
      %p267 = por %p265, %p266
      %p268 = scmp.ne.s32.totalorder %s254, %s255
      %p269 = scmp.eq.s32.totalorder %s59, 1
      %p270 = por %p268, %p269
      %p272 = scmp.ne.s32.totalorder %s255, %s271
      %p273 = scmp.eq.s32.totalorder %s59, 0
      %p274 = por %p272, %p273
      %s275 = ssub.s32 %s53, %s60
      %p276 = scmp.eq.s32.totalorder %s275, 0
      %s278 = sadd.s32 %s277, 1
      %s279 = scalar_select %p276, %s277, %s278
      %p282 = pneg %p276
      %p283 = scmp.eq.s32.totalorder %s53, 1
      %p284 = por %p282, %p283
      %p285 = scmp.ne.s32.totalorder %s277, %s280
      %p286 = scmp.eq.s32.totalorder %s53, 0
      %p287 = por %p285, %p286
      %p288 = scmp.ne.s32.totalorder %s277, %s280
      %p289 = scmp.eq.s32.totalorder %s58, 1
      %p290 = por %p288, %p289
      %p291 = scmp.ne.s32.totalorder %s280, %s281
      %p292 = scmp.eq.s32.totalorder %s58, 0
      %p293 = por %p291, %p292
      %p294 = scmp.ne.s32.totalorder %s280, %s281
      %p295 = scmp.eq.s32.totalorder %s59, 1
      %p296 = por %p294, %p295
      %p298 = scmp.ne.s32.totalorder %s281, %s297
      %p299 = scmp.eq.s32.totalorder %s59, 0
      %p300 = por %p298, %p299
      %s301 = ssub.s32 %s53, %s60
      %p302 = scmp.eq.s32.totalorder %s301, 0
      %s304 = sadd.s32 %s303, 1
      %s305 = scalar_select %p302, %s303, %s304
      %p308 = pneg %p302
      %p309 = scmp.eq.s32.totalorder %s53, 1
      %p310 = por %p308, %p309
      %p311 = scmp.ne.s32.totalorder %s303, %s306
      %p312 = scmp.eq.s32.totalorder %s53, 0
      %p313 = por %p311, %p312
      %p314 = scmp.ne.s32.totalorder %s303, %s306
      %p315 = scmp.eq.s32.totalorder %s58, 1
      %p316 = por %p314, %p315
      %p317 = scmp.ne.s32.totalorder %s306, %s307
      %p318 = scmp.eq.s32.totalorder %s58, 0
      %p319 = por %p317, %p318
      %p320 = scmp.ne.s32.totalorder %s306, %s307
      %p321 = scmp.eq.s32.totalorder %s59, 1
      %p322 = por %p320, %p321
      %p324 = scmp.ne.s32.totalorder %s307, %s323
      %p325 = scmp.eq.s32.totalorder %s59, 0
      %p326 = por %p324, %p325
      %s327 = ssub.s32 %s53, %s60
      %p328 = scmp.eq.s32.totalorder %s327, 0
      %s330 = sadd.s32 %s329, 1
      %s331 = scalar_select %p328, %s329, %s330
      %p334 = pneg %p328
      %p335 = scmp.eq.s32.totalorder %s53, 1
      %p336 = por %p334, %p335
      %p337 = scmp.ne.s32.totalorder %s329, %s332
      %p338 = scmp.eq.s32.totalorder %s53, 0
      %p339 = por %p337, %p338
      %p340 = scmp.ne.s32.totalorder %s329, %s332
      %p341 = scmp.eq.s32.totalorder %s58, 1
      %p342 = por %p340, %p341
      %p343 = scmp.ne.s32.totalorder %s332, %s333
      %p344 = scmp.eq.s32.totalorder %s58, 0
      %p345 = por %p343, %p344
      %p346 = scmp.ne.s32.totalorder %s332, %s333
      %p347 = scmp.eq.s32.totalorder %s59, 1
      %p348 = por %p346, %p347
      %p350 = scmp.ne.s32.totalorder %s333, %s349
      %p351 = scmp.eq.s32.totalorder %s59, 0
      %p352 = por %p350, %p351
      %s353 = ssub.s32 %s53, %s60
      %p354 = scmp.eq.s32.totalorder %s353, 0
      %s356 = sadd.s32 %s355, 1
      %s357 = scalar_select %p354, %s355, %s356
      %p360 = pneg %p354
      %p361 = scmp.eq.s32.totalorder %s53, 1
      %p362 = por %p360, %p361
      %p363 = scmp.ne.s32.totalorder %s355, %s358
      %p364 = scmp.eq.s32.totalorder %s53, 0
      %p365 = por %p363, %p364
      %p366 = scmp.ne.s32.totalorder %s355, %s358
      %p367 = scmp.eq.s32.totalorder %s58, 1
      %p368 = por %p366, %p367
      %p369 = scmp.ne.s32.totalorder %s358, %s359
      %p370 = scmp.eq.s32.totalorder %s58, 0
      %p371 = por %p369, %p370
      %p372 = scmp.ne.s32.totalorder %s358, %s359
      %p373 = scmp.eq.s32.totalorder %s59, 1
      %p374 = por %p372, %p373
      %p376 = scmp.ne.s32.totalorder %s359, %s375
      %p377 = scmp.eq.s32.totalorder %s59, 0
      %p378 = por %p376, %p377
      %s379 = ssub.s32 %s53, %s60
      %p380 = scmp.eq.s32.totalorder %s379, 0
      %s382 = sadd.s32 %s381, 1
      %s383 = scalar_select %p380, %s381, %s382
      %p386 = pneg %p380
      %p387 = scmp.eq.s32.totalorder %s53, 1
      %p388 = por %p386, %p387
      %p389 = scmp.ne.s32.totalorder %s381, %s384
      %p390 = scmp.eq.s32.totalorder %s53, 0
      %p391 = por %p389, %p390
      %p392 = scmp.ne.s32.totalorder %s381, %s384
      %p393 = scmp.eq.s32.totalorder %s58, 1
      %p394 = por %p392, %p393
      %p395 = scmp.ne.s32.totalorder %s384, %s385
      %p396 = scmp.eq.s32.totalorder %s58, 0
      %p397 = por %p395, %p396
      %p398 = scmp.ne.s32.totalorder %s384, %s385
      %p399 = scmp.eq.s32.totalorder %s59, 1
      %p400 = por %p398, %p399
      %p402 = scmp.ne.s32.totalorder %s385, %s401
      %p403 = scmp.eq.s32.totalorder %s59, 0
      %p404 = por %p402, %p403
      %s405 = ssub.s32 %s53, %s60
      %p406 = scmp.eq.s32.totalorder %s405, 0
      %s408 = sadd.s32 %s407, 1
      %s409 = scalar_select %p406, %s407, %s408
      %p412 = pneg %p406
      %p413 = scmp.eq.s32.totalorder %s53, 1
      %p414 = por %p412, %p413
      %p415 = scmp.ne.s32.totalorder %s407, %s410
      %p416 = scmp.eq.s32.totalorder %s53, 0
      %p417 = por %p415, %p416
      %p418 = scmp.ne.s32.totalorder %s407, %s410
      %p419 = scmp.eq.s32.totalorder %s58, 1
      %p420 = por %p418, %p419
      %p421 = scmp.ne.s32.totalorder %s410, %s411
      %p422 = scmp.eq.s32.totalorder %s58, 0
      %p423 = por %p421, %p422
      %p424 = scmp.ne.s32.totalorder %s410, %s411
      %p425 = scmp.eq.s32.totalorder %s59, 1
      %p426 = por %p424, %p425
      %p428 = scmp.ne.s32.totalorder %s411, %s427
      %p429 = scmp.eq.s32.totalorder %s59, 0
      %p430 = por %p428, %p429
      %s431 = ssub.s32 %s53, %s60
      %p432 = scmp.eq.s32.totalorder %s431, 0
      %s434 = sadd.s32 %s433, 1
      %s435 = scalar_select %p432, %s433, %s434
      %p438 = pneg %p432
      %p439 = scmp.eq.s32.totalorder %s53, 1
      %p440 = por %p438, %p439
      %p441 = scmp.ne.s32.totalorder %s433, %s436
      %p442 = scmp.eq.s32.totalorder %s53, 0
      %p443 = por %p441, %p442
      %p444 = scmp.ne.s32.totalorder %s433, %s436
      %p445 = scmp.eq.s32.totalorder %s58, 1
      %p446 = por %p444, %p445
      %p447 = scmp.ne.s32.totalorder %s436, %s437
      %p448 = scmp.eq.s32.totalorder %s58, 0
      %p449 = por %p447, %p448
      %p450 = scmp.ne.s32.totalorder %s436, %s437
      %p451 = scmp.eq.s32.totalorder %s59, 1
      %p452 = por %p450, %p451
      %p454 = scmp.ne.s32.totalorder %s437, %s453
      %p455 = scmp.eq.s32.totalorder %s59, 0
      %p456 = por %p454, %p455
      %s457 = ssub.s32 %s53, %s60
      %p458 = scmp.eq.s32.totalorder %s457, 0
      %s460 = sadd.s32 %s459, 1
      %s461 = scalar_select %p458, %s459, %s460
      %p464 = pneg %p458
      %p465 = scmp.eq.s32.totalorder %s53, 1
      %p466 = por %p464, %p465
      %p467 = scmp.ne.s32.totalorder %s459, %s462
      %p468 = scmp.eq.s32.totalorder %s53, 0
      %p469 = por %p467, %p468
      %p470 = scmp.ne.s32.totalorder %s459, %s462
      %p471 = scmp.eq.s32.totalorder %s58, 1
      %p472 = por %p470, %p471
      %p473 = scmp.ne.s32.totalorder %s462, %s463
      %p474 = scmp.eq.s32.totalorder %s58, 0
      %p475 = por %p473, %p474
      %p476 = scmp.ne.s32.totalorder %s462, %s463
      %p477 = scmp.eq.s32.totalorder %s59, 1
      %p478 = por %p476, %p477
      %p480 = scmp.ne.s32.totalorder %s463, %s479
      %p481 = scmp.eq.s32.totalorder %s59, 0
      %p482 = por %p480, %p481
      %s483 = ssub.s32 %s53, %s60
      %p484 = scmp.eq.s32.totalorder %s483, 0
      %s486 = sadd.s32 %s485, 1
      %s487 = scalar_select %p484, %s485, %s486
      %p490 = pneg %p484
      %p491 = scmp.eq.s32.totalorder %s53, 1
      %p492 = por %p490, %p491
      %p493 = scmp.ne.s32.totalorder %s485, %s488
      %p494 = scmp.eq.s32.totalorder %s53, 0
      %p495 = por %p493, %p494
      %p496 = scmp.ne.s32.totalorder %s485, %s488
      %p497 = scmp.eq.s32.totalorder %s58, 1
      %p498 = por %p496, %p497
      %p499 = scmp.ne.s32.totalorder %s488, %s489
      %p500 = scmp.eq.s32.totalorder %s58, 0
      %p501 = por %p499, %p500
      %p502 = scmp.ne.s32.totalorder %s488, %s489
      %p503 = scmp.eq.s32.totalorder %s59, 1
      %p504 = por %p502, %p503
      %p506 = scmp.ne.s32.totalorder %s489, %s505
      %p507 = scmp.eq.s32.totalorder %s59, 0
      %p508 = por %p506, %p507
      %s510 = sadd.s32 %s509, 1
      %p513 = scmp.eq.s32.totalorder %s53, 1
      %p514 = scmp.ne.s32.totalorder %s509, %s511
      %p515 = scmp.eq.s32.totalorder %s53, 0
      %p516 = por %p514, %p515
      %p517 = scmp.ne.s32.totalorder %s509, %s511
      %p518 = scmp.eq.s32.totalorder %s58, 1
      %p519 = por %p517, %p518
      %p520 = scmp.ne.s32.totalorder %s511, %s512
      %p521 = scmp.eq.s32.totalorder %s58, 0
      %p522 = por %p520, %p521
      %p523 = scmp.ne.s32.totalorder %s511, %s512
      %p524 = scmp.eq.s32.totalorder %s59, 1
      %p525 = por %p523, %p524
      %p527 = scmp.ne.s32.totalorder %s512, %s526
      %p528 = scmp.eq.s32.totalorder %s59, 0
      %p529 = por %p527, %p528
      %s531 = sadd.s32 %s530, 1
      %p534 = scmp.eq.s32.totalorder %s53, 1
      %p535 = scmp.ne.s32.totalorder %s530, %s532
      %p536 = scmp.eq.s32.totalorder %s53, 0
      %p537 = por %p535, %p536
      %p538 = scmp.ne.s32.totalorder %s530, %s532
      %p539 = scmp.eq.s32.totalorder %s58, 1
      %p540 = por %p538, %p539
      %p541 = scmp.ne.s32.totalorder %s532, %s533
      %p542 = scmp.eq.s32.totalorder %s58, 0
      %p543 = por %p541, %p542
      %p544 = scmp.ne.s32.totalorder %s532, %s533
      %p545 = scmp.eq.s32.totalorder %s59, 1
      %p546 = por %p544, %p545
      %p548 = scmp.ne.s32.totalorder %s533, %s547
      %p549 = scmp.eq.s32.totalorder %s59, 0
      %p550 = por %p548, %p549
      %s552 = sadd.s32 %s551, 1
      %p555 = scmp.eq.s32.totalorder %s53, 1
      %p556 = scmp.ne.s32.totalorder %s551, %s553
      %p557 = scmp.eq.s32.totalorder %s53, 0
      %p558 = por %p556, %p557
      %p559 = scmp.ne.s32.totalorder %s551, %s553
      %p560 = scmp.eq.s32.totalorder %s58, 1
      %p561 = por %p559, %p560
      %p562 = scmp.ne.s32.totalorder %s553, %s554
      %p563 = scmp.eq.s32.totalorder %s58, 0
      %p564 = por %p562, %p563
      %p565 = scmp.ne.s32.totalorder %s553, %s554
      %p566 = scmp.eq.s32.totalorder %s59, 1
      %p567 = por %p565, %p566
      %p569 = scmp.ne.s32.totalorder %s554, %s568
      %p570 = scmp.eq.s32.totalorder %s59, 0
      %p571 = por %p569, %p570
      %s573 = sadd.s32 %s572, 1
      %p576 = scmp.eq.s32.totalorder %s53, 1
      %p577 = scmp.ne.s32.totalorder %s572, %s574
      %p578 = scmp.eq.s32.totalorder %s53, 0
      %p579 = por %p577, %p578
      %p580 = scmp.ne.s32.totalorder %s572, %s574
      %p581 = scmp.eq.s32.totalorder %s58, 1
      %p582 = por %p580, %p581
      %p583 = scmp.ne.s32.totalorder %s574, %s575
      %p584 = scmp.eq.s32.totalorder %s58, 0
      %p585 = por %p583, %p584
      %p586 = scmp.ne.s32.totalorder %s574, %s575
      %p587 = scmp.eq.s32.totalorder %s59, 1
      %p588 = por %p586, %p587
      %p590 = scmp.ne.s32.totalorder %s575, %s589
      %p591 = scmp.eq.s32.totalorder %s59, 0
      %p592 = por %p590, %p591
      %s594 = sadd.s32 %s593, 1
      %p597 = scmp.eq.s32.totalorder %s53, 1
      %p598 = scmp.ne.s32.totalorder %s593, %s595
      %p599 = scmp.eq.s32.totalorder %s53, 0
      %p600 = por %p598, %p599
      %p601 = scmp.ne.s32.totalorder %s593, %s595
      %p602 = scmp.eq.s32.totalorder %s58, 1
      %p603 = por %p601, %p602
      %p604 = scmp.ne.s32.totalorder %s595, %s596
      %p605 = scmp.eq.s32.totalorder %s58, 0
      %p606 = por %p604, %p605
      %p607 = scmp.ne.s32.totalorder %s595, %s596
      %p608 = scmp.eq.s32.totalorder %s59, 1
      %p609 = por %p607, %p608
      %p611 = scmp.ne.s32.totalorder %s596, %s610
      %p612 = scmp.eq.s32.totalorder %s59, 0
      %p613 = por %p611, %p612
      %s615 = sadd.s32 %s614, 1
      %p618 = scmp.eq.s32.totalorder %s53, 1
      %p619 = scmp.ne.s32.totalorder %s614, %s616
      %p620 = scmp.eq.s32.totalorder %s53, 0
      %p621 = por %p619, %p620
      %p622 = scmp.ne.s32.totalorder %s614, %s616
      %p623 = scmp.eq.s32.totalorder %s58, 1
      %p624 = por %p622, %p623
      %p625 = scmp.ne.s32.totalorder %s616, %s617
      %p626 = scmp.eq.s32.totalorder %s58, 0
      %p627 = por %p625, %p626
      %p628 = scmp.ne.s32.totalorder %s616, %s617
      %p629 = scmp.eq.s32.totalorder %s59, 1
      %p630 = por %p628, %p629
      %p632 = scmp.ne.s32.totalorder %s617, %s631
      %p633 = scmp.eq.s32.totalorder %s59, 0
      %p634 = por %p632, %p633
      %s636 = sadd.s32 %s635, 1
      %p639 = scmp.eq.s32.totalorder %s53, 1
      %p640 = scmp.ne.s32.totalorder %s635, %s637
      %p641 = scmp.eq.s32.totalorder %s53, 0
      %p642 = por %p640, %p641
      %p643 = scmp.ne.s32.totalorder %s635, %s637
      %p644 = scmp.eq.s32.totalorder %s58, 1
      %p645 = por %p643, %p644
      %p646 = scmp.ne.s32.totalorder %s637, %s638
      %p647 = scmp.eq.s32.totalorder %s58, 0
      %p648 = por %p646, %p647
      %p649 = scmp.ne.s32.totalorder %s637, %s638
      %p650 = scmp.eq.s32.totalorder %s59, 1
      %p651 = por %p649, %p650
      %p653 = scmp.ne.s32.totalorder %s638, %s652
      %p654 = scmp.eq.s32.totalorder %s59, 0
      %p655 = por %p653, %p654
      %s657 = sadd.s32 %s656, 1
      %p660 = scmp.eq.s32.totalorder %s53, 1
      %p661 = scmp.ne.s32.totalorder %s656, %s658
      %p662 = scmp.eq.s32.totalorder %s53, 0
      %p663 = por %p661, %p662
      %p664 = scmp.ne.s32.totalorder %s656, %s658
      %p665 = scmp.eq.s32.totalorder %s58, 1
      %p666 = por %p664, %p665
      %p667 = scmp.ne.s32.totalorder %s658, %s659
      %p668 = scmp.eq.s32.totalorder %s58, 0
      %p669 = por %p667, %p668
      %p670 = scmp.ne.s32.totalorder %s658, %s659
      %p671 = scmp.eq.s32.totalorder %s59, 1
      %p672 = por %p670, %p671
      %p674 = scmp.ne.s32.totalorder %s659, %s673
      %p675 = scmp.eq.s32.totalorder %s59, 0
      %p676 = por %p674, %p675
      %s677 = ssub.s32 %s53, %s60
      %p678 = scmp.eq.s32.totalorder %s677, 0
      %s680 = sadd.s32 %s679, 1
      %s681 = scalar_select %p678, %s679, %s680
      %p684 = pneg %p678
      %p685 = scmp.eq.s32.totalorder %s53, 1
      %p686 = por %p684, %p685
      %p687 = scmp.ne.s32.totalorder %s679, %s682
      %p688 = scmp.eq.s32.totalorder %s53, 0
      %p689 = por %p687, %p688
      %p690 = scmp.ne.s32.totalorder %s679, %s682
      %p691 = scmp.eq.s32.totalorder %s58, 1
      %p692 = por %p690, %p691
      %p693 = scmp.ne.s32.totalorder %s682, %s683
      %p694 = scmp.eq.s32.totalorder %s58, 0
      %p695 = por %p693, %p694
      %p696 = scmp.ne.s32.totalorder %s682, %s683
      %p697 = scmp.eq.s32.totalorder %s59, 1
      %p698 = por %p696, %p697
      %p700 = scmp.ne.s32.totalorder %s683, %s699
      %p701 = scmp.eq.s32.totalorder %s59, 0
      %p702 = por %p700, %p701
      %s703 = ssub.s32 %s53, %s60
      %p704 = scmp.eq.s32.totalorder %s703, 0
      %s706 = sadd.s32 %s705, 1
      %s707 = scalar_select %p704, %s705, %s706
      %p710 = pneg %p704
      %p711 = scmp.eq.s32.totalorder %s53, 1
      %p712 = por %p710, %p711
      %p713 = scmp.ne.s32.totalorder %s705, %s708
      %p714 = scmp.eq.s32.totalorder %s53, 0
      %p715 = por %p713, %p714
      %p716 = scmp.ne.s32.totalorder %s705, %s708
      %p717 = scmp.eq.s32.totalorder %s58, 1
      %p718 = por %p716, %p717
      %p719 = scmp.ne.s32.totalorder %s708, %s709
      %p720 = scmp.eq.s32.totalorder %s58, 0
      %p721 = por %p719, %p720
      %p722 = scmp.ne.s32.totalorder %s708, %s709
      %p723 = scmp.eq.s32.totalorder %s59, 1
      %p724 = por %p722, %p723
      %p726 = scmp.ne.s32.totalorder %s709, %s725
      %p727 = scmp.eq.s32.totalorder %s59, 0
      %p728 = por %p726, %p727
      %s729 = ssub.s32 %s53, %s60
      %p730 = scmp.eq.s32.totalorder %s729, 0
      %s732 = sadd.s32 %s731, 1
      %s733 = scalar_select %p730, %s731, %s732
      %p736 = pneg %p730
      %p737 = scmp.eq.s32.totalorder %s53, 1
      %p738 = por %p736, %p737
      %p739 = scmp.ne.s32.totalorder %s731, %s734
      %p740 = scmp.eq.s32.totalorder %s53, 0
      %p741 = por %p739, %p740
      %p742 = scmp.ne.s32.totalorder %s731, %s734
      %p743 = scmp.eq.s32.totalorder %s58, 1
      %p744 = por %p742, %p743
      %p745 = scmp.ne.s32.totalorder %s734, %s735
      %p746 = scmp.eq.s32.totalorder %s58, 0
      %p747 = por %p745, %p746
      %p748 = scmp.ne.s32.totalorder %s734, %s735
      %p749 = scmp.eq.s32.totalorder %s59, 1
      %p750 = por %p748, %p749
      %p752 = scmp.ne.s32.totalorder %s735, %s751
      %p753 = scmp.eq.s32.totalorder %s59, 0
      %p754 = por %p752, %p753
      %p755 = scmp.le.s32.totalorder 1, %s53
      %p756 = scmp.lt.s32.totalorder %s53, 3
      %p757 = pnand %p755, %p756
      %p758 = pneg %p757
      // Predicated region
      $region9: #{tpu_custom_call.1} parent=5 // pred_check
        _
      $region10: #{tpu_custom_call.1} parent=5 // pred_check_branch
        %760 = sbr.rel (%p757) target = $region12
      $region11: #{tpu_custom_call.1} parent=5 // pred_region
        %s761 = ssub.s32 %s53, 1
        // Predicated region
        $region13: #{tpu_custom_call.1} parent=11 // pred_check
          %p762 = pneg %p178
        $region14: #{tpu_custom_call.1} parent=11 // pred_check_branch
          %764 = sbr.rel (%p762) target = $region16
        $region15: #{tpu_custom_call.1} parent=11 // pred_region
          _
        $region16: #{tpu_custom_call.1} parent=11 // pred_fallthru
          _
        // Predicated region
        $region17: #{tpu_custom_call.1} parent=11 // pred_check
          %p765 = pneg %p199
        $region18: #{tpu_custom_call.1} parent=11 // pred_check_branch
          %767 = sbr.rel (%p765) target = $region20
        $region19: #{tpu_custom_call.1} parent=11 // pred_region
          _
        $region20: #{tpu_custom_call.1} parent=11 // pred_fallthru
          _
        // Predicated region
        $region21: #{tpu_custom_call.1} parent=11 // pred_check
          %p768 = pneg %p220
        $region22: #{tpu_custom_call.1} parent=11 // pred_check_branch
          %770 = sbr.rel (%p768) target = $region24
        $region23: #{tpu_custom_call.1} parent=11 // pred_region
          _
        $region24: #{tpu_custom_call.1} parent=11 // pred_fallthru
          _
        // Predicated region
        $region25: #{tpu_custom_call.1} parent=11 // pred_check
          %p771 = pneg %p241
        $region26: #{tpu_custom_call.1} parent=11 // pred_check_branch
          %773 = sbr.rel (%p771) target = $region28
        $region27: #{tpu_custom_call.1} parent=11 // pred_region
          _
        $region28: #{tpu_custom_call.1} parent=11 // pred_fallthru
          _
        // Predicated region
        $region29: #{tpu_custom_call.1} parent=11 // pred_check
          %p774 = pneg %p522
        $region30: #{tpu_custom_call.1} parent=11 // pred_check_branch
          %776 = sbr.rel (%p774) target = $region32
        $region31: #{tpu_custom_call.1} parent=11 // pred_region
          _
        $region32: #{tpu_custom_call.1} parent=11 // pred_fallthru
          _
        // Predicated region
        $region33: #{tpu_custom_call.1} parent=11 // pred_check
          %p777 = pneg %p543
        $region34: #{tpu_custom_call.1} parent=11 // pred_check_branch
          %779 = sbr.rel (%p777) target = $region36
        $region35: #{tpu_custom_call.1} parent=11 // pred_region
          %s781 = ssub.s32 32, 32
          %782 = vsyncadd [#allocation12], %s781
          %s783 = sshll.u32 [#allocation13], 4
          %s784 = int_to_ptr.vmem [resolvable:$true] %s783
          %789 = dma.hbm_to_vmem [thread:$0]  %s19, 32, %s784, [#allocation12], 16, 16, 1
        $region36: #{tpu_custom_call.1} parent=11 // pred_fallthru
          _
        // Predicated region
        $region37: #{tpu_custom_call.1} parent=11 // pred_check
          %p790 = pneg %p564
        $region38: #{tpu_custom_call.1} parent=11 // pred_check_branch
          %792 = sbr.rel (%p790) target = $region40
        $region39: #{tpu_custom_call.1} parent=11 // pred_region
          _
        $region40: #{tpu_custom_call.1} parent=11 // pred_fallthru
          _
        // Predicated region
        $region41: #{tpu_custom_call.1} parent=11 // pred_check
          %p793 = pneg %p585
        $region42: #{tpu_custom_call.1} parent=11 // pred_check_branch
          %795 = sbr.rel (%p793) target = $region44
        $region43: #{tpu_custom_call.1} parent=11 // pred_region
          _
        $region44: #{tpu_custom_call.1} parent=11 // pred_fallthru
          _
        // Predicated region
        $region45: #{tpu_custom_call.1} parent=11 // pred_check
          %p796 = pneg %p606
        $region46: #{tpu_custom_call.1} parent=11 // pred_check_branch
          %798 = sbr.rel (%p796) target = $region48
        $region47: #{tpu_custom_call.1} parent=11 // pred_region
          _
        $region48: #{tpu_custom_call.1} parent=11 // pred_fallthru
          _
        // Predicated region
        $region49: #{tpu_custom_call.1} parent=11 // pred_check
          %p799 = pneg %p627
        $region50: #{tpu_custom_call.1} parent=11 // pred_check_branch
          %801 = sbr.rel (%p799) target = $region52
        $region51: #{tpu_custom_call.1} parent=11 // pred_region
          _
        $region52: #{tpu_custom_call.1} parent=11 // pred_fallthru
          _
        // Predicated region
        $region53: #{tpu_custom_call.1} parent=11 // pred_check
          %p802 = pneg %p648
        $region54: #{tpu_custom_call.1} parent=11 // pred_check_branch
          %804 = sbr.rel (%p802) target = $region56
        $region55: #{tpu_custom_call.1} parent=11 // pred_region
          _
        $region56: #{tpu_custom_call.1} parent=11 // pred_fallthru
          _
        // Predicated region
        $region57: #{tpu_custom_call.1} parent=11 // pred_check
          %p805 = pneg %p669
        $region58: #{tpu_custom_call.1} parent=11 // pred_check_branch
          %807 = sbr.rel (%p805) target = $region60
        $region59: #{tpu_custom_call.1} parent=11 // pred_region
          _
        $region60: #{tpu_custom_call.1} parent=11 // pred_fallthru
          _
      $region12: #{tpu_custom_call.1} parent=5 // pred_fallthru
        _
      %p808 = scmp.lt.s32.totalorder %s53, 2
      // Predicated region
      $region61: #{tpu_custom_call.1} parent=5 // pred_check
        %p809 = pneg %p808
      $region62: #{tpu_custom_call.1} parent=5 // pred_check_branch
        %811 = sbr.rel (%p809) target = $region64
      $region63: #{tpu_custom_call.1} parent=5 // pred_region
        // Predicated region
        $region65: #{tpu_custom_call.1} parent=63 // pred_check
          %p812 = pneg %p73
        $region66: #{tpu_custom_call.1} parent=63 // pred_check_branch
          %814 = sbr.rel (%p812) target = $region68
        $region67: #{tpu_custom_call.1} parent=63 // pred_region
          %s815 = sand.u32 %s63, 1
          %s816 = scalar_lea.sflag [#allocation3], %s815
          %s817 = sand.u32 %s63, 1
          %s818 = smul.addr %s817, 8
          %s819 = scalar_lea.vmem [#allocation2], %s818
          %s821 = ssub.s32 128, 128
          %822 = vsyncadd %s816, %s821
          %s823 = smul.addr %s53, 128
          %s824 = scalar_lea.hbm %s0, %s823
          %s826 = sshll.u32 %s819, 4
          %s827 = int_to_ptr.vmem [resolvable:$true] %s826
          %829 = dma.hbm_to_vmem [thread:$0]  %s824, 128, %s827, %s816
        $region68: #{tpu_custom_call.1} parent=63 // pred_fallthru
          _
        // Predicated region
        $region69: #{tpu_custom_call.1} parent=63 // pred_check
          %p830 = pneg %p99
        $region70: #{tpu_custom_call.1} parent=63 // pred_check_branch
          %832 = sbr.rel (%p830) target = $region72
        $region71: #{tpu_custom_call.1} parent=63 // pred_region
          %s833 = sand.u32 %s53, 1
          %s834 = scalar_lea.sflag [#allocation6], %s833
          %s835 = sand.u32 %s89, 1
          %s836 = smul.addr %s835, 8
          %s837 = scalar_lea.vmem [#allocation5], %s836
          %s839 = ssub.s32 128, 128
          %840 = vsyncadd %s834, %s839
          %s841 = smul.addr %s53, 128
          %s842 = scalar_lea.hbm %s1, %s841
          %s844 = sshll.u32 %s837, 4
          %s845 = int_to_ptr.vmem [resolvable:$true] %s844
          %847 = dma.hbm_to_vmem [thread:$0]  %s842, 128, %s845, %s834
        $region72: #{tpu_custom_call.1} parent=63 // pred_fallthru
          _
        // Predicated region
        $region73: #{tpu_custom_call.1} parent=63 // pred_check
          %p848 = pneg %p125
        $region74: #{tpu_custom_call.1} parent=63 // pred_check_branch
          %850 = sbr.rel (%p848) target = $region76
        $region75: #{tpu_custom_call.1} parent=63 // pred_region
          %s851 = sand.u32 %s53, 1
          %s852 = scalar_lea.sflag [#allocation6], %s851
          %s853 = sand.u32 %s115, 1
          %s854 = smul.addr %s853, 8
          %s855 = scalar_lea.vmem [#allocation7], %s854
          %s857 = ssub.s32 128, 128
          %858 = vsyncadd %s852, %s857
          %s859 = smul.addr %s53, 128
          %s860 = scalar_lea.hbm %s2, %s859
          %s862 = sshll.u32 %s855, 4
          %s863 = int_to_ptr.vmem [resolvable:$true] %s862
          %865 = dma.hbm_to_vmem [thread:$0]  %s860, 128, %s863, %s852
        $region76: #{tpu_custom_call.1} parent=63 // pred_fallthru
          _
        // Predicated region
        $region77: #{tpu_custom_call.1} parent=63 // pred_check
          %p866 = pneg %p151
        $region78: #{tpu_custom_call.1} parent=63 // pred_check_branch
          %868 = sbr.rel (%p866) target = $region80
        $region79: #{tpu_custom_call.1} parent=63 // pred_region
          %s869 = sand.u32 %s53, 1
          %s870 = scalar_lea.sflag [#allocation9], %s869
          %s871 = sand.u32 %s141, 1
          %s872 = smul.addr %s871, 8
          %s873 = scalar_lea.vmem [#allocation8], %s872
          %s875 = ssub.s32 128, 128
          %876 = vsyncadd %s870, %s875
          %s877 = smul.addr %s53, 128
          %s878 = scalar_lea.hbm %s3, %s877
          %s880 = sshll.u32 %s873, 4
          %s881 = int_to_ptr.vmem [resolvable:$true] %s880
          %883 = dma.hbm_to_vmem [thread:$0]  %s878, 128, %s881, %s870
        $region80: #{tpu_custom_call.1} parent=63 // pred_fallthru
          _
        // Predicated region
        $region81: #{tpu_custom_call.1} parent=63 // pred_check
          %p884 = pneg %p261
        $region82: #{tpu_custom_call.1} parent=63 // pred_check_branch
          %886 = sbr.rel (%p884) target = $region84
        $region83: #{tpu_custom_call.1} parent=63 // pred_region
          %p887 = scmp.lt.s32.totalorder %s53, 1
          %s888 = scalar_select %p887, %s53, 1
          %s889 = smul.addr %s888, 8
          %s890 = scalar_lea.vmem %s8, %s889
        $region84: #{tpu_custom_call.1} parent=63 // pred_fallthru
          _
        // Predicated region
        $region85: #{tpu_custom_call.1} parent=63 // pred_check
          %p891 = pneg %p287
        $region86: #{tpu_custom_call.1} parent=63 // pred_check_branch
          %893 = sbr.rel (%p891) target = $region88
        $region87: #{tpu_custom_call.1} parent=63 // pred_region
          %s894 = sand.u32 %s53, 1
          %s895 = scalar_lea.sflag [#allocation9], %s894
          %s896 = sand.u32 %s277, 1
          %s897 = smul.addr %s896, 8
          %s898 = scalar_lea.vmem [#allocation10], %s897
          %s900 = ssub.s32 128, 128
          %901 = vsyncadd %s895, %s900
          %s902 = smul.addr %s53, 128
          %s903 = scalar_lea.hbm %s9, %s902
          %s905 = sshll.u32 %s898, 4
          %s906 = int_to_ptr.vmem [resolvable:$true] %s905
          %908 = dma.hbm_to_vmem [thread:$0]  %s903, 128, %s906, %s895
        $region88: #{tpu_custom_call.1} parent=63 // pred_fallthru
          _
        // Predicated region
        $region89: #{tpu_custom_call.1} parent=63 // pred_check
          %p909 = pneg %p313
        $region90: #{tpu_custom_call.1} parent=63 // pred_check_branch
          %911 = sbr.rel (%p909) target = $region92
        $region91: #{tpu_custom_call.1} parent=63 // pred_region
          %p912 = scmp.lt.s32.totalorder %s53, 1
          %s913 = scalar_select %p912, %s53, 1
          %s914 = smul.addr %s913, 4
          %s915 = smul.addr %s914, 4
          %s916 = scalar_lea.vmem %s10, %s915
        $region92: #{tpu_custom_call.1} parent=63 // pred_fallthru
          _
        // Predicated region
        $region93: #{tpu_custom_call.1} parent=63 // pred_check
          %p917 = pneg %p339
        $region94: #{tpu_custom_call.1} parent=63 // pred_check_branch
          %919 = sbr.rel (%p917) target = $region96
        $region95: #{tpu_custom_call.1} parent=63 // pred_region
          %p920 = scmp.lt.s32.totalorder %s53, 1
          %s921 = scalar_select %p920, %s53, 1
          %s922 = smul.addr %s921, 4
          %s923 = smul.addr %s922, 4
          %s924 = scalar_lea.vmem %s11, %s923
        $region96: #{tpu_custom_call.1} parent=63 // pred_fallthru
          _
        // Predicated region
        $region97: #{tpu_custom_call.1} parent=63 // pred_check
          %p925 = pneg %p365
        $region98: #{tpu_custom_call.1} parent=63 // pred_check_branch
          %927 = sbr.rel (%p925) target = $region100
        $region99: #{tpu_custom_call.1} parent=63 // pred_region
          %p928 = scmp.lt.s32.totalorder %s53, 1
          %s929 = scalar_select %p928, %s53, 1
          %s930 = smul.addr %s929, 4
          %s931 = smul.addr %s930, 4
          %s932 = scalar_lea.vmem %s12, %s931
        $region100: #{tpu_custom_call.1} parent=63 // pred_fallthru
          _
        // Predicated region
        $region101: #{tpu_custom_call.1} parent=63 // pred_check
          %p933 = pneg %p391
        $region102: #{tpu_custom_call.1} parent=63 // pred_check_branch
          %935 = sbr.rel (%p933) target = $region104
        $region103: #{tpu_custom_call.1} parent=63 // pred_region
          %p936 = scmp.lt.s32.totalorder %s53, 1
          %s937 = scalar_select %p936, %s53, 1
          %s938 = smul.addr %s937, 4
          %s939 = smul.addr %s938, 4
          %s940 = scalar_lea.vmem %s13, %s939
        $region104: #{tpu_custom_call.1} parent=63 // pred_fallthru
          _
        // Predicated region
        $region105: #{tpu_custom_call.1} parent=63 // pred_check
          %p941 = pneg %p417
        $region106: #{tpu_custom_call.1} parent=63 // pred_check_branch
          %943 = sbr.rel (%p941) target = $region108
        $region107: #{tpu_custom_call.1} parent=63 // pred_region
          %p944 = scmp.lt.s32.totalorder %s53, 1
          %s945 = scalar_select %p944, %s53, 1
          %s946 = smul.addr %s945, 8
          %s947 = scalar_lea.vmem %s14, %s946
        $region108: #{tpu_custom_call.1} parent=63 // pred_fallthru
          _
        // Predicated region
        $region109: #{tpu_custom_call.1} parent=63 // pred_check
          %p948 = pneg %p443
        $region110: #{tpu_custom_call.1} parent=63 // pred_check_branch
          %950 = sbr.rel (%p948) target = $region112
        $region111: #{tpu_custom_call.1} parent=63 // pred_region
          %p951 = scmp.lt.s32.totalorder %s53, 1
          %s952 = scalar_select %p951, %s53, 1
          %s953 = smul.addr %s952, 4
          %s954 = scalar_lea.vmem %s15, %s953
        $region112: #{tpu_custom_call.1} parent=63 // pred_fallthru
          _
        // Predicated region
        $region113: #{tpu_custom_call.1} parent=63 // pred_check
          %p955 = pneg %p469
        $region114: #{tpu_custom_call.1} parent=63 // pred_check_branch
          %957 = sbr.rel (%p955) target = $region116
        $region115: #{tpu_custom_call.1} parent=63 // pred_region
          %p958 = scmp.lt.s32.totalorder %s53, 1
          %s959 = scalar_select %p958, %s53, 1
          %s960 = smul.addr %s959, 8
          %s961 = scalar_lea.vmem %s16, %s960
        $region116: #{tpu_custom_call.1} parent=63 // pred_fallthru
          _
        // Predicated region
        $region117: #{tpu_custom_call.1} parent=63 // pred_check
          %p962 = pneg %p495
        $region118: #{tpu_custom_call.1} parent=63 // pred_check_branch
          %964 = sbr.rel (%p962) target = $region120
        $region119: #{tpu_custom_call.1} parent=63 // pred_region
          %s965 = sand.u32 %s53, 1
          %s966 = scalar_lea.sflag [#allocation12], %s965
          %s967 = sand.u32 %s485, 1
          %s968 = scalar_lea.vmem [#allocation11], %s967
          %s970 = ssub.s32 16, 16
          %971 = vsyncadd %s966, %s970
          %s972 = smul.addr %s53, 16
          %s973 = scalar_lea.hbm %s17, %s972
          %s975 = sshll.u32 %s968, 4
          %s976 = int_to_ptr.vmem [resolvable:$true] %s975
          %978 = dma.hbm_to_vmem [thread:$0]  %s973, 16, %s976, %s966
        $region120: #{tpu_custom_call.1} parent=63 // pred_fallthru
          _
      $region64: #{tpu_custom_call.1} parent=5 // pred_fallthru
        _
      %p979 = scmp.le.s32.totalorder 1, %s53
      %p980 = scmp.lt.s32.totalorder %s53, 3
      %p981 = pnand %p979, %p980
      %p982 = pneg %p981
      // Predicated region
      $region121: #{tpu_custom_call.1} parent=5 // pred_check
        _
      $region122: #{tpu_custom_call.1} parent=5 // pred_check_branch
        %984 = sbr.rel (%p981) target = $region124
      $region123: #{tpu_custom_call.1} parent=5 // pred_region
        %s985 = ssub.s32 %s53, 1
        %s986 = sand.u32 %s66, 1
        %s987 = scalar_lea.sflag [#allocation3], %s986
        %s988 = sand.u32 %s66, 1
        %s989 = smul.addr %s988, 8
        %s990 = scalar_lea.vmem [#allocation2], %s989
        // Predicated region
        $region125: #{tpu_custom_call.1} parent=123 // pred_check
          %p991 = pneg %p79
        $region126: #{tpu_custom_call.1} parent=123 // pred_check_branch
          %993 = sbr.rel (%p991) target = $region128
        $region127: #{tpu_custom_call.1} parent=123 // pred_region
          %994 = dma.done %s987, 128
        $region128: #{tpu_custom_call.1} parent=123 // pred_fallthru
          _
        %s995 = sand.u32 %s58, 1
        %s996 = scalar_lea.sflag [#allocation6], %s995
        %s997 = sand.u32 %s92, 1
        %s998 = smul.addr %s997, 8
        %s999 = scalar_lea.vmem [#allocation5], %s998
        // Predicated region
        $region129: #{tpu_custom_call.1} parent=123 // pred_check
          %p1000 = pneg %p105
        $region130: #{tpu_custom_call.1} parent=123 // pred_check_branch
          %1002 = sbr.rel (%p1000) target = $region132
        $region131: #{tpu_custom_call.1} parent=123 // pred_region
          %1003 = dma.done %s996, 128
        $region132: #{tpu_custom_call.1} parent=123 // pred_fallthru
          _
        %s1004 = sand.u32 %s58, 1
        %s1005 = scalar_lea.sflag [#allocation6], %s1004
        %s1006 = sand.u32 %s118, 1
        %s1007 = smul.addr %s1006, 8
        %s1008 = scalar_lea.vmem [#allocation7], %s1007
        // Predicated region
        $region133: #{tpu_custom_call.1} parent=123 // pred_check
          %p1009 = pneg %p131
        $region134: #{tpu_custom_call.1} parent=123 // pred_check_branch
          %1011 = sbr.rel (%p1009) target = $region136
        $region135: #{tpu_custom_call.1} parent=123 // pred_region
          %1012 = dma.done %s1005, 128
        $region136: #{tpu_custom_call.1} parent=123 // pred_fallthru
          _
        %s1013 = sand.u32 %s58, 1
        %s1014 = scalar_lea.sflag [#allocation9], %s1013
        %s1015 = sand.u32 %s144, 1
        %s1016 = smul.addr %s1015, 8
        %s1017 = scalar_lea.vmem [#allocation8], %s1016
        // Predicated region
        $region137: #{tpu_custom_call.1} parent=123 // pred_check
          %p1018 = pneg %p157
        $region138: #{tpu_custom_call.1} parent=123 // pred_check_branch
          %1020 = sbr.rel (%p1018) target = $region140
        $region139: #{tpu_custom_call.1} parent=123 // pred_region
          %1021 = dma.done %s1014, 128
        $region140: #{tpu_custom_call.1} parent=123 // pred_fallthru
          _
        %s1022 = sand.u32 %s58, 1
        %s1023 = scalar_lea.sflag [#allocation9], %s1022
        %s1024 = sand.u32 %s280, 1
        %s1025 = smul.addr %s1024, 8
        %s1026 = scalar_lea.vmem [#allocation10], %s1025
        // Predicated region
        $region141: #{tpu_custom_call.1} parent=123 // pred_check
          %p1027 = pneg %p293
        $region142: #{tpu_custom_call.1} parent=123 // pred_check_branch
          %1029 = sbr.rel (%p1027) target = $region144
        $region143: #{tpu_custom_call.1} parent=123 // pred_region
          %1030 = dma.done %s1023, 128
        $region144: #{tpu_custom_call.1} parent=123 // pred_fallthru
          _
        %s1031 = sand.u32 %s58, 1
        %s1032 = scalar_lea.sflag [#allocation12], %s1031
        %s1033 = sand.u32 %s488, 1
        %s1034 = scalar_lea.vmem [#allocation11], %s1033
        // Predicated region
        $region145: #{tpu_custom_call.1} parent=123 // pred_check
          %p1035 = pneg %p501
        $region146: #{tpu_custom_call.1} parent=123 // pred_check_branch
          %1037 = sbr.rel (%p1035) target = $region148
        $region147: #{tpu_custom_call.1} parent=123 // pred_region
          %1038 = dma.done %s1032, 16
        $region148: #{tpu_custom_call.1} parent=123 // pred_fallthru
          _
        // Predicated region
        $region149: #{tpu_custom_call.1} parent=123 // pred_check
          %p1039 = pneg %p543
        $region150: #{tpu_custom_call.1} parent=123 // pred_check_branch
          %1041 = sbr.rel (%p1039) target = $region152
        $region151: #{tpu_custom_call.1} parent=123 // pred_region
          %1042 = dma.done [#allocation12], 32
        $region152: #{tpu_custom_call.1} parent=123 // pred_fallthru
          _
        %s1043 = sand.u32 %s66, 1
        %s1044 = scalar_lea.sflag [#allocation3], %s1043
        %s1045 = sand.u32 %s66, 1
        %s1046 = smul.addr %s1045, 8
        %s1047 = scalar_lea.vmem [#allocation2], %s1046
        %p1048 = pneg %p79
        %p1049 = pneg %p76
        %s1050 = sand.u32 %s58, 1
        %s1051 = scalar_lea.sflag [#allocation6], %s1050
        %s1052 = sand.u32 %s92, 1
        %s1053 = smul.addr %s1052, 8
        %s1054 = scalar_lea.vmem [#allocation5], %s1053
        %p1055 = pneg %p105
        %p1056 = pneg %p102
        %s1057 = sand.u32 %s58, 1
        %s1058 = scalar_lea.sflag [#allocation6], %s1057
        %s1059 = sand.u32 %s118, 1
        %s1060 = smul.addr %s1059, 8
        %s1061 = scalar_lea.vmem [#allocation7], %s1060
        %p1062 = pneg %p131
        %p1063 = pneg %p128
        %s1064 = sand.u32 %s58, 1
        %s1065 = scalar_lea.sflag [#allocation9], %s1064
        %s1066 = sand.u32 %s144, 1
        %s1067 = smul.addr %s1066, 8
        %s1068 = scalar_lea.vmem [#allocation8], %s1067
        %p1069 = pneg %p157
        %p1070 = pneg %p154
        %p1071 = pneg %p178
        %p1072 = pneg %p175
        %p1073 = pneg %p199
        %p1074 = pneg %p196
        %p1075 = pneg %p220
        %p1076 = pneg %p217
        %p1077 = pneg %p241
        %p1078 = pneg %p238
        %p1079 = scmp.lt.s32.totalorder %s58, 1
        %s1080 = scalar_select %p1079, %s58, 1
        %s1081 = smul.addr %s1080, 8
        %s1082 = scalar_lea.vmem %s8, %s1081
        %p1083 = pneg %p267
        %p1084 = pneg %p264
        %s1085 = sand.u32 %s58, 1
        %s1086 = scalar_lea.sflag [#allocation9], %s1085
        %s1087 = sand.u32 %s280, 1
        %s1088 = smul.addr %s1087, 8
        %s1089 = scalar_lea.vmem [#allocation10], %s1088
        %p1090 = pneg %p293
        %p1091 = pneg %p290
        %p1092 = scmp.lt.s32.totalorder %s58, 1
        %s1093 = scalar_select %p1092, %s58, 1
        %s1094 = smul.addr %s1093, 4
        %s1095 = smul.addr %s1094, 4
        %s1096 = scalar_lea.vmem %s10, %s1095
        %p1097 = pneg %p319
        %p1098 = pneg %p316
        %p1099 = scmp.lt.s32.totalorder %s58, 1
        %s1100 = scalar_select %p1099, %s58, 1
        %s1101 = smul.addr %s1100, 4
        %s1102 = smul.addr %s1101, 4
        %s1103 = scalar_lea.vmem %s11, %s1102
        %p1104 = pneg %p345
        %p1105 = pneg %p342
        %p1106 = scmp.lt.s32.totalorder %s58, 1
        %s1107 = scalar_select %p1106, %s58, 1
        %s1108 = smul.addr %s1107, 4
        %s1109 = smul.addr %s1108, 4
        %s1110 = scalar_lea.vmem %s12, %s1109
        %p1111 = pneg %p371
        %p1112 = pneg %p368
        %p1113 = scmp.lt.s32.totalorder %s58, 1
        %s1114 = scalar_select %p1113, %s58, 1
        %s1115 = smul.addr %s1114, 4
        %s1116 = smul.addr %s1115, 4
        %s1117 = scalar_lea.vmem %s13, %s1116
        %p1118 = pneg %p397
        %p1119 = pneg %p394
        %p1120 = scmp.lt.s32.totalorder %s58, 1
        %s1121 = scalar_select %p1120, %s58, 1
        %s1122 = smul.addr %s1121, 8
        %s1123 = scalar_lea.vmem %s14, %s1122
        %p1124 = pneg %p423
        %p1125 = pneg %p420
        %p1126 = scmp.lt.s32.totalorder %s58, 1
        %s1127 = scalar_select %p1126, %s58, 1
        %s1128 = smul.addr %s1127, 4
        %s1129 = scalar_lea.vmem %s15, %s1128
        %p1130 = pneg %p449
        %p1131 = pneg %p446
        %p1132 = scmp.lt.s32.totalorder %s58, 1
        %s1133 = scalar_select %p1132, %s58, 1
        %s1134 = smul.addr %s1133, 8
        %s1135 = scalar_lea.vmem %s16, %s1134
        %p1136 = pneg %p475
        %p1137 = pneg %p472
        %s1138 = sand.u32 %s58, 1
        %s1139 = scalar_lea.sflag [#allocation12], %s1138
        %s1140 = sand.u32 %s488, 1
        %s1141 = scalar_lea.vmem [#allocation11], %s1140
        %p1142 = pneg %p501
        %p1143 = pneg %p498
        %p1144 = pneg %p522
        %p1145 = pneg %p519
        %p1146 = pneg %p543
        %p1147 = pneg %p540
        %p1148 = pneg %p564
        %p1149 = pneg %p561
        %p1150 = pneg %p585
        %p1151 = pneg %p582
        %p1152 = pneg %p606
        %p1153 = pneg %p603
        %p1154 = pneg %p627
        %p1155 = pneg %p624
        %p1156 = pneg %p648
        %p1157 = pneg %p645
        %p1158 = pneg %p669
        %p1159 = pneg %p666
        %p1160 = pneg %p695
        %p1161 = pneg %p692
        %s1162 = sand.u32 %s682, 1
        %s1163 = scalar_lea.sflag [#allocation4], %s1162
        %s1164 = sand.u32 %s682, 1
        %s1165 = smul.addr %s1164, 8
        %s1166 = scalar_lea.vmem [#allocation14], %s1165
        %p1167 = pneg %p721
        %p1168 = pneg %p718
        %s1169 = sand.u32 %s58, 1
        %s1170 = scalar_lea.sflag [#allocation16], %s1169
        %s1171 = sand.u32 %s708, 1
        %s1172 = smul.addr %s1171, 8
        %s1173 = scalar_lea.vmem [#allocation15], %s1172
        %p1174 = pneg %p747
        %p1175 = pneg %p744
        %s1176 = sand.u32 %s58, 1
        %s1177 = scalar_lea.sflag [#allocation16], %s1176
        %s1178 = sand.u32 %s734, 1
        %s1179 = smul.addr %s1178, 32
        %s1180 = scalar_lea.vmem [#allocation17], %s1179
        %p1181 = scmp.lt.s32.totalorder %s58, 1
        %s1182 = scalar_select %p1181, %s58, 1
        %s1183 = smul.addr %s1182, 8
        %s1184 = scalar_lea.vmem %s8, %s1183
        %p1185 = scmp.lt.s32.totalorder %s58, 1
        %s1186 = scalar_select %p1185, %s58, 1
        %s1187 = smul.addr %s1186, 4
        %s1188 = smul.addr %s1187, 4
        %s1189 = scalar_lea.vmem %s10, %s1188
        %p1190 = scmp.lt.s32.totalorder %s58, 1
        %s1191 = scalar_select %p1190, %s58, 1
        %s1192 = smul.addr %s1191, 4
        %s1193 = smul.addr %s1192, 4
        %s1194 = scalar_lea.vmem %s11, %s1193
        %p1195 = scmp.lt.s32.totalorder %s58, 1
        %s1196 = scalar_select %p1195, %s58, 1
        %s1197 = smul.addr %s1196, 4
        %s1198 = smul.addr %s1197, 4
        %s1199 = scalar_lea.vmem %s12, %s1198
        %p1200 = scmp.lt.s32.totalorder %s58, 1
        %s1201 = scalar_select %p1200, %s58, 1
        %s1202 = smul.addr %s1201, 4
        %s1203 = smul.addr %s1202, 4
        %s1204 = scalar_lea.vmem %s13, %s1203
        %p1205 = scmp.lt.s32.totalorder %s58, 1
        %s1206 = scalar_select %p1205, %s58, 1
        %s1207 = smul.addr %s1206, 8
        %s1208 = scalar_lea.vmem %s14, %s1207
        %p1209 = scmp.lt.s32.totalorder %s58, 1
        %s1210 = scalar_select %p1209, %s58, 1
        %s1211 = smul.addr %s1210, 4
        %s1212 = scalar_lea.vmem %s15, %s1211
        %p1213 = scmp.lt.s32.totalorder %s58, 1
        %s1214 = scalar_select %p1213, %s58, 1
        %s1215 = smul.addr %s1214, 8
        %s1216 = scalar_lea.vmem %s16, %s1215
        %v1218 = vld [vmem:[%s990] sm:$0xff]
        %v1219 = vld [vmem:[%s999] sm:$0xff]
        %v1220 = vpack.c.bf16 %v1218, %v1218
        %v1221 = vpack.c.bf16 %v1219, %v1219
        %v1222 = vld [vmem:[%s1008] sm:$0xff]
        %v1223 = vpack.c.bf16 %v1222, %v1222
        %v1224 = vld [vmem:[%s1017] sm:$0xff]
        %v1225 = vpack.c.bf16 %v1224, %v1224
        %v1226 = vld [vmem:[%s4] sm:$0xf]
        %v1227 = vld [vmem:[%s4 + $0x4] sm:$0xf]
        %v1228 = vld [vmem:[%s4 + $0x8] sm:$0xf]
        %v1229 = vld [vmem:[%s4 + $0xc] sm:$0xf]
        %v1230 = vld [vmem:[%s6] sm:$0xf]
        %v1231 = vld [vmem:[%s6 + $0x4] sm:$0xf]
        %v1232 = vld [vmem:[%s6 + $0x8] sm:$0xf]
        %v1233 = vld [vmem:[%s6 + $0xc] sm:$0xf]
        %v1238 = vunpack.c.l.b16 %v1230
        %v1239 = vunpack.c.l.b16 %v1231
        %v1240 = vunpack.c.l.b16 %v1232
        %v1241 = vunpack.c.l.b16 %v1233
        %v1242 = vpack.c.b16 %v1239, %v1238
        %v1243 = vpack.c.b16 %v1241, %v1240
        %vm1246 = vcmask 261120
        %v1248 = vsel %vm1246, %v1223, 0
        %1250 = vmatprep.subr.bf16.mxu0 0
        %1251 = vmatpush1.bf16.msra.mxu0 %v1242
        %1252 = vmatprep.subr.bf16.mxu0 0
        %1253 = vmatpush1.bf16.msra.mxu0 %v1243
        %1254 = vmatprep.subr.bf16.mxu0 0
        %1255 = vmatpush1.bf16.msra.mxu0 0
        %1256 = vmatprep.subr.bf16.mxu0 0
        %1257 = vmatpush1.bf16.msra.mxu0 0
        %1258 = vmatprep.subr.bf16.mxu0 0
        %1259 = vmatpush1.bf16.msra.mxu0 0
        %1260 = vmatprep.subr.bf16.mxu0 0
        %1261 = vmatpush1.bf16.msra.mxu0 0
        %1262 = vmatprep.subr.bf16.mxu0 0
        %1263 = vmatpush1.bf16.msra.mxu0 0
        %1264 = vmatprep.subr.bf16.mxu0 0
        %1265 = vmatpush1.bf16.msra.mxu0 0
        %1266 = vmatprep.subr.bf16.mxu0 0
        %1267 = vmatpush1.bf16.msra.mxu0 0
        %1268 = vmatprep.subr.bf16.mxu0 0
        %1269 = vmatpush1.bf16.msra.mxu0 0
        %1270 = vmatprep.subr.bf16.mxu0 0
        %1271 = vmatpush1.bf16.msra.mxu0 0
        %1272 = vmatprep.subr.bf16.mxu0 0
        %1273 = vmatpush1.bf16.msra.mxu0 0
        %1274 = vmatprep.subr.bf16.mxu0 0
        %1275 = vmatpush1.bf16.msra.mxu0 0
        %1276 = vmatprep.subr.bf16.mxu0 0
        %1277 = vmatpush1.bf16.msra.mxu0 0
        %1278 = vmatprep.subr.bf16.mxu0 0
        %1279 = vmatpush1.bf16.msra.mxu0 0
        %1280 = vmatprep.subr.bf16.mxu0 0
        %1281 = vmatpush1.bf16.msra.mxu0 0
        %1282 = vmatprep.mubr.bf16.mxu0 0
        %1283 = vmatmul.mubr.bf16.gmra.mrb[0].mxu0 %v1248
        %v1284 = vpop.f32.mrb[0].mxu0
        %v1285 = vadd.f32 0.0, %v1284
        %v1286 = vpop.f32.mrb[0].mxu0
        %v1287 = vpop.f32.mrb[0].mxu0
        %v1288 = vpop.f32.mrb[0].mxu0
        %1289 = vdwg.mxu0
        %v1294 = vunpack.c.l.b16 %v1226
        %v1295 = vunpack.c.l.b16 %v1227
        %v1296 = vunpack.c.l.b16 %v1228
        %v1297 = vunpack.c.l.b16 %v1229
        %v1298 = vpack.c.b16 %v1295, %v1294
        %v1299 = vpack.c.b16 %v1297, %v1296
        %v1303 = vsel %vm1246, %v1220, 0
        %1305 = vmatprep.subr.bf16.mxu0 0
        %1306 = vmatpush1.bf16.msra.mxu0 %v1298
        %1307 = vmatprep.subr.bf16.mxu0 0
        %1308 = vmatpush1.bf16.msra.mxu0 %v1299
        %1309 = vmatprep.subr.bf16.mxu0 0
        %1310 = vmatpush1.bf16.msra.mxu0 0
        %1311 = vmatprep.subr.bf16.mxu0 0
        %1312 = vmatpush1.bf16.msra.mxu0 0
        %1313 = vmatprep.subr.bf16.mxu0 0
        %1314 = vmatpush1.bf16.msra.mxu0 0
        %1315 = vmatprep.subr.bf16.mxu0 0
        %1316 = vmatpush1.bf16.msra.mxu0 0
        %1317 = vmatprep.subr.bf16.mxu0 0
        %1318 = vmatpush1.bf16.msra.mxu0 0
        %1319 = vmatprep.subr.bf16.mxu0 0
        %1320 = vmatpush1.bf16.msra.mxu0 0
        %1321 = vmatprep.subr.bf16.mxu0 0
        %1322 = vmatpush1.bf16.msra.mxu0 0
        %1323 = vmatprep.subr.bf16.mxu0 0
        %1324 = vmatpush1.bf16.msra.mxu0 0
        %1325 = vmatprep.subr.bf16.mxu0 0
        %1326 = vmatpush1.bf16.msra.mxu0 0
        %1327 = vmatprep.subr.bf16.mxu0 0
        %1328 = vmatpush1.bf16.msra.mxu0 0
        %1329 = vmatprep.subr.bf16.mxu0 0
        %1330 = vmatpush1.bf16.msra.mxu0 0
        %1331 = vmatprep.subr.bf16.mxu0 0
        %1332 = vmatpush1.bf16.msra.mxu0 0
        %1333 = vmatprep.subr.bf16.mxu0 0
        %1334 = vmatpush1.bf16.msra.mxu0 0
        %1335 = vmatprep.subr.bf16.mxu0 0
        %1336 = vmatpush1.bf16.msra.mxu0 0
        %1337 = vmatprep.mubr.bf16.mxu0 0
        %1338 = vmatmul.mubr.bf16.gmra.mrb[0].mxu0 %v1303
        %v1339 = vpop.f32.mrb[0].mxu0
        %v1340 = vadd.f32 %v1285, %v1339
        %v1341 = vpop.f32.mrb[0].mxu0
        %v1342 = vpop.f32.mrb[0].mxu0
        %v1343 = vpop.f32.mrb[0].mxu0
        %1344 = vdwg.mxu0
        %s1345 = scalar_lea.vmem %s4, 16
        %v1346 = vld [vmem:[%s1345] sm:$0xf]
        %v1347 = vld [vmem:[%s1345 + $0x4] sm:$0xf]
        %v1348 = vld [vmem:[%s1345 + $0x8] sm:$0xf]
        %v1349 = vld [vmem:[%s1345 + $0xc] sm:$0xf]
        %s1350 = scalar_lea.vmem %s6, 16
        %v1351 = vld [vmem:[%s1350] sm:$0xf]
        %v1352 = vld [vmem:[%s1350 + $0x4] sm:$0xf]
        %v1353 = vld [vmem:[%s1350 + $0x8] sm:$0xf]
        %v1354 = vld [vmem:[%s1350 + $0xc] sm:$0xf]
        %v1359 = vunpack.c.l.b16 %v1351
        %v1360 = vunpack.c.l.b16 %v1352
        %v1361 = vunpack.c.l.b16 %v1353
        %v1362 = vunpack.c.l.b16 %v1354
        %v1363 = vpack.c.b16 %v1360, %v1359
        %v1364 = vpack.c.b16 %v1362, %v1361
        %1367 = vmatprep.subr.bf16.mxu0 0
        %1368 = vmatpush1.bf16.msra.mxu0 %v1363
        %1369 = vmatprep.subr.bf16.mxu0 0
        %1370 = vmatpush1.bf16.msra.mxu0 %v1364
        %1371 = vmatprep.subr.bf16.mxu0 0
        %1372 = vmatpush1.bf16.msra.mxu0 0
        %1373 = vmatprep.subr.bf16.mxu0 0
        %1374 = vmatpush1.bf16.msra.mxu0 0
        %1375 = vmatprep.subr.bf16.mxu0 0
        %1376 = vmatpush1.bf16.msra.mxu0 0
        %1377 = vmatprep.subr.bf16.mxu0 0
        %1378 = vmatpush1.bf16.msra.mxu0 0
        %1379 = vmatprep.subr.bf16.mxu0 0
        %1380 = vmatpush1.bf16.msra.mxu0 0
        %1381 = vmatprep.subr.bf16.mxu0 0
        %1382 = vmatpush1.bf16.msra.mxu0 0
        %1383 = vmatprep.subr.bf16.mxu0 0
        %1384 = vmatpush1.bf16.msra.mxu0 0
        %1385 = vmatprep.subr.bf16.mxu0 0
        %1386 = vmatpush1.bf16.msra.mxu0 0
        %1387 = vmatprep.subr.bf16.mxu0 0
        %1388 = vmatpush1.bf16.msra.mxu0 0
        %1389 = vmatprep.subr.bf16.mxu0 0
        %1390 = vmatpush1.bf16.msra.mxu0 0
        %1391 = vmatprep.subr.bf16.mxu0 0
        %1392 = vmatpush1.bf16.msra.mxu0 0
        %1393 = vmatprep.subr.bf16.mxu0 0
        %1394 = vmatpush1.bf16.msra.mxu0 0
        %1395 = vmatprep.subr.bf16.mxu0 0
        %1396 = vmatpush1.bf16.msra.mxu0 0
        %1397 = vmatprep.subr.bf16.mxu0 0
        %1398 = vmatpush1.bf16.msra.mxu0 0
        %1399 = vmatprep.mubr.bf16.mxu0 0
        %1400 = vmatmul.mubr.bf16.gmra.mrb[0].mxu0 %v1248
        %v1401 = vpop.f32.mrb[0].mxu0
        %v1402 = vadd.f32 0.0, %v1401
        %v1403 = vpop.f32.mrb[0].mxu0
        %v1404 = vpop.f32.mrb[0].mxu0
        %v1405 = vpop.f32.mrb[0].mxu0
        %1406 = vdwg.mxu0
        %v1411 = vunpack.c.l.b16 %v1346
        %v1412 = vunpack.c.l.b16 %v1347
        %v1413 = vunpack.c.l.b16 %v1348
        %v1414 = vunpack.c.l.b16 %v1349
        %v1415 = vpack.c.b16 %v1412, %v1411
        %v1416 = vpack.c.b16 %v1414, %v1413
        %1419 = vmatprep.subr.bf16.mxu0 0
        %1420 = vmatpush1.bf16.msra.mxu0 %v1415
        %1421 = vmatprep.subr.bf16.mxu0 0
        %1422 = vmatpush1.bf16.msra.mxu0 %v1416
        %1423 = vmatprep.subr.bf16.mxu0 0
        %1424 = vmatpush1.bf16.msra.mxu0 0
        %1425 = vmatprep.subr.bf16.mxu0 0
        %1426 = vmatpush1.bf16.msra.mxu0 0
        %1427 = vmatprep.subr.bf16.mxu0 0
        %1428 = vmatpush1.bf16.msra.mxu0 0
        %1429 = vmatprep.subr.bf16.mxu0 0
        %1430 = vmatpush1.bf16.msra.mxu0 0
        %1431 = vmatprep.subr.bf16.mxu0 0
        %1432 = vmatpush1.bf16.msra.mxu0 0
        %1433 = vmatprep.subr.bf16.mxu0 0
        %1434 = vmatpush1.bf16.msra.mxu0 0
        %1435 = vmatprep.subr.bf16.mxu0 0
        %1436 = vmatpush1.bf16.msra.mxu0 0
        %1437 = vmatprep.subr.bf16.mxu0 0
        %1438 = vmatpush1.bf16.msra.mxu0 0
        %1439 = vmatprep.subr.bf16.mxu0 0
        %1440 = vmatpush1.bf16.msra.mxu0 0
        %1441 = vmatprep.subr.bf16.mxu0 0
        %1442 = vmatpush1.bf16.msra.mxu0 0
        %1443 = vmatprep.subr.bf16.mxu0 0
        %1444 = vmatpush1.bf16.msra.mxu0 0
        %1445 = vmatprep.subr.bf16.mxu0 0
        %1446 = vmatpush1.bf16.msra.mxu0 0
        %1447 = vmatprep.subr.bf16.mxu0 0
        %1448 = vmatpush1.bf16.msra.mxu0 0
        %1449 = vmatprep.subr.bf16.mxu0 0
        %1450 = vmatpush1.bf16.msra.mxu0 0
        %1451 = vmatprep.mubr.bf16.mxu0 0
        %1452 = vmatmul.mubr.bf16.gmra.mrb[0].mxu0 %v1303
        %v1453 = vpop.f32.mrb[0].mxu0
        %v1454 = vadd.f32 %v1402, %v1453
        %v1455 = vpop.f32.mrb[0].mxu0
        %v1456 = vpop.f32.mrb[0].mxu0
        %v1457 = vpop.f32.mrb[0].mxu0
        %1458 = vdwg.mxu0
        %s1459 = scalar_lea.vmem %s4, 32
        %v1460 = vld [vmem:[%s1459] sm:$0xf]
        %v1461 = vld [vmem:[%s1459 + $0x4] sm:$0xf]
        %v1462 = vld [vmem:[%s1459 + $0x8] sm:$0xf]
        %v1463 = vld [vmem:[%s1459 + $0xc] sm:$0xf]
        %s1464 = scalar_lea.vmem %s6, 32
        %v1465 = vld [vmem:[%s1464] sm:$0xf]
        %v1466 = vld [vmem:[%s1464 + $0x4] sm:$0xf]
        %v1467 = vld [vmem:[%s1464 + $0x8] sm:$0xf]
        %v1468 = vld [vmem:[%s1464 + $0xc] sm:$0xf]
        %v1473 = vunpack.c.l.b16 %v1465
        %v1474 = vunpack.c.l.b16 %v1466
        %v1475 = vunpack.c.l.b16 %v1467
        %v1476 = vunpack.c.l.b16 %v1468
        %v1477 = vpack.c.b16 %v1474, %v1473
        %v1478 = vpack.c.b16 %v1476, %v1475
        %1481 = vmatprep.subr.bf16.mxu0 0
        %1482 = vmatpush1.bf16.msra.mxu0 %v1477
        %1483 = vmatprep.subr.bf16.mxu0 0
        %1484 = vmatpush1.bf16.msra.mxu0 %v1478
        %1485 = vmatprep.subr.bf16.mxu0 0
        %1486 = vmatpush1.bf16.msra.mxu0 0
        %1487 = vmatprep.subr.bf16.mxu0 0
        %1488 = vmatpush1.bf16.msra.mxu0 0
        %1489 = vmatprep.subr.bf16.mxu0 0
        %1490 = vmatpush1.bf16.msra.mxu0 0
        %1491 = vmatprep.subr.bf16.mxu0 0
        %1492 = vmatpush1.bf16.msra.mxu0 0
        %1493 = vmatprep.subr.bf16.mxu0 0
        %1494 = vmatpush1.bf16.msra.mxu0 0
        %1495 = vmatprep.subr.bf16.mxu0 0
        %1496 = vmatpush1.bf16.msra.mxu0 0
        %1497 = vmatprep.subr.bf16.mxu0 0
        %1498 = vmatpush1.bf16.msra.mxu0 0
        %1499 = vmatprep.subr.bf16.mxu0 0
        %1500 = vmatpush1.bf16.msra.mxu0 0
        %1501 = vmatprep.subr.bf16.mxu0 0
        %1502 = vmatpush1.bf16.msra.mxu0 0
        %1503 = vmatprep.subr.bf16.mxu0 0
        %1504 = vmatpush1.bf16.msra.mxu0 0
        %1505 = vmatprep.subr.bf16.mxu0 0
        %1506 = vmatpush1.bf16.msra.mxu0 0
        %1507 = vmatprep.subr.bf16.mxu0 0
        %1508 = vmatpush1.bf16.msra.mxu0 0
        %1509 = vmatprep.subr.bf16.mxu0 0
        %1510 = vmatpush1.bf16.msra.mxu0 0
        %1511 = vmatprep.subr.bf16.mxu0 0
        %1512 = vmatpush1.bf16.msra.mxu0 0
        %1513 = vmatprep.mubr.bf16.mxu0 0
        %1514 = vmatmul.mubr.bf16.gmra.mrb[0].mxu0 %v1248
        %v1515 = vpop.f32.mrb[0].mxu0
        %v1516 = vadd.f32 0.0, %v1515
        %v1517 = vpop.f32.mrb[0].mxu0
        %v1518 = vpop.f32.mrb[0].mxu0
        %v1519 = vpop.f32.mrb[0].mxu0
        %1520 = vdwg.mxu0
        %v1525 = vunpack.c.l.b16 %v1460
        %v1526 = vunpack.c.l.b16 %v1461
        %v1527 = vunpack.c.l.b16 %v1462
        %v1528 = vunpack.c.l.b16 %v1463
        %v1529 = vpack.c.b16 %v1526, %v1525
        %v1530 = vpack.c.b16 %v1528, %v1527
        %1533 = vmatprep.subr.bf16.mxu0 0
        %1534 = vmatpush1.bf16.msra.mxu0 %v1529
        %1535 = vmatprep.subr.bf16.mxu0 0
        %1536 = vmatpush1.bf16.msra.mxu0 %v1530
        %1537 = vmatprep.subr.bf16.mxu0 0
        %1538 = vmatpush1.bf16.msra.mxu0 0
        %1539 = vmatprep.subr.bf16.mxu0 0
        %1540 = vmatpush1.bf16.msra.mxu0 0
        %1541 = vmatprep.subr.bf16.mxu0 0
        %1542 = vmatpush1.bf16.msra.mxu0 0
        %1543 = vmatprep.subr.bf16.mxu0 0
        %1544 = vmatpush1.bf16.msra.mxu0 0
        %1545 = vmatprep.subr.bf16.mxu0 0
        %1546 = vmatpush1.bf16.msra.mxu0 0
        %1547 = vmatprep.subr.bf16.mxu0 0
        %1548 = vmatpush1.bf16.msra.mxu0 0
        %1549 = vmatprep.subr.bf16.mxu0 0
        %1550 = vmatpush1.bf16.msra.mxu0 0
        %1551 = vmatprep.subr.bf16.mxu0 0
        %1552 = vmatpush1.bf16.msra.mxu0 0
        %1553 = vmatprep.subr.bf16.mxu0 0
        %1554 = vmatpush1.bf16.msra.mxu0 0
        %1555 = vmatprep.subr.bf16.mxu0 0
        %1556 = vmatpush1.bf16.msra.mxu0 0
        %1557 = vmatprep.subr.bf16.mxu0 0
        %1558 = vmatpush1.bf16.msra.mxu0 0
        %1559 = vmatprep.subr.bf16.mxu0 0
        %1560 = vmatpush1.bf16.msra.mxu0 0
        %1561 = vmatprep.subr.bf16.mxu0 0
        %1562 = vmatpush1.bf16.msra.mxu0 0
        %1563 = vmatprep.subr.bf16.mxu0 0
        %1564 = vmatpush1.bf16.msra.mxu0 0
        %1565 = vmatprep.mubr.bf16.mxu0 0
        %1566 = vmatmul.mubr.bf16.gmra.mrb[0].mxu0 %v1303
        %v1567 = vpop.f32.mrb[0].mxu0
        %v1568 = vadd.f32 %v1516, %v1567
        %v1569 = vpop.f32.mrb[0].mxu0
        %v1570 = vpop.f32.mrb[0].mxu0
        %v1571 = vpop.f32.mrb[0].mxu0
        %1572 = vdwg.mxu0
        %v1573 = vld [vmem:[%s5] sm:$0xf]
        %v1574 = vld [vmem:[%s5 + $0x4] sm:$0xf]
        %v1575 = vld [vmem:[%s5 + $0x8] sm:$0xf]
        %v1576 = vld [vmem:[%s5 + $0xc] sm:$0xf]
        %v1577 = vld [vmem:[%s7] sm:$0xf]
        %v1578 = vld [vmem:[%s7 + $0x4] sm:$0xf]
        %v1579 = vld [vmem:[%s7 + $0x8] sm:$0xf]
        %v1580 = vld [vmem:[%s7 + $0xc] sm:$0xf]
        %v1585 = vunpack.c.l.b16 %v1577
        %v1586 = vunpack.c.l.b16 %v1578
        %v1587 = vunpack.c.l.b16 %v1579
        %v1588 = vunpack.c.l.b16 %v1580
        %v1589 = vpack.c.b16 %v1586, %v1585
        %v1590 = vpack.c.b16 %v1588, %v1587
        %v1594 = vsel %vm1246, %v1225, 0
        %1596 = vmatprep.subr.bf16.mxu0 0
        %1597 = vmatpush1.bf16.msra.mxu0 %v1589
        %1598 = vmatprep.subr.bf16.mxu0 0
        %1599 = vmatpush1.bf16.msra.mxu0 %v1590
        %1600 = vmatprep.subr.bf16.mxu0 0
        %1601 = vmatpush1.bf16.msra.mxu0 0
        %1602 = vmatprep.subr.bf16.mxu0 0
        %1603 = vmatpush1.bf16.msra.mxu0 0
        %1604 = vmatprep.subr.bf16.mxu0 0
        %1605 = vmatpush1.bf16.msra.mxu0 0
        %1606 = vmatprep.subr.bf16.mxu0 0
        %1607 = vmatpush1.bf16.msra.mxu0 0
        %1608 = vmatprep.subr.bf16.mxu0 0
        %1609 = vmatpush1.bf16.msra.mxu0 0
        %1610 = vmatprep.subr.bf16.mxu0 0
        %1611 = vmatpush1.bf16.msra.mxu0 0
        %1612 = vmatprep.subr.bf16.mxu0 0
        %1613 = vmatpush1.bf16.msra.mxu0 0
        %1614 = vmatprep.subr.bf16.mxu0 0
        %1615 = vmatpush1.bf16.msra.mxu0 0
        %1616 = vmatprep.subr.bf16.mxu0 0
        %1617 = vmatpush1.bf16.msra.mxu0 0
        %1618 = vmatprep.subr.bf16.mxu0 0
        %1619 = vmatpush1.bf16.msra.mxu0 0
        %1620 = vmatprep.subr.bf16.mxu0 0
        %1621 = vmatpush1.bf16.msra.mxu0 0
        %1622 = vmatprep.subr.bf16.mxu0 0
        %1623 = vmatpush1.bf16.msra.mxu0 0
        %1624 = vmatprep.subr.bf16.mxu0 0
        %1625 = vmatpush1.bf16.msra.mxu0 0
        %1626 = vmatprep.subr.bf16.mxu0 0
        %1627 = vmatpush1.bf16.msra.mxu0 0
        %1628 = vmatprep.mubr.bf16.mxu0 0
        %1629 = vmatmul.mubr.bf16.gmra.mrb[0].mxu0 %v1594
        %v1630 = vpop.f32.mrb[0].mxu0
        %v1631 = vadd.f32 0.0, %v1630
        %v1632 = vpop.f32.mrb[0].mxu0
        %v1633 = vpop.f32.mrb[0].mxu0
        %v1634 = vpop.f32.mrb[0].mxu0
        %1635 = vdwg.mxu0
        %v1640 = vunpack.c.l.b16 %v1573
        %v1641 = vunpack.c.l.b16 %v1574
        %v1642 = vunpack.c.l.b16 %v1575
        %v1643 = vunpack.c.l.b16 %v1576
        %v1644 = vpack.c.b16 %v1641, %v1640
        %v1645 = vpack.c.b16 %v1643, %v1642
        %v1649 = vsel %vm1246, %v1221, 0
        %1651 = vmatprep.subr.bf16.mxu0 0
        %1652 = vmatpush1.bf16.msra.mxu0 %v1644
        %1653 = vmatprep.subr.bf16.mxu0 0
        %1654 = vmatpush1.bf16.msra.mxu0 %v1645
        %1655 = vmatprep.subr.bf16.mxu0 0
        %1656 = vmatpush1.bf16.msra.mxu0 0
        %1657 = vmatprep.subr.bf16.mxu0 0
        %1658 = vmatpush1.bf16.msra.mxu0 0
        %1659 = vmatprep.subr.bf16.mxu0 0
        %1660 = vmatpush1.bf16.msra.mxu0 0
        %1661 = vmatprep.subr.bf16.mxu0 0
        %1662 = vmatpush1.bf16.msra.mxu0 0
        %1663 = vmatprep.subr.bf16.mxu0 0
        %1664 = vmatpush1.bf16.msra.mxu0 0
        %1665 = vmatprep.subr.bf16.mxu0 0
        %1666 = vmatpush1.bf16.msra.mxu0 0
        %1667 = vmatprep.subr.bf16.mxu0 0
        %1668 = vmatpush1.bf16.msra.mxu0 0
        %1669 = vmatprep.subr.bf16.mxu0 0
        %1670 = vmatpush1.bf16.msra.mxu0 0
        %1671 = vmatprep.subr.bf16.mxu0 0
        %1672 = vmatpush1.bf16.msra.mxu0 0
        %1673 = vmatprep.subr.bf16.mxu0 0
        %1674 = vmatpush1.bf16.msra.mxu0 0
        %1675 = vmatprep.subr.bf16.mxu0 0
        %1676 = vmatpush1.bf16.msra.mxu0 0
        %1677 = vmatprep.subr.bf16.mxu0 0
        %1678 = vmatpush1.bf16.msra.mxu0 0
        %1679 = vmatprep.subr.bf16.mxu0 0
        %1680 = vmatpush1.bf16.msra.mxu0 0
        %1681 = vmatprep.subr.bf16.mxu0 0
        %1682 = vmatpush1.bf16.msra.mxu0 0
        %1683 = vmatprep.mubr.bf16.mxu0 0
        %1684 = vmatmul.mubr.bf16.gmra.mrb[0].mxu0 %v1649
        %v1685 = vpop.f32.mrb[0].mxu0
        %v1686 = vadd.f32 %v1631, %v1685
        %v1687 = vpop.f32.mrb[0].mxu0
        %v1688 = vpop.f32.mrb[0].mxu0
        %v1689 = vpop.f32.mrb[0].mxu0
        %1690 = vdwg.mxu0
        %vm1691 = vcmp.gt.f32.partialorder %v1686, 0.0
        %v1692 = vmin.f32 %v1686, 0.0
        %v1693 = vmul.f32 %v1692, 1.442695
        %v1694 = vpow.pop %v1693
        %v1695 = vsub.f32 %v1694, 1.0
        %v1696 = vsel %vm1691, %v1686, %v1695
        %v1697 = vadd.f32 %v1696, 1.0
        %s1698 = scalar_lea.vmem %s5, 16
        %v1699 = vld [vmem:[%s1698] sm:$0xf]
        %v1700 = vld [vmem:[%s1698 + $0x4] sm:$0xf]
        %v1701 = vld [vmem:[%s1698 + $0x8] sm:$0xf]
        %v1702 = vld [vmem:[%s1698 + $0xc] sm:$0xf]
        %s1703 = scalar_lea.vmem %s7, 16
        %v1704 = vld [vmem:[%s1703] sm:$0xf]
        %v1705 = vld [vmem:[%s1703 + $0x4] sm:$0xf]
        %v1706 = vld [vmem:[%s1703 + $0x8] sm:$0xf]
        %v1707 = vld [vmem:[%s1703 + $0xc] sm:$0xf]
        %v1712 = vunpack.c.l.b16 %v1704
        %v1713 = vunpack.c.l.b16 %v1705
        %v1714 = vunpack.c.l.b16 %v1706
        %v1715 = vunpack.c.l.b16 %v1707
        %v1716 = vpack.c.b16 %v1713, %v1712
        %v1717 = vpack.c.b16 %v1715, %v1714
        %1720 = vmatprep.subr.bf16.mxu0 0
        %1721 = vmatpush1.bf16.msra.mxu0 %v1716
        %1722 = vmatprep.subr.bf16.mxu0 0
        %1723 = vmatpush1.bf16.msra.mxu0 %v1717
        %1724 = vmatprep.subr.bf16.mxu0 0
        %1725 = vmatpush1.bf16.msra.mxu0 0
        %1726 = vmatprep.subr.bf16.mxu0 0
        %1727 = vmatpush1.bf16.msra.mxu0 0
        %1728 = vmatprep.subr.bf16.mxu0 0
        %1729 = vmatpush1.bf16.msra.mxu0 0
        %1730 = vmatprep.subr.bf16.mxu0 0
        %1731 = vmatpush1.bf16.msra.mxu0 0
        %1732 = vmatprep.subr.bf16.mxu0 0
        %1733 = vmatpush1.bf16.msra.mxu0 0
        %1734 = vmatprep.subr.bf16.mxu0 0
        %1735 = vmatpush1.bf16.msra.mxu0 0
        %1736 = vmatprep.subr.bf16.mxu0 0
        %1737 = vmatpush1.bf16.msra.mxu0 0
        %1738 = vmatprep.subr.bf16.mxu0 0
        %1739 = vmatpush1.bf16.msra.mxu0 0
        %1740 = vmatprep.subr.bf16.mxu0 0
        %1741 = vmatpush1.bf16.msra.mxu0 0
        %1742 = vmatprep.subr.bf16.mxu0 0
        %1743 = vmatpush1.bf16.msra.mxu0 0
        %1744 = vmatprep.subr.bf16.mxu0 0
        %1745 = vmatpush1.bf16.msra.mxu0 0
        %1746 = vmatprep.subr.bf16.mxu0 0
        %1747 = vmatpush1.bf16.msra.mxu0 0
        %1748 = vmatprep.subr.bf16.mxu0 0
        %1749 = vmatpush1.bf16.msra.mxu0 0
        %1750 = vmatprep.subr.bf16.mxu0 0
        %1751 = vmatpush1.bf16.msra.mxu0 0
        %1752 = vmatprep.mubr.bf16.mxu0 0
        %1753 = vmatmul.mubr.bf16.gmra.mrb[0].mxu0 %v1594
        %v1754 = vpop.f32.mrb[0].mxu0
        %v1755 = vadd.f32 0.0, %v1754
        %v1756 = vpop.f32.mrb[0].mxu0
        %v1757 = vpop.f32.mrb[0].mxu0
        %v1758 = vpop.f32.mrb[0].mxu0
        %1759 = vdwg.mxu0
        %v1764 = vunpack.c.l.b16 %v1699
        %v1765 = vunpack.c.l.b16 %v1700
        %v1766 = vunpack.c.l.b16 %v1701
        %v1767 = vunpack.c.l.b16 %v1702
        %v1768 = vpack.c.b16 %v1765, %v1764
        %v1769 = vpack.c.b16 %v1767, %v1766
        %1772 = vmatprep.subr.bf16.mxu0 0
        %1773 = vmatpush1.bf16.msra.mxu0 %v1768
        %1774 = vmatprep.subr.bf16.mxu0 0
        %1775 = vmatpush1.bf16.msra.mxu0 %v1769
        %1776 = vmatprep.subr.bf16.mxu0 0
        %1777 = vmatpush1.bf16.msra.mxu0 0
        %1778 = vmatprep.subr.bf16.mxu0 0
        %1779 = vmatpush1.bf16.msra.mxu0 0
        %1780 = vmatprep.subr.bf16.mxu0 0
        %1781 = vmatpush1.bf16.msra.mxu0 0
        %1782 = vmatprep.subr.bf16.mxu0 0
        %1783 = vmatpush1.bf16.msra.mxu0 0
        %1784 = vmatprep.subr.bf16.mxu0 0
        %1785 = vmatpush1.bf16.msra.mxu0 0
        %1786 = vmatprep.subr.bf16.mxu0 0
        %1787 = vmatpush1.bf16.msra.mxu0 0
        %1788 = vmatprep.subr.bf16.mxu0 0
        %1789 = vmatpush1.bf16.msra.mxu0 0
        %1790 = vmatprep.subr.bf16.mxu0 0
        %1791 = vmatpush1.bf16.msra.mxu0 0
        %1792 = vmatprep.subr.bf16.mxu0 0
        %1793 = vmatpush1.bf16.msra.mxu0 0
        %1794 = vmatprep.subr.bf16.mxu0 0
        %1795 = vmatpush1.bf16.msra.mxu0 0
        %1796 = vmatprep.subr.bf16.mxu0 0
        %1797 = vmatpush1.bf16.msra.mxu0 0
        %1798 = vmatprep.subr.bf16.mxu0 0
        %1799 = vmatpush1.bf16.msra.mxu0 0
        %1800 = vmatprep.subr.bf16.mxu0 0
        %1801 = vmatpush1.bf16.msra.mxu0 0
        %1802 = vmatprep.subr.bf16.mxu0 0
        %1803 = vmatpush1.bf16.msra.mxu0 0
        %1804 = vmatprep.mubr.bf16.mxu0 0
        %1805 = vmatmul.mubr.bf16.gmra.mrb[0].mxu0 %v1649
        %v1806 = vpop.f32.mrb[0].mxu0
        %v1807 = vadd.f32 %v1755, %v1806
        %v1808 = vpop.f32.mrb[0].mxu0
        %v1809 = vpop.f32.mrb[0].mxu0
        %v1810 = vpop.f32.mrb[0].mxu0
        %1811 = vdwg.mxu0
        %vm1812 = vcmp.gt.f32.partialorder %v1807, 0.0
        %v1813 = vmin.f32 %v1807, 0.0
        %v1814 = vmul.f32 %v1813, 1.442695
        %v1815 = vpow.pop %v1814
        %v1816 = vsub.f32 %v1815, 1.0
        %v1817 = vsel %vm1812, %v1807, %v1816
        %v1818 = vadd.f32 %v1817, 1.0
        %s1819 = scalar_lea.vmem %s5, 32
        %v1820 = vld [vmem:[%s1819] sm:$0xf]
        %v1821 = vld [vmem:[%s1819 + $0x4] sm:$0xf]
        %v1822 = vld [vmem:[%s1819 + $0x8] sm:$0xf]
        %v1823 = vld [vmem:[%s1819 + $0xc] sm:$0xf]
        %s1824 = scalar_lea.vmem %s7, 32
        %v1825 = vld [vmem:[%s1824] sm:$0xf]
        %v1826 = vld [vmem:[%s1824 + $0x4] sm:$0xf]
        %v1827 = vld [vmem:[%s1824 + $0x8] sm:$0xf]
        %v1828 = vld [vmem:[%s1824 + $0xc] sm:$0xf]
        %v1833 = vunpack.c.l.b16 %v1825
        %v1834 = vunpack.c.l.b16 %v1826
        %v1835 = vunpack.c.l.b16 %v1827
        %v1836 = vunpack.c.l.b16 %v1828
        %v1837 = vpack.c.b16 %v1834, %v1833
        %v1838 = vpack.c.b16 %v1836, %v1835
        %1841 = vmatprep.subr.bf16.mxu0 0
        %1842 = vmatpush1.bf16.msra.mxu0 %v1837
        %1843 = vmatprep.subr.bf16.mxu0 0
        %1844 = vmatpush1.bf16.msra.mxu0 %v1838
        %1845 = vmatprep.subr.bf16.mxu0 0
        %1846 = vmatpush1.bf16.msra.mxu0 0
        %1847 = vmatprep.subr.bf16.mxu0 0
        %1848 = vmatpush1.bf16.msra.mxu0 0
        %1849 = vmatprep.subr.bf16.mxu0 0
        %1850 = vmatpush1.bf16.msra.mxu0 0
        %1851 = vmatprep.subr.bf16.mxu0 0
        %1852 = vmatpush1.bf16.msra.mxu0 0
        %1853 = vmatprep.subr.bf16.mxu0 0
        %1854 = vmatpush1.bf16.msra.mxu0 0
        %1855 = vmatprep.subr.bf16.mxu0 0
        %1856 = vmatpush1.bf16.msra.mxu0 0
        %1857 = vmatprep.subr.bf16.mxu0 0
        %1858 = vmatpush1.bf16.msra.mxu0 0
        %1859 = vmatprep.subr.bf16.mxu0 0
        %1860 = vmatpush1.bf16.msra.mxu0 0
        %1861 = vmatprep.subr.bf16.mxu0 0
        %1862 = vmatpush1.bf16.msra.mxu0 0
        %1863 = vmatprep.subr.bf16.mxu0 0
        %1864 = vmatpush1.bf16.msra.mxu0 0
        %1865 = vmatprep.subr.bf16.mxu0 0
        %1866 = vmatpush1.bf16.msra.mxu0 0
        %1867 = vmatprep.subr.bf16.mxu0 0
        %1868 = vmatpush1.bf16.msra.mxu0 0
        %1869 = vmatprep.subr.bf16.mxu0 0
        %1870 = vmatpush1.bf16.msra.mxu0 0
        %1871 = vmatprep.subr.bf16.mxu0 0
        %1872 = vmatpush1.bf16.msra.mxu0 0
        %1873 = vmatprep.mubr.bf16.mxu0 0
        %1874 = vmatmul.mubr.bf16.gmra.mrb[0].mxu0 %v1594
        %v1875 = vpop.f32.mrb[0].mxu0
        %v1876 = vadd.f32 0.0, %v1875
        %v1877 = vpop.f32.mrb[0].mxu0
        %v1878 = vpop.f32.mrb[0].mxu0
        %v1879 = vpop.f32.mrb[0].mxu0
        %1880 = vdwg.mxu0
        %v1885 = vunpack.c.l.b16 %v1820
        %v1886 = vunpack.c.l.b16 %v1821
        %v1887 = vunpack.c.l.b16 %v1822
        %v1888 = vunpack.c.l.b16 %v1823
        %v1889 = vpack.c.b16 %v1886, %v1885
        %v1890 = vpack.c.b16 %v1888, %v1887
        %1893 = vmatprep.subr.bf16.mxu0 0
        %1894 = vmatpush1.bf16.msra.mxu0 %v1889
        %1895 = vmatprep.subr.bf16.mxu0 0
        %1896 = vmatpush1.bf16.msra.mxu0 %v1890
        %1897 = vmatprep.subr.bf16.mxu0 0
        %1898 = vmatpush1.bf16.msra.mxu0 0
        %1899 = vmatprep.subr.bf16.mxu0 0
        %1900 = vmatpush1.bf16.msra.mxu0 0
        %1901 = vmatprep.subr.bf16.mxu0 0
        %1902 = vmatpush1.bf16.msra.mxu0 0
        %1903 = vmatprep.subr.bf16.mxu0 0
        %1904 = vmatpush1.bf16.msra.mxu0 0
        %1905 = vmatprep.subr.bf16.mxu0 0
        %1906 = vmatpush1.bf16.msra.mxu0 0
        %1907 = vmatprep.subr.bf16.mxu0 0
        %1908 = vmatpush1.bf16.msra.mxu0 0
        %1909 = vmatprep.subr.bf16.mxu0 0
        %1910 = vmatpush1.bf16.msra.mxu0 0
        %1911 = vmatprep.subr.bf16.mxu0 0
        %1912 = vmatpush1.bf16.msra.mxu0 0
        %1913 = vmatprep.subr.bf16.mxu0 0
        %1914 = vmatpush1.bf16.msra.mxu0 0
        %1915 = vmatprep.subr.bf16.mxu0 0
        %1916 = vmatpush1.bf16.msra.mxu0 0
        %1917 = vmatprep.subr.bf16.mxu0 0
        %1918 = vmatpush1.bf16.msra.mxu0 0
        %1919 = vmatprep.subr.bf16.mxu0 0
        %1920 = vmatpush1.bf16.msra.mxu0 0
        %1921 = vmatprep.subr.bf16.mxu0 0
        %1922 = vmatpush1.bf16.msra.mxu0 0
        %1923 = vmatprep.subr.bf16.mxu0 0
        %1924 = vmatpush1.bf16.msra.mxu0 0
        %1925 = vmatprep.mubr.bf16.mxu0 0
        %1926 = vmatmul.mubr.bf16.gmra.mrb[0].mxu0 %v1649
        %v1927 = vpop.f32.mrb[0].mxu0
        %v1928 = vadd.f32 %v1876, %v1927
        %v1929 = vpop.f32.mrb[0].mxu0
        %v1930 = vpop.f32.mrb[0].mxu0
        %v1931 = vpop.f32.mrb[0].mxu0
        %1932 = vdwg.mxu0
        %vm1933 = vcmp.gt.f32.partialorder %v1928, 0.0
        %v1934 = vmin.f32 %v1928, 0.0
        %v1935 = vmul.f32 %v1934, 1.442695
        %v1936 = vpow.pop %v1935
        %v1937 = vsub.f32 %v1936, 1.0
        %v1938 = vsel %vm1933, %v1928, %v1937
        %v1939 = vadd.f32 %v1938, 1.0
        %v1940 = vld [vmem:[%s1184] sm:$0xff]
        %v1941 = vld [vmem:[%s1026] sm:$0xff]
        %vm1942 = vcmp.gt.f32.partialorder %v1941, 0.0
        %v1943 = vmin.f32 %v1941, 0.0
        %v1944 = vmul.f32 %v1943, 1.442695
        %v1945 = vpow.pop %v1944
        %v1946 = vsub.f32 %v1945, 1.0
        %v1947 = vsel %vm1942, %v1941, %v1946
        %v1948 = vadd.f32 %v1947, 1.0
        %v1949 = vmax.f32 %v1948, 1e-06
        %v1950 = vrcp.pop %v1949
        %v1951 = vld [vmem:[%s1208] sm:$0xff]
        %v1952 = vld [vmem:[%s1212] sm:$0x7]
        %v1953 = vld [vmem:[%s1216] sm:$0xff]
        %v1954 = vld [vmem:[%s1034] sm:$0x1]
        %1956 = vset.pattern.permute.xlu0 0
        %1957 = vperm.xlu0 %1956, %v1953
        %v1958 = vpop.permute.xlu0 %1957
        %v1961 = vlaneseq
        %v1962 = vshrl.u32 %v1961, 7
        %v1963 = vsub.s32 0, %v1962
        %v1964 = vrot.slane %v1954, %v1963
        %v1966 = vmul.f32 %v1958, %v1964
        %v1967 = vmax.f32 %v1697, 1e-06
        %v1968 = vmax.f32 %v1818, 1e-06
        %v1969 = vld [vmem:[%s18] sm:$0xff]
        %v1970 = vld [vmem:[#allocation13] sm:$0x1]
        %v1972 = vlaneseq
        %v1973 = vshrl.u32 %v1972, 7
        %v1974 = vsub.s32 0, %v1973
        %v1975 = vrot.slane %v1970, %v1974
        %vm1977 = vcmask 64512
        %v1979 = vsel %vm1977, %v1940, 0
        %1981 = vmatprep.subr.mxu0 0.0
        %1982 = vmatpush1.msra.mxu0 %v1969
        %1983 = vmatprep.subr.mxu0 0.0
        %1984 = vmatpush1.msra.mxu0 0.0
        %1985 = vmatprep.subr.mxu0 0.0
        %1986 = vmatpush1.msra.mxu0 0.0
        %1987 = vmatprep.subr.mxu0 0.0
        %1988 = vmatpush1.msra.mxu0 0.0
        %1989 = vmatprep.subr.mxu0 0.0
        %1990 = vmatpush1.msra.mxu0 0.0
        %1991 = vmatprep.subr.mxu0 0.0
        %1992 = vmatpush1.msra.mxu0 0.0
        %1993 = vmatprep.subr.mxu0 0.0
        %1994 = vmatpush1.msra.mxu0 0.0
        %1995 = vmatprep.subr.mxu0 0.0
        %1996 = vmatpush1.msra.mxu0 0.0
        %1997 = vmatprep.subr.mxu0 0.0
        %1998 = vmatpush1.msra.mxu0 0.0
        %1999 = vmatprep.subr.mxu0 0.0
        %2000 = vmatpush1.msra.mxu0 0.0
        %2001 = vmatprep.subr.mxu0 0.0
        %2002 = vmatpush1.msra.mxu0 0.0
        %2003 = vmatprep.subr.mxu0 0.0
        %2004 = vmatpush1.msra.mxu0 0.0
        %2005 = vmatprep.subr.mxu0 0.0
        %2006 = vmatpush1.msra.mxu0 0.0
        %2007 = vmatprep.subr.mxu0 0.0
        %2008 = vmatpush1.msra.mxu0 0.0
        %2009 = vmatprep.subr.mxu0 0.0
        %2010 = vmatpush1.msra.mxu0 0.0
        %2011 = vmatprep.subr.mxu0 0.0
        %2012 = vmatpush1.msra.mxu0 0.0
        %2013 = vmatprep.subr.mxu0 0.0
        %2014 = vmatpush1.msra.mxu0 0.0
        %2015 = vmatprep.subr.mxu0 0.0
        %2016 = vmatpush1.msra.mxu0 0.0
        %2017 = vmatprep.subr.mxu0 0.0
        %2018 = vmatpush1.msra.mxu0 0.0
        %2019 = vmatprep.subr.mxu0 0.0
        %2020 = vmatpush1.msra.mxu0 0.0
        %2021 = vmatprep.subr.mxu0 0.0
        %2022 = vmatpush1.msra.mxu0 0.0
        %2023 = vmatprep.subr.mxu0 0.0
        %2024 = vmatpush1.msra.mxu0 0.0
        %2025 = vmatprep.subr.mxu0 0.0
        %2026 = vmatpush1.msra.mxu0 0.0
        %2027 = vmatprep.subr.mxu0 0.0
        %2028 = vmatpush1.msra.mxu0 0.0
        %2029 = vmatprep.subr.mxu0 0.0
        %2030 = vmatpush1.msra.mxu0 0.0
        %2031 = vmatprep.subr.mxu0 0.0
        %2032 = vmatpush1.msra.mxu0 0.0
        %2033 = vmatprep.subr.mxu0 0.0
        %2034 = vmatpush1.msra.mxu0 0.0
        %2035 = vmatprep.subr.mxu0 0.0
        %2036 = vmatpush1.msra.mxu0 0.0
        %2037 = vmatprep.subr.mxu0 0.0
        %2038 = vmatpush1.msra.mxu0 0.0
        %2039 = vmatprep.subr.mxu0 0.0
        %2040 = vmatpush1.msra.mxu0 0.0
        %2041 = vmatprep.subr.mxu0 0.0
        %2042 = vmatpush1.msra.mxu0 0.0
        %2043 = vmatprep.subr.mxu0 0.0
        %2044 = vmatpush1.msra.mxu0 0.0
        %2045 = vmatprep.mubr.f32.mxu0 0.0
        %2046 = vmatmul.mubr.f32.gmra.mrb[0].mxu0 %v1979
        %v2047 = vpop.f32.mrb[0].mxu0
        %v2048 = vadd.f32 %v1975, %v2047
        %v2049 = vpop.f32.mrb[0].mxu0
        %2050 = vdwg.mxu0
        %s2051 = scalar_lea.vmem %s18, 8
        %v2052 = vld [vmem:[%s2051] sm:$0xff]
        %s2053 = scalar_lea.vmem [#allocation13], 1
        %v2054 = vld [vmem:[%s2053] sm:$0x1]
        %v2056 = vlaneseq
        %v2057 = vshrl.u32 %v2056, 7
        %v2058 = vsub.s32 0, %v2057
        %v2059 = vrot.slane %v2054, %v2058
        %2061 = vmatprep.subr.mxu0 0.0
        %2062 = vmatpush1.msra.mxu0 %v2052
        %2063 = vmatprep.subr.mxu0 0.0
        %2064 = vmatpush1.msra.mxu0 0.0
        %2065 = vmatprep.subr.mxu0 0.0
        %2066 = vmatpush1.msra.mxu0 0.0
        %2067 = vmatprep.subr.mxu0 0.0
        %2068 = vmatpush1.msra.mxu0 0.0
        %2069 = vmatprep.subr.mxu0 0.0
        %2070 = vmatpush1.msra.mxu0 0.0
        %2071 = vmatprep.subr.mxu0 0.0
        %2072 = vmatpush1.msra.mxu0 0.0
        %2073 = vmatprep.subr.mxu0 0.0
        %2074 = vmatpush1.msra.mxu0 0.0
        %2075 = vmatprep.subr.mxu0 0.0
        %2076 = vmatpush1.msra.mxu0 0.0
        %2077 = vmatprep.subr.mxu0 0.0
        %2078 = vmatpush1.msra.mxu0 0.0
        %2079 = vmatprep.subr.mxu0 0.0
        %2080 = vmatpush1.msra.mxu0 0.0
        %2081 = vmatprep.subr.mxu0 0.0
        %2082 = vmatpush1.msra.mxu0 0.0
        %2083 = vmatprep.subr.mxu0 0.0
        %2084 = vmatpush1.msra.mxu0 0.0
        %2085 = vmatprep.subr.mxu0 0.0
        %2086 = vmatpush1.msra.mxu0 0.0
        %2087 = vmatprep.subr.mxu0 0.0
        %2088 = vmatpush1.msra.mxu0 0.0
        %2089 = vmatprep.subr.mxu0 0.0
        %2090 = vmatpush1.msra.mxu0 0.0
        %2091 = vmatprep.subr.mxu0 0.0
        %2092 = vmatpush1.msra.mxu0 0.0
        %2093 = vmatprep.subr.mxu0 0.0
        %2094 = vmatpush1.msra.mxu0 0.0
        %2095 = vmatprep.subr.mxu0 0.0
        %2096 = vmatpush1.msra.mxu0 0.0
        %2097 = vmatprep.subr.mxu0 0.0
        %2098 = vmatpush1.msra.mxu0 0.0
        %2099 = vmatprep.subr.mxu0 0.0
        %2100 = vmatpush1.msra.mxu0 0.0
        %2101 = vmatprep.subr.mxu0 0.0
        %2102 = vmatpush1.msra.mxu0 0.0
        %2103 = vmatprep.subr.mxu0 0.0
        %2104 = vmatpush1.msra.mxu0 0.0
        %2105 = vmatprep.subr.mxu0 0.0
        %2106 = vmatpush1.msra.mxu0 0.0
        %2107 = vmatprep.subr.mxu0 0.0
        %2108 = vmatpush1.msra.mxu0 0.0
        %2109 = vmatprep.subr.mxu0 0.0
        %2110 = vmatpush1.msra.mxu0 0.0
        %2111 = vmatprep.subr.mxu0 0.0
        %2112 = vmatpush1.msra.mxu0 0.0
        %2113 = vmatprep.subr.mxu0 0.0
        %2114 = vmatpush1.msra.mxu0 0.0
        %2115 = vmatprep.subr.mxu0 0.0
        %2116 = vmatpush1.msra.mxu0 0.0
        %2117 = vmatprep.subr.mxu0 0.0
        %2118 = vmatpush1.msra.mxu0 0.0
        %2119 = vmatprep.subr.mxu0 0.0
        %2120 = vmatpush1.msra.mxu0 0.0
        %2121 = vmatprep.subr.mxu0 0.0
        %2122 = vmatpush1.msra.mxu0 0.0
        %2123 = vmatprep.subr.mxu0 0.0
        %2124 = vmatpush1.msra.mxu0 0.0
        %2125 = vmatprep.mubr.f32.mxu0 0.0
        %2126 = vmatmul.mubr.f32.gmra.mrb[0].mxu0 %v1979
        %v2127 = vpop.f32.mrb[0].mxu0
        %v2128 = vadd.f32 %v2059, %v2127
        %v2129 = vpop.f32.mrb[0].mxu0
        %2130 = vdwg.mxu0
        %v2131 = vrcp.pop %v1967
        %v2132 = vrcp.pop %v1968
        %v2133 = vld [vmem:[%s1189] sm:$0x7]
        %v2134 = vld [vmem:[%s1194] sm:$0x7]
        %v2135 = vld [vmem:[%s1199] sm:$0x7]
        %v2136 = vld [vmem:[%s1204] sm:$0x7]
        %2138 = vset.pattern.permute.xlu0 0
        %2139 = vperm.xlu0 %2138, %v1951
        %v2140 = vpop.permute.xlu0 %2139
        %v2142 = vlaneseq
        %v2143 = vshrl.u32 %v2142, 7
        %v2144 = vsub.s32 0, %v2143
        %v2145 = vrot.slane %v2133, %v2144
        %v2146 = vmul.f32 %v2140, %v2145
        %2147 = vset.pattern.permute.xlu0 1
        %2148 = vperm.xlu0 %2147, %v1951
        %v2149 = vpop.permute.xlu0 %2148
        %v2151 = vlaneseq
        %v2152 = vshrl.u32 %v2151, 7
        %v2153 = vsub.s32 1, %v2152
        %v2154 = vrot.slane %v2133, %v2153
        %v2155 = vmul.f32 %v2149, %v2154
        %v2156 = vadd.f32 %v2146, %v2155
        %2157 = vset.pattern.permute.xlu0 2
        %2158 = vperm.xlu0 %2157, %v1951
        %v2159 = vpop.permute.xlu0 %2158
        %v2161 = vlaneseq
        %v2162 = vshrl.u32 %v2161, 7
        %v2163 = vsub.s32 2, %v2162
        %v2164 = vrot.slane %v2133, %v2163
        %v2165 = vmul.f32 %v2159, %v2164
        %v2166 = vadd.f32 %v2156, %v2165
        %v2167 = vlaneseq
        %v2168 = vshrl.u32 %v2167, 7
        %v2169 = vsub.s32 0, %v2168
        %v2170 = vrot.slane %v2134, %v2169
        %v2171 = vmul.f32 %v2140, %v2170
        %v2172 = vlaneseq
        %v2173 = vshrl.u32 %v2172, 7
        %v2174 = vsub.s32 1, %v2173
        %v2175 = vrot.slane %v2134, %v2174
        %v2176 = vmul.f32 %v2149, %v2175
        %v2177 = vadd.f32 %v2171, %v2176
        %v2178 = vlaneseq
        %v2179 = vshrl.u32 %v2178, 7
        %v2180 = vsub.s32 2, %v2179
        %v2181 = vrot.slane %v2134, %v2180
        %v2182 = vmul.f32 %v2159, %v2181
        %v2183 = vadd.f32 %v2177, %v2182
        %v2184 = vlaneseq
        %v2185 = vshrl.u32 %v2184, 7
        %v2186 = vsub.s32 0, %v2185
        %v2187 = vrot.slane %v2135, %v2186
        %v2188 = vmul.f32 %v2140, %v2187
        %v2189 = vlaneseq
        %v2190 = vshrl.u32 %v2189, 7
        %v2191 = vsub.s32 1, %v2190
        %v2192 = vrot.slane %v2135, %v2191
        %v2193 = vmul.f32 %v2149, %v2192
        %v2194 = vadd.f32 %v2188, %v2193
        %v2195 = vlaneseq
        %v2196 = vshrl.u32 %v2195, 7
        %v2197 = vsub.s32 2, %v2196
        %v2198 = vrot.slane %v2135, %v2197
        %v2199 = vmul.f32 %v2159, %v2198
        %v2200 = vadd.f32 %v2194, %v2199
        %v2201 = vlaneseq
        %v2202 = vshrl.u32 %v2201, 7
        %v2203 = vsub.s32 0, %v2202
        %v2204 = vrot.slane %v2136, %v2203
        %v2205 = vmul.f32 %v2140, %v2204
        %v2206 = vlaneseq
        %v2207 = vshrl.u32 %v2206, 7
        %v2208 = vsub.s32 1, %v2207
        %v2209 = vrot.slane %v2136, %v2208
        %v2210 = vmul.f32 %v2149, %v2209
        %v2211 = vadd.f32 %v2205, %v2210
        %v2212 = vlaneseq
        %v2213 = vshrl.u32 %v2212, 7
        %v2214 = vsub.s32 2, %v2213
        %v2215 = vrot.slane %v2136, %v2214
        %v2216 = vmul.f32 %v2159, %v2215
        %v2217 = vadd.f32 %v2211, %v2216
        %v2218 = vadd.f32 %v2131, %v1950
        %v2219 = vmul.f32 %v1340, %v2131
        %v2220 = vmul.f32 %v2048, %v1950
        %v2221 = vadd.f32 %v2219, %v2220
        %2223 = vrot.lane.b32.xlu0 %v2218, 8
        %v2224 = vpop.permute.xlu0 %2223
        %2226 = vrot.lane.b32.xlu0 %v2218, 16
        %v2227 = vpop.permute.xlu0 %2226
        %v2229 = vsel %vm1977, %v2218, %v2224
        %vm2230 = vcmask 130048
        %v2231 = vsel %vm2230, %v2229, %v2227
        %v2232 = vadd.f32 %v2231, %v2166
        %v2233 = vrcp.pop %v2232
        %2235 = vrot.lane.b32.xlu0 %v2221, 8
        %v2236 = vpop.permute.xlu0 %2235
        %2238 = vrot.lane.b32.xlu0 %v2221, 16
        %v2239 = vpop.permute.xlu0 %2238
        %v2241 = vsel %vm1977, %v2221, %v2236
        %v2242 = vsel %vm2230, %v2241, %v2239
        %v2243 = vadd.f32 %v2242, %v2183
        %v2244 = vmul.f32 %v2233, %v2243
        %v2245 = vmax.f32 %v2233, 1e-24
        %v2246 = vrsqrt.pop %v2245
        %v2247 = vmul.f32 %v2245, %v2246
        %vm2248 = vcmp.eq.f32.partialorder %v2245, inf
        %v2249 = vsel %vm2248, %v2245, %v2247
        %vm2250 = vcmp.eq.f32.partialorder %v2245, 0.0
        %v2251 = vand.u32 %v2245, 2147483648
        %v2252 = vsel %vm2250, %v2251, %v2249
        %v2253 = vadd.f32 %v2132, %v1950
        %v2254 = vmul.f32 %v1454, %v2132
        %v2255 = vmul.f32 %v2128, %v1950
        %v2256 = vadd.f32 %v2254, %v2255
        %v2257 = vmul.f32 %v2244, %v2244
        %v2258 = vadd.f32 %v2257, %v2233
        %v2259 = vsel %vm1977, %v2258, 0.0
        %2260 = vadd.xlane.f32.xlu0 %v2259
        %v2261 = vpop.xlane.xlu0 %2260
        %2263 = vrot.lane.b32.xlu0 %v2252, 8
        %v2264 = vpop.permute.xlu0 %2263
        %v2266 = vsel %vm1977, %v2244, %v2264
        %2268 = vrot.lane.b32.xlu0 %v2258, 120
        %v2269 = vpop.permute.xlu0 %2268
        %v2271 = vsel %vm1977, %v2269, 0.0
        %2272 = vadd.xlane.f32.xlu0 %v2271
        %v2273 = vpop.xlane.xlu0 %2272
        %2275 = vrot.lane.b32.xlu0 %v2244, 120
        %v2276 = vpop.permute.xlu0 %2275
        %v2278 = vsel %vm1977, %v2276, %v2252
        %2279 = vrot.lane.b32.xlu0 %v2258, 112
        %v2280 = vpop.permute.xlu0 %2279
        %v2282 = vsel %vm1977, %v2280, 0.0
        %2283 = vadd.xlane.f32.xlu0 %v2282
        %v2284 = vpop.xlane.xlu0 %2283
        %2285 = vrot.lane.b32.xlu0 %v2244, 112
        %v2286 = vpop.permute.xlu0 %2285
        %2288 = vrot.lane.b32.xlu0 %v2252, 120
        %v2289 = vpop.permute.xlu0 %2288
        %v2291 = vsel %vm1977, %v2286, %v2289
        %vm2292 = vcmask 7168
        %v2293 = vsel %vm2292, %v2261, %v2273
        %vm2294 = vcmask 15360
        %v2295 = vsel %vm2294, %v2293, %v2284
        %v2296 = vadd.f32 %v2253, %v2200
        %v2297 = vrcp.pop %v2296
        %v2298 = vadd.f32 %v2256, %v2217
        %v2299 = vmul.f32 %v2297, %v2298
        %v2300 = vmax.f32 %v2297, 1e-24
        %v2301 = vrsqrt.pop %v2300
        %v2302 = vmul.f32 %v2300, %v2301
        %vm2303 = vcmp.eq.f32.partialorder %v2300, inf
        %v2304 = vsel %vm2303, %v2300, %v2302
        %vm2305 = vcmp.eq.f32.partialorder %v2300, 0.0
        %v2306 = vand.u32 %v2300, 2147483648
        %v2307 = vsel %vm2305, %v2306, %v2304
        %v2308 = vmul.f32 %v2299, %v2299
        %v2309 = vadd.f32 %v2308, %v2297
        %v2310 = vsel %vm1977, %v2309, 0.0
        %2311 = vadd.xlane.f32.xlu0 %v2310
        %v2312 = vpop.xlane.xlu0 %2311
        %2314 = vrot.lane.b32.xlu0 %v2307, 8
        %v2315 = vpop.permute.xlu0 %2314
        %v2317 = vsel %vm1977, %v2299, %v2315
        %v2318 = vmul.f32 %v2317, -2.0
        %2320 = vrot.lane.b32.xlu0 %v2200, 120
        %v2321 = vpop.permute.xlu0 %2320
        %v2323 = vadd.f32 %v2253, %v2321
        %v2324 = vrcp.pop %v2323
        %2326 = vrot.lane.b32.xlu0 %v2217, 120
        %v2327 = vpop.permute.xlu0 %2326
        %v2329 = vadd.f32 %v2256, %v2327
        %v2330 = vmul.f32 %v2324, %v2329
        %v2331 = vmax.f32 %v2324, 1e-24
        %v2332 = vrsqrt.pop %v2331
        %v2333 = vmul.f32 %v2331, %v2332
        %vm2334 = vcmp.eq.f32.partialorder %v2331, inf
        %v2335 = vsel %vm2334, %v2331, %v2333
        %vm2336 = vcmp.eq.f32.partialorder %v2331, 0.0
        %v2337 = vand.u32 %v2331, 2147483648
        %v2338 = vsel %vm2336, %v2337, %v2335
        %v2339 = vmul.f32 %v2330, %v2330
        %v2340 = vadd.f32 %v2339, %v2324
        %v2341 = vsel %vm1977, %v2340, 0.0
        %2342 = vadd.xlane.f32.xlu0 %v2341
        %v2343 = vpop.xlane.xlu0 %2342
        %2345 = vrot.lane.b32.xlu0 %v2338, 8
        %v2346 = vpop.permute.xlu0 %2345
        %v2348 = vsel %vm1977, %v2330, %v2346
        %v2349 = vmul.f32 %v2348, -2.0
        %2350 = vrot.lane.b32.xlu0 %v2200, 112
        %v2351 = vpop.permute.xlu0 %2350
        %v2353 = vadd.f32 %v2253, %v2351
        %v2354 = vrcp.pop %v2353
        %2355 = vrot.lane.b32.xlu0 %v2217, 112
        %v2356 = vpop.permute.xlu0 %2355
        %v2358 = vadd.f32 %v2256, %v2356
        %v2359 = vmul.f32 %v2354, %v2358
        %v2360 = vmax.f32 %v2354, 1e-24
        %v2361 = vrsqrt.pop %v2360
        %v2362 = vmul.f32 %v2360, %v2361
        %vm2363 = vcmp.eq.f32.partialorder %v2360, inf
        %v2364 = vsel %vm2363, %v2360, %v2362
        %vm2365 = vcmp.eq.f32.partialorder %v2360, 0.0
        %v2366 = vand.u32 %v2360, 2147483648
        %v2367 = vsel %vm2365, %v2366, %v2364
        %v2368 = vmul.f32 %v2359, %v2359
        %v2369 = vadd.f32 %v2368, %v2354
        %v2370 = vsel %vm1977, %v2369, 0.0
        %2371 = vadd.xlane.f32.xlu0 %v2370
        %v2372 = vpop.xlane.xlu0 %2371
        %2374 = vrot.lane.b32.xlu0 %v2367, 8
        %v2375 = vpop.permute.xlu0 %2374
        %v2377 = vsel %vm1977, %v2359, %v2375
        %v2378 = vmul.f32 %v2377, -2.0
        %v2379 = vsel %vm2292, %v2312, %v2343
        %v2380 = vsel %vm2294, %v2379, %v2372
        %2381 = vrot.lane.b32.xlu0 %v1951, 3
        %v2382 = vpop.permute.xlu0 %2381
        %vm2384 = vcmask 23552
        %v2385 = vsel %vm2384, %v2295, %v2382
        %2387 = vrot.lane.b32.xlu0 %v2380, 3
        %v2388 = vpop.permute.xlu0 %2387
        %v2390 = vsel %vm2384, %v1951, %v2388
        %v2392 = vsel %vm2230, %v2266, 0
        %v2395 = vsel %vm2230, %v2318, 0
        %2397 = vmatprep.subr.mxu0 0.0
        %2398 = vmatpush1.xpose.msra.mxu0 %v2395
        %2399 = vmatprep.subr.mxu0 0.0
        %2400 = vmatpush1.xpose.msra.mxu0 0.0
        %2401 = vmatprep.subr.mxu0 0.0
        %2402 = vmatpush1.xpose.msra.mxu0 0.0
        %2403 = vmatprep.subr.mxu0 0.0
        %2404 = vmatpush1.xpose.msra.mxu0 0.0
        %2405 = vmatprep.subr.mxu0 0.0
        %2406 = vmatpush1.xpose.msra.mxu0 0.0
        %2407 = vmatprep.subr.mxu0 0.0
        %2408 = vmatpush1.xpose.msra.mxu0 0.0
        %2409 = vmatprep.subr.mxu0 0.0
        %2410 = vmatpush1.xpose.msra.mxu0 0.0
        %2411 = vmatprep.subr.mxu0 0.0
        %2412 = vmatpush1.xpose.msra.mxu0 0.0
        %2413 = vmatprep.subr.mxu0 0.0
        %2414 = vmatpush1.xpose.msra.mxu0 0.0
        %2415 = vmatprep.subr.mxu0 0.0
        %2416 = vmatpush1.xpose.msra.mxu0 0.0
        %2417 = vmatprep.subr.mxu0 0.0
        %2418 = vmatpush1.xpose.msra.mxu0 0.0
        %2419 = vmatprep.subr.mxu0 0.0
        %2420 = vmatpush1.xpose.msra.mxu0 0.0
        %2421 = vmatprep.subr.mxu0 0.0
        %2422 = vmatpush1.xpose.msra.mxu0 0.0
        %2423 = vmatprep.subr.mxu0 0.0
        %2424 = vmatpush1.xpose.msra.mxu0 0.0
        %2425 = vmatprep.subr.mxu0 0.0
        %2426 = vmatpush1.xpose.msra.mxu0 0.0
        %2427 = vmatprep.subr.mxu0 0.0
        %2428 = vmatpush1.xpose.msra.mxu0 0.0
        %2429 = vmatprep.subr.mxu0 0.0
        %2430 = vmatpush1.xpose.msra.mxu0 0.0
        %2431 = vmatprep.subr.mxu0 0.0
        %2432 = vmatpush1.xpose.msra.mxu0 0.0
        %2433 = vmatprep.subr.mxu0 0.0
        %2434 = vmatpush1.xpose.msra.mxu0 0.0
        %2435 = vmatprep.subr.mxu0 0.0
        %2436 = vmatpush1.xpose.msra.mxu0 0.0
        %2437 = vmatprep.subr.mxu0 0.0
        %2438 = vmatpush1.xpose.msra.mxu0 0.0
        %2439 = vmatprep.subr.mxu0 0.0
        %2440 = vmatpush1.xpose.msra.mxu0 0.0
        %2441 = vmatprep.subr.mxu0 0.0
        %2442 = vmatpush1.xpose.msra.mxu0 0.0
        %2443 = vmatprep.subr.mxu0 0.0
        %2444 = vmatpush1.xpose.msra.mxu0 0.0
        %2445 = vmatprep.subr.mxu0 0.0
        %2446 = vmatpush1.xpose.msra.mxu0 0.0
        %2447 = vmatprep.subr.mxu0 0.0
        %2448 = vmatpush1.xpose.msra.mxu0 0.0
        %2449 = vmatprep.subr.mxu0 0.0
        %2450 = vmatpush1.xpose.msra.mxu0 0.0
        %2451 = vmatprep.subr.mxu0 0.0
        %2452 = vmatpush1.xpose.msra.mxu0 0.0
        %2453 = vmatprep.subr.mxu0 0.0
        %2454 = vmatpush1.xpose.msra.mxu0 0.0
        %2455 = vmatprep.subr.mxu0 0.0
        %2456 = vmatpush1.xpose.msra.mxu0 0.0
        %2457 = vmatprep.subr.mxu0 0.0
        %2458 = vmatpush1.xpose.msra.mxu0 0.0
        %2459 = vmatprep.subr.mxu0 0.0
        %2460 = vmatpush1.xpose.msra.mxu0 0.0
        %2461 = vmatprep.mubr.f32.mxu0 0.0
        %2462 = vmatmul.mubr.f32.gmra.mrb[0].mxu0 %v2392
        %v2463 = vpop.f32.mrb[0].mxu0
        %v2464 = vadd.f32 0.0, %v2463
        %v2465 = vpop.f32.mrb[0].mxu0
        %2466 = vdwg.mxu0
        %v2467 = vlaneseq
        %v2468 = vshrl.u32 %v2467, 7
        %v2469 = vsub.s32 0, %v2468
        %v2470 = vrot.slane %v1952, %v2469
        %v2471 = vmul.f32 %v2140, %v2470
        %v2472 = vmul.f32 %v2471, %v2464
        %vm2473 = vcmask 48128
        %v2475 = vsel %vm2473, %v2385, 0
        %v2478 = vsel %vm2473, %v2390, 0
        %2480 = vmatprep.subr.mxu0 0.0
        %2481 = vmatpush1.xpose.msra.mxu0 %v2478
        %2482 = vmatprep.subr.mxu0 0.0
        %2483 = vmatpush1.xpose.msra.mxu0 0.0
        %2484 = vmatprep.subr.mxu0 0.0
        %2485 = vmatpush1.xpose.msra.mxu0 0.0
        %2486 = vmatprep.subr.mxu0 0.0
        %2487 = vmatpush1.xpose.msra.mxu0 0.0
        %2488 = vmatprep.subr.mxu0 0.0
        %2489 = vmatpush1.xpose.msra.mxu0 0.0
        %2490 = vmatprep.subr.mxu0 0.0
        %2491 = vmatpush1.xpose.msra.mxu0 0.0
        %2492 = vmatprep.subr.mxu0 0.0
        %2493 = vmatpush1.xpose.msra.mxu0 0.0
        %2494 = vmatprep.subr.mxu0 0.0
        %2495 = vmatpush1.xpose.msra.mxu0 0.0
        %2496 = vmatprep.subr.mxu0 0.0
        %2497 = vmatpush1.xpose.msra.mxu0 0.0
        %2498 = vmatprep.subr.mxu0 0.0
        %2499 = vmatpush1.xpose.msra.mxu0 0.0
        %2500 = vmatprep.subr.mxu0 0.0
        %2501 = vmatpush1.xpose.msra.mxu0 0.0
        %2502 = vmatprep.subr.mxu0 0.0
        %2503 = vmatpush1.xpose.msra.mxu0 0.0
        %2504 = vmatprep.subr.mxu0 0.0
        %2505 = vmatpush1.xpose.msra.mxu0 0.0
        %2506 = vmatprep.subr.mxu0 0.0
        %2507 = vmatpush1.xpose.msra.mxu0 0.0
        %2508 = vmatprep.subr.mxu0 0.0
        %2509 = vmatpush1.xpose.msra.mxu0 0.0
        %2510 = vmatprep.subr.mxu0 0.0
        %2511 = vmatpush1.xpose.msra.mxu0 0.0
        %2512 = vmatprep.subr.mxu0 0.0
        %2513 = vmatpush1.xpose.msra.mxu0 0.0
        %2514 = vmatprep.subr.mxu0 0.0
        %2515 = vmatpush1.xpose.msra.mxu0 0.0
        %2516 = vmatprep.subr.mxu0 0.0
        %2517 = vmatpush1.xpose.msra.mxu0 0.0
        %2518 = vmatprep.subr.mxu0 0.0
        %2519 = vmatpush1.xpose.msra.mxu0 0.0
        %2520 = vmatprep.subr.mxu0 0.0
        %2521 = vmatpush1.xpose.msra.mxu0 0.0
        %2522 = vmatprep.subr.mxu0 0.0
        %2523 = vmatpush1.xpose.msra.mxu0 0.0
        %2524 = vmatprep.subr.mxu0 0.0
        %2525 = vmatpush1.xpose.msra.mxu0 0.0
        %2526 = vmatprep.subr.mxu0 0.0
        %2527 = vmatpush1.xpose.msra.mxu0 0.0
        %2528 = vmatprep.subr.mxu0 0.0
        %2529 = vmatpush1.xpose.msra.mxu0 0.0
        %2530 = vmatprep.subr.mxu0 0.0
        %2531 = vmatpush1.xpose.msra.mxu0 0.0
        %2532 = vmatprep.subr.mxu0 0.0
        %2533 = vmatpush1.xpose.msra.mxu0 0.0
        %2534 = vmatprep.subr.mxu0 0.0
        %2535 = vmatpush1.xpose.msra.mxu0 0.0
        %2536 = vmatprep.subr.mxu0 0.0
        %2537 = vmatpush1.xpose.msra.mxu0 0.0
        %2538 = vmatprep.subr.mxu0 0.0
        %2539 = vmatpush1.xpose.msra.mxu0 0.0
        %2540 = vmatprep.subr.mxu0 0.0
        %2541 = vmatpush1.xpose.msra.mxu0 0.0
        %2542 = vmatprep.subr.mxu0 0.0
        %2543 = vmatpush1.xpose.msra.mxu0 0.0
        %2544 = vmatprep.mubr.f32.mxu0 0.0
        %2545 = vmatmul.mubr.f32.gmra.mrb[0].mxu0 %v2475
        %v2546 = vpop.f32.mrb[0].mxu0
        %v2547 = vadd.f32 %v2472, %v2546
        %v2548 = vpop.f32.mrb[0].mxu0
        %2549 = vdwg.mxu0
        %v2551 = vsel %vm2230, %v2278, 0
        %2553 = vmatprep.subr.mxu0 0.0
        %2554 = vmatpush1.xpose.msra.mxu0 %v2395
        %2555 = vmatprep.subr.mxu0 0.0
        %2556 = vmatpush1.xpose.msra.mxu0 0.0
        %2557 = vmatprep.subr.mxu0 0.0
        %2558 = vmatpush1.xpose.msra.mxu0 0.0
        %2559 = vmatprep.subr.mxu0 0.0
        %2560 = vmatpush1.xpose.msra.mxu0 0.0
        %2561 = vmatprep.subr.mxu0 0.0
        %2562 = vmatpush1.xpose.msra.mxu0 0.0
        %2563 = vmatprep.subr.mxu0 0.0
        %2564 = vmatpush1.xpose.msra.mxu0 0.0
        %2565 = vmatprep.subr.mxu0 0.0
        %2566 = vmatpush1.xpose.msra.mxu0 0.0
        %2567 = vmatprep.subr.mxu0 0.0
        %2568 = vmatpush1.xpose.msra.mxu0 0.0
        %2569 = vmatprep.subr.mxu0 0.0
        %2570 = vmatpush1.xpose.msra.mxu0 0.0
        %2571 = vmatprep.subr.mxu0 0.0
        %2572 = vmatpush1.xpose.msra.mxu0 0.0
        %2573 = vmatprep.subr.mxu0 0.0
        %2574 = vmatpush1.xpose.msra.mxu0 0.0
        %2575 = vmatprep.subr.mxu0 0.0
        %2576 = vmatpush1.xpose.msra.mxu0 0.0
        %2577 = vmatprep.subr.mxu0 0.0
        %2578 = vmatpush1.xpose.msra.mxu0 0.0
        %2579 = vmatprep.subr.mxu0 0.0
        %2580 = vmatpush1.xpose.msra.mxu0 0.0
        %2581 = vmatprep.subr.mxu0 0.0
        %2582 = vmatpush1.xpose.msra.mxu0 0.0
        %2583 = vmatprep.subr.mxu0 0.0
        %2584 = vmatpush1.xpose.msra.mxu0 0.0
        %2585 = vmatprep.subr.mxu0 0.0
        %2586 = vmatpush1.xpose.msra.mxu0 0.0
        %2587 = vmatprep.subr.mxu0 0.0
        %2588 = vmatpush1.xpose.msra.mxu0 0.0
        %2589 = vmatprep.subr.mxu0 0.0
        %2590 = vmatpush1.xpose.msra.mxu0 0.0
        %2591 = vmatprep.subr.mxu0 0.0
        %2592 = vmatpush1.xpose.msra.mxu0 0.0
        %2593 = vmatprep.subr.mxu0 0.0
        %2594 = vmatpush1.xpose.msra.mxu0 0.0
        %2595 = vmatprep.subr.mxu0 0.0
        %2596 = vmatpush1.xpose.msra.mxu0 0.0
        %2597 = vmatprep.subr.mxu0 0.0
        %2598 = vmatpush1.xpose.msra.mxu0 0.0
        %2599 = vmatprep.subr.mxu0 0.0
        %2600 = vmatpush1.xpose.msra.mxu0 0.0
        %2601 = vmatprep.subr.mxu0 0.0
        %2602 = vmatpush1.xpose.msra.mxu0 0.0
        %2603 = vmatprep.subr.mxu0 0.0
        %2604 = vmatpush1.xpose.msra.mxu0 0.0
        %2605 = vmatprep.subr.mxu0 0.0
        %2606 = vmatpush1.xpose.msra.mxu0 0.0
        %2607 = vmatprep.subr.mxu0 0.0
        %2608 = vmatpush1.xpose.msra.mxu0 0.0
        %2609 = vmatprep.subr.mxu0 0.0
        %2610 = vmatpush1.xpose.msra.mxu0 0.0
        %2611 = vmatprep.subr.mxu0 0.0
        %2612 = vmatpush1.xpose.msra.mxu0 0.0
        %2613 = vmatprep.subr.mxu0 0.0
        %2614 = vmatpush1.xpose.msra.mxu0 0.0
        %2615 = vmatprep.subr.mxu0 0.0
        %2616 = vmatpush1.xpose.msra.mxu0 0.0
        %2617 = vmatprep.mubr.f32.mxu0 0.0
        %2618 = vmatmul.mubr.f32.gmra.mrb[0].mxu0 %v2551
        %v2619 = vpop.f32.mrb[0].mxu0
        %v2620 = vadd.f32 0.0, %v2619
        %v2621 = vpop.f32.mrb[0].mxu0
        %2622 = vdwg.mxu0
        %v2623 = vlaneseq
        %v2624 = vshrl.u32 %v2623, 7
        %v2625 = vsub.s32 1, %v2624
        %v2626 = vrot.slane %v1952, %v2625
        %v2627 = vmul.f32 %v2140, %v2626
        %v2628 = vmul.f32 %v2627, %v2620
        %v2629 = vadd.f32 %v2547, %v2628
        %v2631 = vsel %vm2230, %v2291, 0
        %2633 = vmatprep.subr.mxu0 0.0
        %2634 = vmatpush1.xpose.msra.mxu0 %v2395
        %2635 = vmatprep.subr.mxu0 0.0
        %2636 = vmatpush1.xpose.msra.mxu0 0.0
        %2637 = vmatprep.subr.mxu0 0.0
        %2638 = vmatpush1.xpose.msra.mxu0 0.0
        %2639 = vmatprep.subr.mxu0 0.0
        %2640 = vmatpush1.xpose.msra.mxu0 0.0
        %2641 = vmatprep.subr.mxu0 0.0
        %2642 = vmatpush1.xpose.msra.mxu0 0.0
        %2643 = vmatprep.subr.mxu0 0.0
        %2644 = vmatpush1.xpose.msra.mxu0 0.0
        %2645 = vmatprep.subr.mxu0 0.0
        %2646 = vmatpush1.xpose.msra.mxu0 0.0
        %2647 = vmatprep.subr.mxu0 0.0
        %2648 = vmatpush1.xpose.msra.mxu0 0.0
        %2649 = vmatprep.subr.mxu0 0.0
        %2650 = vmatpush1.xpose.msra.mxu0 0.0
        %2651 = vmatprep.subr.mxu0 0.0
        %2652 = vmatpush1.xpose.msra.mxu0 0.0
        %2653 = vmatprep.subr.mxu0 0.0
        %2654 = vmatpush1.xpose.msra.mxu0 0.0
        %2655 = vmatprep.subr.mxu0 0.0
        %2656 = vmatpush1.xpose.msra.mxu0 0.0
        %2657 = vmatprep.subr.mxu0 0.0
        %2658 = vmatpush1.xpose.msra.mxu0 0.0
        %2659 = vmatprep.subr.mxu0 0.0
        %2660 = vmatpush1.xpose.msra.mxu0 0.0
        %2661 = vmatprep.subr.mxu0 0.0
        %2662 = vmatpush1.xpose.msra.mxu0 0.0
        %2663 = vmatprep.subr.mxu0 0.0
        %2664 = vmatpush1.xpose.msra.mxu0 0.0
        %2665 = vmatprep.subr.mxu0 0.0
        %2666 = vmatpush1.xpose.msra.mxu0 0.0
        %2667 = vmatprep.subr.mxu0 0.0
        %2668 = vmatpush1.xpose.msra.mxu0 0.0
        %2669 = vmatprep.subr.mxu0 0.0
        %2670 = vmatpush1.xpose.msra.mxu0 0.0
        %2671 = vmatprep.subr.mxu0 0.0
        %2672 = vmatpush1.xpose.msra.mxu0 0.0
        %2673 = vmatprep.subr.mxu0 0.0
        %2674 = vmatpush1.xpose.msra.mxu0 0.0
        %2675 = vmatprep.subr.mxu0 0.0
        %2676 = vmatpush1.xpose.msra.mxu0 0.0
        %2677 = vmatprep.subr.mxu0 0.0
        %2678 = vmatpush1.xpose.msra.mxu0 0.0
        %2679 = vmatprep.subr.mxu0 0.0
        %2680 = vmatpush1.xpose.msra.mxu0 0.0
        %2681 = vmatprep.subr.mxu0 0.0
        %2682 = vmatpush1.xpose.msra.mxu0 0.0
        %2683 = vmatprep.subr.mxu0 0.0
        %2684 = vmatpush1.xpose.msra.mxu0 0.0
        %2685 = vmatprep.subr.mxu0 0.0
        %2686 = vmatpush1.xpose.msra.mxu0 0.0
        %2687 = vmatprep.subr.mxu0 0.0
        %2688 = vmatpush1.xpose.msra.mxu0 0.0
        %2689 = vmatprep.subr.mxu0 0.0
        %2690 = vmatpush1.xpose.msra.mxu0 0.0
        %2691 = vmatprep.subr.mxu0 0.0
        %2692 = vmatpush1.xpose.msra.mxu0 0.0
        %2693 = vmatprep.subr.mxu0 0.0
        %2694 = vmatpush1.xpose.msra.mxu0 0.0
        %2695 = vmatprep.subr.mxu0 0.0
        %2696 = vmatpush1.xpose.msra.mxu0 0.0
        %2697 = vmatprep.mubr.f32.mxu0 0.0
        %2698 = vmatmul.mubr.f32.gmra.mrb[0].mxu0 %v2631
        %v2699 = vpop.f32.mrb[0].mxu0
        %v2700 = vadd.f32 0.0, %v2699
        %v2701 = vpop.f32.mrb[0].mxu0
        %2702 = vdwg.mxu0
        %v2703 = vlaneseq
        %v2704 = vshrl.u32 %v2703, 7
        %v2705 = vsub.s32 2, %v2704
        %v2706 = vrot.slane %v1952, %v2705
        %v2707 = vmul.f32 %v2140, %v2706
        %v2708 = vmul.f32 %v2707, %v2700
        %v2709 = vadd.f32 %v2629, %v2708
        %v2711 = vsel %vm2230, %v2349, 0
        %2713 = vmatprep.subr.mxu0 0.0
        %2714 = vmatpush1.xpose.msra.mxu0 %v2711
        %2715 = vmatprep.subr.mxu0 0.0
        %2716 = vmatpush1.xpose.msra.mxu0 0.0
        %2717 = vmatprep.subr.mxu0 0.0
        %2718 = vmatpush1.xpose.msra.mxu0 0.0
        %2719 = vmatprep.subr.mxu0 0.0
        %2720 = vmatpush1.xpose.msra.mxu0 0.0
        %2721 = vmatprep.subr.mxu0 0.0
        %2722 = vmatpush1.xpose.msra.mxu0 0.0
        %2723 = vmatprep.subr.mxu0 0.0
        %2724 = vmatpush1.xpose.msra.mxu0 0.0
        %2725 = vmatprep.subr.mxu0 0.0
        %2726 = vmatpush1.xpose.msra.mxu0 0.0
        %2727 = vmatprep.subr.mxu0 0.0
        %2728 = vmatpush1.xpose.msra.mxu0 0.0
        %2729 = vmatprep.subr.mxu0 0.0
        %2730 = vmatpush1.xpose.msra.mxu0 0.0
        %2731 = vmatprep.subr.mxu0 0.0
        %2732 = vmatpush1.xpose.msra.mxu0 0.0
        %2733 = vmatprep.subr.mxu0 0.0
        %2734 = vmatpush1.xpose.msra.mxu0 0.0
        %2735 = vmatprep.subr.mxu0 0.0
        %2736 = vmatpush1.xpose.msra.mxu0 0.0
        %2737 = vmatprep.subr.mxu0 0.0
        %2738 = vmatpush1.xpose.msra.mxu0 0.0
        %2739 = vmatprep.subr.mxu0 0.0
        %2740 = vmatpush1.xpose.msra.mxu0 0.0
        %2741 = vmatprep.subr.mxu0 0.0
        %2742 = vmatpush1.xpose.msra.mxu0 0.0
        %2743 = vmatprep.subr.mxu0 0.0
        %2744 = vmatpush1.xpose.msra.mxu0 0.0
        %2745 = vmatprep.subr.mxu0 0.0
        %2746 = vmatpush1.xpose.msra.mxu0 0.0
        %2747 = vmatprep.subr.mxu0 0.0
        %2748 = vmatpush1.xpose.msra.mxu0 0.0
        %2749 = vmatprep.subr.mxu0 0.0
        %2750 = vmatpush1.xpose.msra.mxu0 0.0
        %2751 = vmatprep.subr.mxu0 0.0
        %2752 = vmatpush1.xpose.msra.mxu0 0.0
        %2753 = vmatprep.subr.mxu0 0.0
        %2754 = vmatpush1.xpose.msra.mxu0 0.0
        %2755 = vmatprep.subr.mxu0 0.0
        %2756 = vmatpush1.xpose.msra.mxu0 0.0
        %2757 = vmatprep.subr.mxu0 0.0
        %2758 = vmatpush1.xpose.msra.mxu0 0.0
        %2759 = vmatprep.subr.mxu0 0.0
        %2760 = vmatpush1.xpose.msra.mxu0 0.0
        %2761 = vmatprep.subr.mxu0 0.0
        %2762 = vmatpush1.xpose.msra.mxu0 0.0
        %2763 = vmatprep.subr.mxu0 0.0
        %2764 = vmatpush1.xpose.msra.mxu0 0.0
        %2765 = vmatprep.subr.mxu0 0.0
        %2766 = vmatpush1.xpose.msra.mxu0 0.0
        %2767 = vmatprep.subr.mxu0 0.0
        %2768 = vmatpush1.xpose.msra.mxu0 0.0
        %2769 = vmatprep.subr.mxu0 0.0
        %2770 = vmatpush1.xpose.msra.mxu0 0.0
        %2771 = vmatprep.subr.mxu0 0.0
        %2772 = vmatpush1.xpose.msra.mxu0 0.0
        %2773 = vmatprep.subr.mxu0 0.0
        %2774 = vmatpush1.xpose.msra.mxu0 0.0
        %2775 = vmatprep.subr.mxu0 0.0
        %2776 = vmatpush1.xpose.msra.mxu0 0.0
        %2777 = vmatprep.mubr.f32.mxu0 0.0
        %2778 = vmatmul.mubr.f32.gmra.mrb[0].mxu0 %v2392
        %v2779 = vpop.f32.mrb[0].mxu0
        %v2780 = vadd.f32 0.0, %v2779
        %v2781 = vpop.f32.mrb[0].mxu0
        %2782 = vdwg.mxu0
        %v2783 = vmul.f32 %v2149, %v2470
        %v2784 = vmul.f32 %v2783, %v2780
        %v2785 = vadd.f32 %v2709, %v2784
        %2786 = vmatprep.subr.mxu0 0.0
        %2787 = vmatpush1.xpose.msra.mxu0 %v2711
        %2788 = vmatprep.subr.mxu0 0.0
        %2789 = vmatpush1.xpose.msra.mxu0 0.0
        %2790 = vmatprep.subr.mxu0 0.0
        %2791 = vmatpush1.xpose.msra.mxu0 0.0
        %2792 = vmatprep.subr.mxu0 0.0
        %2793 = vmatpush1.xpose.msra.mxu0 0.0
        %2794 = vmatprep.subr.mxu0 0.0
        %2795 = vmatpush1.xpose.msra.mxu0 0.0
        %2796 = vmatprep.subr.mxu0 0.0
        %2797 = vmatpush1.xpose.msra.mxu0 0.0
        %2798 = vmatprep.subr.mxu0 0.0
        %2799 = vmatpush1.xpose.msra.mxu0 0.0
        %2800 = vmatprep.subr.mxu0 0.0
        %2801 = vmatpush1.xpose.msra.mxu0 0.0
        %2802 = vmatprep.subr.mxu0 0.0
        %2803 = vmatpush1.xpose.msra.mxu0 0.0
        %2804 = vmatprep.subr.mxu0 0.0
        %2805 = vmatpush1.xpose.msra.mxu0 0.0
        %2806 = vmatprep.subr.mxu0 0.0
        %2807 = vmatpush1.xpose.msra.mxu0 0.0
        %2808 = vmatprep.subr.mxu0 0.0
        %2809 = vmatpush1.xpose.msra.mxu0 0.0
        %2810 = vmatprep.subr.mxu0 0.0
        %2811 = vmatpush1.xpose.msra.mxu0 0.0
        %2812 = vmatprep.subr.mxu0 0.0
        %2813 = vmatpush1.xpose.msra.mxu0 0.0
        %2814 = vmatprep.subr.mxu0 0.0
        %2815 = vmatpush1.xpose.msra.mxu0 0.0
        %2816 = vmatprep.subr.mxu0 0.0
        %2817 = vmatpush1.xpose.msra.mxu0 0.0
        %2818 = vmatprep.subr.mxu0 0.0
        %2819 = vmatpush1.xpose.msra.mxu0 0.0
        %2820 = vmatprep.subr.mxu0 0.0
        %2821 = vmatpush1.xpose.msra.mxu0 0.0
        %2822 = vmatprep.subr.mxu0 0.0
        %2823 = vmatpush1.xpose.msra.mxu0 0.0
        %2824 = vmatprep.subr.mxu0 0.0
        %2825 = vmatpush1.xpose.msra.mxu0 0.0
        %2826 = vmatprep.subr.mxu0 0.0
        %2827 = vmatpush1.xpose.msra.mxu0 0.0
        %2828 = vmatprep.subr.mxu0 0.0
        %2829 = vmatpush1.xpose.msra.mxu0 0.0
        %2830 = vmatprep.subr.mxu0 0.0
        %2831 = vmatpush1.xpose.msra.mxu0 0.0
        %2832 = vmatprep.subr.mxu0 0.0
        %2833 = vmatpush1.xpose.msra.mxu0 0.0
        %2834 = vmatprep.subr.mxu0 0.0
        %2835 = vmatpush1.xpose.msra.mxu0 0.0
        %2836 = vmatprep.subr.mxu0 0.0
        %2837 = vmatpush1.xpose.msra.mxu0 0.0
        %2838 = vmatprep.subr.mxu0 0.0
        %2839 = vmatpush1.xpose.msra.mxu0 0.0
        %2840 = vmatprep.subr.mxu0 0.0
        %2841 = vmatpush1.xpose.msra.mxu0 0.0
        %2842 = vmatprep.subr.mxu0 0.0
        %2843 = vmatpush1.xpose.msra.mxu0 0.0
        %2844 = vmatprep.subr.mxu0 0.0
        %2845 = vmatpush1.xpose.msra.mxu0 0.0
        %2846 = vmatprep.subr.mxu0 0.0
        %2847 = vmatpush1.xpose.msra.mxu0 0.0
        %2848 = vmatprep.subr.mxu0 0.0
        %2849 = vmatpush1.xpose.msra.mxu0 0.0
        %2850 = vmatprep.mubr.f32.mxu0 0.0
        %2851 = vmatmul.mubr.f32.gmra.mrb[0].mxu0 %v2551
        %v2852 = vpop.f32.mrb[0].mxu0
        %v2853 = vadd.f32 0.0, %v2852
        %v2854 = vpop.f32.mrb[0].mxu0
        %2855 = vdwg.mxu0
        %v2856 = vmul.f32 %v2149, %v2626
        %v2857 = vmul.f32 %v2856, %v2853
        %v2858 = vadd.f32 %v2785, %v2857
        %2859 = vmatprep.subr.mxu0 0.0
        %2860 = vmatpush1.xpose.msra.mxu0 %v2711
        %2861 = vmatprep.subr.mxu0 0.0
        %2862 = vmatpush1.xpose.msra.mxu0 0.0
        %2863 = vmatprep.subr.mxu0 0.0
        %2864 = vmatpush1.xpose.msra.mxu0 0.0
        %2865 = vmatprep.subr.mxu0 0.0
        %2866 = vmatpush1.xpose.msra.mxu0 0.0
        %2867 = vmatprep.subr.mxu0 0.0
        %2868 = vmatpush1.xpose.msra.mxu0 0.0
        %2869 = vmatprep.subr.mxu0 0.0
        %2870 = vmatpush1.xpose.msra.mxu0 0.0
        %2871 = vmatprep.subr.mxu0 0.0
        %2872 = vmatpush1.xpose.msra.mxu0 0.0
        %2873 = vmatprep.subr.mxu0 0.0
        %2874 = vmatpush1.xpose.msra.mxu0 0.0
        %2875 = vmatprep.subr.mxu0 0.0
        %2876 = vmatpush1.xpose.msra.mxu0 0.0
        %2877 = vmatprep.subr.mxu0 0.0
        %2878 = vmatpush1.xpose.msra.mxu0 0.0
        %2879 = vmatprep.subr.mxu0 0.0
        %2880 = vmatpush1.xpose.msra.mxu0 0.0
        %2881 = vmatprep.subr.mxu0 0.0
        %2882 = vmatpush1.xpose.msra.mxu0 0.0
        %2883 = vmatprep.subr.mxu0 0.0
        %2884 = vmatpush1.xpose.msra.mxu0 0.0
        %2885 = vmatprep.subr.mxu0 0.0
        %2886 = vmatpush1.xpose.msra.mxu0 0.0
        %2887 = vmatprep.subr.mxu0 0.0
        %2888 = vmatpush1.xpose.msra.mxu0 0.0
        %2889 = vmatprep.subr.mxu0 0.0
        %2890 = vmatpush1.xpose.msra.mxu0 0.0
        %2891 = vmatprep.subr.mxu0 0.0
        %2892 = vmatpush1.xpose.msra.mxu0 0.0
        %2893 = vmatprep.subr.mxu0 0.0
        %2894 = vmatpush1.xpose.msra.mxu0 0.0
        %2895 = vmatprep.subr.mxu0 0.0
        %2896 = vmatpush1.xpose.msra.mxu0 0.0
        %2897 = vmatprep.subr.mxu0 0.0
        %2898 = vmatpush1.xpose.msra.mxu0 0.0
        %2899 = vmatprep.subr.mxu0 0.0
        %2900 = vmatpush1.xpose.msra.mxu0 0.0
        %2901 = vmatprep.subr.mxu0 0.0
        %2902 = vmatpush1.xpose.msra.mxu0 0.0
        %2903 = vmatprep.subr.mxu0 0.0
        %2904 = vmatpush1.xpose.msra.mxu0 0.0
        %2905 = vmatprep.subr.mxu0 0.0
        %2906 = vmatpush1.xpose.msra.mxu0 0.0
        %2907 = vmatprep.subr.mxu0 0.0
        %2908 = vmatpush1.xpose.msra.mxu0 0.0
        %2909 = vmatprep.subr.mxu0 0.0
        %2910 = vmatpush1.xpose.msra.mxu0 0.0
        %2911 = vmatprep.subr.mxu0 0.0
        %2912 = vmatpush1.xpose.msra.mxu0 0.0
        %2913 = vmatprep.subr.mxu0 0.0
        %2914 = vmatpush1.xpose.msra.mxu0 0.0
        %2915 = vmatprep.subr.mxu0 0.0
        %2916 = vmatpush1.xpose.msra.mxu0 0.0
        %2917 = vmatprep.subr.mxu0 0.0
        %2918 = vmatpush1.xpose.msra.mxu0 0.0
        %2919 = vmatprep.subr.mxu0 0.0
        %2920 = vmatpush1.xpose.msra.mxu0 0.0
        %2921 = vmatprep.subr.mxu0 0.0
        %2922 = vmatpush1.xpose.msra.mxu0 0.0
        %2923 = vmatprep.mubr.f32.mxu0 0.0
        %2924 = vmatmul.mubr.f32.gmra.mrb[0].mxu0 %v2631
        %v2925 = vpop.f32.mrb[0].mxu0
        %v2926 = vadd.f32 0.0, %v2925
        %v2927 = vpop.f32.mrb[0].mxu0
        %2928 = vdwg.mxu0
        %v2929 = vmul.f32 %v2149, %v2706
        %v2930 = vmul.f32 %v2929, %v2926
        %v2931 = vadd.f32 %v2858, %v2930
        %v2933 = vsel %vm2230, %v2378, 0
        %2935 = vmatprep.subr.mxu0 0.0
        %2936 = vmatpush1.xpose.msra.mxu0 %v2933
        %2937 = vmatprep.subr.mxu0 0.0
        %2938 = vmatpush1.xpose.msra.mxu0 0.0
        %2939 = vmatprep.subr.mxu0 0.0
        %2940 = vmatpush1.xpose.msra.mxu0 0.0
        %2941 = vmatprep.subr.mxu0 0.0
        %2942 = vmatpush1.xpose.msra.mxu0 0.0
        %2943 = vmatprep.subr.mxu0 0.0
        %2944 = vmatpush1.xpose.msra.mxu0 0.0
        %2945 = vmatprep.subr.mxu0 0.0
        %2946 = vmatpush1.xpose.msra.mxu0 0.0
        %2947 = vmatprep.subr.mxu0 0.0
        %2948 = vmatpush1.xpose.msra.mxu0 0.0
        %2949 = vmatprep.subr.mxu0 0.0
        %2950 = vmatpush1.xpose.msra.mxu0 0.0
        %2951 = vmatprep.subr.mxu0 0.0
        %2952 = vmatpush1.xpose.msra.mxu0 0.0
        %2953 = vmatprep.subr.mxu0 0.0
        %2954 = vmatpush1.xpose.msra.mxu0 0.0
        %2955 = vmatprep.subr.mxu0 0.0
        %2956 = vmatpush1.xpose.msra.mxu0 0.0
        %2957 = vmatprep.subr.mxu0 0.0
        %2958 = vmatpush1.xpose.msra.mxu0 0.0
        %2959 = vmatprep.subr.mxu0 0.0
        %2960 = vmatpush1.xpose.msra.mxu0 0.0
        %2961 = vmatprep.subr.mxu0 0.0
        %2962 = vmatpush1.xpose.msra.mxu0 0.0
        %2963 = vmatprep.subr.mxu0 0.0
        %2964 = vmatpush1.xpose.msra.mxu0 0.0
        %2965 = vmatprep.subr.mxu0 0.0
        %2966 = vmatpush1.xpose.msra.mxu0 0.0
        %2967 = vmatprep.subr.mxu0 0.0
        %2968 = vmatpush1.xpose.msra.mxu0 0.0
        %2969 = vmatprep.subr.mxu0 0.0
        %2970 = vmatpush1.xpose.msra.mxu0 0.0
        %2971 = vmatprep.subr.mxu0 0.0
        %2972 = vmatpush1.xpose.msra.mxu0 0.0
        %2973 = vmatprep.subr.mxu0 0.0
        %2974 = vmatpush1.xpose.msra.mxu0 0.0
        %2975 = vmatprep.subr.mxu0 0.0
        %2976 = vmatpush1.xpose.msra.mxu0 0.0
        %2977 = vmatprep.subr.mxu0 0.0
        %2978 = vmatpush1.xpose.msra.mxu0 0.0
        %2979 = vmatprep.subr.mxu0 0.0
        %2980 = vmatpush1.xpose.msra.mxu0 0.0
        %2981 = vmatprep.subr.mxu0 0.0
        %2982 = vmatpush1.xpose.msra.mxu0 0.0
        %2983 = vmatprep.subr.mxu0 0.0
        %2984 = vmatpush1.xpose.msra.mxu0 0.0
        %2985 = vmatprep.subr.mxu0 0.0
        %2986 = vmatpush1.xpose.msra.mxu0 0.0
        %2987 = vmatprep.subr.mxu0 0.0
        %2988 = vmatpush1.xpose.msra.mxu0 0.0
        %2989 = vmatprep.subr.mxu0 0.0
        %2990 = vmatpush1.xpose.msra.mxu0 0.0
        %2991 = vmatprep.subr.mxu0 0.0
        %2992 = vmatpush1.xpose.msra.mxu0 0.0
        %2993 = vmatprep.subr.mxu0 0.0
        %2994 = vmatpush1.xpose.msra.mxu0 0.0
        %2995 = vmatprep.subr.mxu0 0.0
        %2996 = vmatpush1.xpose.msra.mxu0 0.0
        %2997 = vmatprep.subr.mxu0 0.0
        %2998 = vmatpush1.xpose.msra.mxu0 0.0
        %2999 = vmatprep.mubr.f32.mxu0 0.0
        %3000 = vmatmul.mubr.f32.gmra.mrb[0].mxu0 %v2392
        %v3001 = vpop.f32.mrb[0].mxu0
        %v3002 = vadd.f32 0.0, %v3001
        %v3003 = vpop.f32.mrb[0].mxu0
        %3004 = vdwg.mxu0
        %v3005 = vmul.f32 %v2159, %v2470
        %v3006 = vmul.f32 %v3005, %v3002
        %v3007 = vadd.f32 %v2931, %v3006
        %3008 = vmatprep.subr.mxu0 0.0
        %3009 = vmatpush1.xpose.msra.mxu0 %v2933
        %3010 = vmatprep.subr.mxu0 0.0
        %3011 = vmatpush1.xpose.msra.mxu0 0.0
        %3012 = vmatprep.subr.mxu0 0.0
        %3013 = vmatpush1.xpose.msra.mxu0 0.0
        %3014 = vmatprep.subr.mxu0 0.0
        %3015 = vmatpush1.xpose.msra.mxu0 0.0
        %3016 = vmatprep.subr.mxu0 0.0
        %3017 = vmatpush1.xpose.msra.mxu0 0.0
        %3018 = vmatprep.subr.mxu0 0.0
        %3019 = vmatpush1.xpose.msra.mxu0 0.0
        %3020 = vmatprep.subr.mxu0 0.0
        %3021 = vmatpush1.xpose.msra.mxu0 0.0
        %3022 = vmatprep.subr.mxu0 0.0
        %3023 = vmatpush1.xpose.msra.mxu0 0.0
        %3024 = vmatprep.subr.mxu0 0.0
        %3025 = vmatpush1.xpose.msra.mxu0 0.0
        %3026 = vmatprep.subr.mxu0 0.0
        %3027 = vmatpush1.xpose.msra.mxu0 0.0
        %3028 = vmatprep.subr.mxu0 0.0
        %3029 = vmatpush1.xpose.msra.mxu0 0.0
        %3030 = vmatprep.subr.mxu0 0.0
        %3031 = vmatpush1.xpose.msra.mxu0 0.0
        %3032 = vmatprep.subr.mxu0 0.0
        %3033 = vmatpush1.xpose.msra.mxu0 0.0
        %3034 = vmatprep.subr.mxu0 0.0
        %3035 = vmatpush1.xpose.msra.mxu0 0.0
        %3036 = vmatprep.subr.mxu0 0.0
        %3037 = vmatpush1.xpose.msra.mxu0 0.0
        %3038 = vmatprep.subr.mxu0 0.0
        %3039 = vmatpush1.xpose.msra.mxu0 0.0
        %3040 = vmatprep.subr.mxu0 0.0
        %3041 = vmatpush1.xpose.msra.mxu0 0.0
        %3042 = vmatprep.subr.mxu0 0.0
        %3043 = vmatpush1.xpose.msra.mxu0 0.0
        %3044 = vmatprep.subr.mxu0 0.0
        %3045 = vmatpush1.xpose.msra.mxu0 0.0
        %3046 = vmatprep.subr.mxu0 0.0
        %3047 = vmatpush1.xpose.msra.mxu0 0.0
        %3048 = vmatprep.subr.mxu0 0.0
        %3049 = vmatpush1.xpose.msra.mxu0 0.0
        %3050 = vmatprep.subr.mxu0 0.0
        %3051 = vmatpush1.xpose.msra.mxu0 0.0
        %3052 = vmatprep.subr.mxu0 0.0
        %3053 = vmatpush1.xpose.msra.mxu0 0.0
        %3054 = vmatprep.subr.mxu0 0.0
        %3055 = vmatpush1.xpose.msra.mxu0 0.0
        %3056 = vmatprep.subr.mxu0 0.0
        %3057 = vmatpush1.xpose.msra.mxu0 0.0
        %3058 = vmatprep.subr.mxu0 0.0
        %3059 = vmatpush1.xpose.msra.mxu0 0.0
        %3060 = vmatprep.subr.mxu0 0.0
        %3061 = vmatpush1.xpose.msra.mxu0 0.0
        %3062 = vmatprep.subr.mxu0 0.0
        %3063 = vmatpush1.xpose.msra.mxu0 0.0
        %3064 = vmatprep.subr.mxu0 0.0
        %3065 = vmatpush1.xpose.msra.mxu0 0.0
        %3066 = vmatprep.subr.mxu0 0.0
        %3067 = vmatpush1.xpose.msra.mxu0 0.0
        %3068 = vmatprep.subr.mxu0 0.0
        %3069 = vmatpush1.xpose.msra.mxu0 0.0
        %3070 = vmatprep.subr.mxu0 0.0
        %3071 = vmatpush1.xpose.msra.mxu0 0.0
        %3072 = vmatprep.mubr.f32.mxu0 0.0
        %3073 = vmatmul.mubr.f32.gmra.mrb[0].mxu0 %v2551
        %v3074 = vpop.f32.mrb[0].mxu0
        %v3075 = vadd.f32 0.0, %v3074
        %v3076 = vpop.f32.mrb[0].mxu0
        %3077 = vdwg.mxu0
        %v3078 = vmul.f32 %v2159, %v2626
        %v3079 = vmul.f32 %v3078, %v3075
        %v3080 = vadd.f32 %v3007, %v3079
        %3081 = vmatprep.subr.mxu0 0.0
        %3082 = vmatpush1.xpose.msra.mxu0 %v2933
        %3083 = vmatprep.subr.mxu0 0.0
        %3084 = vmatpush1.xpose.msra.mxu0 0.0
        %3085 = vmatprep.subr.mxu0 0.0
        %3086 = vmatpush1.xpose.msra.mxu0 0.0
        %3087 = vmatprep.subr.mxu0 0.0
        %3088 = vmatpush1.xpose.msra.mxu0 0.0
        %3089 = vmatprep.subr.mxu0 0.0
        %3090 = vmatpush1.xpose.msra.mxu0 0.0
        %3091 = vmatprep.subr.mxu0 0.0
        %3092 = vmatpush1.xpose.msra.mxu0 0.0
        %3093 = vmatprep.subr.mxu0 0.0
        %3094 = vmatpush1.xpose.msra.mxu0 0.0
        %3095 = vmatprep.subr.mxu0 0.0
        %3096 = vmatpush1.xpose.msra.mxu0 0.0
        %3097 = vmatprep.subr.mxu0 0.0
        %3098 = vmatpush1.xpose.msra.mxu0 0.0
        %3099 = vmatprep.subr.mxu0 0.0
        %3100 = vmatpush1.xpose.msra.mxu0 0.0
        %3101 = vmatprep.subr.mxu0 0.0
        %3102 = vmatpush1.xpose.msra.mxu0 0.0
        %3103 = vmatprep.subr.mxu0 0.0
        %3104 = vmatpush1.xpose.msra.mxu0 0.0
        %3105 = vmatprep.subr.mxu0 0.0
        %3106 = vmatpush1.xpose.msra.mxu0 0.0
        %3107 = vmatprep.subr.mxu0 0.0
        %3108 = vmatpush1.xpose.msra.mxu0 0.0
        %3109 = vmatprep.subr.mxu0 0.0
        %3110 = vmatpush1.xpose.msra.mxu0 0.0
        %3111 = vmatprep.subr.mxu0 0.0
        %3112 = vmatpush1.xpose.msra.mxu0 0.0
        %3113 = vmatprep.subr.mxu0 0.0
        %3114 = vmatpush1.xpose.msra.mxu0 0.0
        %3115 = vmatprep.subr.mxu0 0.0
        %3116 = vmatpush1.xpose.msra.mxu0 0.0
        %3117 = vmatprep.subr.mxu0 0.0
        %3118 = vmatpush1.xpose.msra.mxu0 0.0
        %3119 = vmatprep.subr.mxu0 0.0
        %3120 = vmatpush1.xpose.msra.mxu0 0.0
        %3121 = vmatprep.subr.mxu0 0.0
        %3122 = vmatpush1.xpose.msra.mxu0 0.0
        %3123 = vmatprep.subr.mxu0 0.0
        %3124 = vmatpush1.xpose.msra.mxu0 0.0
        %3125 = vmatprep.subr.mxu0 0.0
        %3126 = vmatpush1.xpose.msra.mxu0 0.0
        %3127 = vmatprep.subr.mxu0 0.0
        %3128 = vmatpush1.xpose.msra.mxu0 0.0
        %3129 = vmatprep.subr.mxu0 0.0
        %3130 = vmatpush1.xpose.msra.mxu0 0.0
        %3131 = vmatprep.subr.mxu0 0.0
        %3132 = vmatpush1.xpose.msra.mxu0 0.0
        %3133 = vmatprep.subr.mxu0 0.0
        %3134 = vmatpush1.xpose.msra.mxu0 0.0
        %3135 = vmatprep.subr.mxu0 0.0
        %3136 = vmatpush1.xpose.msra.mxu0 0.0
        %3137 = vmatprep.subr.mxu0 0.0
        %3138 = vmatpush1.xpose.msra.mxu0 0.0
        %3139 = vmatprep.subr.mxu0 0.0
        %3140 = vmatpush1.xpose.msra.mxu0 0.0
        %3141 = vmatprep.subr.mxu0 0.0
        %3142 = vmatpush1.xpose.msra.mxu0 0.0
        %3143 = vmatprep.subr.mxu0 0.0
        %3144 = vmatpush1.xpose.msra.mxu0 0.0
        %3145 = vmatprep.mubr.f32.mxu0 0.0
        %3146 = vmatmul.mubr.f32.gmra.mrb[0].mxu0 %v2631
        %v3147 = vpop.f32.mrb[0].mxu0
        %v3148 = vadd.f32 0.0, %v3147
        %v3149 = vpop.f32.mrb[0].mxu0
        %3150 = vdwg.mxu0
        %v3151 = vmul.f32 %v2159, %v2706
        %v3152 = vmul.f32 %v3151, %v3148
        %v3153 = vadd.f32 %v3080, %v3152
        %v3154 = vmul.f32 %v3153, -0.35355338
        %vm3155 = vcmp.gt.f32.partialorder %v1966, 0.0
        %v3156 = vsel %vm3155, %v3154, -1e+30
        %v3157 = vsel %vm1977, %v3156, -inf
        %3158 = vmax.xlane.f32.xlu0 %v3157
        %v3159 = vpop.xlane.xlu0 %3158
        %v3160 = vsub.f32 %v3156, %v3159
        %v3161 = vmul.f32 %v3160, 1.442695
        %v3162 = vpow.pop %v3161
        %v3163 = vsel %vm1977, %v3162, 0.0
        %3164 = vadd.xlane.f32.xlu0 %v3163
        %v3165 = vpop.xlane.xlu0 %3164
        %v3166 = vrcp.pop %v3165
        %v3167 = vmul.f32 %v3162, %v3166
        %3168 = vst.msk [vmem:[%s1180] sm:$0xff] %vm1977, %v3167
        %v3169 = vpack.c.bf16 %v3167, %v3167
        %v3170 = vpack.c.bf16 %v1568, %v1568
        %v3172 = vsel %vm1977, %v3169, 0
        %vm3174 = vcmask 1043456
        %v3176 = vsel %vm3174, %v3170, 0
        %3178 = vmatprep.subr.bf16.mxu0 0
        %3179 = vmatpush1.bf16.msra.mxu0 %v3176
        %3180 = vmatprep.subr.bf16.mxu0 0
        %3181 = vmatpush1.bf16.msra.mxu0 0
        %3182 = vmatprep.subr.bf16.mxu0 0
        %3183 = vmatpush1.bf16.msra.mxu0 0
        %3184 = vmatprep.subr.bf16.mxu0 0
        %3185 = vmatpush1.bf16.msra.mxu0 0
        %3186 = vmatprep.subr.bf16.mxu0 0
        %3187 = vmatpush1.bf16.msra.mxu0 0
        %3188 = vmatprep.subr.bf16.mxu0 0
        %3189 = vmatpush1.bf16.msra.mxu0 0
        %3190 = vmatprep.subr.bf16.mxu0 0
        %3191 = vmatpush1.bf16.msra.mxu0 0
        %3192 = vmatprep.subr.bf16.mxu0 0
        %3193 = vmatpush1.bf16.msra.mxu0 0
        %3194 = vmatprep.subr.bf16.mxu0 0
        %3195 = vmatpush1.bf16.msra.mxu0 0
        %3196 = vmatprep.subr.bf16.mxu0 0
        %3197 = vmatpush1.bf16.msra.mxu0 0
        %3198 = vmatprep.subr.bf16.mxu0 0
        %3199 = vmatpush1.bf16.msra.mxu0 0
        %3200 = vmatprep.subr.bf16.mxu0 0
        %3201 = vmatpush1.bf16.msra.mxu0 0
        %3202 = vmatprep.subr.bf16.mxu0 0
        %3203 = vmatpush1.bf16.msra.mxu0 0
        %3204 = vmatprep.subr.bf16.mxu0 0
        %3205 = vmatpush1.bf16.msra.mxu0 0
        %3206 = vmatprep.subr.bf16.mxu0 0
        %3207 = vmatpush1.bf16.msra.mxu0 0
        %3208 = vmatprep.subr.bf16.mxu0 0
        %3209 = vmatpush1.bf16.msra.mxu0 0
        %3210 = vmatprep.mubr.bf16.mxu0 0
        %3211 = vmatmul.mubr.bf16.gmra.mrb[0].mxu0 %v3172
        %v3212 = vpop.f32.mrb[0].mxu0
        %v3213 = vadd.f32 0.0, %v3212
        %v3214 = vpop.f32.mrb[0].mxu0
        %v3215 = vpop.f32.mrb[0].mxu0
        %v3216 = vpop.f32.mrb[0].mxu0
        %3217 = vdwg.mxu0
        %v3218 = vmul.f32 %v3167, %v3167
        %v3219 = vpack.c.bf16 %v3218, %v3218
        %v3220 = vpack.c.bf16 %v1939, %v1939
        %v3222 = vsel %vm1977, %v3219, 0
        %v3225 = vsel %vm3174, %v3220, 0
        %3227 = vmatprep.subr.bf16.mxu0 0
        %3228 = vmatpush1.bf16.msra.mxu0 %v3225
        %3229 = vmatprep.subr.bf16.mxu0 0
        %3230 = vmatpush1.bf16.msra.mxu0 0
        %3231 = vmatprep.subr.bf16.mxu0 0
        %3232 = vmatpush1.bf16.msra.mxu0 0
        %3233 = vmatprep.subr.bf16.mxu0 0
        %3234 = vmatpush1.bf16.msra.mxu0 0
        %3235 = vmatprep.subr.bf16.mxu0 0
        %3236 = vmatpush1.bf16.msra.mxu0 0
        %3237 = vmatprep.subr.bf16.mxu0 0
        %3238 = vmatpush1.bf16.msra.mxu0 0
        %3239 = vmatprep.subr.bf16.mxu0 0
        %3240 = vmatpush1.bf16.msra.mxu0 0
        %3241 = vmatprep.subr.bf16.mxu0 0
        %3242 = vmatpush1.bf16.msra.mxu0 0
        %3243 = vmatprep.subr.bf16.mxu0 0
        %3244 = vmatpush1.bf16.msra.mxu0 0
        %3245 = vmatprep.subr.bf16.mxu0 0
        %3246 = vmatpush1.bf16.msra.mxu0 0
        %3247 = vmatprep.subr.bf16.mxu0 0
        %3248 = vmatpush1.bf16.msra.mxu0 0
        %3249 = vmatprep.subr.bf16.mxu0 0
        %3250 = vmatpush1.bf16.msra.mxu0 0
        %3251 = vmatprep.subr.bf16.mxu0 0
        %3252 = vmatpush1.bf16.msra.mxu0 0
        %3253 = vmatprep.subr.bf16.mxu0 0
        %3254 = vmatpush1.bf16.msra.mxu0 0
        %3255 = vmatprep.subr.bf16.mxu0 0
        %3256 = vmatpush1.bf16.msra.mxu0 0
        %3257 = vmatprep.subr.bf16.mxu0 0
        %3258 = vmatpush1.bf16.msra.mxu0 0
        %3259 = vmatprep.mubr.bf16.mxu0 0
        %3260 = vmatmul.mubr.bf16.gmra.mrb[0].mxu0 %v3222
        %v3261 = vpop.f32.mrb[0].mxu0
        %v3262 = vadd.f32 0.0, %v3261
        %v3263 = vpop.f32.mrb[0].mxu0
        %v3264 = vpop.f32.mrb[0].mxu0
        %v3265 = vpop.f32.mrb[0].mxu0
        %3266 = vdwg.mxu0
        %v3267 = vld [vmem:[%s18] sm:$0xff]
        %v3268 = vld [vmem:[#allocation13] sm:$0x1]
        %v3270 = vlaneseq
        %v3271 = vshrl.u32 %v3270, 7
        %v3272 = vsub.s32 0, %v3271
        %v3273 = vrot.slane %v3268, %v3272
        %3275 = vrot.lane.b32.xlu0 %v1940, 120
        %v3276 = vpop.permute.xlu0 %3275
        %v3277 = vsel %vm1977, %v3276, 0
        %3279 = vmatprep.subr.mxu0 0.0
        %3280 = vmatpush1.msra.mxu0 %v3267
        %3281 = vmatprep.subr.mxu0 0.0
        %3282 = vmatpush1.msra.mxu0 0.0
        %3283 = vmatprep.subr.mxu0 0.0
        %3284 = vmatpush1.msra.mxu0 0.0
        %3285 = vmatprep.subr.mxu0 0.0
        %3286 = vmatpush1.msra.mxu0 0.0
        %3287 = vmatprep.subr.mxu0 0.0
        %3288 = vmatpush1.msra.mxu0 0.0
        %3289 = vmatprep.subr.mxu0 0.0
        %3290 = vmatpush1.msra.mxu0 0.0
        %3291 = vmatprep.subr.mxu0 0.0
        %3292 = vmatpush1.msra.mxu0 0.0
        %3293 = vmatprep.subr.mxu0 0.0
        %3294 = vmatpush1.msra.mxu0 0.0
        %3295 = vmatprep.subr.mxu0 0.0
        %3296 = vmatpush1.msra.mxu0 0.0
        %3297 = vmatprep.subr.mxu0 0.0
        %3298 = vmatpush1.msra.mxu0 0.0
        %3299 = vmatprep.subr.mxu0 0.0
        %3300 = vmatpush1.msra.mxu0 0.0
        %3301 = vmatprep.subr.mxu0 0.0
        %3302 = vmatpush1.msra.mxu0 0.0
        %3303 = vmatprep.subr.mxu0 0.0
        %3304 = vmatpush1.msra.mxu0 0.0
        %3305 = vmatprep.subr.mxu0 0.0
        %3306 = vmatpush1.msra.mxu0 0.0
        %3307 = vmatprep.subr.mxu0 0.0
        %3308 = vmatpush1.msra.mxu0 0.0
        %3309 = vmatprep.subr.mxu0 0.0
        %3310 = vmatpush1.msra.mxu0 0.0
        %3311 = vmatprep.subr.mxu0 0.0
        %3312 = vmatpush1.msra.mxu0 0.0
        %3313 = vmatprep.subr.mxu0 0.0
        %3314 = vmatpush1.msra.mxu0 0.0
        %3315 = vmatprep.subr.mxu0 0.0
        %3316 = vmatpush1.msra.mxu0 0.0
        %3317 = vmatprep.subr.mxu0 0.0
        %3318 = vmatpush1.msra.mxu0 0.0
        %3319 = vmatprep.subr.mxu0 0.0
        %3320 = vmatpush1.msra.mxu0 0.0
        %3321 = vmatprep.subr.mxu0 0.0
        %3322 = vmatpush1.msra.mxu0 0.0
        %3323 = vmatprep.subr.mxu0 0.0
        %3324 = vmatpush1.msra.mxu0 0.0
        %3325 = vmatprep.subr.mxu0 0.0
        %3326 = vmatpush1.msra.mxu0 0.0
        %3327 = vmatprep.subr.mxu0 0.0
        %3328 = vmatpush1.msra.mxu0 0.0
        %3329 = vmatprep.subr.mxu0 0.0
        %3330 = vmatpush1.msra.mxu0 0.0
        %3331 = vmatprep.subr.mxu0 0.0
        %3332 = vmatpush1.msra.mxu0 0.0
        %3333 = vmatprep.subr.mxu0 0.0
        %3334 = vmatpush1.msra.mxu0 0.0
        %3335 = vmatprep.subr.mxu0 0.0
        %3336 = vmatpush1.msra.mxu0 0.0
        %3337 = vmatprep.subr.mxu0 0.0
        %3338 = vmatpush1.msra.mxu0 0.0
        %3339 = vmatprep.subr.mxu0 0.0
        %3340 = vmatpush1.msra.mxu0 0.0
        %3341 = vmatprep.subr.mxu0 0.0
        %3342 = vmatpush1.msra.mxu0 0.0
        %3343 = vmatprep.mubr.f32.mxu0 0.0
        %3344 = vmatmul.mubr.f32.gmra.mrb[0].mxu0 %v3277
        %v3345 = vpop.f32.mrb[0].mxu0
        %v3346 = vadd.f32 %v3273, %v3345
        %v3347 = vpop.f32.mrb[0].mxu0
        %3348 = vdwg.mxu0
        %v3349 = vld [vmem:[%s2051] sm:$0xff]
        %v3350 = vld [vmem:[%s2053] sm:$0x1]
        %v3352 = vlaneseq
        %v3353 = vshrl.u32 %v3352, 7
        %v3354 = vsub.s32 0, %v3353
        %v3355 = vrot.slane %v3350, %v3354
        %3357 = vmatprep.subr.mxu0 0.0
        %3358 = vmatpush1.msra.mxu0 %v3349
        %3359 = vmatprep.subr.mxu0 0.0
        %3360 = vmatpush1.msra.mxu0 0.0
        %3361 = vmatprep.subr.mxu0 0.0
        %3362 = vmatpush1.msra.mxu0 0.0
        %3363 = vmatprep.subr.mxu0 0.0
        %3364 = vmatpush1.msra.mxu0 0.0
        %3365 = vmatprep.subr.mxu0 0.0
        %3366 = vmatpush1.msra.mxu0 0.0
        %3367 = vmatprep.subr.mxu0 0.0
        %3368 = vmatpush1.msra.mxu0 0.0
        %3369 = vmatprep.subr.mxu0 0.0
        %3370 = vmatpush1.msra.mxu0 0.0
        %3371 = vmatprep.subr.mxu0 0.0
        %3372 = vmatpush1.msra.mxu0 0.0
        %3373 = vmatprep.subr.mxu0 0.0
        %3374 = vmatpush1.msra.mxu0 0.0
        %3375 = vmatprep.subr.mxu0 0.0
        %3376 = vmatpush1.msra.mxu0 0.0
        %3377 = vmatprep.subr.mxu0 0.0
        %3378 = vmatpush1.msra.mxu0 0.0
        %3379 = vmatprep.subr.mxu0 0.0
        %3380 = vmatpush1.msra.mxu0 0.0
        %3381 = vmatprep.subr.mxu0 0.0
        %3382 = vmatpush1.msra.mxu0 0.0
        %3383 = vmatprep.subr.mxu0 0.0
        %3384 = vmatpush1.msra.mxu0 0.0
        %3385 = vmatprep.subr.mxu0 0.0
        %3386 = vmatpush1.msra.mxu0 0.0
        %3387 = vmatprep.subr.mxu0 0.0
        %3388 = vmatpush1.msra.mxu0 0.0
        %3389 = vmatprep.subr.mxu0 0.0
        %3390 = vmatpush1.msra.mxu0 0.0
        %3391 = vmatprep.subr.mxu0 0.0
        %3392 = vmatpush1.msra.mxu0 0.0
        %3393 = vmatprep.subr.mxu0 0.0
        %3394 = vmatpush1.msra.mxu0 0.0
        %3395 = vmatprep.subr.mxu0 0.0
        %3396 = vmatpush1.msra.mxu0 0.0
        %3397 = vmatprep.subr.mxu0 0.0
        %3398 = vmatpush1.msra.mxu0 0.0
        %3399 = vmatprep.subr.mxu0 0.0
        %3400 = vmatpush1.msra.mxu0 0.0
        %3401 = vmatprep.subr.mxu0 0.0
        %3402 = vmatpush1.msra.mxu0 0.0
        %3403 = vmatprep.subr.mxu0 0.0
        %3404 = vmatpush1.msra.mxu0 0.0
        %3405 = vmatprep.subr.mxu0 0.0
        %3406 = vmatpush1.msra.mxu0 0.0
        %3407 = vmatprep.subr.mxu0 0.0
        %3408 = vmatpush1.msra.mxu0 0.0
        %3409 = vmatprep.subr.mxu0 0.0
        %3410 = vmatpush1.msra.mxu0 0.0
        %3411 = vmatprep.subr.mxu0 0.0
        %3412 = vmatpush1.msra.mxu0 0.0
        %3413 = vmatprep.subr.mxu0 0.0
        %3414 = vmatpush1.msra.mxu0 0.0
        %3415 = vmatprep.subr.mxu0 0.0
        %3416 = vmatpush1.msra.mxu0 0.0
        %3417 = vmatprep.subr.mxu0 0.0
        %3418 = vmatpush1.msra.mxu0 0.0
        %3419 = vmatprep.subr.mxu0 0.0
        %3420 = vmatpush1.msra.mxu0 0.0
        %3421 = vmatprep.mubr.f32.mxu0 0.0
        %3422 = vmatmul.mubr.f32.gmra.mrb[0].mxu0 %v3277
        %v3423 = vpop.f32.mrb[0].mxu0
        %v3424 = vadd.f32 %v3355, %v3423
        %v3425 = vpop.f32.mrb[0].mxu0
        %3426 = vdwg.mxu0
        %s3427 = scalar_lea.vmem %s1189, 4
        %v3428 = vld [vmem:[%s3427] sm:$0x7]
        %s3429 = scalar_lea.vmem %s1194, 4
        %v3430 = vld [vmem:[%s3429] sm:$0x7]
        %s3431 = scalar_lea.vmem %s1199, 4
        %v3432 = vld [vmem:[%s3431] sm:$0x7]
        %s3433 = scalar_lea.vmem %s1204, 4
        %v3434 = vld [vmem:[%s3433] sm:$0x7]
        %v3435 = vlaneseq
        %v3436 = vshrl.u32 %v3435, 7
        %v3437 = vsub.s32 0, %v3436
        %v3438 = vrot.slane %v3428, %v3437
        %v3439 = vmul.f32 %v2140, %v3438
        %v3440 = vlaneseq
        %v3441 = vshrl.u32 %v3440, 7
        %v3442 = vsub.s32 1, %v3441
        %v3443 = vrot.slane %v3428, %v3442
        %v3444 = vmul.f32 %v2149, %v3443
        %v3445 = vadd.f32 %v3439, %v3444
        %v3446 = vlaneseq
        %v3447 = vshrl.u32 %v3446, 7
        %v3448 = vsub.s32 2, %v3447
        %v3449 = vrot.slane %v3428, %v3448
        %v3450 = vmul.f32 %v2159, %v3449
        %v3451 = vadd.f32 %v3445, %v3450
        %v3452 = vlaneseq
        %v3453 = vshrl.u32 %v3452, 7
        %v3454 = vsub.s32 0, %v3453
        %v3455 = vrot.slane %v3430, %v3454
        %v3456 = vmul.f32 %v2140, %v3455
        %v3457 = vlaneseq
        %v3458 = vshrl.u32 %v3457, 7
        %v3459 = vsub.s32 1, %v3458
        %v3460 = vrot.slane %v3430, %v3459
        %v3461 = vmul.f32 %v2149, %v3460
        %v3462 = vadd.f32 %v3456, %v3461
        %v3463 = vlaneseq
        %v3464 = vshrl.u32 %v3463, 7
        %v3465 = vsub.s32 2, %v3464
        %v3466 = vrot.slane %v3430, %v3465
        %v3467 = vmul.f32 %v2159, %v3466
        %v3468 = vadd.f32 %v3462, %v3467
        %v3469 = vlaneseq
        %v3470 = vshrl.u32 %v3469, 7
        %v3471 = vsub.s32 0, %v3470
        %v3472 = vrot.slane %v3432, %v3471
        %v3473 = vmul.f32 %v2140, %v3472
        %v3474 = vlaneseq
        %v3475 = vshrl.u32 %v3474, 7
        %v3476 = vsub.s32 1, %v3475
        %v3477 = vrot.slane %v3432, %v3476
        %v3478 = vmul.f32 %v2149, %v3477
        %v3479 = vadd.f32 %v3473, %v3478
        %v3480 = vlaneseq
        %v3481 = vshrl.u32 %v3480, 7
        %v3482 = vsub.s32 2, %v3481
        %v3483 = vrot.slane %v3432, %v3482
        %v3484 = vmul.f32 %v2159, %v3483
        %v3485 = vadd.f32 %v3479, %v3484
        %v3486 = vlaneseq
        %v3487 = vshrl.u32 %v3486, 7
        %v3488 = vsub.s32 0, %v3487
        %v3489 = vrot.slane %v3434, %v3488
        %v3490 = vmul.f32 %v2140, %v3489
        %v3491 = vlaneseq
        %v3492 = vshrl.u32 %v3491, 7
        %v3493 = vsub.s32 1, %v3492
        %v3494 = vrot.slane %v3434, %v3493
        %v3495 = vmul.f32 %v2149, %v3494
        %v3496 = vadd.f32 %v3490, %v3495
        %v3497 = vlaneseq
        %v3498 = vshrl.u32 %v3497, 7
        %v3499 = vsub.s32 2, %v3498
        %v3500 = vrot.slane %v3434, %v3499
        %v3501 = vmul.f32 %v2159, %v3500
        %v3502 = vadd.f32 %v3496, %v3501
        %3504 = vrot.lane.b32.xlu0 %v1950, 120
        %v3505 = vpop.permute.xlu0 %3504
        %v3507 = vmul.f32 %v3346, %v3505
        %3509 = vrot.lane.b32.xlu0 %v3507, 8
        %v3510 = vpop.permute.xlu0 %3509
        %v3512 = vadd.f32 %v2219, %v3510
        %3513 = vrot.lane.b32.xlu0 %v2218, 120
        %v3514 = vpop.permute.xlu0 %3513
        %v3516 = vsel %vm1977, %v3514, %v2218
        %v3517 = vsel %vm2230, %v3516, %v2224
        %v3518 = vadd.f32 %v3517, %v3451
        %v3519 = vrcp.pop %v3518
        %3521 = vrot.lane.b32.xlu0 %v3512, 120
        %v3522 = vpop.permute.xlu0 %3521
        %3524 = vrot.lane.b32.xlu0 %v3512, 8
        %v3525 = vpop.permute.xlu0 %3524
        %v3527 = vsel %vm1977, %v3522, %v3512
        %v3528 = vsel %vm2230, %v3527, %v3525
        %v3529 = vadd.f32 %v3528, %v3468
        %v3530 = vmul.f32 %v3519, %v3529
        %v3531 = vmax.f32 %v3519, 1e-24
        %v3532 = vrsqrt.pop %v3531
        %v3533 = vmul.f32 %v3531, %v3532
        %vm3534 = vcmp.eq.f32.partialorder %v3531, inf
        %v3535 = vsel %vm3534, %v3531, %v3533
        %vm3536 = vcmp.eq.f32.partialorder %v3531, 0.0
        %v3537 = vand.u32 %v3531, 2147483648
        %v3538 = vsel %vm3536, %v3537, %v3535
        %v3539 = vmul.f32 %v3424, %v3505
        %3541 = vrot.lane.b32.xlu0 %v3539, 8
        %v3542 = vpop.permute.xlu0 %3541
        %v3544 = vadd.f32 %v2254, %v3542
        %v3545 = vmul.f32 %v3530, %v3530
        %v3546 = vadd.f32 %v3545, %v3519
        %v3547 = vsel %vm1977, %v3546, 0.0
        %3548 = vadd.xlane.f32.xlu0 %v3547
        %v3549 = vpop.xlane.xlu0 %3548
        %3551 = vrot.lane.b32.xlu0 %v3538, 8
        %v3552 = vpop.permute.xlu0 %3551
        %v3554 = vsel %vm1977, %v3530, %v3552
        %3556 = vrot.lane.b32.xlu0 %v3546, 120
        %v3557 = vpop.permute.xlu0 %3556
        %v3559 = vsel %vm1977, %v3557, 0.0
        %3560 = vadd.xlane.f32.xlu0 %v3559
        %v3561 = vpop.xlane.xlu0 %3560
        %3563 = vrot.lane.b32.xlu0 %v3530, 120
        %v3564 = vpop.permute.xlu0 %3563
        %v3566 = vsel %vm1977, %v3564, %v3538
        %3567 = vrot.lane.b32.xlu0 %v3546, 112
        %v3568 = vpop.permute.xlu0 %3567
        %v3570 = vsel %vm1977, %v3568, 0.0
        %3571 = vadd.xlane.f32.xlu0 %v3570
        %v3572 = vpop.xlane.xlu0 %3571
        %3573 = vrot.lane.b32.xlu0 %v3530, 112
        %v3574 = vpop.permute.xlu0 %3573
        %3576 = vrot.lane.b32.xlu0 %v3538, 120
        %v3577 = vpop.permute.xlu0 %3576
        %v3579 = vsel %vm1977, %v3574, %v3577
        %v3580 = vsel %vm2292, %v3549, %v3561
        %v3581 = vsel %vm2294, %v3580, %v3572
        %3583 = vrot.lane.b32.xlu0 %v3485, 8
        %v3584 = vpop.permute.xlu0 %3583
        %v3586 = vadd.f32 %v2253, %v3584
        %v3587 = vrcp.pop %v3586
        %3589 = vrot.lane.b32.xlu0 %v3502, 8
        %v3590 = vpop.permute.xlu0 %3589
        %v3592 = vadd.f32 %v3544, %v3590
        %v3593 = vmul.f32 %v3587, %v3592
        %v3594 = vmax.f32 %v3587, 1e-24
        %v3595 = vrsqrt.pop %v3594
        %v3596 = vmul.f32 %v3594, %v3595
        %vm3597 = vcmp.eq.f32.partialorder %v3594, inf
        %v3598 = vsel %vm3597, %v3594, %v3596
        %vm3599 = vcmp.eq.f32.partialorder %v3594, 0.0
        %v3600 = vand.u32 %v3594, 2147483648
        %v3601 = vsel %vm3599, %v3600, %v3598
        %v3602 = vmul.f32 %v3593, %v3593
        %v3603 = vadd.f32 %v3602, %v3587
        %3605 = vrot.lane.b32.xlu0 %v3603, 120
        %v3606 = vpop.permute.xlu0 %3605
        %v3608 = vsel %vm1977, %v3606, 0.0
        %3609 = vadd.xlane.f32.xlu0 %v3608
        %v3610 = vpop.xlane.xlu0 %3609
        %3612 = vrot.lane.b32.xlu0 %v3593, 120
        %v3613 = vpop.permute.xlu0 %3612
        %v3615 = vsel %vm1977, %v3613, %v3601
        %v3616 = vmul.f32 %v3615, -2.0
        %v3617 = vadd.f32 %v2253, %v3485
        %v3618 = vrcp.pop %v3617
        %v3619 = vadd.f32 %v3544, %v3502
        %v3620 = vmul.f32 %v3618, %v3619
        %v3621 = vmax.f32 %v3618, 1e-24
        %v3622 = vrsqrt.pop %v3621
        %v3623 = vmul.f32 %v3621, %v3622
        %vm3624 = vcmp.eq.f32.partialorder %v3621, inf
        %v3625 = vsel %vm3624, %v3621, %v3623
        %vm3626 = vcmp.eq.f32.partialorder %v3621, 0.0
        %v3627 = vand.u32 %v3621, 2147483648
        %v3628 = vsel %vm3626, %v3627, %v3625
        %v3629 = vmul.f32 %v3620, %v3620
        %v3630 = vadd.f32 %v3629, %v3618
        %3632 = vrot.lane.b32.xlu0 %v3630, 120
        %v3633 = vpop.permute.xlu0 %3632
        %v3635 = vsel %vm1977, %v3633, 0.0
        %3636 = vadd.xlane.f32.xlu0 %v3635
        %v3637 = vpop.xlane.xlu0 %3636
        %3639 = vrot.lane.b32.xlu0 %v3620, 120
        %v3640 = vpop.permute.xlu0 %3639
        %v3642 = vsel %vm1977, %v3640, %v3628
        %v3643 = vmul.f32 %v3642, -2.0
        %3644 = vrot.lane.b32.xlu0 %v3485, 120
        %v3645 = vpop.permute.xlu0 %3644
        %v3647 = vadd.f32 %v2253, %v3645
        %v3648 = vrcp.pop %v3647
        %3649 = vrot.lane.b32.xlu0 %v3502, 120
        %v3650 = vpop.permute.xlu0 %3649
        %v3652 = vadd.f32 %v3544, %v3650
        %v3653 = vmul.f32 %v3648, %v3652
        %v3654 = vmax.f32 %v3648, 1e-24
        %v3655 = vrsqrt.pop %v3654
        %v3656 = vmul.f32 %v3654, %v3655
        %vm3657 = vcmp.eq.f32.partialorder %v3654, inf
        %v3658 = vsel %vm3657, %v3654, %v3656
        %vm3659 = vcmp.eq.f32.partialorder %v3654, 0.0
        %v3660 = vand.u32 %v3654, 2147483648
        %v3661 = vsel %vm3659, %v3660, %v3658
        %v3662 = vmul.f32 %v3653, %v3653
        %v3663 = vadd.f32 %v3662, %v3648
        %3665 = vrot.lane.b32.xlu0 %v3663, 120
        %v3666 = vpop.permute.xlu0 %3665
        %v3668 = vsel %vm1977, %v3666, 0.0
        %3669 = vadd.xlane.f32.xlu0 %v3668
        %v3670 = vpop.xlane.xlu0 %3669
        %3672 = vrot.lane.b32.xlu0 %v3653, 120
        %v3673 = vpop.permute.xlu0 %3672
        %v3675 = vsel %vm1977, %v3673, %v3661
        %v3676 = vmul.f32 %v3675, -2.0
        %v3677 = vsel %vm2292, %v3610, %v3637
        %v3678 = vsel %vm2294, %v3677, %v3670
        %v3679 = vsel %vm2384, %v3581, %v2382
        %3681 = vrot.lane.b32.xlu0 %v3678, 3
        %v3682 = vpop.permute.xlu0 %3681
        %v3684 = vsel %vm2384, %v1951, %v3682
        %v3686 = vsel %vm2230, %v3554, 0
        %v3689 = vsel %vm2230, %v3616, 0
        %3691 = vmatprep.subr.mxu0 0.0
        %3692 = vmatpush1.xpose.msra.mxu0 %v3689
        %3693 = vmatprep.subr.mxu0 0.0
        %3694 = vmatpush1.xpose.msra.mxu0 0.0
        %3695 = vmatprep.subr.mxu0 0.0
        %3696 = vmatpush1.xpose.msra.mxu0 0.0
        %3697 = vmatprep.subr.mxu0 0.0
        %3698 = vmatpush1.xpose.msra.mxu0 0.0
        %3699 = vmatprep.subr.mxu0 0.0
        %3700 = vmatpush1.xpose.msra.mxu0 0.0
        %3701 = vmatprep.subr.mxu0 0.0
        %3702 = vmatpush1.xpose.msra.mxu0 0.0
        %3703 = vmatprep.subr.mxu0 0.0
        %3704 = vmatpush1.xpose.msra.mxu0 0.0
        %3705 = vmatprep.subr.mxu0 0.0
        %3706 = vmatpush1.xpose.msra.mxu0 0.0
        %3707 = vmatprep.subr.mxu0 0.0
        %3708 = vmatpush1.xpose.msra.mxu0 0.0
        %3709 = vmatprep.subr.mxu0 0.0
        %3710 = vmatpush1.xpose.msra.mxu0 0.0
        %3711 = vmatprep.subr.mxu0 0.0
        %3712 = vmatpush1.xpose.msra.mxu0 0.0
        %3713 = vmatprep.subr.mxu0 0.0
        %3714 = vmatpush1.xpose.msra.mxu0 0.0
        %3715 = vmatprep.subr.mxu0 0.0
        %3716 = vmatpush1.xpose.msra.mxu0 0.0
        %3717 = vmatprep.subr.mxu0 0.0
        %3718 = vmatpush1.xpose.msra.mxu0 0.0
        %3719 = vmatprep.subr.mxu0 0.0
        %3720 = vmatpush1.xpose.msra.mxu0 0.0
        %3721 = vmatprep.subr.mxu0 0.0
        %3722 = vmatpush1.xpose.msra.mxu0 0.0
        %3723 = vmatprep.subr.mxu0 0.0
        %3724 = vmatpush1.xpose.msra.mxu0 0.0
        %3725 = vmatprep.subr.mxu0 0.0
        %3726 = vmatpush1.xpose.msra.mxu0 0.0
        %3727 = vmatprep.subr.mxu0 0.0
        %3728 = vmatpush1.xpose.msra.mxu0 0.0
        %3729 = vmatprep.subr.mxu0 0.0
        %3730 = vmatpush1.xpose.msra.mxu0 0.0
        %3731 = vmatprep.subr.mxu0 0.0
        %3732 = vmatpush1.xpose.msra.mxu0 0.0
        %3733 = vmatprep.subr.mxu0 0.0
        %3734 = vmatpush1.xpose.msra.mxu0 0.0
        %3735 = vmatprep.subr.mxu0 0.0
        %3736 = vmatpush1.xpose.msra.mxu0 0.0
        %3737 = vmatprep.subr.mxu0 0.0
        %3738 = vmatpush1.xpose.msra.mxu0 0.0
        %3739 = vmatprep.subr.mxu0 0.0
        %3740 = vmatpush1.xpose.msra.mxu0 0.0
        %3741 = vmatprep.subr.mxu0 0.0
        %3742 = vmatpush1.xpose.msra.mxu0 0.0
        %3743 = vmatprep.subr.mxu0 0.0
        %3744 = vmatpush1.xpose.msra.mxu0 0.0
        %3745 = vmatprep.subr.mxu0 0.0
        %3746 = vmatpush1.xpose.msra.mxu0 0.0
        %3747 = vmatprep.subr.mxu0 0.0
        %3748 = vmatpush1.xpose.msra.mxu0 0.0
        %3749 = vmatprep.subr.mxu0 0.0
        %3750 = vmatpush1.xpose.msra.mxu0 0.0
        %3751 = vmatprep.subr.mxu0 0.0
        %3752 = vmatpush1.xpose.msra.mxu0 0.0
        %3753 = vmatprep.subr.mxu0 0.0
        %3754 = vmatpush1.xpose.msra.mxu0 0.0
        %3755 = vmatprep.mubr.f32.mxu0 0.0
        %3756 = vmatmul.mubr.f32.gmra.mrb[0].mxu0 %v3686
        %v3757 = vpop.f32.mrb[0].mxu0
        %v3758 = vadd.f32 0.0, %v3757
        %v3759 = vpop.f32.mrb[0].mxu0
        %3760 = vdwg.mxu0
        %v3761 = vmul.f32 %v2471, %v3758
        %v3763 = vsel %vm2473, %v3679, 0
        %v3766 = vsel %vm2473, %v3684, 0
        %3768 = vmatprep.subr.mxu0 0.0
        %3769 = vmatpush1.xpose.msra.mxu0 %v3766
        %3770 = vmatprep.subr.mxu0 0.0
        %3771 = vmatpush1.xpose.msra.mxu0 0.0
        %3772 = vmatprep.subr.mxu0 0.0
        %3773 = vmatpush1.xpose.msra.mxu0 0.0
        %3774 = vmatprep.subr.mxu0 0.0
        %3775 = vmatpush1.xpose.msra.mxu0 0.0
        %3776 = vmatprep.subr.mxu0 0.0
        %3777 = vmatpush1.xpose.msra.mxu0 0.0
        %3778 = vmatprep.subr.mxu0 0.0
        %3779 = vmatpush1.xpose.msra.mxu0 0.0
        %3780 = vmatprep.subr.mxu0 0.0
        %3781 = vmatpush1.xpose.msra.mxu0 0.0
        %3782 = vmatprep.subr.mxu0 0.0
        %3783 = vmatpush1.xpose.msra.mxu0 0.0
        %3784 = vmatprep.subr.mxu0 0.0
        %3785 = vmatpush1.xpose.msra.mxu0 0.0
        %3786 = vmatprep.subr.mxu0 0.0
        %3787 = vmatpush1.xpose.msra.mxu0 0.0
        %3788 = vmatprep.subr.mxu0 0.0
        %3789 = vmatpush1.xpose.msra.mxu0 0.0
        %3790 = vmatprep.subr.mxu0 0.0
        %3791 = vmatpush1.xpose.msra.mxu0 0.0
        %3792 = vmatprep.subr.mxu0 0.0
        %3793 = vmatpush1.xpose.msra.mxu0 0.0
        %3794 = vmatprep.subr.mxu0 0.0
        %3795 = vmatpush1.xpose.msra.mxu0 0.0
        %3796 = vmatprep.subr.mxu0 0.0
        %3797 = vmatpush1.xpose.msra.mxu0 0.0
        %3798 = vmatprep.subr.mxu0 0.0
        %3799 = vmatpush1.xpose.msra.mxu0 0.0
        %3800 = vmatprep.subr.mxu0 0.0
        %3801 = vmatpush1.xpose.msra.mxu0 0.0
        %3802 = vmatprep.subr.mxu0 0.0
        %3803 = vmatpush1.xpose.msra.mxu0 0.0
        %3804 = vmatprep.subr.mxu0 0.0
        %3805 = vmatpush1.xpose.msra.mxu0 0.0
        %3806 = vmatprep.subr.mxu0 0.0
        %3807 = vmatpush1.xpose.msra.mxu0 0.0
        %3808 = vmatprep.subr.mxu0 0.0
        %3809 = vmatpush1.xpose.msra.mxu0 0.0
        %3810 = vmatprep.subr.mxu0 0.0
        %3811 = vmatpush1.xpose.msra.mxu0 0.0
        %3812 = vmatprep.subr.mxu0 0.0
        %3813 = vmatpush1.xpose.msra.mxu0 0.0
        %3814 = vmatprep.subr.mxu0 0.0
        %3815 = vmatpush1.xpose.msra.mxu0 0.0
        %3816 = vmatprep.subr.mxu0 0.0
        %3817 = vmatpush1.xpose.msra.mxu0 0.0
        %3818 = vmatprep.subr.mxu0 0.0
        %3819 = vmatpush1.xpose.msra.mxu0 0.0
        %3820 = vmatprep.subr.mxu0 0.0
        %3821 = vmatpush1.xpose.msra.mxu0 0.0
        %3822 = vmatprep.subr.mxu0 0.0
        %3823 = vmatpush1.xpose.msra.mxu0 0.0
        %3824 = vmatprep.subr.mxu0 0.0
        %3825 = vmatpush1.xpose.msra.mxu0 0.0
        %3826 = vmatprep.subr.mxu0 0.0
        %3827 = vmatpush1.xpose.msra.mxu0 0.0
        %3828 = vmatprep.subr.mxu0 0.0
        %3829 = vmatpush1.xpose.msra.mxu0 0.0
        %3830 = vmatprep.subr.mxu0 0.0
        %3831 = vmatpush1.xpose.msra.mxu0 0.0
        %3832 = vmatprep.mubr.f32.mxu0 0.0
        %3833 = vmatmul.mubr.f32.gmra.mrb[0].mxu0 %v3763
        %v3834 = vpop.f32.mrb[0].mxu0
        %v3835 = vadd.f32 %v3761, %v3834
        %v3836 = vpop.f32.mrb[0].mxu0
        %3837 = vdwg.mxu0
        %v3839 = vsel %vm2230, %v3566, 0
        %3841 = vmatprep.subr.mxu0 0.0
        %3842 = vmatpush1.xpose.msra.mxu0 %v3689
        %3843 = vmatprep.subr.mxu0 0.0
        %3844 = vmatpush1.xpose.msra.mxu0 0.0
        %3845 = vmatprep.subr.mxu0 0.0
        %3846 = vmatpush1.xpose.msra.mxu0 0.0
        %3847 = vmatprep.subr.mxu0 0.0
        %3848 = vmatpush1.xpose.msra.mxu0 0.0
        %3849 = vmatprep.subr.mxu0 0.0
        %3850 = vmatpush1.xpose.msra.mxu0 0.0
        %3851 = vmatprep.subr.mxu0 0.0
        %3852 = vmatpush1.xpose.msra.mxu0 0.0
        %3853 = vmatprep.subr.mxu0 0.0
        %3854 = vmatpush1.xpose.msra.mxu0 0.0
        %3855 = vmatprep.subr.mxu0 0.0
        %3856 = vmatpush1.xpose.msra.mxu0 0.0
        %3857 = vmatprep.subr.mxu0 0.0
        %3858 = vmatpush1.xpose.msra.mxu0 0.0
        %3859 = vmatprep.subr.mxu0 0.0
        %3860 = vmatpush1.xpose.msra.mxu0 0.0
        %3861 = vmatprep.subr.mxu0 0.0
        %3862 = vmatpush1.xpose.msra.mxu0 0.0
        %3863 = vmatprep.subr.mxu0 0.0
        %3864 = vmatpush1.xpose.msra.mxu0 0.0
        %3865 = vmatprep.subr.mxu0 0.0
        %3866 = vmatpush1.xpose.msra.mxu0 0.0
        %3867 = vmatprep.subr.mxu0 0.0
        %3868 = vmatpush1.xpose.msra.mxu0 0.0
        %3869 = vmatprep.subr.mxu0 0.0
        %3870 = vmatpush1.xpose.msra.mxu0 0.0
        %3871 = vmatprep.subr.mxu0 0.0
        %3872 = vmatpush1.xpose.msra.mxu0 0.0
        %3873 = vmatprep.subr.mxu0 0.0
        %3874 = vmatpush1.xpose.msra.mxu0 0.0
        %3875 = vmatprep.subr.mxu0 0.0
        %3876 = vmatpush1.xpose.msra.mxu0 0.0
        %3877 = vmatprep.subr.mxu0 0.0
        %3878 = vmatpush1.xpose.msra.mxu0 0.0
        %3879 = vmatprep.subr.mxu0 0.0
        %3880 = vmatpush1.xpose.msra.mxu0 0.0
        %3881 = vmatprep.subr.mxu0 0.0
        %3882 = vmatpush1.xpose.msra.mxu0 0.0
        %3883 = vmatprep.subr.mxu0 0.0
        %3884 = vmatpush1.xpose.msra.mxu0 0.0
        %3885 = vmatprep.subr.mxu0 0.0
        %3886 = vmatpush1.xpose.msra.mxu0 0.0
        %3887 = vmatprep.subr.mxu0 0.0
        %3888 = vmatpush1.xpose.msra.mxu0 0.0
        %3889 = vmatprep.subr.mxu0 0.0
        %3890 = vmatpush1.xpose.msra.mxu0 0.0
        %3891 = vmatprep.subr.mxu0 0.0
        %3892 = vmatpush1.xpose.msra.mxu0 0.0
        %3893 = vmatprep.subr.mxu0 0.0
        %3894 = vmatpush1.xpose.msra.mxu0 0.0
        %3895 = vmatprep.subr.mxu0 0.0
        %3896 = vmatpush1.xpose.msra.mxu0 0.0
        %3897 = vmatprep.subr.mxu0 0.0
        %3898 = vmatpush1.xpose.msra.mxu0 0.0
        %3899 = vmatprep.subr.mxu0 0.0
        %3900 = vmatpush1.xpose.msra.mxu0 0.0
        %3901 = vmatprep.subr.mxu0 0.0
        %3902 = vmatpush1.xpose.msra.mxu0 0.0
        %3903 = vmatprep.subr.mxu0 0.0
        %3904 = vmatpush1.xpose.msra.mxu0 0.0
        %3905 = vmatprep.mubr.f32.mxu0 0.0
        %3906 = vmatmul.mubr.f32.gmra.mrb[0].mxu0 %v3839
        %v3907 = vpop.f32.mrb[0].mxu0
        %v3908 = vadd.f32 0.0, %v3907
        %v3909 = vpop.f32.mrb[0].mxu0
        %3910 = vdwg.mxu0
        %v3911 = vmul.f32 %v2627, %v3908
        %v3912 = vadd.f32 %v3835, %v3911
        %v3914 = vsel %vm2230, %v3579, 0
        %3916 = vmatprep.subr.mxu0 0.0
        %3917 = vmatpush1.xpose.msra.mxu0 %v3689
        %3918 = vmatprep.subr.mxu0 0.0
        %3919 = vmatpush1.xpose.msra.mxu0 0.0
        %3920 = vmatprep.subr.mxu0 0.0
        %3921 = vmatpush1.xpose.msra.mxu0 0.0
        %3922 = vmatprep.subr.mxu0 0.0
        %3923 = vmatpush1.xpose.msra.mxu0 0.0
        %3924 = vmatprep.subr.mxu0 0.0
        %3925 = vmatpush1.xpose.msra.mxu0 0.0
        %3926 = vmatprep.subr.mxu0 0.0
        %3927 = vmatpush1.xpose.msra.mxu0 0.0
        %3928 = vmatprep.subr.mxu0 0.0
        %3929 = vmatpush1.xpose.msra.mxu0 0.0
        %3930 = vmatprep.subr.mxu0 0.0
        %3931 = vmatpush1.xpose.msra.mxu0 0.0
        %3932 = vmatprep.subr.mxu0 0.0
        %3933 = vmatpush1.xpose.msra.mxu0 0.0
        %3934 = vmatprep.subr.mxu0 0.0
        %3935 = vmatpush1.xpose.msra.mxu0 0.0
        %3936 = vmatprep.subr.mxu0 0.0
        %3937 = vmatpush1.xpose.msra.mxu0 0.0
        %3938 = vmatprep.subr.mxu0 0.0
        %3939 = vmatpush1.xpose.msra.mxu0 0.0
        %3940 = vmatprep.subr.mxu0 0.0
        %3941 = vmatpush1.xpose.msra.mxu0 0.0
        %3942 = vmatprep.subr.mxu0 0.0
        %3943 = vmatpush1.xpose.msra.mxu0 0.0
        %3944 = vmatprep.subr.mxu0 0.0
        %3945 = vmatpush1.xpose.msra.mxu0 0.0
        %3946 = vmatprep.subr.mxu0 0.0
        %3947 = vmatpush1.xpose.msra.mxu0 0.0
        %3948 = vmatprep.subr.mxu0 0.0
        %3949 = vmatpush1.xpose.msra.mxu0 0.0
        %3950 = vmatprep.subr.mxu0 0.0
        %3951 = vmatpush1.xpose.msra.mxu0 0.0
        %3952 = vmatprep.subr.mxu0 0.0
        %3953 = vmatpush1.xpose.msra.mxu0 0.0
        %3954 = vmatprep.subr.mxu0 0.0
        %3955 = vmatpush1.xpose.msra.mxu0 0.0
        %3956 = vmatprep.subr.mxu0 0.0
        %3957 = vmatpush1.xpose.msra.mxu0 0.0
        %3958 = vmatprep.subr.mxu0 0.0
        %3959 = vmatpush1.xpose.msra.mxu0 0.0
        %3960 = vmatprep.subr.mxu0 0.0
        %3961 = vmatpush1.xpose.msra.mxu0 0.0
        %3962 = vmatprep.subr.mxu0 0.0
        %3963 = vmatpush1.xpose.msra.mxu0 0.0
        %3964 = vmatprep.subr.mxu0 0.0
        %3965 = vmatpush1.xpose.msra.mxu0 0.0
        %3966 = vmatprep.subr.mxu0 0.0
        %3967 = vmatpush1.xpose.msra.mxu0 0.0
        %3968 = vmatprep.subr.mxu0 0.0
        %3969 = vmatpush1.xpose.msra.mxu0 0.0
        %3970 = vmatprep.subr.mxu0 0.0
        %3971 = vmatpush1.xpose.msra.mxu0 0.0
        %3972 = vmatprep.subr.mxu0 0.0
        %3973 = vmatpush1.xpose.msra.mxu0 0.0
        %3974 = vmatprep.subr.mxu0 0.0
        %3975 = vmatpush1.xpose.msra.mxu0 0.0
        %3976 = vmatprep.subr.mxu0 0.0
        %3977 = vmatpush1.xpose.msra.mxu0 0.0
        %3978 = vmatprep.subr.mxu0 0.0
        %3979 = vmatpush1.xpose.msra.mxu0 0.0
        %3980 = vmatprep.mubr.f32.mxu0 0.0
        %3981 = vmatmul.mubr.f32.gmra.mrb[0].mxu0 %v3914
        %v3982 = vpop.f32.mrb[0].mxu0
        %v3983 = vadd.f32 0.0, %v3982
        %v3984 = vpop.f32.mrb[0].mxu0
        %3985 = vdwg.mxu0
        %v3986 = vmul.f32 %v2707, %v3983
        %v3987 = vadd.f32 %v3912, %v3986
        %v3989 = vsel %vm2230, %v3643, 0
        %3991 = vmatprep.subr.mxu0 0.0
        %3992 = vmatpush1.xpose.msra.mxu0 %v3989
        %3993 = vmatprep.subr.mxu0 0.0
        %3994 = vmatpush1.xpose.msra.mxu0 0.0
        %3995 = vmatprep.subr.mxu0 0.0
        %3996 = vmatpush1.xpose.msra.mxu0 0.0
        %3997 = vmatprep.subr.mxu0 0.0
        %3998 = vmatpush1.xpose.msra.mxu0 0.0
        %3999 = vmatprep.subr.mxu0 0.0
        %4000 = vmatpush1.xpose.msra.mxu0 0.0
        %4001 = vmatprep.subr.mxu0 0.0
        %4002 = vmatpush1.xpose.msra.mxu0 0.0
        %4003 = vmatprep.subr.mxu0 0.0
        %4004 = vmatpush1.xpose.msra.mxu0 0.0
        %4005 = vmatprep.subr.mxu0 0.0
        %4006 = vmatpush1.xpose.msra.mxu0 0.0
        %4007 = vmatprep.subr.mxu0 0.0
        %4008 = vmatpush1.xpose.msra.mxu0 0.0
        %4009 = vmatprep.subr.mxu0 0.0
        %4010 = vmatpush1.xpose.msra.mxu0 0.0
        %4011 = vmatprep.subr.mxu0 0.0
        %4012 = vmatpush1.xpose.msra.mxu0 0.0
        %4013 = vmatprep.subr.mxu0 0.0
        %4014 = vmatpush1.xpose.msra.mxu0 0.0
        %4015 = vmatprep.subr.mxu0 0.0
        %4016 = vmatpush1.xpose.msra.mxu0 0.0
        %4017 = vmatprep.subr.mxu0 0.0
        %4018 = vmatpush1.xpose.msra.mxu0 0.0
        %4019 = vmatprep.subr.mxu0 0.0
        %4020 = vmatpush1.xpose.msra.mxu0 0.0
        %4021 = vmatprep.subr.mxu0 0.0
        %4022 = vmatpush1.xpose.msra.mxu0 0.0
        %4023 = vmatprep.subr.mxu0 0.0
        %4024 = vmatpush1.xpose.msra.mxu0 0.0
        %4025 = vmatprep.subr.mxu0 0.0
        %4026 = vmatpush1.xpose.msra.mxu0 0.0
        %4027 = vmatprep.subr.mxu0 0.0
        %4028 = vmatpush1.xpose.msra.mxu0 0.0
        %4029 = vmatprep.subr.mxu0 0.0
        %4030 = vmatpush1.xpose.msra.mxu0 0.0
        %4031 = vmatprep.subr.mxu0 0.0
        %4032 = vmatpush1.xpose.msra.mxu0 0.0
        %4033 = vmatprep.subr.mxu0 0.0
        %4034 = vmatpush1.xpose.msra.mxu0 0.0
        %4035 = vmatprep.subr.mxu0 0.0
        %4036 = vmatpush1.xpose.msra.mxu0 0.0
        %4037 = vmatprep.subr.mxu0 0.0
        %4038 = vmatpush1.xpose.msra.mxu0 0.0
        %4039 = vmatprep.subr.mxu0 0.0
        %4040 = vmatpush1.xpose.msra.mxu0 0.0
        %4041 = vmatprep.subr.mxu0 0.0
        %4042 = vmatpush1.xpose.msra.mxu0 0.0
        %4043 = vmatprep.subr.mxu0 0.0
        %4044 = vmatpush1.xpose.msra.mxu0 0.0
        %4045 = vmatprep.subr.mxu0 0.0
        %4046 = vmatpush1.xpose.msra.mxu0 0.0
        %4047 = vmatprep.subr.mxu0 0.0
        %4048 = vmatpush1.xpose.msra.mxu0 0.0
        %4049 = vmatprep.subr.mxu0 0.0
        %4050 = vmatpush1.xpose.msra.mxu0 0.0
        %4051 = vmatprep.subr.mxu0 0.0
        %4052 = vmatpush1.xpose.msra.mxu0 0.0
        %4053 = vmatprep.subr.mxu0 0.0
        %4054 = vmatpush1.xpose.msra.mxu0 0.0
        %4055 = vmatprep.mubr.f32.mxu0 0.0
        %4056 = vmatmul.mubr.f32.gmra.mrb[0].mxu0 %v3686
        %v4057 = vpop.f32.mrb[0].mxu0
        %v4058 = vadd.f32 0.0, %v4057
        %v4059 = vpop.f32.mrb[0].mxu0
        %4060 = vdwg.mxu0
        %v4061 = vmul.f32 %v2783, %v4058
        %v4062 = vadd.f32 %v3987, %v4061
        %4063 = vmatprep.subr.mxu0 0.0
        %4064 = vmatpush1.xpose.msra.mxu0 %v3989
        %4065 = vmatprep.subr.mxu0 0.0
        %4066 = vmatpush1.xpose.msra.mxu0 0.0
        %4067 = vmatprep.subr.mxu0 0.0
        %4068 = vmatpush1.xpose.msra.mxu0 0.0
        %4069 = vmatprep.subr.mxu0 0.0
        %4070 = vmatpush1.xpose.msra.mxu0 0.0
        %4071 = vmatprep.subr.mxu0 0.0
        %4072 = vmatpush1.xpose.msra.mxu0 0.0
        %4073 = vmatprep.subr.mxu0 0.0
        %4074 = vmatpush1.xpose.msra.mxu0 0.0
        %4075 = vmatprep.subr.mxu0 0.0
        %4076 = vmatpush1.xpose.msra.mxu0 0.0
        %4077 = vmatprep.subr.mxu0 0.0
        %4078 = vmatpush1.xpose.msra.mxu0 0.0
        %4079 = vmatprep.subr.mxu0 0.0
        %4080 = vmatpush1.xpose.msra.mxu0 0.0
        %4081 = vmatprep.subr.mxu0 0.0
        %4082 = vmatpush1.xpose.msra.mxu0 0.0
        %4083 = vmatprep.subr.mxu0 0.0
        %4084 = vmatpush1.xpose.msra.mxu0 0.0
        %4085 = vmatprep.subr.mxu0 0.0
        %4086 = vmatpush1.xpose.msra.mxu0 0.0
        %4087 = vmatprep.subr.mxu0 0.0
        %4088 = vmatpush1.xpose.msra.mxu0 0.0
        %4089 = vmatprep.subr.mxu0 0.0
        %4090 = vmatpush1.xpose.msra.mxu0 0.0
        %4091 = vmatprep.subr.mxu0 0.0
        %4092 = vmatpush1.xpose.msra.mxu0 0.0
        %4093 = vmatprep.subr.mxu0 0.0
        %4094 = vmatpush1.xpose.msra.mxu0 0.0
        %4095 = vmatprep.subr.mxu0 0.0
        %4096 = vmatpush1.xpose.msra.mxu0 0.0
        %4097 = vmatprep.subr.mxu0 0.0
        %4098 = vmatpush1.xpose.msra.mxu0 0.0
        %4099 = vmatprep.subr.mxu0 0.0
        %4100 = vmatpush1.xpose.msra.mxu0 0.0
        %4101 = vmatprep.subr.mxu0 0.0
        %4102 = vmatpush1.xpose.msra.mxu0 0.0
        %4103 = vmatprep.subr.mxu0 0.0
        %4104 = vmatpush1.xpose.msra.mxu0 0.0
        %4105 = vmatprep.subr.mxu0 0.0
        %4106 = vmatpush1.xpose.msra.mxu0 0.0
        %4107 = vmatprep.subr.mxu0 0.0
        %4108 = vmatpush1.xpose.msra.mxu0 0.0
        %4109 = vmatprep.subr.mxu0 0.0
        %4110 = vmatpush1.xpose.msra.mxu0 0.0
        %4111 = vmatprep.subr.mxu0 0.0
        %4112 = vmatpush1.xpose.msra.mxu0 0.0
        %4113 = vmatprep.subr.mxu0 0.0
        %4114 = vmatpush1.xpose.msra.mxu0 0.0
        %4115 = vmatprep.subr.mxu0 0.0
        %4116 = vmatpush1.xpose.msra.mxu0 0.0
        %4117 = vmatprep.subr.mxu0 0.0
        %4118 = vmatpush1.xpose.msra.mxu0 0.0
        %4119 = vmatprep.subr.mxu0 0.0
        %4120 = vmatpush1.xpose.msra.mxu0 0.0
        %4121 = vmatprep.subr.mxu0 0.0
        %4122 = vmatpush1.xpose.msra.mxu0 0.0
        %4123 = vmatprep.subr.mxu0 0.0
        %4124 = vmatpush1.xpose.msra.mxu0 0.0
        %4125 = vmatprep.subr.mxu0 0.0
        %4126 = vmatpush1.xpose.msra.mxu0 0.0
        %4127 = vmatprep.mubr.f32.mxu0 0.0
        %4128 = vmatmul.mubr.f32.gmra.mrb[0].mxu0 %v3839
        %v4129 = vpop.f32.mrb[0].mxu0
        %v4130 = vadd.f32 0.0, %v4129
        %v4131 = vpop.f32.mrb[0].mxu0
        %4132 = vdwg.mxu0
        %v4133 = vmul.f32 %v2856, %v4130
        %v4134 = vadd.f32 %v4062, %v4133
        %4135 = vmatprep.subr.mxu0 0.0
        %4136 = vmatpush1.xpose.msra.mxu0 %v3989
        %4137 = vmatprep.subr.mxu0 0.0
        %4138 = vmatpush1.xpose.msra.mxu0 0.0
        %4139 = vmatprep.subr.mxu0 0.0
        %4140 = vmatpush1.xpose.msra.mxu0 0.0
        %4141 = vmatprep.subr.mxu0 0.0
        %4142 = vmatpush1.xpose.msra.mxu0 0.0
        %4143 = vmatprep.subr.mxu0 0.0
        %4144 = vmatpush1.xpose.msra.mxu0 0.0
        %4145 = vmatprep.subr.mxu0 0.0
        %4146 = vmatpush1.xpose.msra.mxu0 0.0
        %4147 = vmatprep.subr.mxu0 0.0
        %4148 = vmatpush1.xpose.msra.mxu0 0.0
        %4149 = vmatprep.subr.mxu0 0.0
        %4150 = vmatpush1.xpose.msra.mxu0 0.0
        %4151 = vmatprep.subr.mxu0 0.0
        %4152 = vmatpush1.xpose.msra.mxu0 0.0
        %4153 = vmatprep.subr.mxu0 0.0
        %4154 = vmatpush1.xpose.msra.mxu0 0.0
        %4155 = vmatprep.subr.mxu0 0.0
        %4156 = vmatpush1.xpose.msra.mxu0 0.0
        %4157 = vmatprep.subr.mxu0 0.0
        %4158 = vmatpush1.xpose.msra.mxu0 0.0
        %4159 = vmatprep.subr.mxu0 0.0
        %4160 = vmatpush1.xpose.msra.mxu0 0.0
        %4161 = vmatprep.subr.mxu0 0.0
        %4162 = vmatpush1.xpose.msra.mxu0 0.0
        %4163 = vmatprep.subr.mxu0 0.0
        %4164 = vmatpush1.xpose.msra.mxu0 0.0
        %4165 = vmatprep.subr.mxu0 0.0
        %4166 = vmatpush1.xpose.msra.mxu0 0.0
        %4167 = vmatprep.subr.mxu0 0.0
        %4168 = vmatpush1.xpose.msra.mxu0 0.0
        %4169 = vmatprep.subr.mxu0 0.0
        %4170 = vmatpush1.xpose.msra.mxu0 0.0
        %4171 = vmatprep.subr.mxu0 0.0
        %4172 = vmatpush1.xpose.msra.mxu0 0.0
        %4173 = vmatprep.subr.mxu0 0.0
        %4174 = vmatpush1.xpose.msra.mxu0 0.0
        %4175 = vmatprep.subr.mxu0 0.0
        %4176 = vmatpush1.xpose.msra.mxu0 0.0
        %4177 = vmatprep.subr.mxu0 0.0
        %4178 = vmatpush1.xpose.msra.mxu0 0.0
        %4179 = vmatprep.subr.mxu0 0.0
        %4180 = vmatpush1.xpose.msra.mxu0 0.0
        %4181 = vmatprep.subr.mxu0 0.0
        %4182 = vmatpush1.xpose.msra.mxu0 0.0
        %4183 = vmatprep.subr.mxu0 0.0
        %4184 = vmatpush1.xpose.msra.mxu0 0.0
        %4185 = vmatprep.subr.mxu0 0.0
        %4186 = vmatpush1.xpose.msra.mxu0 0.0
        %4187 = vmatprep.subr.mxu0 0.0
        %4188 = vmatpush1.xpose.msra.mxu0 0.0
        %4189 = vmatprep.subr.mxu0 0.0
        %4190 = vmatpush1.xpose.msra.mxu0 0.0
        %4191 = vmatprep.subr.mxu0 0.0
        %4192 = vmatpush1.xpose.msra.mxu0 0.0
        %4193 = vmatprep.subr.mxu0 0.0
        %4194 = vmatpush1.xpose.msra.mxu0 0.0
        %4195 = vmatprep.subr.mxu0 0.0
        %4196 = vmatpush1.xpose.msra.mxu0 0.0
        %4197 = vmatprep.subr.mxu0 0.0
        %4198 = vmatpush1.xpose.msra.mxu0 0.0
        %4199 = vmatprep.mubr.f32.mxu0 0.0
        %4200 = vmatmul.mubr.f32.gmra.mrb[0].mxu0 %v3914
        %v4201 = vpop.f32.mrb[0].mxu0
        %v4202 = vadd.f32 0.0, %v4201
        %v4203 = vpop.f32.mrb[0].mxu0
        %4204 = vdwg.mxu0
        %v4205 = vmul.f32 %v2929, %v4202
        %v4206 = vadd.f32 %v4134, %v4205
        %v4208 = vsel %vm2230, %v3676, 0
        %4210 = vmatprep.subr.mxu0 0.0
        %4211 = vmatpush1.xpose.msra.mxu0 %v4208
        %4212 = vmatprep.subr.mxu0 0.0
        %4213 = vmatpush1.xpose.msra.mxu0 0.0
        %4214 = vmatprep.subr.mxu0 0.0
        %4215 = vmatpush1.xpose.msra.mxu0 0.0
        %4216 = vmatprep.subr.mxu0 0.0
        %4217 = vmatpush1.xpose.msra.mxu0 0.0
        %4218 = vmatprep.subr.mxu0 0.0
        %4219 = vmatpush1.xpose.msra.mxu0 0.0
        %4220 = vmatprep.subr.mxu0 0.0
        %4221 = vmatpush1.xpose.msra.mxu0 0.0
        %4222 = vmatprep.subr.mxu0 0.0
        %4223 = vmatpush1.xpose.msra.mxu0 0.0
        %4224 = vmatprep.subr.mxu0 0.0
        %4225 = vmatpush1.xpose.msra.mxu0 0.0
        %4226 = vmatprep.subr.mxu0 0.0
        %4227 = vmatpush1.xpose.msra.mxu0 0.0
        %4228 = vmatprep.subr.mxu0 0.0
        %4229 = vmatpush1.xpose.msra.mxu0 0.0
        %4230 = vmatprep.subr.mxu0 0.0
        %4231 = vmatpush1.xpose.msra.mxu0 0.0
        %4232 = vmatprep.subr.mxu0 0.0
        %4233 = vmatpush1.xpose.msra.mxu0 0.0
        %4234 = vmatprep.subr.mxu0 0.0
        %4235 = vmatpush1.xpose.msra.mxu0 0.0
        %4236 = vmatprep.subr.mxu0 0.0
        %4237 = vmatpush1.xpose.msra.mxu0 0.0
        %4238 = vmatprep.subr.mxu0 0.0
        %4239 = vmatpush1.xpose.msra.mxu0 0.0
        %4240 = vmatprep.subr.mxu0 0.0
        %4241 = vmatpush1.xpose.msra.mxu0 0.0
        %4242 = vmatprep.subr.mxu0 0.0
        %4243 = vmatpush1.xpose.msra.mxu0 0.0
        %4244 = vmatprep.subr.mxu0 0.0
        %4245 = vmatpush1.xpose.msra.mxu0 0.0
        %4246 = vmatprep.subr.mxu0 0.0
        %4247 = vmatpush1.xpose.msra.mxu0 0.0
        %4248 = vmatprep.subr.mxu0 0.0
        %4249 = vmatpush1.xpose.msra.mxu0 0.0
        %4250 = vmatprep.subr.mxu0 0.0
        %4251 = vmatpush1.xpose.msra.mxu0 0.0
        %4252 = vmatprep.subr.mxu0 0.0
        %4253 = vmatpush1.xpose.msra.mxu0 0.0
        %4254 = vmatprep.subr.mxu0 0.0
        %4255 = vmatpush1.xpose.msra.mxu0 0.0
        %4256 = vmatprep.subr.mxu0 0.0
        %4257 = vmatpush1.xpose.msra.mxu0 0.0
        %4258 = vmatprep.subr.mxu0 0.0
        %4259 = vmatpush1.xpose.msra.mxu0 0.0
        %4260 = vmatprep.subr.mxu0 0.0
        %4261 = vmatpush1.xpose.msra.mxu0 0.0
        %4262 = vmatprep.subr.mxu0 0.0
        %4263 = vmatpush1.xpose.msra.mxu0 0.0
        %4264 = vmatprep.subr.mxu0 0.0
        %4265 = vmatpush1.xpose.msra.mxu0 0.0
        %4266 = vmatprep.subr.mxu0 0.0
        %4267 = vmatpush1.xpose.msra.mxu0 0.0
        %4268 = vmatprep.subr.mxu0 0.0
        %4269 = vmatpush1.xpose.msra.mxu0 0.0
        %4270 = vmatprep.subr.mxu0 0.0
        %4271 = vmatpush1.xpose.msra.mxu0 0.0
        %4272 = vmatprep.subr.mxu0 0.0
        %4273 = vmatpush1.xpose.msra.mxu0 0.0
        %4274 = vmatprep.mubr.f32.mxu0 0.0
        %4275 = vmatmul.mubr.f32.gmra.mrb[0].mxu0 %v3686
        %v4276 = vpop.f32.mrb[0].mxu0
        %v4277 = vadd.f32 0.0, %v4276
        %v4278 = vpop.f32.mrb[0].mxu0
        %4279 = vdwg.mxu0
        %v4280 = vmul.f32 %v3005, %v4277
        %v4281 = vadd.f32 %v4206, %v4280
        %4282 = vmatprep.subr.mxu0 0.0
        %4283 = vmatpush1.xpose.msra.mxu0 %v4208
        %4284 = vmatprep.subr.mxu0 0.0
        %4285 = vmatpush1.xpose.msra.mxu0 0.0
        %4286 = vmatprep.subr.mxu0 0.0
        %4287 = vmatpush1.xpose.msra.mxu0 0.0
        %4288 = vmatprep.subr.mxu0 0.0
        %4289 = vmatpush1.xpose.msra.mxu0 0.0
        %4290 = vmatprep.subr.mxu0 0.0
        %4291 = vmatpush1.xpose.msra.mxu0 0.0
        %4292 = vmatprep.subr.mxu0 0.0
        %4293 = vmatpush1.xpose.msra.mxu0 0.0
        %4294 = vmatprep.subr.mxu0 0.0
        %4295 = vmatpush1.xpose.msra.mxu0 0.0
        %4296 = vmatprep.subr.mxu0 0.0
        %4297 = vmatpush1.xpose.msra.mxu0 0.0
        %4298 = vmatprep.subr.mxu0 0.0
        %4299 = vmatpush1.xpose.msra.mxu0 0.0
        %4300 = vmatprep.subr.mxu0 0.0
        %4301 = vmatpush1.xpose.msra.mxu0 0.0
        %4302 = vmatprep.subr.mxu0 0.0
        %4303 = vmatpush1.xpose.msra.mxu0 0.0
        %4304 = vmatprep.subr.mxu0 0.0
        %4305 = vmatpush1.xpose.msra.mxu0 0.0
        %4306 = vmatprep.subr.mxu0 0.0
        %4307 = vmatpush1.xpose.msra.mxu0 0.0
        %4308 = vmatprep.subr.mxu0 0.0
        %4309 = vmatpush1.xpose.msra.mxu0 0.0
        %4310 = vmatprep.subr.mxu0 0.0
        %4311 = vmatpush1.xpose.msra.mxu0 0.0
        %4312 = vmatprep.subr.mxu0 0.0
        %4313 = vmatpush1.xpose.msra.mxu0 0.0
        %4314 = vmatprep.subr.mxu0 0.0
        %4315 = vmatpush1.xpose.msra.mxu0 0.0
        %4316 = vmatprep.subr.mxu0 0.0
        %4317 = vmatpush1.xpose.msra.mxu0 0.0
        %4318 = vmatprep.subr.mxu0 0.0
        %4319 = vmatpush1.xpose.msra.mxu0 0.0
        %4320 = vmatprep.subr.mxu0 0.0
        %4321 = vmatpush1.xpose.msra.mxu0 0.0
        %4322 = vmatprep.subr.mxu0 0.0
        %4323 = vmatpush1.xpose.msra.mxu0 0.0
        %4324 = vmatprep.subr.mxu0 0.0
        %4325 = vmatpush1.xpose.msra.mxu0 0.0
        %4326 = vmatprep.subr.mxu0 0.0
        %4327 = vmatpush1.xpose.msra.mxu0 0.0
        %4328 = vmatprep.subr.mxu0 0.0
        %4329 = vmatpush1.xpose.msra.mxu0 0.0
        %4330 = vmatprep.subr.mxu0 0.0
        %4331 = vmatpush1.xpose.msra.mxu0 0.0
        %4332 = vmatprep.subr.mxu0 0.0
        %4333 = vmatpush1.xpose.msra.mxu0 0.0
        %4334 = vmatprep.subr.mxu0 0.0
        %4335 = vmatpush1.xpose.msra.mxu0 0.0
        %4336 = vmatprep.subr.mxu0 0.0
        %4337 = vmatpush1.xpose.msra.mxu0 0.0
        %4338 = vmatprep.subr.mxu0 0.0
        %4339 = vmatpush1.xpose.msra.mxu0 0.0
        %4340 = vmatprep.subr.mxu0 0.0
        %4341 = vmatpush1.xpose.msra.mxu0 0.0
        %4342 = vmatprep.subr.mxu0 0.0
        %4343 = vmatpush1.xpose.msra.mxu0 0.0
        %4344 = vmatprep.subr.mxu0 0.0
        %4345 = vmatpush1.xpose.msra.mxu0 0.0
        %4346 = vmatprep.mubr.f32.mxu0 0.0
        %4347 = vmatmul.mubr.f32.gmra.mrb[0].mxu0 %v3839
        %v4348 = vpop.f32.mrb[0].mxu0
        %v4349 = vadd.f32 0.0, %v4348
        %v4350 = vpop.f32.mrb[0].mxu0
        %4351 = vdwg.mxu0
        %v4352 = vmul.f32 %v3078, %v4349
        %v4353 = vadd.f32 %v4281, %v4352
        %4354 = vmatprep.subr.mxu0 0.0
        %4355 = vmatpush1.xpose.msra.mxu0 %v4208
        %4356 = vmatprep.subr.mxu0 0.0
        %4357 = vmatpush1.xpose.msra.mxu0 0.0
        %4358 = vmatprep.subr.mxu0 0.0
        %4359 = vmatpush1.xpose.msra.mxu0 0.0
        %4360 = vmatprep.subr.mxu0 0.0
        %4361 = vmatpush1.xpose.msra.mxu0 0.0
        %4362 = vmatprep.subr.mxu0 0.0
        %4363 = vmatpush1.xpose.msra.mxu0 0.0
        %4364 = vmatprep.subr.mxu0 0.0
        %4365 = vmatpush1.xpose.msra.mxu0 0.0
        %4366 = vmatprep.subr.mxu0 0.0
        %4367 = vmatpush1.xpose.msra.mxu0 0.0
        %4368 = vmatprep.subr.mxu0 0.0
        %4369 = vmatpush1.xpose.msra.mxu0 0.0
        %4370 = vmatprep.subr.mxu0 0.0
        %4371 = vmatpush1.xpose.msra.mxu0 0.0
        %4372 = vmatprep.subr.mxu0 0.0
        %4373 = vmatpush1.xpose.msra.mxu0 0.0
        %4374 = vmatprep.subr.mxu0 0.0
        %4375 = vmatpush1.xpose.msra.mxu0 0.0
        %4376 = vmatprep.subr.mxu0 0.0
        %4377 = vmatpush1.xpose.msra.mxu0 0.0
        %4378 = vmatprep.subr.mxu0 0.0
        %4379 = vmatpush1.xpose.msra.mxu0 0.0
        %4380 = vmatprep.subr.mxu0 0.0
        %4381 = vmatpush1.xpose.msra.mxu0 0.0
        %4382 = vmatprep.subr.mxu0 0.0
        %4383 = vmatpush1.xpose.msra.mxu0 0.0
        %4384 = vmatprep.subr.mxu0 0.0
        %4385 = vmatpush1.xpose.msra.mxu0 0.0
        %4386 = vmatprep.subr.mxu0 0.0
        %4387 = vmatpush1.xpose.msra.mxu0 0.0
        %4388 = vmatprep.subr.mxu0 0.0
        %4389 = vmatpush1.xpose.msra.mxu0 0.0
        %4390 = vmatprep.subr.mxu0 0.0
        %4391 = vmatpush1.xpose.msra.mxu0 0.0
        %4392 = vmatprep.subr.mxu0 0.0
        %4393 = vmatpush1.xpose.msra.mxu0 0.0
        %4394 = vmatprep.subr.mxu0 0.0
        %4395 = vmatpush1.xpose.msra.mxu0 0.0
        %4396 = vmatprep.subr.mxu0 0.0
        %4397 = vmatpush1.xpose.msra.mxu0 0.0
        %4398 = vmatprep.subr.mxu0 0.0
        %4399 = vmatpush1.xpose.msra.mxu0 0.0
        %4400 = vmatprep.subr.mxu0 0.0
        %4401 = vmatpush1.xpose.msra.mxu0 0.0
        %4402 = vmatprep.subr.mxu0 0.0
        %4403 = vmatpush1.xpose.msra.mxu0 0.0
        %4404 = vmatprep.subr.mxu0 0.0
        %4405 = vmatpush1.xpose.msra.mxu0 0.0
        %4406 = vmatprep.subr.mxu0 0.0
        %4407 = vmatpush1.xpose.msra.mxu0 0.0
        %4408 = vmatprep.subr.mxu0 0.0
        %4409 = vmatpush1.xpose.msra.mxu0 0.0
        %4410 = vmatprep.subr.mxu0 0.0
        %4411 = vmatpush1.xpose.msra.mxu0 0.0
        %4412 = vmatprep.subr.mxu0 0.0
        %4413 = vmatpush1.xpose.msra.mxu0 0.0
        %4414 = vmatprep.subr.mxu0 0.0
        %4415 = vmatpush1.xpose.msra.mxu0 0.0
        %4416 = vmatprep.subr.mxu0 0.0
        %4417 = vmatpush1.xpose.msra.mxu0 0.0
        %4418 = vmatprep.mubr.f32.mxu0 0.0
        %4419 = vmatmul.mubr.f32.gmra.mrb[0].mxu0 %v3914
        %v4420 = vpop.f32.mrb[0].mxu0
        %v4421 = vadd.f32 0.0, %v4420
        %v4422 = vpop.f32.mrb[0].mxu0
        %4423 = vdwg.mxu0
        %v4424 = vmul.f32 %v3151, %v4421
        %v4425 = vadd.f32 %v4353, %v4424
        %v4426 = vmul.f32 %v4425, -0.35355338
        %v4427 = vsel %vm3155, %v4426, -1e+30
        %v4428 = vsel %vm1977, %v4427, -inf
        %4429 = vmax.xlane.f32.xlu0 %v4428
        %v4430 = vpop.xlane.xlu0 %4429
        %v4431 = vsub.f32 %v4427, %v4430
        %v4432 = vmul.f32 %v4431, 1.442695
        %v4433 = vpow.pop %v4432
        %v4434 = vsel %vm1977, %v4433, 0.0
        %4435 = vadd.xlane.f32.xlu0 %v4434
        %v4436 = vpop.xlane.xlu0 %4435
        %v4437 = vrcp.pop %v4436
        %v4438 = vmul.f32 %v4433, %v4437
        %s4439 = scalar_lea.vmem %s1180, 8 [#allocation17]
        %4440 = vst.msk [vmem:[%s4439] sm:$0xff] %vm1977, %v4438
        %v4441 = vpack.c.bf16 %v4438, %v4438
        %4443 = vrot.lane.b32.xlu0 %v3170, 120
        %v4444 = vpop.permute.xlu0 %4443
        %v4446 = vsel %vm1977, %v4441, 0
        %v4449 = vsel %vm3174, %v4444, 0
        %4451 = vmatprep.subr.bf16.mxu0 0
        %4452 = vmatpush1.bf16.msra.mxu0 %v4449
        %4453 = vmatprep.subr.bf16.mxu0 0
        %4454 = vmatpush1.bf16.msra.mxu0 0
        %4455 = vmatprep.subr.bf16.mxu0 0
        %4456 = vmatpush1.bf16.msra.mxu0 0
        %4457 = vmatprep.subr.bf16.mxu0 0
        %4458 = vmatpush1.bf16.msra.mxu0 0
        %4459 = vmatprep.subr.bf16.mxu0 0
        %4460 = vmatpush1.bf16.msra.mxu0 0
        %4461 = vmatprep.subr.bf16.mxu0 0
        %4462 = vmatpush1.bf16.msra.mxu0 0
        %4463 = vmatprep.subr.bf16.mxu0 0
        %4464 = vmatpush1.bf16.msra.mxu0 0
        %4465 = vmatprep.subr.bf16.mxu0 0
        %4466 = vmatpush1.bf16.msra.mxu0 0
        %4467 = vmatprep.subr.bf16.mxu0 0
        %4468 = vmatpush1.bf16.msra.mxu0 0
        %4469 = vmatprep.subr.bf16.mxu0 0
        %4470 = vmatpush1.bf16.msra.mxu0 0
        %4471 = vmatprep.subr.bf16.mxu0 0
        %4472 = vmatpush1.bf16.msra.mxu0 0
        %4473 = vmatprep.subr.bf16.mxu0 0
        %4474 = vmatpush1.bf16.msra.mxu0 0
        %4475 = vmatprep.subr.bf16.mxu0 0
        %4476 = vmatpush1.bf16.msra.mxu0 0
        %4477 = vmatprep.subr.bf16.mxu0 0
        %4478 = vmatpush1.bf16.msra.mxu0 0
        %4479 = vmatprep.subr.bf16.mxu0 0
        %4480 = vmatpush1.bf16.msra.mxu0 0
        %4481 = vmatprep.subr.bf16.mxu0 0
        %4482 = vmatpush1.bf16.msra.mxu0 0
        %4483 = vmatprep.mubr.bf16.mxu0 0
        %4484 = vmatmul.mubr.bf16.gmra.mrb[0].mxu0 %v4446
        %v4485 = vpop.f32.mrb[0].mxu0
        %v4486 = vadd.f32 0.0, %v4485
        %v4487 = vpop.f32.mrb[0].mxu0
        %v4488 = vpop.f32.mrb[0].mxu0
        %v4489 = vpop.f32.mrb[0].mxu0
        %4490 = vdwg.mxu0
        %v4491 = vmul.f32 %v4438, %v4438
        %v4492 = vpack.c.bf16 %v4491, %v4491
        %4494 = vrot.lane.b32.xlu0 %v3220, 120
        %v4495 = vpop.permute.xlu0 %4494
        %v4497 = vsel %vm1977, %v4492, 0
        %v4500 = vsel %vm3174, %v4495, 0
        %4502 = vmatprep.subr.bf16.mxu0 0
        %4503 = vmatpush1.bf16.msra.mxu0 %v4500
        %4504 = vmatprep.subr.bf16.mxu0 0
        %4505 = vmatpush1.bf16.msra.mxu0 0
        %4506 = vmatprep.subr.bf16.mxu0 0
        %4507 = vmatpush1.bf16.msra.mxu0 0
        %4508 = vmatprep.subr.bf16.mxu0 0
        %4509 = vmatpush1.bf16.msra.mxu0 0
        %4510 = vmatprep.subr.bf16.mxu0 0
        %4511 = vmatpush1.bf16.msra.mxu0 0
        %4512 = vmatprep.subr.bf16.mxu0 0
        %4513 = vmatpush1.bf16.msra.mxu0 0
        %4514 = vmatprep.subr.bf16.mxu0 0
        %4515 = vmatpush1.bf16.msra.mxu0 0
        %4516 = vmatprep.subr.bf16.mxu0 0
        %4517 = vmatpush1.bf16.msra.mxu0 0
        %4518 = vmatprep.subr.bf16.mxu0 0
        %4519 = vmatpush1.bf16.msra.mxu0 0
        %4520 = vmatprep.subr.bf16.mxu0 0
        %4521 = vmatpush1.bf16.msra.mxu0 0
        %4522 = vmatprep.subr.bf16.mxu0 0
        %4523 = vmatpush1.bf16.msra.mxu0 0
        %4524 = vmatprep.subr.bf16.mxu0 0
        %4525 = vmatpush1.bf16.msra.mxu0 0
        %4526 = vmatprep.subr.bf16.mxu0 0
        %4527 = vmatpush1.bf16.msra.mxu0 0
        %4528 = vmatprep.subr.bf16.mxu0 0
        %4529 = vmatpush1.bf16.msra.mxu0 0
        %4530 = vmatprep.subr.bf16.mxu0 0
        %4531 = vmatpush1.bf16.msra.mxu0 0
        %4532 = vmatprep.subr.bf16.mxu0 0
        %4533 = vmatpush1.bf16.msra.mxu0 0
        %4534 = vmatprep.mubr.bf16.mxu0 0
        %4535 = vmatmul.mubr.bf16.gmra.mrb[0].mxu0 %v4497
        %v4536 = vpop.f32.mrb[0].mxu0
        %v4537 = vadd.f32 0.0, %v4536
        %v4538 = vpop.f32.mrb[0].mxu0
        %v4539 = vpop.f32.mrb[0].mxu0
        %v4540 = vpop.f32.mrb[0].mxu0
        %4541 = vdwg.mxu0
        %v4542 = vld [vmem:[%s18] sm:$0xff]
        %v4543 = vld [vmem:[#allocation13] sm:$0x1]
        %v4545 = vlaneseq
        %v4546 = vshrl.u32 %v4545, 7
        %v4547 = vsub.s32 0, %v4546
        %v4548 = vrot.slane %v4543, %v4547
        %4550 = vrot.lane.b32.xlu0 %v1940, 112
        %v4551 = vpop.permute.xlu0 %4550
        %v4552 = vsel %vm1977, %v4551, 0
        %4554 = vmatprep.subr.mxu0 0.0
        %4555 = vmatpush1.msra.mxu0 %v4542
        %4556 = vmatprep.subr.mxu0 0.0
        %4557 = vmatpush1.msra.mxu0 0.0
        %4558 = vmatprep.subr.mxu0 0.0
        %4559 = vmatpush1.msra.mxu0 0.0
        %4560 = vmatprep.subr.mxu0 0.0
        %4561 = vmatpush1.msra.mxu0 0.0
        %4562 = vmatprep.subr.mxu0 0.0
        %4563 = vmatpush1.msra.mxu0 0.0
        %4564 = vmatprep.subr.mxu0 0.0
        %4565 = vmatpush1.msra.mxu0 0.0
        %4566 = vmatprep.subr.mxu0 0.0
        %4567 = vmatpush1.msra.mxu0 0.0
        %4568 = vmatprep.subr.mxu0 0.0
        %4569 = vmatpush1.msra.mxu0 0.0
        %4570 = vmatprep.subr.mxu0 0.0
        %4571 = vmatpush1.msra.mxu0 0.0
        %4572 = vmatprep.subr.mxu0 0.0
        %4573 = vmatpush1.msra.mxu0 0.0
        %4574 = vmatprep.subr.mxu0 0.0
        %4575 = vmatpush1.msra.mxu0 0.0
        %4576 = vmatprep.subr.mxu0 0.0
        %4577 = vmatpush1.msra.mxu0 0.0
        %4578 = vmatprep.subr.mxu0 0.0
        %4579 = vmatpush1.msra.mxu0 0.0
        %4580 = vmatprep.subr.mxu0 0.0
        %4581 = vmatpush1.msra.mxu0 0.0
        %4582 = vmatprep.subr.mxu0 0.0
        %4583 = vmatpush1.msra.mxu0 0.0
        %4584 = vmatprep.subr.mxu0 0.0
        %4585 = vmatpush1.msra.mxu0 0.0
        %4586 = vmatprep.subr.mxu0 0.0
        %4587 = vmatpush1.msra.mxu0 0.0
        %4588 = vmatprep.subr.mxu0 0.0
        %4589 = vmatpush1.msra.mxu0 0.0
        %4590 = vmatprep.subr.mxu0 0.0
        %4591 = vmatpush1.msra.mxu0 0.0
        %4592 = vmatprep.subr.mxu0 0.0
        %4593 = vmatpush1.msra.mxu0 0.0
        %4594 = vmatprep.subr.mxu0 0.0
        %4595 = vmatpush1.msra.mxu0 0.0
        %4596 = vmatprep.subr.mxu0 0.0
        %4597 = vmatpush1.msra.mxu0 0.0
        %4598 = vmatprep.subr.mxu0 0.0
        %4599 = vmatpush1.msra.mxu0 0.0
        %4600 = vmatprep.subr.mxu0 0.0
        %4601 = vmatpush1.msra.mxu0 0.0
        %4602 = vmatprep.subr.mxu0 0.0
        %4603 = vmatpush1.msra.mxu0 0.0
        %4604 = vmatprep.subr.mxu0 0.0
        %4605 = vmatpush1.msra.mxu0 0.0
        %4606 = vmatprep.subr.mxu0 0.0
        %4607 = vmatpush1.msra.mxu0 0.0
        %4608 = vmatprep.subr.mxu0 0.0
        %4609 = vmatpush1.msra.mxu0 0.0
        %4610 = vmatprep.subr.mxu0 0.0
        %4611 = vmatpush1.msra.mxu0 0.0
        %4612 = vmatprep.subr.mxu0 0.0
        %4613 = vmatpush1.msra.mxu0 0.0
        %4614 = vmatprep.subr.mxu0 0.0
        %4615 = vmatpush1.msra.mxu0 0.0
        %4616 = vmatprep.subr.mxu0 0.0
        %4617 = vmatpush1.msra.mxu0 0.0
        %4618 = vmatprep.mubr.f32.mxu0 0.0
        %4619 = vmatmul.mubr.f32.gmra.mrb[0].mxu0 %v4552
        %v4620 = vpop.f32.mrb[0].mxu0
        %v4621 = vadd.f32 %v4548, %v4620
        %v4622 = vpop.f32.mrb[0].mxu0
        %4623 = vdwg.mxu0
        %v4624 = vld [vmem:[%s2051] sm:$0xff]
        %v4625 = vld [vmem:[%s2053] sm:$0x1]
        %v4627 = vlaneseq
        %v4628 = vshrl.u32 %v4627, 7
        %v4629 = vsub.s32 0, %v4628
        %v4630 = vrot.slane %v4625, %v4629
        %4632 = vmatprep.subr.mxu0 0.0
        %4633 = vmatpush1.msra.mxu0 %v4624
        %4634 = vmatprep.subr.mxu0 0.0
        %4635 = vmatpush1.msra.mxu0 0.0
        %4636 = vmatprep.subr.mxu0 0.0
        %4637 = vmatpush1.msra.mxu0 0.0
        %4638 = vmatprep.subr.mxu0 0.0
        %4639 = vmatpush1.msra.mxu0 0.0
        %4640 = vmatprep.subr.mxu0 0.0
        %4641 = vmatpush1.msra.mxu0 0.0
        %4642 = vmatprep.subr.mxu0 0.0
        %4643 = vmatpush1.msra.mxu0 0.0
        %4644 = vmatprep.subr.mxu0 0.0
        %4645 = vmatpush1.msra.mxu0 0.0
        %4646 = vmatprep.subr.mxu0 0.0
        %4647 = vmatpush1.msra.mxu0 0.0
        %4648 = vmatprep.subr.mxu0 0.0
        %4649 = vmatpush1.msra.mxu0 0.0
        %4650 = vmatprep.subr.mxu0 0.0
        %4651 = vmatpush1.msra.mxu0 0.0
        %4652 = vmatprep.subr.mxu0 0.0
        %4653 = vmatpush1.msra.mxu0 0.0
        %4654 = vmatprep.subr.mxu0 0.0
        %4655 = vmatpush1.msra.mxu0 0.0
        %4656 = vmatprep.subr.mxu0 0.0
        %4657 = vmatpush1.msra.mxu0 0.0
        %4658 = vmatprep.subr.mxu0 0.0
        %4659 = vmatpush1.msra.mxu0 0.0
        %4660 = vmatprep.subr.mxu0 0.0
        %4661 = vmatpush1.msra.mxu0 0.0
        %4662 = vmatprep.subr.mxu0 0.0
        %4663 = vmatpush1.msra.mxu0 0.0
        %4664 = vmatprep.subr.mxu0 0.0
        %4665 = vmatpush1.msra.mxu0 0.0
        %4666 = vmatprep.subr.mxu0 0.0
        %4667 = vmatpush1.msra.mxu0 0.0
        %4668 = vmatprep.subr.mxu0 0.0
        %4669 = vmatpush1.msra.mxu0 0.0
        %4670 = vmatprep.subr.mxu0 0.0
        %4671 = vmatpush1.msra.mxu0 0.0
        %4672 = vmatprep.subr.mxu0 0.0
        %4673 = vmatpush1.msra.mxu0 0.0
        %4674 = vmatprep.subr.mxu0 0.0
        %4675 = vmatpush1.msra.mxu0 0.0
        %4676 = vmatprep.subr.mxu0 0.0
        %4677 = vmatpush1.msra.mxu0 0.0
        %4678 = vmatprep.subr.mxu0 0.0
        %4679 = vmatpush1.msra.mxu0 0.0
        %4680 = vmatprep.subr.mxu0 0.0
        %4681 = vmatpush1.msra.mxu0 0.0
        %4682 = vmatprep.subr.mxu0 0.0
        %4683 = vmatpush1.msra.mxu0 0.0
        %4684 = vmatprep.subr.mxu0 0.0
        %4685 = vmatpush1.msra.mxu0 0.0
        %4686 = vmatprep.subr.mxu0 0.0
        %4687 = vmatpush1.msra.mxu0 0.0
        %4688 = vmatprep.subr.mxu0 0.0
        %4689 = vmatpush1.msra.mxu0 0.0
        %4690 = vmatprep.subr.mxu0 0.0
        %4691 = vmatpush1.msra.mxu0 0.0
        %4692 = vmatprep.subr.mxu0 0.0
        %4693 = vmatpush1.msra.mxu0 0.0
        %4694 = vmatprep.subr.mxu0 0.0
        %4695 = vmatpush1.msra.mxu0 0.0
        %4696 = vmatprep.mubr.f32.mxu0 0.0
        %4697 = vmatmul.mubr.f32.gmra.mrb[0].mxu0 %v4552
        %v4698 = vpop.f32.mrb[0].mxu0
        %v4699 = vadd.f32 %v4630, %v4698
        %v4700 = vpop.f32.mrb[0].mxu0
        %4701 = vdwg.mxu0
        %s4702 = scalar_lea.vmem %s1189, 8
        %v4703 = vld [vmem:[%s4702] sm:$0x7]
        %s4704 = scalar_lea.vmem %s1194, 8
        %v4705 = vld [vmem:[%s4704] sm:$0x7]
        %s4706 = scalar_lea.vmem %s1199, 8
        %v4707 = vld [vmem:[%s4706] sm:$0x7]
        %s4708 = scalar_lea.vmem %s1204, 8
        %v4709 = vld [vmem:[%s4708] sm:$0x7]
        %v4710 = vlaneseq
        %v4711 = vshrl.u32 %v4710, 7
        %v4712 = vsub.s32 0, %v4711
        %v4713 = vrot.slane %v4703, %v4712
        %v4714 = vmul.f32 %v2140, %v4713
        %v4715 = vlaneseq
        %v4716 = vshrl.u32 %v4715, 7
        %v4717 = vsub.s32 1, %v4716
        %v4718 = vrot.slane %v4703, %v4717
        %v4719 = vmul.f32 %v2149, %v4718
        %v4720 = vadd.f32 %v4714, %v4719
        %v4721 = vlaneseq
        %v4722 = vshrl.u32 %v4721, 7
        %v4723 = vsub.s32 2, %v4722
        %v4724 = vrot.slane %v4703, %v4723
        %v4725 = vmul.f32 %v2159, %v4724
        %v4726 = vadd.f32 %v4720, %v4725
        %v4727 = vlaneseq
        %v4728 = vshrl.u32 %v4727, 7
        %v4729 = vsub.s32 0, %v4728
        %v4730 = vrot.slane %v4705, %v4729
        %v4731 = vmul.f32 %v2140, %v4730
        %v4732 = vlaneseq
        %v4733 = vshrl.u32 %v4732, 7
        %v4734 = vsub.s32 1, %v4733
        %v4735 = vrot.slane %v4705, %v4734
        %v4736 = vmul.f32 %v2149, %v4735
        %v4737 = vadd.f32 %v4731, %v4736
        %v4738 = vlaneseq
        %v4739 = vshrl.u32 %v4738, 7
        %v4740 = vsub.s32 2, %v4739
        %v4741 = vrot.slane %v4705, %v4740
        %v4742 = vmul.f32 %v2159, %v4741
        %v4743 = vadd.f32 %v4737, %v4742
        %v4744 = vlaneseq
        %v4745 = vshrl.u32 %v4744, 7
        %v4746 = vsub.s32 0, %v4745
        %v4747 = vrot.slane %v4707, %v4746
        %v4748 = vmul.f32 %v2140, %v4747
        %v4749 = vlaneseq
        %v4750 = vshrl.u32 %v4749, 7
        %v4751 = vsub.s32 1, %v4750
        %v4752 = vrot.slane %v4707, %v4751
        %v4753 = vmul.f32 %v2149, %v4752
        %v4754 = vadd.f32 %v4748, %v4753
        %v4755 = vlaneseq
        %v4756 = vshrl.u32 %v4755, 7
        %v4757 = vsub.s32 2, %v4756
        %v4758 = vrot.slane %v4707, %v4757
        %v4759 = vmul.f32 %v2159, %v4758
        %v4760 = vadd.f32 %v4754, %v4759
        %v4761 = vlaneseq
        %v4762 = vshrl.u32 %v4761, 7
        %v4763 = vsub.s32 0, %v4762
        %v4764 = vrot.slane %v4709, %v4763
        %v4765 = vmul.f32 %v2140, %v4764
        %v4766 = vlaneseq
        %v4767 = vshrl.u32 %v4766, 7
        %v4768 = vsub.s32 1, %v4767
        %v4769 = vrot.slane %v4709, %v4768
        %v4770 = vmul.f32 %v2149, %v4769
        %v4771 = vadd.f32 %v4765, %v4770
        %v4772 = vlaneseq
        %v4773 = vshrl.u32 %v4772, 7
        %v4774 = vsub.s32 2, %v4773
        %v4775 = vrot.slane %v4709, %v4774
        %v4776 = vmul.f32 %v2159, %v4775
        %v4777 = vadd.f32 %v4771, %v4776
        %4778 = vrot.lane.b32.xlu0 %v1950, 112
        %v4779 = vpop.permute.xlu0 %4778
        %v4781 = vmul.f32 %v4621, %v4779
        %4783 = vrot.lane.b32.xlu0 %v4781, 16
        %v4784 = vpop.permute.xlu0 %4783
        %v4786 = vadd.f32 %v2219, %v4784
        %4787 = vrot.lane.b32.xlu0 %v2218, 112
        %v4788 = vpop.permute.xlu0 %4787
        %v4790 = vsel %vm1977, %v4788, %v3514
        %v4791 = vsel %vm2230, %v4790, %v2218
        %v4792 = vadd.f32 %v4791, %v4726
        %v4793 = vrcp.pop %v4792
        %4795 = vrot.lane.b32.xlu0 %v4786, 112
        %v4796 = vpop.permute.xlu0 %4795
        %4798 = vrot.lane.b32.xlu0 %v4786, 120
        %v4799 = vpop.permute.xlu0 %4798
        %v4801 = vsel %vm1977, %v4796, %v4799
        %v4802 = vsel %vm2230, %v4801, %v4786
        %v4803 = vadd.f32 %v4802, %v4743
        %v4804 = vmul.f32 %v4793, %v4803
        %v4805 = vmax.f32 %v4793, 1e-24
        %v4806 = vrsqrt.pop %v4805
        %v4807 = vmul.f32 %v4805, %v4806
        %vm4808 = vcmp.eq.f32.partialorder %v4805, inf
        %v4809 = vsel %vm4808, %v4805, %v4807
        %vm4810 = vcmp.eq.f32.partialorder %v4805, 0.0
        %v4811 = vand.u32 %v4805, 2147483648
        %v4812 = vsel %vm4810, %v4811, %v4809
        %v4813 = vmul.f32 %v4699, %v4779
        %4815 = vrot.lane.b32.xlu0 %v4813, 16
        %v4816 = vpop.permute.xlu0 %4815
        %v4818 = vadd.f32 %v2254, %v4816
        %v4819 = vmul.f32 %v4804, %v4804
        %v4820 = vadd.f32 %v4819, %v4793
        %v4821 = vsel %vm1977, %v4820, 0.0
        %4822 = vadd.xlane.f32.xlu0 %v4821
        %v4823 = vpop.xlane.xlu0 %4822
        %4825 = vrot.lane.b32.xlu0 %v4812, 8
        %v4826 = vpop.permute.xlu0 %4825
        %v4828 = vsel %vm1977, %v4804, %v4826
        %4830 = vrot.lane.b32.xlu0 %v4820, 120
        %v4831 = vpop.permute.xlu0 %4830
        %v4833 = vsel %vm1977, %v4831, 0.0
        %4834 = vadd.xlane.f32.xlu0 %v4833
        %v4835 = vpop.xlane.xlu0 %4834
        %4837 = vrot.lane.b32.xlu0 %v4804, 120
        %v4838 = vpop.permute.xlu0 %4837
        %v4840 = vsel %vm1977, %v4838, %v4812
        %4841 = vrot.lane.b32.xlu0 %v4820, 112
        %v4842 = vpop.permute.xlu0 %4841
        %v4844 = vsel %vm1977, %v4842, 0.0
        %4845 = vadd.xlane.f32.xlu0 %v4844
        %v4846 = vpop.xlane.xlu0 %4845
        %4847 = vrot.lane.b32.xlu0 %v4804, 112
        %v4848 = vpop.permute.xlu0 %4847
        %4850 = vrot.lane.b32.xlu0 %v4812, 120
        %v4851 = vpop.permute.xlu0 %4850
        %v4853 = vsel %vm1977, %v4848, %v4851
        %v4854 = vsel %vm2292, %v4823, %v4835
        %v4855 = vsel %vm2294, %v4854, %v4846
        %4857 = vrot.lane.b32.xlu0 %v4760, 16
        %v4858 = vpop.permute.xlu0 %4857
        %v4860 = vadd.f32 %v2253, %v4858
        %v4861 = vrcp.pop %v4860
        %4863 = vrot.lane.b32.xlu0 %v4777, 16
        %v4864 = vpop.permute.xlu0 %4863
        %v4866 = vadd.f32 %v4818, %v4864
        %v4867 = vmul.f32 %v4861, %v4866
        %v4868 = vmax.f32 %v4861, 1e-24
        %v4869 = vrsqrt.pop %v4868
        %v4870 = vmul.f32 %v4868, %v4869
        %vm4871 = vcmp.eq.f32.partialorder %v4868, inf
        %v4872 = vsel %vm4871, %v4868, %v4870
        %vm4873 = vcmp.eq.f32.partialorder %v4868, 0.0
        %v4874 = vand.u32 %v4868, 2147483648
        %v4875 = vsel %vm4873, %v4874, %v4872
        %v4876 = vmul.f32 %v4867, %v4867
        %v4877 = vadd.f32 %v4876, %v4861
        %4879 = vrot.lane.b32.xlu0 %v4877, 112
        %v4880 = vpop.permute.xlu0 %4879
        %v4882 = vsel %vm1977, %v4880, 0.0
        %4883 = vadd.xlane.f32.xlu0 %v4882
        %v4884 = vpop.xlane.xlu0 %4883
        %4886 = vrot.lane.b32.xlu0 %v4867, 112
        %v4887 = vpop.permute.xlu0 %4886
        %4890 = vrot.lane.b32.xlu0 %v4875, 120
        %v4891 = vpop.permute.xlu0 %4890
        %v4893 = vsel %vm1977, %v4887, %v4891
        %v4894 = vmul.f32 %v4893, -2.0
        %4895 = vrot.lane.b32.xlu0 %v4760, 8
        %v4896 = vpop.permute.xlu0 %4895
        %v4898 = vadd.f32 %v2253, %v4896
        %v4899 = vrcp.pop %v4898
        %4900 = vrot.lane.b32.xlu0 %v4777, 8
        %v4901 = vpop.permute.xlu0 %4900
        %v4903 = vadd.f32 %v4818, %v4901
        %v4904 = vmul.f32 %v4899, %v4903
        %v4905 = vmax.f32 %v4899, 1e-24
        %v4906 = vrsqrt.pop %v4905
        %v4907 = vmul.f32 %v4905, %v4906
        %vm4908 = vcmp.eq.f32.partialorder %v4905, inf
        %v4909 = vsel %vm4908, %v4905, %v4907
        %vm4910 = vcmp.eq.f32.partialorder %v4905, 0.0
        %v4911 = vand.u32 %v4905, 2147483648
        %v4912 = vsel %vm4910, %v4911, %v4909
        %v4913 = vmul.f32 %v4904, %v4904
        %v4914 = vadd.f32 %v4913, %v4899
        %4916 = vrot.lane.b32.xlu0 %v4914, 112
        %v4917 = vpop.permute.xlu0 %4916
        %v4919 = vsel %vm1977, %v4917, 0.0
        %4920 = vadd.xlane.f32.xlu0 %v4919
        %v4921 = vpop.xlane.xlu0 %4920
        %4923 = vrot.lane.b32.xlu0 %v4904, 112
        %v4924 = vpop.permute.xlu0 %4923
        %4927 = vrot.lane.b32.xlu0 %v4912, 120
        %v4928 = vpop.permute.xlu0 %4927
        %v4930 = vsel %vm1977, %v4924, %v4928
        %v4931 = vmul.f32 %v4930, -2.0
        %v4932 = vadd.f32 %v2253, %v4760
        %v4933 = vrcp.pop %v4932
        %v4934 = vadd.f32 %v4818, %v4777
        %v4935 = vmul.f32 %v4933, %v4934
        %v4936 = vmax.f32 %v4933, 1e-24
        %v4937 = vrsqrt.pop %v4936
        %v4938 = vmul.f32 %v4936, %v4937
        %vm4939 = vcmp.eq.f32.partialorder %v4936, inf
        %v4940 = vsel %vm4939, %v4936, %v4938
        %vm4941 = vcmp.eq.f32.partialorder %v4936, 0.0
        %v4942 = vand.u32 %v4936, 2147483648
        %v4943 = vsel %vm4941, %v4942, %v4940
        %v4944 = vmul.f32 %v4935, %v4935
        %v4945 = vadd.f32 %v4944, %v4933
        %4947 = vrot.lane.b32.xlu0 %v4945, 112
        %v4948 = vpop.permute.xlu0 %4947
        %v4950 = vsel %vm1977, %v4948, 0.0
        %4951 = vadd.xlane.f32.xlu0 %v4950
        %v4952 = vpop.xlane.xlu0 %4951
        %4954 = vrot.lane.b32.xlu0 %v4935, 112
        %v4955 = vpop.permute.xlu0 %4954
        %4958 = vrot.lane.b32.xlu0 %v4943, 120
        %v4959 = vpop.permute.xlu0 %4958
        %v4961 = vsel %vm1977, %v4955, %v4959
        %v4962 = vmul.f32 %v4961, -2.0
        %v4963 = vsel %vm2292, %v4884, %v4921
        %v4964 = vsel %vm2294, %v4963, %v4952
        %v4965 = vsel %vm2384, %v4855, %v2382
        %4967 = vrot.lane.b32.xlu0 %v4964, 3
        %v4968 = vpop.permute.xlu0 %4967
        %v4970 = vsel %vm2384, %v1951, %v4968
        %v4972 = vsel %vm2230, %v4828, 0
        %v4975 = vsel %vm2230, %v4894, 0
        %4977 = vmatprep.subr.mxu0 0.0
        %4978 = vmatpush1.xpose.msra.mxu0 %v4975
        %4979 = vmatprep.subr.mxu0 0.0
        %4980 = vmatpush1.xpose.msra.mxu0 0.0
        %4981 = vmatprep.subr.mxu0 0.0
        %4982 = vmatpush1.xpose.msra.mxu0 0.0
        %4983 = vmatprep.subr.mxu0 0.0
        %4984 = vmatpush1.xpose.msra.mxu0 0.0
        %4985 = vmatprep.subr.mxu0 0.0
        %4986 = vmatpush1.xpose.msra.mxu0 0.0
        %4987 = vmatprep.subr.mxu0 0.0
        %4988 = vmatpush1.xpose.msra.mxu0 0.0
        %4989 = vmatprep.subr.mxu0 0.0
        %4990 = vmatpush1.xpose.msra.mxu0 0.0
        %4991 = vmatprep.subr.mxu0 0.0
        %4992 = vmatpush1.xpose.msra.mxu0 0.0
        %4993 = vmatprep.subr.mxu0 0.0
        %4994 = vmatpush1.xpose.msra.mxu0 0.0
        %4995 = vmatprep.subr.mxu0 0.0
        %4996 = vmatpush1.xpose.msra.mxu0 0.0
        %4997 = vmatprep.subr.mxu0 0.0
        %4998 = vmatpush1.xpose.msra.mxu0 0.0
        %4999 = vmatprep.subr.mxu0 0.0
        %5000 = vmatpush1.xpose.msra.mxu0 0.0
        %5001 = vmatprep.subr.mxu0 0.0
        %5002 = vmatpush1.xpose.msra.mxu0 0.0
        %5003 = vmatprep.subr.mxu0 0.0
        %5004 = vmatpush1.xpose.msra.mxu0 0.0
        %5005 = vmatprep.subr.mxu0 0.0
        %5006 = vmatpush1.xpose.msra.mxu0 0.0
        %5007 = vmatprep.subr.mxu0 0.0
        %5008 = vmatpush1.xpose.msra.mxu0 0.0
        %5009 = vmatprep.subr.mxu0 0.0
        %5010 = vmatpush1.xpose.msra.mxu0 0.0
        %5011 = vmatprep.subr.mxu0 0.0
        %5012 = vmatpush1.xpose.msra.mxu0 0.0
        %5013 = vmatprep.subr.mxu0 0.0
        %5014 = vmatpush1.xpose.msra.mxu0 0.0
        %5015 = vmatprep.subr.mxu0 0.0
        %5016 = vmatpush1.xpose.msra.mxu0 0.0
        %5017 = vmatprep.subr.mxu0 0.0
        %5018 = vmatpush1.xpose.msra.mxu0 0.0
        %5019 = vmatprep.subr.mxu0 0.0
        %5020 = vmatpush1.xpose.msra.mxu0 0.0
        %5021 = vmatprep.subr.mxu0 0.0
        %5022 = vmatpush1.xpose.msra.mxu0 0.0
        %5023 = vmatprep.subr.mxu0 0.0
        %5024 = vmatpush1.xpose.msra.mxu0 0.0
        %5025 = vmatprep.subr.mxu0 0.0
        %5026 = vmatpush1.xpose.msra.mxu0 0.0
        %5027 = vmatprep.subr.mxu0 0.0
        %5028 = vmatpush1.xpose.msra.mxu0 0.0
        %5029 = vmatprep.subr.mxu0 0.0
        %5030 = vmatpush1.xpose.msra.mxu0 0.0
        %5031 = vmatprep.subr.mxu0 0.0
        %5032 = vmatpush1.xpose.msra.mxu0 0.0
        %5033 = vmatprep.subr.mxu0 0.0
        %5034 = vmatpush1.xpose.msra.mxu0 0.0
        %5035 = vmatprep.subr.mxu0 0.0
        %5036 = vmatpush1.xpose.msra.mxu0 0.0
        %5037 = vmatprep.subr.mxu0 0.0
        %5038 = vmatpush1.xpose.msra.mxu0 0.0
        %5039 = vmatprep.subr.mxu0 0.0
        %5040 = vmatpush1.xpose.msra.mxu0 0.0
        %5041 = vmatprep.mubr.f32.mxu0 0.0
        %5042 = vmatmul.mubr.f32.gmra.mrb[0].mxu0 %v4972
        %v5043 = vpop.f32.mrb[0].mxu0
        %v5044 = vadd.f32 0.0, %v5043
        %v5045 = vpop.f32.mrb[0].mxu0
        %5046 = vdwg.mxu0
        %v5047 = vmul.f32 %v2471, %v5044
        %v5049 = vsel %vm2473, %v4965, 0
        %v5052 = vsel %vm2473, %v4970, 0
        %5054 = vmatprep.subr.mxu0 0.0
        %5055 = vmatpush1.xpose.msra.mxu0 %v5052
        %5056 = vmatprep.subr.mxu0 0.0
        %5057 = vmatpush1.xpose.msra.mxu0 0.0
        %5058 = vmatprep.subr.mxu0 0.0
        %5059 = vmatpush1.xpose.msra.mxu0 0.0
        %5060 = vmatprep.subr.mxu0 0.0
        %5061 = vmatpush1.xpose.msra.mxu0 0.0
        %5062 = vmatprep.subr.mxu0 0.0
        %5063 = vmatpush1.xpose.msra.mxu0 0.0
        %5064 = vmatprep.subr.mxu0 0.0
        %5065 = vmatpush1.xpose.msra.mxu0 0.0
        %5066 = vmatprep.subr.mxu0 0.0
        %5067 = vmatpush1.xpose.msra.mxu0 0.0
        %5068 = vmatprep.subr.mxu0 0.0
        %5069 = vmatpush1.xpose.msra.mxu0 0.0
        %5070 = vmatprep.subr.mxu0 0.0
        %5071 = vmatpush1.xpose.msra.mxu0 0.0
        %5072 = vmatprep.subr.mxu0 0.0
        %5073 = vmatpush1.xpose.msra.mxu0 0.0
        %5074 = vmatprep.subr.mxu0 0.0
        %5075 = vmatpush1.xpose.msra.mxu0 0.0
        %5076 = vmatprep.subr.mxu0 0.0
        %5077 = vmatpush1.xpose.msra.mxu0 0.0
        %5078 = vmatprep.subr.mxu0 0.0
        %5079 = vmatpush1.xpose.msra.mxu0 0.0
        %5080 = vmatprep.subr.mxu0 0.0
        %5081 = vmatpush1.xpose.msra.mxu0 0.0
        %5082 = vmatprep.subr.mxu0 0.0
        %5083 = vmatpush1.xpose.msra.mxu0 0.0
        %5084 = vmatprep.subr.mxu0 0.0
        %5085 = vmatpush1.xpose.msra.mxu0 0.0
        %5086 = vmatprep.subr.mxu0 0.0
        %5087 = vmatpush1.xpose.msra.mxu0 0.0
        %5088 = vmatprep.subr.mxu0 0.0
        %5089 = vmatpush1.xpose.msra.mxu0 0.0
        %5090 = vmatprep.subr.mxu0 0.0
        %5091 = vmatpush1.xpose.msra.mxu0 0.0
        %5092 = vmatprep.subr.mxu0 0.0
        %5093 = vmatpush1.xpose.msra.mxu0 0.0
        %5094 = vmatprep.subr.mxu0 0.0
        %5095 = vmatpush1.xpose.msra.mxu0 0.0
        %5096 = vmatprep.subr.mxu0 0.0
        %5097 = vmatpush1.xpose.msra.mxu0 0.0
        %5098 = vmatprep.subr.mxu0 0.0
        %5099 = vmatpush1.xpose.msra.mxu0 0.0
        %5100 = vmatprep.subr.mxu0 0.0
        %5101 = vmatpush1.xpose.msra.mxu0 0.0
        %5102 = vmatprep.subr.mxu0 0.0
        %5103 = vmatpush1.xpose.msra.mxu0 0.0
        %5104 = vmatprep.subr.mxu0 0.0
        %5105 = vmatpush1.xpose.msra.mxu0 0.0
        %5106 = vmatprep.subr.mxu0 0.0
        %5107 = vmatpush1.xpose.msra.mxu0 0.0
        %5108 = vmatprep.subr.mxu0 0.0
        %5109 = vmatpush1.xpose.msra.mxu0 0.0
        %5110 = vmatprep.subr.mxu0 0.0
        %5111 = vmatpush1.xpose.msra.mxu0 0.0
        %5112 = vmatprep.subr.mxu0 0.0
        %5113 = vmatpush1.xpose.msra.mxu0 0.0
        %5114 = vmatprep.subr.mxu0 0.0
        %5115 = vmatpush1.xpose.msra.mxu0 0.0
        %5116 = vmatprep.subr.mxu0 0.0
        %5117 = vmatpush1.xpose.msra.mxu0 0.0
        %5118 = vmatprep.mubr.f32.mxu0 0.0
        %5119 = vmatmul.mubr.f32.gmra.mrb[0].mxu0 %v5049
        %v5120 = vpop.f32.mrb[0].mxu0
        %v5121 = vadd.f32 %v5047, %v5120
        %v5122 = vpop.f32.mrb[0].mxu0
        %5123 = vdwg.mxu0
        %v5125 = vsel %vm2230, %v4840, 0
        %5127 = vmatprep.subr.mxu0 0.0
        %5128 = vmatpush1.xpose.msra.mxu0 %v4975
        %5129 = vmatprep.subr.mxu0 0.0
        %5130 = vmatpush1.xpose.msra.mxu0 0.0
        %5131 = vmatprep.subr.mxu0 0.0
        %5132 = vmatpush1.xpose.msra.mxu0 0.0
        %5133 = vmatprep.subr.mxu0 0.0
        %5134 = vmatpush1.xpose.msra.mxu0 0.0
        %5135 = vmatprep.subr.mxu0 0.0
        %5136 = vmatpush1.xpose.msra.mxu0 0.0
        %5137 = vmatprep.subr.mxu0 0.0
        %5138 = vmatpush1.xpose.msra.mxu0 0.0
        %5139 = vmatprep.subr.mxu0 0.0
        %5140 = vmatpush1.xpose.msra.mxu0 0.0
        %5141 = vmatprep.subr.mxu0 0.0
        %5142 = vmatpush1.xpose.msra.mxu0 0.0
        %5143 = vmatprep.subr.mxu0 0.0
        %5144 = vmatpush1.xpose.msra.mxu0 0.0
        %5145 = vmatprep.subr.mxu0 0.0
        %5146 = vmatpush1.xpose.msra.mxu0 0.0
        %5147 = vmatprep.subr.mxu0 0.0
        %5148 = vmatpush1.xpose.msra.mxu0 0.0
        %5149 = vmatprep.subr.mxu0 0.0
        %5150 = vmatpush1.xpose.msra.mxu0 0.0
        %5151 = vmatprep.subr.mxu0 0.0
        %5152 = vmatpush1.xpose.msra.mxu0 0.0
        %5153 = vmatprep.subr.mxu0 0.0
        %5154 = vmatpush1.xpose.msra.mxu0 0.0
        %5155 = vmatprep.subr.mxu0 0.0
        %5156 = vmatpush1.xpose.msra.mxu0 0.0
        %5157 = vmatprep.subr.mxu0 0.0
        %5158 = vmatpush1.xpose.msra.mxu0 0.0
        %5159 = vmatprep.subr.mxu0 0.0
        %5160 = vmatpush1.xpose.msra.mxu0 0.0
        %5161 = vmatprep.subr.mxu0 0.0
        %5162 = vmatpush1.xpose.msra.mxu0 0.0
        %5163 = vmatprep.subr.mxu0 0.0
        %5164 = vmatpush1.xpose.msra.mxu0 0.0
        %5165 = vmatprep.subr.mxu0 0.0
        %5166 = vmatpush1.xpose.msra.mxu0 0.0
        %5167 = vmatprep.subr.mxu0 0.0
        %5168 = vmatpush1.xpose.msra.mxu0 0.0
        %5169 = vmatprep.subr.mxu0 0.0
        %5170 = vmatpush1.xpose.msra.mxu0 0.0
        %5171 = vmatprep.subr.mxu0 0.0
        %5172 = vmatpush1.xpose.msra.mxu0 0.0
        %5173 = vmatprep.subr.mxu0 0.0
        %5174 = vmatpush1.xpose.msra.mxu0 0.0
        %5175 = vmatprep.subr.mxu0 0.0
        %5176 = vmatpush1.xpose.msra.mxu0 0.0
        %5177 = vmatprep.subr.mxu0 0.0
        %5178 = vmatpush1.xpose.msra.mxu0 0.0
        %5179 = vmatprep.subr.mxu0 0.0
        %5180 = vmatpush1.xpose.msra.mxu0 0.0
        %5181 = vmatprep.subr.mxu0 0.0
        %5182 = vmatpush1.xpose.msra.mxu0 0.0
        %5183 = vmatprep.subr.mxu0 0.0
        %5184 = vmatpush1.xpose.msra.mxu0 0.0
        %5185 = vmatprep.subr.mxu0 0.0
        %5186 = vmatpush1.xpose.msra.mxu0 0.0
        %5187 = vmatprep.subr.mxu0 0.0
        %5188 = vmatpush1.xpose.msra.mxu0 0.0
        %5189 = vmatprep.subr.mxu0 0.0
        %5190 = vmatpush1.xpose.msra.mxu0 0.0
        %5191 = vmatprep.mubr.f32.mxu0 0.0
        %5192 = vmatmul.mubr.f32.gmra.mrb[0].mxu0 %v5125
        %v5193 = vpop.f32.mrb[0].mxu0
        %v5194 = vadd.f32 0.0, %v5193
        %v5195 = vpop.f32.mrb[0].mxu0
        %5196 = vdwg.mxu0
        %v5197 = vmul.f32 %v2627, %v5194
        %v5198 = vadd.f32 %v5121, %v5197
        %v5200 = vsel %vm2230, %v4853, 0
        %5202 = vmatprep.subr.mxu0 0.0
        %5203 = vmatpush1.xpose.msra.mxu0 %v4975
        %5204 = vmatprep.subr.mxu0 0.0
        %5205 = vmatpush1.xpose.msra.mxu0 0.0
        %5206 = vmatprep.subr.mxu0 0.0
        %5207 = vmatpush1.xpose.msra.mxu0 0.0
        %5208 = vmatprep.subr.mxu0 0.0
        %5209 = vmatpush1.xpose.msra.mxu0 0.0
        %5210 = vmatprep.subr.mxu0 0.0
        %5211 = vmatpush1.xpose.msra.mxu0 0.0
        %5212 = vmatprep.subr.mxu0 0.0
        %5213 = vmatpush1.xpose.msra.mxu0 0.0
        %5214 = vmatprep.subr.mxu0 0.0
        %5215 = vmatpush1.xpose.msra.mxu0 0.0
        %5216 = vmatprep.subr.mxu0 0.0
        %5217 = vmatpush1.xpose.msra.mxu0 0.0
        %5218 = vmatprep.subr.mxu0 0.0
        %5219 = vmatpush1.xpose.msra.mxu0 0.0
        %5220 = vmatprep.subr.mxu0 0.0
        %5221 = vmatpush1.xpose.msra.mxu0 0.0
        %5222 = vmatprep.subr.mxu0 0.0
        %5223 = vmatpush1.xpose.msra.mxu0 0.0
        %5224 = vmatprep.subr.mxu0 0.0
        %5225 = vmatpush1.xpose.msra.mxu0 0.0
        %5226 = vmatprep.subr.mxu0 0.0
        %5227 = vmatpush1.xpose.msra.mxu0 0.0
        %5228 = vmatprep.subr.mxu0 0.0
        %5229 = vmatpush1.xpose.msra.mxu0 0.0
        %5230 = vmatprep.subr.mxu0 0.0
        %5231 = vmatpush1.xpose.msra.mxu0 0.0
        %5232 = vmatprep.subr.mxu0 0.0
        %5233 = vmatpush1.xpose.msra.mxu0 0.0
        %5234 = vmatprep.subr.mxu0 0.0
        %5235 = vmatpush1.xpose.msra.mxu0 0.0
        %5236 = vmatprep.subr.mxu0 0.0
        %5237 = vmatpush1.xpose.msra.mxu0 0.0
        %5238 = vmatprep.subr.mxu0 0.0
        %5239 = vmatpush1.xpose.msra.mxu0 0.0
        %5240 = vmatprep.subr.mxu0 0.0
        %5241 = vmatpush1.xpose.msra.mxu0 0.0
        %5242 = vmatprep.subr.mxu0 0.0
        %5243 = vmatpush1.xpose.msra.mxu0 0.0
        %5244 = vmatprep.subr.mxu0 0.0
        %5245 = vmatpush1.xpose.msra.mxu0 0.0
        %5246 = vmatprep.subr.mxu0 0.0
        %5247 = vmatpush1.xpose.msra.mxu0 0.0
        %5248 = vmatprep.subr.mxu0 0.0
        %5249 = vmatpush1.xpose.msra.mxu0 0.0
        %5250 = vmatprep.subr.mxu0 0.0
        %5251 = vmatpush1.xpose.msra.mxu0 0.0
        %5252 = vmatprep.subr.mxu0 0.0
        %5253 = vmatpush1.xpose.msra.mxu0 0.0
        %5254 = vmatprep.subr.mxu0 0.0
        %5255 = vmatpush1.xpose.msra.mxu0 0.0
        %5256 = vmatprep.subr.mxu0 0.0
        %5257 = vmatpush1.xpose.msra.mxu0 0.0
        %5258 = vmatprep.subr.mxu0 0.0
        %5259 = vmatpush1.xpose.msra.mxu0 0.0
        %5260 = vmatprep.subr.mxu0 0.0
        %5261 = vmatpush1.xpose.msra.mxu0 0.0
        %5262 = vmatprep.subr.mxu0 0.0
        %5263 = vmatpush1.xpose.msra.mxu0 0.0
        %5264 = vmatprep.subr.mxu0 0.0
        %5265 = vmatpush1.xpose.msra.mxu0 0.0
        %5266 = vmatprep.mubr.f32.mxu0 0.0
        %5267 = vmatmul.mubr.f32.gmra.mrb[0].mxu0 %v5200
        %v5268 = vpop.f32.mrb[0].mxu0
        %v5269 = vadd.f32 0.0, %v5268
        %v5270 = vpop.f32.mrb[0].mxu0
        %5271 = vdwg.mxu0
        %v5272 = vmul.f32 %v2707, %v5269
        %v5273 = vadd.f32 %v5198, %v5272
        %v5275 = vsel %vm2230, %v4931, 0
        %5277 = vmatprep.subr.mxu0 0.0
        %5278 = vmatpush1.xpose.msra.mxu0 %v5275
        %5279 = vmatprep.subr.mxu0 0.0
        %5280 = vmatpush1.xpose.msra.mxu0 0.0
        %5281 = vmatprep.subr.mxu0 0.0
        %5282 = vmatpush1.xpose.msra.mxu0 0.0
        %5283 = vmatprep.subr.mxu0 0.0
        %5284 = vmatpush1.xpose.msra.mxu0 0.0
        %5285 = vmatprep.subr.mxu0 0.0
        %5286 = vmatpush1.xpose.msra.mxu0 0.0
        %5287 = vmatprep.subr.mxu0 0.0
        %5288 = vmatpush1.xpose.msra.mxu0 0.0
        %5289 = vmatprep.subr.mxu0 0.0
        %5290 = vmatpush1.xpose.msra.mxu0 0.0
        %5291 = vmatprep.subr.mxu0 0.0
        %5292 = vmatpush1.xpose.msra.mxu0 0.0
        %5293 = vmatprep.subr.mxu0 0.0
        %5294 = vmatpush1.xpose.msra.mxu0 0.0
        %5295 = vmatprep.subr.mxu0 0.0
        %5296 = vmatpush1.xpose.msra.mxu0 0.0
        %5297 = vmatprep.subr.mxu0 0.0
        %5298 = vmatpush1.xpose.msra.mxu0 0.0
        %5299 = vmatprep.subr.mxu0 0.0
        %5300 = vmatpush1.xpose.msra.mxu0 0.0
        %5301 = vmatprep.subr.mxu0 0.0
        %5302 = vmatpush1.xpose.msra.mxu0 0.0
        %5303 = vmatprep.subr.mxu0 0.0
        %5304 = vmatpush1.xpose.msra.mxu0 0.0
        %5305 = vmatprep.subr.mxu0 0.0
        %5306 = vmatpush1.xpose.msra.mxu0 0.0
        %5307 = vmatprep.subr.mxu0 0.0
        %5308 = vmatpush1.xpose.msra.mxu0 0.0
        %5309 = vmatprep.subr.mxu0 0.0
        %5310 = vmatpush1.xpose.msra.mxu0 0.0
        %5311 = vmatprep.subr.mxu0 0.0
        %5312 = vmatpush1.xpose.msra.mxu0 0.0
        %5313 = vmatprep.subr.mxu0 0.0
        %5314 = vmatpush1.xpose.msra.mxu0 0.0
        %5315 = vmatprep.subr.mxu0 0.0
        %5316 = vmatpush1.xpose.msra.mxu0 0.0
        %5317 = vmatprep.subr.mxu0 0.0
        %5318 = vmatpush1.xpose.msra.mxu0 0.0
        %5319 = vmatprep.subr.mxu0 0.0
        %5320 = vmatpush1.xpose.msra.mxu0 0.0
        %5321 = vmatprep.subr.mxu0 0.0
        %5322 = vmatpush1.xpose.msra.mxu0 0.0
        %5323 = vmatprep.subr.mxu0 0.0
        %5324 = vmatpush1.xpose.msra.mxu0 0.0
        %5325 = vmatprep.subr.mxu0 0.0
        %5326 = vmatpush1.xpose.msra.mxu0 0.0
        %5327 = vmatprep.subr.mxu0 0.0
        %5328 = vmatpush1.xpose.msra.mxu0 0.0
        %5329 = vmatprep.subr.mxu0 0.0
        %5330 = vmatpush1.xpose.msra.mxu0 0.0
        %5331 = vmatprep.subr.mxu0 0.0
        %5332 = vmatpush1.xpose.msra.mxu0 0.0
        %5333 = vmatprep.subr.mxu0 0.0
        %5334 = vmatpush1.xpose.msra.mxu0 0.0
        %5335 = vmatprep.subr.mxu0 0.0
        %5336 = vmatpush1.xpose.msra.mxu0 0.0
        %5337 = vmatprep.subr.mxu0 0.0
        %5338 = vmatpush1.xpose.msra.mxu0 0.0
        %5339 = vmatprep.subr.mxu0 0.0
        %5340 = vmatpush1.xpose.msra.mxu0 0.0
        %5341 = vmatprep.mubr.f32.mxu0 0.0
        %5342 = vmatmul.mubr.f32.gmra.mrb[0].mxu0 %v4972
        %v5343 = vpop.f32.mrb[0].mxu0
        %v5344 = vadd.f32 0.0, %v5343
        %v5345 = vpop.f32.mrb[0].mxu0
        %5346 = vdwg.mxu0
        %v5347 = vmul.f32 %v2783, %v5344
        %v5348 = vadd.f32 %v5273, %v5347
        %5349 = vmatprep.subr.mxu0 0.0
        %5350 = vmatpush1.xpose.msra.mxu0 %v5275
        %5351 = vmatprep.subr.mxu0 0.0
        %5352 = vmatpush1.xpose.msra.mxu0 0.0
        %5353 = vmatprep.subr.mxu0 0.0
        %5354 = vmatpush1.xpose.msra.mxu0 0.0
        %5355 = vmatprep.subr.mxu0 0.0
        %5356 = vmatpush1.xpose.msra.mxu0 0.0
        %5357 = vmatprep.subr.mxu0 0.0
        %5358 = vmatpush1.xpose.msra.mxu0 0.0
        %5359 = vmatprep.subr.mxu0 0.0
        %5360 = vmatpush1.xpose.msra.mxu0 0.0
        %5361 = vmatprep.subr.mxu0 0.0
        %5362 = vmatpush1.xpose.msra.mxu0 0.0
        %5363 = vmatprep.subr.mxu0 0.0
        %5364 = vmatpush1.xpose.msra.mxu0 0.0
        %5365 = vmatprep.subr.mxu0 0.0
        %5366 = vmatpush1.xpose.msra.mxu0 0.0
        %5367 = vmatprep.subr.mxu0 0.0
        %5368 = vmatpush1.xpose.msra.mxu0 0.0
        %5369 = vmatprep.subr.mxu0 0.0
        %5370 = vmatpush1.xpose.msra.mxu0 0.0
        %5371 = vmatprep.subr.mxu0 0.0
        %5372 = vmatpush1.xpose.msra.mxu0 0.0
        %5373 = vmatprep.subr.mxu0 0.0
        %5374 = vmatpush1.xpose.msra.mxu0 0.0
        %5375 = vmatprep.subr.mxu0 0.0
        %5376 = vmatpush1.xpose.msra.mxu0 0.0
        %5377 = vmatprep.subr.mxu0 0.0
        %5378 = vmatpush1.xpose.msra.mxu0 0.0
        %5379 = vmatprep.subr.mxu0 0.0
        %5380 = vmatpush1.xpose.msra.mxu0 0.0
        %5381 = vmatprep.subr.mxu0 0.0
        %5382 = vmatpush1.xpose.msra.mxu0 0.0
        %5383 = vmatprep.subr.mxu0 0.0
        %5384 = vmatpush1.xpose.msra.mxu0 0.0
        %5385 = vmatprep.subr.mxu0 0.0
        %5386 = vmatpush1.xpose.msra.mxu0 0.0
        %5387 = vmatprep.subr.mxu0 0.0
        %5388 = vmatpush1.xpose.msra.mxu0 0.0
        %5389 = vmatprep.subr.mxu0 0.0
        %5390 = vmatpush1.xpose.msra.mxu0 0.0
        %5391 = vmatprep.subr.mxu0 0.0
        %5392 = vmatpush1.xpose.msra.mxu0 0.0
        %5393 = vmatprep.subr.mxu0 0.0
        %5394 = vmatpush1.xpose.msra.mxu0 0.0
        %5395 = vmatprep.subr.mxu0 0.0
        %5396 = vmatpush1.xpose.msra.mxu0 0.0
        %5397 = vmatprep.subr.mxu0 0.0
        %5398 = vmatpush1.xpose.msra.mxu0 0.0
        %5399 = vmatprep.subr.mxu0 0.0
        %5400 = vmatpush1.xpose.msra.mxu0 0.0
        %5401 = vmatprep.subr.mxu0 0.0
        %5402 = vmatpush1.xpose.msra.mxu0 0.0
        %5403 = vmatprep.subr.mxu0 0.0
        %5404 = vmatpush1.xpose.msra.mxu0 0.0
        %5405 = vmatprep.subr.mxu0 0.0
        %5406 = vmatpush1.xpose.msra.mxu0 0.0
        %5407 = vmatprep.subr.mxu0 0.0
        %5408 = vmatpush1.xpose.msra.mxu0 0.0
        %5409 = vmatprep.subr.mxu0 0.0
        %5410 = vmatpush1.xpose.msra.mxu0 0.0
        %5411 = vmatprep.subr.mxu0 0.0
        %5412 = vmatpush1.xpose.msra.mxu0 0.0
        %5413 = vmatprep.mubr.f32.mxu0 0.0
        %5414 = vmatmul.mubr.f32.gmra.mrb[0].mxu0 %v5125
        %v5415 = vpop.f32.mrb[0].mxu0
        %v5416 = vadd.f32 0.0, %v5415
        %v5417 = vpop.f32.mrb[0].mxu0
        %5418 = vdwg.mxu0
        %v5419 = vmul.f32 %v2856, %v5416
        %v5420 = vadd.f32 %v5348, %v5419
        %5421 = vmatprep.subr.mxu0 0.0
        %5422 = vmatpush1.xpose.msra.mxu0 %v5275
        %5423 = vmatprep.subr.mxu0 0.0
        %5424 = vmatpush1.xpose.msra.mxu0 0.0
        %5425 = vmatprep.subr.mxu0 0.0
        %5426 = vmatpush1.xpose.msra.mxu0 0.0
        %5427 = vmatprep.subr.mxu0 0.0
        %5428 = vmatpush1.xpose.msra.mxu0 0.0
        %5429 = vmatprep.subr.mxu0 0.0
        %5430 = vmatpush1.xpose.msra.mxu0 0.0
        %5431 = vmatprep.subr.mxu0 0.0
        %5432 = vmatpush1.xpose.msra.mxu0 0.0
        %5433 = vmatprep.subr.mxu0 0.0
        %5434 = vmatpush1.xpose.msra.mxu0 0.0
        %5435 = vmatprep.subr.mxu0 0.0
        %5436 = vmatpush1.xpose.msra.mxu0 0.0
        %5437 = vmatprep.subr.mxu0 0.0
        %5438 = vmatpush1.xpose.msra.mxu0 0.0
        %5439 = vmatprep.subr.mxu0 0.0
        %5440 = vmatpush1.xpose.msra.mxu0 0.0
        %5441 = vmatprep.subr.mxu0 0.0
        %5442 = vmatpush1.xpose.msra.mxu0 0.0
        %5443 = vmatprep.subr.mxu0 0.0
        %5444 = vmatpush1.xpose.msra.mxu0 0.0
        %5445 = vmatprep.subr.mxu0 0.0
        %5446 = vmatpush1.xpose.msra.mxu0 0.0
        %5447 = vmatprep.subr.mxu0 0.0
        %5448 = vmatpush1.xpose.msra.mxu0 0.0
        %5449 = vmatprep.subr.mxu0 0.0
        %5450 = vmatpush1.xpose.msra.mxu0 0.0
        %5451 = vmatprep.subr.mxu0 0.0
        %5452 = vmatpush1.xpose.msra.mxu0 0.0
        %5453 = vmatprep.subr.mxu0 0.0
        %5454 = vmatpush1.xpose.msra.mxu0 0.0
        %5455 = vmatprep.subr.mxu0 0.0
        %5456 = vmatpush1.xpose.msra.mxu0 0.0
        %5457 = vmatprep.subr.mxu0 0.0
        %5458 = vmatpush1.xpose.msra.mxu0 0.0
        %5459 = vmatprep.subr.mxu0 0.0
        %5460 = vmatpush1.xpose.msra.mxu0 0.0
        %5461 = vmatprep.subr.mxu0 0.0
        %5462 = vmatpush1.xpose.msra.mxu0 0.0
        %5463 = vmatprep.subr.mxu0 0.0
        %5464 = vmatpush1.xpose.msra.mxu0 0.0
        %5465 = vmatprep.subr.mxu0 0.0
        %5466 = vmatpush1.xpose.msra.mxu0 0.0
        %5467 = vmatprep.subr.mxu0 0.0
        %5468 = vmatpush1.xpose.msra.mxu0 0.0
        %5469 = vmatprep.subr.mxu0 0.0
        %5470 = vmatpush1.xpose.msra.mxu0 0.0
        %5471 = vmatprep.subr.mxu0 0.0
        %5472 = vmatpush1.xpose.msra.mxu0 0.0
        %5473 = vmatprep.subr.mxu0 0.0
        %5474 = vmatpush1.xpose.msra.mxu0 0.0
        %5475 = vmatprep.subr.mxu0 0.0
        %5476 = vmatpush1.xpose.msra.mxu0 0.0
        %5477 = vmatprep.subr.mxu0 0.0
        %5478 = vmatpush1.xpose.msra.mxu0 0.0
        %5479 = vmatprep.subr.mxu0 0.0
        %5480 = vmatpush1.xpose.msra.mxu0 0.0
        %5481 = vmatprep.subr.mxu0 0.0
        %5482 = vmatpush1.xpose.msra.mxu0 0.0
        %5483 = vmatprep.subr.mxu0 0.0
        %5484 = vmatpush1.xpose.msra.mxu0 0.0
        %5485 = vmatprep.mubr.f32.mxu0 0.0
        %5486 = vmatmul.mubr.f32.gmra.mrb[0].mxu0 %v5200
        %v5487 = vpop.f32.mrb[0].mxu0
        %v5488 = vadd.f32 0.0, %v5487
        %v5489 = vpop.f32.mrb[0].mxu0
        %5490 = vdwg.mxu0
        %v5491 = vmul.f32 %v2929, %v5488
        %v5492 = vadd.f32 %v5420, %v5491
        %v5494 = vsel %vm2230, %v4962, 0
        %5496 = vmatprep.subr.mxu0 0.0
        %5497 = vmatpush1.xpose.msra.mxu0 %v5494
        %5498 = vmatprep.subr.mxu0 0.0
        %5499 = vmatpush1.xpose.msra.mxu0 0.0
        %5500 = vmatprep.subr.mxu0 0.0
        %5501 = vmatpush1.xpose.msra.mxu0 0.0
        %5502 = vmatprep.subr.mxu0 0.0
        %5503 = vmatpush1.xpose.msra.mxu0 0.0
        %5504 = vmatprep.subr.mxu0 0.0
        %5505 = vmatpush1.xpose.msra.mxu0 0.0
        %5506 = vmatprep.subr.mxu0 0.0
        %5507 = vmatpush1.xpose.msra.mxu0 0.0
        %5508 = vmatprep.subr.mxu0 0.0
        %5509 = vmatpush1.xpose.msra.mxu0 0.0
        %5510 = vmatprep.subr.mxu0 0.0
        %5511 = vmatpush1.xpose.msra.mxu0 0.0
        %5512 = vmatprep.subr.mxu0 0.0
        %5513 = vmatpush1.xpose.msra.mxu0 0.0
        %5514 = vmatprep.subr.mxu0 0.0
        %5515 = vmatpush1.xpose.msra.mxu0 0.0
        %5516 = vmatprep.subr.mxu0 0.0
        %5517 = vmatpush1.xpose.msra.mxu0 0.0
        %5518 = vmatprep.subr.mxu0 0.0
        %5519 = vmatpush1.xpose.msra.mxu0 0.0
        %5520 = vmatprep.subr.mxu0 0.0
        %5521 = vmatpush1.xpose.msra.mxu0 0.0
        %5522 = vmatprep.subr.mxu0 0.0
        %5523 = vmatpush1.xpose.msra.mxu0 0.0
        %5524 = vmatprep.subr.mxu0 0.0
        %5525 = vmatpush1.xpose.msra.mxu0 0.0
        %5526 = vmatprep.subr.mxu0 0.0
        %5527 = vmatpush1.xpose.msra.mxu0 0.0
        %5528 = vmatprep.subr.mxu0 0.0
        %5529 = vmatpush1.xpose.msra.mxu0 0.0
        %5530 = vmatprep.subr.mxu0 0.0
        %5531 = vmatpush1.xpose.msra.mxu0 0.0
        %5532 = vmatprep.subr.mxu0 0.0
        %5533 = vmatpush1.xpose.msra.mxu0 0.0
        %5534 = vmatprep.subr.mxu0 0.0
        %5535 = vmatpush1.xpose.msra.mxu0 0.0
        %5536 = vmatprep.subr.mxu0 0.0
        %5537 = vmatpush1.xpose.msra.mxu0 0.0
        %5538 = vmatprep.subr.mxu0 0.0
        %5539 = vmatpush1.xpose.msra.mxu0 0.0
        %5540 = vmatprep.subr.mxu0 0.0
        %5541 = vmatpush1.xpose.msra.mxu0 0.0
        %5542 = vmatprep.subr.mxu0 0.0
        %5543 = vmatpush1.xpose.msra.mxu0 0.0
        %5544 = vmatprep.subr.mxu0 0.0
        %5545 = vmatpush1.xpose.msra.mxu0 0.0
        %5546 = vmatprep.subr.mxu0 0.0
        %5547 = vmatpush1.xpose.msra.mxu0 0.0
        %5548 = vmatprep.subr.mxu0 0.0
        %5549 = vmatpush1.xpose.msra.mxu0 0.0
        %5550 = vmatprep.subr.mxu0 0.0
        %5551 = vmatpush1.xpose.msra.mxu0 0.0
        %5552 = vmatprep.subr.mxu0 0.0
        %5553 = vmatpush1.xpose.msra.mxu0 0.0
        %5554 = vmatprep.subr.mxu0 0.0
        %5555 = vmatpush1.xpose.msra.mxu0 0.0
        %5556 = vmatprep.subr.mxu0 0.0
        %5557 = vmatpush1.xpose.msra.mxu0 0.0
        %5558 = vmatprep.subr.mxu0 0.0
        %5559 = vmatpush1.xpose.msra.mxu0 0.0
        %5560 = vmatprep.mubr.f32.mxu0 0.0
        %5561 = vmatmul.mubr.f32.gmra.mrb[0].mxu0 %v4972
        %v5562 = vpop.f32.mrb[0].mxu0
        %v5563 = vadd.f32 0.0, %v5562
        %v5564 = vpop.f32.mrb[0].mxu0
        %5565 = vdwg.mxu0
        %v5566 = vmul.f32 %v3005, %v5563
        %v5567 = vadd.f32 %v5492, %v5566
        %5568 = vmatprep.subr.mxu0 0.0
        %5569 = vmatpush1.xpose.msra.mxu0 %v5494
        %5570 = vmatprep.subr.mxu0 0.0
        %5571 = vmatpush1.xpose.msra.mxu0 0.0
        %5572 = vmatprep.subr.mxu0 0.0
        %5573 = vmatpush1.xpose.msra.mxu0 0.0
        %5574 = vmatprep.subr.mxu0 0.0
        %5575 = vmatpush1.xpose.msra.mxu0 0.0
        %5576 = vmatprep.subr.mxu0 0.0
        %5577 = vmatpush1.xpose.msra.mxu0 0.0
        %5578 = vmatprep.subr.mxu0 0.0
        %5579 = vmatpush1.xpose.msra.mxu0 0.0
        %5580 = vmatprep.subr.mxu0 0.0
        %5581 = vmatpush1.xpose.msra.mxu0 0.0
        %5582 = vmatprep.subr.mxu0 0.0
        %5583 = vmatpush1.xpose.msra.mxu0 0.0
        %5584 = vmatprep.subr.mxu0 0.0
        %5585 = vmatpush1.xpose.msra.mxu0 0.0
        %5586 = vmatprep.subr.mxu0 0.0
        %5587 = vmatpush1.xpose.msra.mxu0 0.0
        %5588 = vmatprep.subr.mxu0 0.0
        %5589 = vmatpush1.xpose.msra.mxu0 0.0
        %5590 = vmatprep.subr.mxu0 0.0
        %5591 = vmatpush1.xpose.msra.mxu0 0.0
        %5592 = vmatprep.subr.mxu0 0.0
        %5593 = vmatpush1.xpose.msra.mxu0 0.0
        %5594 = vmatprep.subr.mxu0 0.0
        %5595 = vmatpush1.xpose.msra.mxu0 0.0
        %5596 = vmatprep.subr.mxu0 0.0
        %5597 = vmatpush1.xpose.msra.mxu0 0.0
        %5598 = vmatprep.subr.mxu0 0.0
        %5599 = vmatpush1.xpose.msra.mxu0 0.0
        %5600 = vmatprep.subr.mxu0 0.0
        %5601 = vmatpush1.xpose.msra.mxu0 0.0
        %5602 = vmatprep.subr.mxu0 0.0
        %5603 = vmatpush1.xpose.msra.mxu0 0.0
        %5604 = vmatprep.subr.mxu0 0.0
        %5605 = vmatpush1.xpose.msra.mxu0 0.0
        %5606 = vmatprep.subr.mxu0 0.0
        %5607 = vmatpush1.xpose.msra.mxu0 0.0
        %5608 = vmatprep.subr.mxu0 0.0
        %5609 = vmatpush1.xpose.msra.mxu0 0.0
        %5610 = vmatprep.subr.mxu0 0.0
        %5611 = vmatpush1.xpose.msra.mxu0 0.0
        %5612 = vmatprep.subr.mxu0 0.0
        %5613 = vmatpush1.xpose.msra.mxu0 0.0
        %5614 = vmatprep.subr.mxu0 0.0
        %5615 = vmatpush1.xpose.msra.mxu0 0.0
        %5616 = vmatprep.subr.mxu0 0.0
        %5617 = vmatpush1.xpose.msra.mxu0 0.0
        %5618 = vmatprep.subr.mxu0 0.0
        %5619 = vmatpush1.xpose.msra.mxu0 0.0
        %5620 = vmatprep.subr.mxu0 0.0
        %5621 = vmatpush1.xpose.msra.mxu0 0.0
        %5622 = vmatprep.subr.mxu0 0.0
        %5623 = vmatpush1.xpose.msra.mxu0 0.0
        %5624 = vmatprep.subr.mxu0 0.0
        %5625 = vmatpush1.xpose.msra.mxu0 0.0
        %5626 = vmatprep.subr.mxu0 0.0
        %5627 = vmatpush1.xpose.msra.mxu0 0.0
        %5628 = vmatprep.subr.mxu0 0.0
        %5629 = vmatpush1.xpose.msra.mxu0 0.0
        %5630 = vmatprep.subr.mxu0 0.0
        %5631 = vmatpush1.xpose.msra.mxu0 0.0
        %5632 = vmatprep.mubr.f32.mxu0 0.0
        %5633 = vmatmul.mubr.f32.gmra.mrb[0].mxu0 %v5125
        %v5634 = vpop.f32.mrb[0].mxu0
        %v5635 = vadd.f32 0.0, %v5634
        %v5636 = vpop.f32.mrb[0].mxu0
        %5637 = vdwg.mxu0
        %v5638 = vmul.f32 %v3078, %v5635
        %v5639 = vadd.f32 %v5567, %v5638
        %5640 = vmatprep.subr.mxu0 0.0
        %5641 = vmatpush1.xpose.msra.mxu0 %v5494
        %5642 = vmatprep.subr.mxu0 0.0
        %5643 = vmatpush1.xpose.msra.mxu0 0.0
        %5644 = vmatprep.subr.mxu0 0.0
        %5645 = vmatpush1.xpose.msra.mxu0 0.0
        %5646 = vmatprep.subr.mxu0 0.0
        %5647 = vmatpush1.xpose.msra.mxu0 0.0
        %5648 = vmatprep.subr.mxu0 0.0
        %5649 = vmatpush1.xpose.msra.mxu0 0.0
        %5650 = vmatprep.subr.mxu0 0.0
        %5651 = vmatpush1.xpose.msra.mxu0 0.0
        %5652 = vmatprep.subr.mxu0 0.0
        %5653 = vmatpush1.xpose.msra.mxu0 0.0
        %5654 = vmatprep.subr.mxu0 0.0
        %5655 = vmatpush1.xpose.msra.mxu0 0.0
        %5656 = vmatprep.subr.mxu0 0.0
        %5657 = vmatpush1.xpose.msra.mxu0 0.0
        %5658 = vmatprep.subr.mxu0 0.0
        %5659 = vmatpush1.xpose.msra.mxu0 0.0
        %5660 = vmatprep.subr.mxu0 0.0
        %5661 = vmatpush1.xpose.msra.mxu0 0.0
        %5662 = vmatprep.subr.mxu0 0.0
        %5663 = vmatpush1.xpose.msra.mxu0 0.0
        %5664 = vmatprep.subr.mxu0 0.0
        %5665 = vmatpush1.xpose.msra.mxu0 0.0
        %5666 = vmatprep.subr.mxu0 0.0
        %5667 = vmatpush1.xpose.msra.mxu0 0.0
        %5668 = vmatprep.subr.mxu0 0.0
        %5669 = vmatpush1.xpose.msra.mxu0 0.0
        %5670 = vmatprep.subr.mxu0 0.0
        %5671 = vmatpush1.xpose.msra.mxu0 0.0
        %5672 = vmatprep.subr.mxu0 0.0
        %5673 = vmatpush1.xpose.msra.mxu0 0.0
        %5674 = vmatprep.subr.mxu0 0.0
        %5675 = vmatpush1.xpose.msra.mxu0 0.0
        %5676 = vmatprep.subr.mxu0 0.0
        %5677 = vmatpush1.xpose.msra.mxu0 0.0
        %5678 = vmatprep.subr.mxu0 0.0
        %5679 = vmatpush1.xpose.msra.mxu0 0.0
        %5680 = vmatprep.subr.mxu0 0.0
        %5681 = vmatpush1.xpose.msra.mxu0 0.0
        %5682 = vmatprep.subr.mxu0 0.0
        %5683 = vmatpush1.xpose.msra.mxu0 0.0
        %5684 = vmatprep.subr.mxu0 0.0
        %5685 = vmatpush1.xpose.msra.mxu0 0.0
        %5686 = vmatprep.subr.mxu0 0.0
        %5687 = vmatpush1.xpose.msra.mxu0 0.0
        %5688 = vmatprep.subr.mxu0 0.0
        %5689 = vmatpush1.xpose.msra.mxu0 0.0
        %5690 = vmatprep.subr.mxu0 0.0
        %5691 = vmatpush1.xpose.msra.mxu0 0.0
        %5692 = vmatprep.subr.mxu0 0.0
        %5693 = vmatpush1.xpose.msra.mxu0 0.0
        %5694 = vmatprep.subr.mxu0 0.0
        %5695 = vmatpush1.xpose.msra.mxu0 0.0
        %5696 = vmatprep.subr.mxu0 0.0
        %5697 = vmatpush1.xpose.msra.mxu0 0.0
        %5698 = vmatprep.subr.mxu0 0.0
        %5699 = vmatpush1.xpose.msra.mxu0 0.0
        %5700 = vmatprep.subr.mxu0 0.0
        %5701 = vmatpush1.xpose.msra.mxu0 0.0
        %5702 = vmatprep.subr.mxu0 0.0
        %5703 = vmatpush1.xpose.msra.mxu0 0.0
        %5704 = vmatprep.mubr.f32.mxu0 0.0
        %5705 = vmatmul.mubr.f32.gmra.mrb[0].mxu0 %v5200
        %v5706 = vpop.f32.mrb[0].mxu0
        %v5707 = vadd.f32 0.0, %v5706
        %v5708 = vpop.f32.mrb[0].mxu0
        %5709 = vdwg.mxu0
        %v5710 = vmul.f32 %v3151, %v5707
        %v5711 = vadd.f32 %v5639, %v5710
        %v5712 = vmul.f32 %v5711, -0.35355338
        %v5713 = vsel %vm3155, %v5712, -1e+30
        %v5714 = vsel %vm1977, %v5713, -inf
        %5715 = vmax.xlane.f32.xlu0 %v5714
        %v5716 = vpop.xlane.xlu0 %5715
        %v5717 = vsub.f32 %v5713, %v5716
        %v5718 = vmul.f32 %v5717, 1.442695
        %v5719 = vpow.pop %v5718
        %v5720 = vsel %vm1977, %v5719, 0.0
        %5721 = vadd.xlane.f32.xlu0 %v5720
        %v5722 = vpop.xlane.xlu0 %5721
        %v5723 = vrcp.pop %v5722
        %v5724 = vmul.f32 %v5719, %v5723
        %s5725 = scalar_lea.vmem %s1180, 16 [#allocation17]
        %5726 = vst.msk [vmem:[%s5725] sm:$0xff] %vm1977, %v5724
        %v5727 = vpack.c.bf16 %v5724, %v5724
        %5728 = vrot.lane.b32.xlu0 %v3170, 112
        %v5729 = vpop.permute.xlu0 %5728
        %v5731 = vsel %vm1977, %v5727, 0
        %v5734 = vsel %vm3174, %v5729, 0
        %5736 = vmatprep.subr.bf16.mxu0 0
        %5737 = vmatpush1.bf16.msra.mxu0 %v5734
        %5738 = vmatprep.subr.bf16.mxu0 0
        %5739 = vmatpush1.bf16.msra.mxu0 0
        %5740 = vmatprep.subr.bf16.mxu0 0
        %5741 = vmatpush1.bf16.msra.mxu0 0
        %5742 = vmatprep.subr.bf16.mxu0 0
        %5743 = vmatpush1.bf16.msra.mxu0 0
        %5744 = vmatprep.subr.bf16.mxu0 0
        %5745 = vmatpush1.bf16.msra.mxu0 0
        %5746 = vmatprep.subr.bf16.mxu0 0
        %5747 = vmatpush1.bf16.msra.mxu0 0
        %5748 = vmatprep.subr.bf16.mxu0 0
        %5749 = vmatpush1.bf16.msra.mxu0 0
        %5750 = vmatprep.subr.bf16.mxu0 0
        %5751 = vmatpush1.bf16.msra.mxu0 0
        %5752 = vmatprep.subr.bf16.mxu0 0
        %5753 = vmatpush1.bf16.msra.mxu0 0
        %5754 = vmatprep.subr.bf16.mxu0 0
        %5755 = vmatpush1.bf16.msra.mxu0 0
        %5756 = vmatprep.subr.bf16.mxu0 0
        %5757 = vmatpush1.bf16.msra.mxu0 0
        %5758 = vmatprep.subr.bf16.mxu0 0
        %5759 = vmatpush1.bf16.msra.mxu0 0
        %5760 = vmatprep.subr.bf16.mxu0 0
        %5761 = vmatpush1.bf16.msra.mxu0 0
        %5762 = vmatprep.subr.bf16.mxu0 0
        %5763 = vmatpush1.bf16.msra.mxu0 0
        %5764 = vmatprep.subr.bf16.mxu0 0
        %5765 = vmatpush1.bf16.msra.mxu0 0
        %5766 = vmatprep.subr.bf16.mxu0 0
        %5767 = vmatpush1.bf16.msra.mxu0 0
        %5768 = vmatprep.mubr.bf16.mxu0 0
        %5769 = vmatmul.mubr.bf16.gmra.mrb[0].mxu0 %v5731
        %v5770 = vpop.f32.mrb[0].mxu0
        %v5771 = vadd.f32 0.0, %v5770
        %v5772 = vpop.f32.mrb[0].mxu0
        %v5773 = vpop.f32.mrb[0].mxu0
        %v5774 = vpop.f32.mrb[0].mxu0
        %5775 = vdwg.mxu0
        %v5776 = vmul.f32 %v5724, %v5724
        %v5777 = vpack.c.bf16 %v5776, %v5776
        %5778 = vrot.lane.b32.xlu0 %v3220, 112
        %v5779 = vpop.permute.xlu0 %5778
        %v5781 = vsel %vm1977, %v5777, 0
        %v5784 = vsel %vm3174, %v5779, 0
        %5786 = vmatprep.subr.bf16.mxu0 0
        %5787 = vmatpush1.bf16.msra.mxu0 %v5784
        %5788 = vmatprep.subr.bf16.mxu0 0
        %5789 = vmatpush1.bf16.msra.mxu0 0
        %5790 = vmatprep.subr.bf16.mxu0 0
        %5791 = vmatpush1.bf16.msra.mxu0 0
        %5792 = vmatprep.subr.bf16.mxu0 0
        %5793 = vmatpush1.bf16.msra.mxu0 0
        %5794 = vmatprep.subr.bf16.mxu0 0
        %5795 = vmatpush1.bf16.msra.mxu0 0
        %5796 = vmatprep.subr.bf16.mxu0 0
        %5797 = vmatpush1.bf16.msra.mxu0 0
        %5798 = vmatprep.subr.bf16.mxu0 0
        %5799 = vmatpush1.bf16.msra.mxu0 0
        %5800 = vmatprep.subr.bf16.mxu0 0
        %5801 = vmatpush1.bf16.msra.mxu0 0
        %5802 = vmatprep.subr.bf16.mxu0 0
        %5803 = vmatpush1.bf16.msra.mxu0 0
        %5804 = vmatprep.subr.bf16.mxu0 0
        %5805 = vmatpush1.bf16.msra.mxu0 0
        %5806 = vmatprep.subr.bf16.mxu0 0
        %5807 = vmatpush1.bf16.msra.mxu0 0
        %5808 = vmatprep.subr.bf16.mxu0 0
        %5809 = vmatpush1.bf16.msra.mxu0 0
        %5810 = vmatprep.subr.bf16.mxu0 0
        %5811 = vmatpush1.bf16.msra.mxu0 0
        %5812 = vmatprep.subr.bf16.mxu0 0
        %5813 = vmatpush1.bf16.msra.mxu0 0
        %5814 = vmatprep.subr.bf16.mxu0 0
        %5815 = vmatpush1.bf16.msra.mxu0 0
        %5816 = vmatprep.subr.bf16.mxu0 0
        %5817 = vmatpush1.bf16.msra.mxu0 0
        %5818 = vmatprep.mubr.bf16.mxu0 0
        %5819 = vmatmul.mubr.bf16.gmra.mrb[0].mxu0 %v5781
        %v5820 = vpop.f32.mrb[0].mxu0
        %v5821 = vadd.f32 0.0, %v5820
        %v5822 = vpop.f32.mrb[0].mxu0
        %v5823 = vpop.f32.mrb[0].mxu0
        %v5824 = vpop.f32.mrb[0].mxu0
        %5825 = vdwg.mxu0
        %v5826 = vld [vmem:[%s18] sm:$0xff]
        %v5827 = vld [vmem:[#allocation13] sm:$0x1]
        %v5829 = vlaneseq
        %v5830 = vshrl.u32 %v5829, 7
        %v5831 = vsub.s32 0, %v5830
        %v5832 = vrot.slane %v5827, %v5831
        %5834 = vrot.lane.b32.xlu0 %v1940, 104
        %v5835 = vpop.permute.xlu0 %5834
        %v5836 = vsel %vm1977, %v5835, 0
        %5838 = vmatprep.subr.mxu0 0.0
        %5839 = vmatpush1.msra.mxu0 %v5826
        %5840 = vmatprep.subr.mxu0 0.0
        %5841 = vmatpush1.msra.mxu0 0.0
        %5842 = vmatprep.subr.mxu0 0.0
        %5843 = vmatpush1.msra.mxu0 0.0
        %5844 = vmatprep.subr.mxu0 0.0
        %5845 = vmatpush1.msra.mxu0 0.0
        %5846 = vmatprep.subr.mxu0 0.0
        %5847 = vmatpush1.msra.mxu0 0.0
        %5848 = vmatprep.subr.mxu0 0.0
        %5849 = vmatpush1.msra.mxu0 0.0
        %5850 = vmatprep.subr.mxu0 0.0
        %5851 = vmatpush1.msra.mxu0 0.0
        %5852 = vmatprep.subr.mxu0 0.0
        %5853 = vmatpush1.msra.mxu0 0.0
        %5854 = vmatprep.subr.mxu0 0.0
        %5855 = vmatpush1.msra.mxu0 0.0
        %5856 = vmatprep.subr.mxu0 0.0
        %5857 = vmatpush1.msra.mxu0 0.0
        %5858 = vmatprep.subr.mxu0 0.0
        %5859 = vmatpush1.msra.mxu0 0.0
        %5860 = vmatprep.subr.mxu0 0.0
        %5861 = vmatpush1.msra.mxu0 0.0
        %5862 = vmatprep.subr.mxu0 0.0
        %5863 = vmatpush1.msra.mxu0 0.0
        %5864 = vmatprep.subr.mxu0 0.0
        %5865 = vmatpush1.msra.mxu0 0.0
        %5866 = vmatprep.subr.mxu0 0.0
        %5867 = vmatpush1.msra.mxu0 0.0
        %5868 = vmatprep.subr.mxu0 0.0
        %5869 = vmatpush1.msra.mxu0 0.0
        %5870 = vmatprep.subr.mxu0 0.0
        %5871 = vmatpush1.msra.mxu0 0.0
        %5872 = vmatprep.subr.mxu0 0.0
        %5873 = vmatpush1.msra.mxu0 0.0
        %5874 = vmatprep.subr.mxu0 0.0
        %5875 = vmatpush1.msra.mxu0 0.0
        %5876 = vmatprep.subr.mxu0 0.0
        %5877 = vmatpush1.msra.mxu0 0.0
        %5878 = vmatprep.subr.mxu0 0.0
        %5879 = vmatpush1.msra.mxu0 0.0
        %5880 = vmatprep.subr.mxu0 0.0
        %5881 = vmatpush1.msra.mxu0 0.0
        %5882 = vmatprep.subr.mxu0 0.0
        %5883 = vmatpush1.msra.mxu0 0.0
        %5884 = vmatprep.subr.mxu0 0.0
        %5885 = vmatpush1.msra.mxu0 0.0
        %5886 = vmatprep.subr.mxu0 0.0
        %5887 = vmatpush1.msra.mxu0 0.0
        %5888 = vmatprep.subr.mxu0 0.0
        %5889 = vmatpush1.msra.mxu0 0.0
        %5890 = vmatprep.subr.mxu0 0.0
        %5891 = vmatpush1.msra.mxu0 0.0
        %5892 = vmatprep.subr.mxu0 0.0
        %5893 = vmatpush1.msra.mxu0 0.0
        %5894 = vmatprep.subr.mxu0 0.0
        %5895 = vmatpush1.msra.mxu0 0.0
        %5896 = vmatprep.subr.mxu0 0.0
        %5897 = vmatpush1.msra.mxu0 0.0
        %5898 = vmatprep.subr.mxu0 0.0
        %5899 = vmatpush1.msra.mxu0 0.0
        %5900 = vmatprep.subr.mxu0 0.0
        %5901 = vmatpush1.msra.mxu0 0.0
        %5902 = vmatprep.mubr.f32.mxu0 0.0
        %5903 = vmatmul.mubr.f32.gmra.mrb[0].mxu0 %v5836
        %v5904 = vpop.f32.mrb[0].mxu0
        %v5905 = vadd.f32 %v5832, %v5904
        %v5906 = vpop.f32.mrb[0].mxu0
        %5907 = vdwg.mxu0
        %v5908 = vld [vmem:[%s2051] sm:$0xff]
        %v5909 = vld [vmem:[%s2053] sm:$0x1]
        %v5911 = vlaneseq
        %v5912 = vshrl.u32 %v5911, 7
        %v5913 = vsub.s32 0, %v5912
        %v5914 = vrot.slane %v5909, %v5913
        %5916 = vmatprep.subr.mxu0 0.0
        %5917 = vmatpush1.msra.mxu0 %v5908
        %5918 = vmatprep.subr.mxu0 0.0
        %5919 = vmatpush1.msra.mxu0 0.0
        %5920 = vmatprep.subr.mxu0 0.0
        %5921 = vmatpush1.msra.mxu0 0.0
        %5922 = vmatprep.subr.mxu0 0.0
        %5923 = vmatpush1.msra.mxu0 0.0
        %5924 = vmatprep.subr.mxu0 0.0
        %5925 = vmatpush1.msra.mxu0 0.0
        %5926 = vmatprep.subr.mxu0 0.0
        %5927 = vmatpush1.msra.mxu0 0.0
        %5928 = vmatprep.subr.mxu0 0.0
        %5929 = vmatpush1.msra.mxu0 0.0
        %5930 = vmatprep.subr.mxu0 0.0
        %5931 = vmatpush1.msra.mxu0 0.0
        %5932 = vmatprep.subr.mxu0 0.0
        %5933 = vmatpush1.msra.mxu0 0.0
        %5934 = vmatprep.subr.mxu0 0.0
        %5935 = vmatpush1.msra.mxu0 0.0
        %5936 = vmatprep.subr.mxu0 0.0
        %5937 = vmatpush1.msra.mxu0 0.0
        %5938 = vmatprep.subr.mxu0 0.0
        %5939 = vmatpush1.msra.mxu0 0.0
        %5940 = vmatprep.subr.mxu0 0.0
        %5941 = vmatpush1.msra.mxu0 0.0
        %5942 = vmatprep.subr.mxu0 0.0
        %5943 = vmatpush1.msra.mxu0 0.0
        %5944 = vmatprep.subr.mxu0 0.0
        %5945 = vmatpush1.msra.mxu0 0.0
        %5946 = vmatprep.subr.mxu0 0.0
        %5947 = vmatpush1.msra.mxu0 0.0
        %5948 = vmatprep.subr.mxu0 0.0
        %5949 = vmatpush1.msra.mxu0 0.0
        %5950 = vmatprep.subr.mxu0 0.0
        %5951 = vmatpush1.msra.mxu0 0.0
        %5952 = vmatprep.subr.mxu0 0.0
        %5953 = vmatpush1.msra.mxu0 0.0
        %5954 = vmatprep.subr.mxu0 0.0
        %5955 = vmatpush1.msra.mxu0 0.0
        %5956 = vmatprep.subr.mxu0 0.0
        %5957 = vmatpush1.msra.mxu0 0.0
        %5958 = vmatprep.subr.mxu0 0.0
        %5959 = vmatpush1.msra.mxu0 0.0
        %5960 = vmatprep.subr.mxu0 0.0
        %5961 = vmatpush1.msra.mxu0 0.0
        %5962 = vmatprep.subr.mxu0 0.0
        %5963 = vmatpush1.msra.mxu0 0.0
        %5964 = vmatprep.subr.mxu0 0.0
        %5965 = vmatpush1.msra.mxu0 0.0
        %5966 = vmatprep.subr.mxu0 0.0
        %5967 = vmatpush1.msra.mxu0 0.0
        %5968 = vmatprep.subr.mxu0 0.0
        %5969 = vmatpush1.msra.mxu0 0.0
        %5970 = vmatprep.subr.mxu0 0.0
        %5971 = vmatpush1.msra.mxu0 0.0
        %5972 = vmatprep.subr.mxu0 0.0
        %5973 = vmatpush1.msra.mxu0 0.0
        %5974 = vmatprep.subr.mxu0 0.0
        %5975 = vmatpush1.msra.mxu0 0.0
        %5976 = vmatprep.subr.mxu0 0.0
        %5977 = vmatpush1.msra.mxu0 0.0
        %5978 = vmatprep.subr.mxu0 0.0
        %5979 = vmatpush1.msra.mxu0 0.0
        %5980 = vmatprep.mubr.f32.mxu0 0.0
        %5981 = vmatmul.mubr.f32.gmra.mrb[0].mxu0 %v5836
        %v5982 = vpop.f32.mrb[0].mxu0
        %v5983 = vadd.f32 %v5914, %v5982
        %v5984 = vpop.f32.mrb[0].mxu0
        %5985 = vdwg.mxu0
        %s5986 = scalar_lea.vmem %s1189, 12
        %v5987 = vld [vmem:[%s5986] sm:$0x7]
        %s5988 = scalar_lea.vmem %s1194, 12
        %v5989 = vld [vmem:[%s5988] sm:$0x7]
        %s5990 = scalar_lea.vmem %s1199, 12
        %v5991 = vld [vmem:[%s5990] sm:$0x7]
        %s5992 = scalar_lea.vmem %s1204, 12
        %v5993 = vld [vmem:[%s5992] sm:$0x7]
        %v5994 = vlaneseq
        %v5995 = vshrl.u32 %v5994, 7
        %v5996 = vsub.s32 0, %v5995
        %v5997 = vrot.slane %v5987, %v5996
        %v5998 = vmul.f32 %v2140, %v5997
        %v5999 = vlaneseq
        %v6000 = vshrl.u32 %v5999, 7
        %v6001 = vsub.s32 1, %v6000
        %v6002 = vrot.slane %v5987, %v6001
        %v6003 = vmul.f32 %v2149, %v6002
        %v6004 = vadd.f32 %v5998, %v6003
        %v6005 = vlaneseq
        %v6006 = vshrl.u32 %v6005, 7
        %v6007 = vsub.s32 2, %v6006
        %v6008 = vrot.slane %v5987, %v6007
        %v6009 = vmul.f32 %v2159, %v6008
        %v6010 = vadd.f32 %v6004, %v6009
        %v6011 = vlaneseq
        %v6012 = vshrl.u32 %v6011, 7
        %v6013 = vsub.s32 0, %v6012
        %v6014 = vrot.slane %v5989, %v6013
        %v6015 = vmul.f32 %v2140, %v6014
        %v6016 = vlaneseq
        %v6017 = vshrl.u32 %v6016, 7
        %v6018 = vsub.s32 1, %v6017
        %v6019 = vrot.slane %v5989, %v6018
        %v6020 = vmul.f32 %v2149, %v6019
        %v6021 = vadd.f32 %v6015, %v6020
        %v6022 = vlaneseq
        %v6023 = vshrl.u32 %v6022, 7
        %v6024 = vsub.s32 2, %v6023
        %v6025 = vrot.slane %v5989, %v6024
        %v6026 = vmul.f32 %v2159, %v6025
        %v6027 = vadd.f32 %v6021, %v6026
        %v6028 = vlaneseq
        %v6029 = vshrl.u32 %v6028, 7
        %v6030 = vsub.s32 0, %v6029
        %v6031 = vrot.slane %v5991, %v6030
        %v6032 = vmul.f32 %v2140, %v6031
        %v6033 = vlaneseq
        %v6034 = vshrl.u32 %v6033, 7
        %v6035 = vsub.s32 1, %v6034
        %v6036 = vrot.slane %v5991, %v6035
        %v6037 = vmul.f32 %v2149, %v6036
        %v6038 = vadd.f32 %v6032, %v6037
        %v6039 = vlaneseq
        %v6040 = vshrl.u32 %v6039, 7
        %v6041 = vsub.s32 2, %v6040
        %v6042 = vrot.slane %v5991, %v6041
        %v6043 = vmul.f32 %v2159, %v6042
        %v6044 = vadd.f32 %v6038, %v6043
        %v6045 = vlaneseq
        %v6046 = vshrl.u32 %v6045, 7
        %v6047 = vsub.s32 0, %v6046
        %v6048 = vrot.slane %v5993, %v6047
        %v6049 = vmul.f32 %v2140, %v6048
        %v6050 = vlaneseq
        %v6051 = vshrl.u32 %v6050, 7
        %v6052 = vsub.s32 1, %v6051
        %v6053 = vrot.slane %v5993, %v6052
        %v6054 = vmul.f32 %v2149, %v6053
        %v6055 = vadd.f32 %v6049, %v6054
        %v6056 = vlaneseq
        %v6057 = vshrl.u32 %v6056, 7
        %v6058 = vsub.s32 2, %v6057
        %v6059 = vrot.slane %v5993, %v6058
        %v6060 = vmul.f32 %v2159, %v6059
        %v6061 = vadd.f32 %v6055, %v6060
        %6062 = vrot.lane.b32.xlu0 %v1950, 104
        %v6063 = vpop.permute.xlu0 %6062
        %v6065 = vmul.f32 %v5905, %v6063
        %6067 = vrot.lane.b32.xlu0 %v6065, 24
        %v6068 = vpop.permute.xlu0 %6067
        %v6070 = vadd.f32 %v2219, %v6068
        %6071 = vrot.lane.b32.xlu0 %v2218, 104
        %v6072 = vpop.permute.xlu0 %6071
        %v6074 = vsel %vm1977, %v6072, %v4788
        %v6075 = vsel %vm2230, %v6074, %v3514
        %v6076 = vadd.f32 %v6075, %v6010
        %v6077 = vrcp.pop %v6076
        %6079 = vrot.lane.b32.xlu0 %v6070, 104
        %v6080 = vpop.permute.xlu0 %6079
        %6082 = vrot.lane.b32.xlu0 %v6070, 112
        %v6083 = vpop.permute.xlu0 %6082
        %6085 = vrot.lane.b32.xlu0 %v6070, 120
        %v6086 = vpop.permute.xlu0 %6085
        %v6088 = vsel %vm1977, %v6080, %v6083
        %v6089 = vsel %vm2230, %v6088, %v6086
        %v6090 = vadd.f32 %v6089, %v6027
        %v6091 = vmul.f32 %v6077, %v6090
        %v6092 = vmax.f32 %v6077, 1e-24
        %v6093 = vrsqrt.pop %v6092
        %v6094 = vmul.f32 %v6092, %v6093
        %vm6095 = vcmp.eq.f32.partialorder %v6092, inf
        %v6096 = vsel %vm6095, %v6092, %v6094
        %vm6097 = vcmp.eq.f32.partialorder %v6092, 0.0
        %v6098 = vand.u32 %v6092, 2147483648
        %v6099 = vsel %vm6097, %v6098, %v6096
        %v6100 = vmul.f32 %v5983, %v6063
        %6102 = vrot.lane.b32.xlu0 %v6100, 24
        %v6103 = vpop.permute.xlu0 %6102
        %v6105 = vadd.f32 %v2254, %v6103
        %v6106 = vmul.f32 %v6091, %v6091
        %v6107 = vadd.f32 %v6106, %v6077
        %v6108 = vsel %vm1977, %v6107, 0.0
        %6109 = vadd.xlane.f32.xlu0 %v6108
        %v6110 = vpop.xlane.xlu0 %6109
        %6112 = vrot.lane.b32.xlu0 %v6099, 8
        %v6113 = vpop.permute.xlu0 %6112
        %v6115 = vsel %vm1977, %v6091, %v6113
        %6117 = vrot.lane.b32.xlu0 %v6107, 120
        %v6118 = vpop.permute.xlu0 %6117
        %v6120 = vsel %vm1977, %v6118, 0.0
        %6121 = vadd.xlane.f32.xlu0 %v6120
        %v6122 = vpop.xlane.xlu0 %6121
        %6124 = vrot.lane.b32.xlu0 %v6091, 120
        %v6125 = vpop.permute.xlu0 %6124
        %v6127 = vsel %vm1977, %v6125, %v6099
        %6128 = vrot.lane.b32.xlu0 %v6107, 112
        %v6129 = vpop.permute.xlu0 %6128
        %v6131 = vsel %vm1977, %v6129, 0.0
        %6132 = vadd.xlane.f32.xlu0 %v6131
        %v6133 = vpop.xlane.xlu0 %6132
        %6134 = vrot.lane.b32.xlu0 %v6091, 112
        %v6135 = vpop.permute.xlu0 %6134
        %6137 = vrot.lane.b32.xlu0 %v6099, 120
        %v6138 = vpop.permute.xlu0 %6137
        %v6140 = vsel %vm1977, %v6135, %v6138
        %v6141 = vsel %vm2292, %v6110, %v6122
        %v6142 = vsel %vm2294, %v6141, %v6133
        %6144 = vrot.lane.b32.xlu0 %v6044, 24
        %v6145 = vpop.permute.xlu0 %6144
        %v6147 = vadd.f32 %v2253, %v6145
        %v6148 = vrcp.pop %v6147
        %6150 = vrot.lane.b32.xlu0 %v6061, 24
        %v6151 = vpop.permute.xlu0 %6150
        %v6153 = vadd.f32 %v6105, %v6151
        %v6154 = vmul.f32 %v6148, %v6153
        %v6155 = vmax.f32 %v6148, 1e-24
        %v6156 = vrsqrt.pop %v6155
        %v6157 = vmul.f32 %v6155, %v6156
        %vm6158 = vcmp.eq.f32.partialorder %v6155, inf
        %v6159 = vsel %vm6158, %v6155, %v6157
        %vm6160 = vcmp.eq.f32.partialorder %v6155, 0.0
        %v6161 = vand.u32 %v6155, 2147483648
        %v6162 = vsel %vm6160, %v6161, %v6159
        %v6163 = vmul.f32 %v6154, %v6154
        %v6164 = vadd.f32 %v6163, %v6148
        %6166 = vrot.lane.b32.xlu0 %v6164, 104
        %v6167 = vpop.permute.xlu0 %6166
        %v6169 = vsel %vm1977, %v6167, 0.0
        %6170 = vadd.xlane.f32.xlu0 %v6169
        %v6171 = vpop.xlane.xlu0 %6170
        %6173 = vrot.lane.b32.xlu0 %v6154, 104
        %v6174 = vpop.permute.xlu0 %6173
        %6177 = vrot.lane.b32.xlu0 %v6162, 112
        %v6178 = vpop.permute.xlu0 %6177
        %v6180 = vsel %vm1977, %v6174, %v6178
        %v6181 = vmul.f32 %v6180, -2.0
        %6182 = vrot.lane.b32.xlu0 %v6044, 16
        %v6183 = vpop.permute.xlu0 %6182
        %v6185 = vadd.f32 %v2253, %v6183
        %v6186 = vrcp.pop %v6185
        %6187 = vrot.lane.b32.xlu0 %v6061, 16
        %v6188 = vpop.permute.xlu0 %6187
        %v6190 = vadd.f32 %v6105, %v6188
        %v6191 = vmul.f32 %v6186, %v6190
        %v6192 = vmax.f32 %v6186, 1e-24
        %v6193 = vrsqrt.pop %v6192
        %v6194 = vmul.f32 %v6192, %v6193
        %vm6195 = vcmp.eq.f32.partialorder %v6192, inf
        %v6196 = vsel %vm6195, %v6192, %v6194
        %vm6197 = vcmp.eq.f32.partialorder %v6192, 0.0
        %v6198 = vand.u32 %v6192, 2147483648
        %v6199 = vsel %vm6197, %v6198, %v6196
        %v6200 = vmul.f32 %v6191, %v6191
        %v6201 = vadd.f32 %v6200, %v6186
        %6203 = vrot.lane.b32.xlu0 %v6201, 104
        %v6204 = vpop.permute.xlu0 %6203
        %v6206 = vsel %vm1977, %v6204, 0.0
        %6207 = vadd.xlane.f32.xlu0 %v6206
        %v6208 = vpop.xlane.xlu0 %6207
        %6210 = vrot.lane.b32.xlu0 %v6191, 104
        %v6211 = vpop.permute.xlu0 %6210
        %6214 = vrot.lane.b32.xlu0 %v6199, 112
        %v6215 = vpop.permute.xlu0 %6214
        %v6217 = vsel %vm1977, %v6211, %v6215
        %v6218 = vmul.f32 %v6217, -2.0
        %6219 = vrot.lane.b32.xlu0 %v6044, 8
        %v6220 = vpop.permute.xlu0 %6219
        %v6222 = vadd.f32 %v2253, %v6220
        %v6223 = vrcp.pop %v6222
        %6224 = vrot.lane.b32.xlu0 %v6061, 8
        %v6225 = vpop.permute.xlu0 %6224
        %v6227 = vadd.f32 %v6105, %v6225
        %v6228 = vmul.f32 %v6223, %v6227
        %v6229 = vmax.f32 %v6223, 1e-24
        %v6230 = vrsqrt.pop %v6229
        %v6231 = vmul.f32 %v6229, %v6230
        %vm6232 = vcmp.eq.f32.partialorder %v6229, inf
        %v6233 = vsel %vm6232, %v6229, %v6231
        %vm6234 = vcmp.eq.f32.partialorder %v6229, 0.0
        %v6235 = vand.u32 %v6229, 2147483648
        %v6236 = vsel %vm6234, %v6235, %v6233
        %v6237 = vmul.f32 %v6228, %v6228
        %v6238 = vadd.f32 %v6237, %v6223
        %6240 = vrot.lane.b32.xlu0 %v6238, 104
        %v6241 = vpop.permute.xlu0 %6240
        %v6243 = vsel %vm1977, %v6241, 0.0
        %6244 = vadd.xlane.f32.xlu0 %v6243
        %v6245 = vpop.xlane.xlu0 %6244
        %6247 = vrot.lane.b32.xlu0 %v6228, 104
        %v6248 = vpop.permute.xlu0 %6247
        %6251 = vrot.lane.b32.xlu0 %v6236, 112
        %v6252 = vpop.permute.xlu0 %6251
        %v6254 = vsel %vm1977, %v6248, %v6252
        %v6255 = vmul.f32 %v6254, -2.0
        %v6256 = vsel %vm2292, %v6171, %v6208
        %v6257 = vsel %vm2294, %v6256, %v6245
        %v6258 = vsel %vm2384, %v6142, %v2382
        %6260 = vrot.lane.b32.xlu0 %v6257, 3
        %v6261 = vpop.permute.xlu0 %6260
        %v6263 = vsel %vm2384, %v1951, %v6261
        %v6265 = vsel %vm2230, %v6115, 0
        %v6268 = vsel %vm2230, %v6181, 0
        %6270 = vmatprep.subr.mxu0 0.0
        %6271 = vmatpush1.xpose.msra.mxu0 %v6268
        %6272 = vmatprep.subr.mxu0 0.0
        %6273 = vmatpush1.xpose.msra.mxu0 0.0
        %6274 = vmatprep.subr.mxu0 0.0
        %6275 = vmatpush1.xpose.msra.mxu0 0.0
        %6276 = vmatprep.subr.mxu0 0.0
        %6277 = vmatpush1.xpose.msra.mxu0 0.0
        %6278 = vmatprep.subr.mxu0 0.0
        %6279 = vmatpush1.xpose.msra.mxu0 0.0
        %6280 = vmatprep.subr.mxu0 0.0
        %6281 = vmatpush1.xpose.msra.mxu0 0.0
        %6282 = vmatprep.subr.mxu0 0.0
        %6283 = vmatpush1.xpose.msra.mxu0 0.0
        %6284 = vmatprep.subr.mxu0 0.0
        %6285 = vmatpush1.xpose.msra.mxu0 0.0
        %6286 = vmatprep.subr.mxu0 0.0
        %6287 = vmatpush1.xpose.msra.mxu0 0.0
        %6288 = vmatprep.subr.mxu0 0.0
        %6289 = vmatpush1.xpose.msra.mxu0 0.0
        %6290 = vmatprep.subr.mxu0 0.0
        %6291 = vmatpush1.xpose.msra.mxu0 0.0
        %6292 = vmatprep.subr.mxu0 0.0
        %6293 = vmatpush1.xpose.msra.mxu0 0.0
        %6294 = vmatprep.subr.mxu0 0.0
        %6295 = vmatpush1.xpose.msra.mxu0 0.0
        %6296 = vmatprep.subr.mxu0 0.0
        %6297 = vmatpush1.xpose.msra.mxu0 0.0
        %6298 = vmatprep.subr.mxu0 0.0
        %6299 = vmatpush1.xpose.msra.mxu0 0.0
        %6300 = vmatprep.subr.mxu0 0.0
        %6301 = vmatpush1.xpose.msra.mxu0 0.0
        %6302 = vmatprep.subr.mxu0 0.0
        %6303 = vmatpush1.xpose.msra.mxu0 0.0
        %6304 = vmatprep.subr.mxu0 0.0
        %6305 = vmatpush1.xpose.msra.mxu0 0.0
        %6306 = vmatprep.subr.mxu0 0.0
        %6307 = vmatpush1.xpose.msra.mxu0 0.0
        %6308 = vmatprep.subr.mxu0 0.0
        %6309 = vmatpush1.xpose.msra.mxu0 0.0
        %6310 = vmatprep.subr.mxu0 0.0
        %6311 = vmatpush1.xpose.msra.mxu0 0.0
        %6312 = vmatprep.subr.mxu0 0.0
        %6313 = vmatpush1.xpose.msra.mxu0 0.0
        %6314 = vmatprep.subr.mxu0 0.0
        %6315 = vmatpush1.xpose.msra.mxu0 0.0
        %6316 = vmatprep.subr.mxu0 0.0
        %6317 = vmatpush1.xpose.msra.mxu0 0.0
        %6318 = vmatprep.subr.mxu0 0.0
        %6319 = vmatpush1.xpose.msra.mxu0 0.0
        %6320 = vmatprep.subr.mxu0 0.0
        %6321 = vmatpush1.xpose.msra.mxu0 0.0
        %6322 = vmatprep.subr.mxu0 0.0
        %6323 = vmatpush1.xpose.msra.mxu0 0.0
        %6324 = vmatprep.subr.mxu0 0.0
        %6325 = vmatpush1.xpose.msra.mxu0 0.0
        %6326 = vmatprep.subr.mxu0 0.0
        %6327 = vmatpush1.xpose.msra.mxu0 0.0
        %6328 = vmatprep.subr.mxu0 0.0
        %6329 = vmatpush1.xpose.msra.mxu0 0.0
        %6330 = vmatprep.subr.mxu0 0.0
        %6331 = vmatpush1.xpose.msra.mxu0 0.0
        %6332 = vmatprep.subr.mxu0 0.0
        %6333 = vmatpush1.xpose.msra.mxu0 0.0
        %6334 = vmatprep.mubr.f32.mxu0 0.0
        %6335 = vmatmul.mubr.f32.gmra.mrb[0].mxu0 %v6265
        %v6336 = vpop.f32.mrb[0].mxu0
        %v6337 = vadd.f32 0.0, %v6336
        %v6338 = vpop.f32.mrb[0].mxu0
        %6339 = vdwg.mxu0
        %v6340 = vmul.f32 %v2471, %v6337
        %v6342 = vsel %vm2473, %v6258, 0
        %v6345 = vsel %vm2473, %v6263, 0
        %6347 = vmatprep.subr.mxu0 0.0
        %6348 = vmatpush1.xpose.msra.mxu0 %v6345
        %6349 = vmatprep.subr.mxu0 0.0
        %6350 = vmatpush1.xpose.msra.mxu0 0.0
        %6351 = vmatprep.subr.mxu0 0.0
        %6352 = vmatpush1.xpose.msra.mxu0 0.0
        %6353 = vmatprep.subr.mxu0 0.0
        %6354 = vmatpush1.xpose.msra.mxu0 0.0
        %6355 = vmatprep.subr.mxu0 0.0
        %6356 = vmatpush1.xpose.msra.mxu0 0.0
        %6357 = vmatprep.subr.mxu0 0.0
        %6358 = vmatpush1.xpose.msra.mxu0 0.0
        %6359 = vmatprep.subr.mxu0 0.0
        %6360 = vmatpush1.xpose.msra.mxu0 0.0
        %6361 = vmatprep.subr.mxu0 0.0
        %6362 = vmatpush1.xpose.msra.mxu0 0.0
        %6363 = vmatprep.subr.mxu0 0.0
        %6364 = vmatpush1.xpose.msra.mxu0 0.0
        %6365 = vmatprep.subr.mxu0 0.0
        %6366 = vmatpush1.xpose.msra.mxu0 0.0
        %6367 = vmatprep.subr.mxu0 0.0
        %6368 = vmatpush1.xpose.msra.mxu0 0.0
        %6369 = vmatprep.subr.mxu0 0.0
        %6370 = vmatpush1.xpose.msra.mxu0 0.0
        %6371 = vmatprep.subr.mxu0 0.0
        %6372 = vmatpush1.xpose.msra.mxu0 0.0
        %6373 = vmatprep.subr.mxu0 0.0
        %6374 = vmatpush1.xpose.msra.mxu0 0.0
        %6375 = vmatprep.subr.mxu0 0.0
        %6376 = vmatpush1.xpose.msra.mxu0 0.0
        %6377 = vmatprep.subr.mxu0 0.0
        %6378 = vmatpush1.xpose.msra.mxu0 0.0
        %6379 = vmatprep.subr.mxu0 0.0
        %6380 = vmatpush1.xpose.msra.mxu0 0.0
        %6381 = vmatprep.subr.mxu0 0.0
        %6382 = vmatpush1.xpose.msra.mxu0 0.0
        %6383 = vmatprep.subr.mxu0 0.0
        %6384 = vmatpush1.xpose.msra.mxu0 0.0
        %6385 = vmatprep.subr.mxu0 0.0
        %6386 = vmatpush1.xpose.msra.mxu0 0.0
        %6387 = vmatprep.subr.mxu0 0.0
        %6388 = vmatpush1.xpose.msra.mxu0 0.0
        %6389 = vmatprep.subr.mxu0 0.0
        %6390 = vmatpush1.xpose.msra.mxu0 0.0
        %6391 = vmatprep.subr.mxu0 0.0
        %6392 = vmatpush1.xpose.msra.mxu0 0.0
        %6393 = vmatprep.subr.mxu0 0.0
        %6394 = vmatpush1.xpose.msra.mxu0 0.0
        %6395 = vmatprep.subr.mxu0 0.0
        %6396 = vmatpush1.xpose.msra.mxu0 0.0
        %6397 = vmatprep.subr.mxu0 0.0
        %6398 = vmatpush1.xpose.msra.mxu0 0.0
        %6399 = vmatprep.subr.mxu0 0.0
        %6400 = vmatpush1.xpose.msra.mxu0 0.0
        %6401 = vmatprep.subr.mxu0 0.0
        %6402 = vmatpush1.xpose.msra.mxu0 0.0
        %6403 = vmatprep.subr.mxu0 0.0
        %6404 = vmatpush1.xpose.msra.mxu0 0.0
        %6405 = vmatprep.subr.mxu0 0.0
        %6406 = vmatpush1.xpose.msra.mxu0 0.0
        %6407 = vmatprep.subr.mxu0 0.0
        %6408 = vmatpush1.xpose.msra.mxu0 0.0
        %6409 = vmatprep.subr.mxu0 0.0
        %6410 = vmatpush1.xpose.msra.mxu0 0.0
        %6411 = vmatprep.mubr.f32.mxu0 0.0
        %6412 = vmatmul.mubr.f32.gmra.mrb[0].mxu0 %v6342
        %v6413 = vpop.f32.mrb[0].mxu0
        %v6414 = vadd.f32 %v6340, %v6413
        %v6415 = vpop.f32.mrb[0].mxu0
        %6416 = vdwg.mxu0
        %v6418 = vsel %vm2230, %v6127, 0
        %6420 = vmatprep.subr.mxu0 0.0
        %6421 = vmatpush1.xpose.msra.mxu0 %v6268
        %6422 = vmatprep.subr.mxu0 0.0
        %6423 = vmatpush1.xpose.msra.mxu0 0.0
        %6424 = vmatprep.subr.mxu0 0.0
        %6425 = vmatpush1.xpose.msra.mxu0 0.0
        %6426 = vmatprep.subr.mxu0 0.0
        %6427 = vmatpush1.xpose.msra.mxu0 0.0
        %6428 = vmatprep.subr.mxu0 0.0
        %6429 = vmatpush1.xpose.msra.mxu0 0.0
        %6430 = vmatprep.subr.mxu0 0.0
        %6431 = vmatpush1.xpose.msra.mxu0 0.0
        %6432 = vmatprep.subr.mxu0 0.0
        %6433 = vmatpush1.xpose.msra.mxu0 0.0
        %6434 = vmatprep.subr.mxu0 0.0
        %6435 = vmatpush1.xpose.msra.mxu0 0.0
        %6436 = vmatprep.subr.mxu0 0.0
        %6437 = vmatpush1.xpose.msra.mxu0 0.0
        %6438 = vmatprep.subr.mxu0 0.0
        %6439 = vmatpush1.xpose.msra.mxu0 0.0
        %6440 = vmatprep.subr.mxu0 0.0
        %6441 = vmatpush1.xpose.msra.mxu0 0.0
        %6442 = vmatprep.subr.mxu0 0.0
        %6443 = vmatpush1.xpose.msra.mxu0 0.0
        %6444 = vmatprep.subr.mxu0 0.0
        %6445 = vmatpush1.xpose.msra.mxu0 0.0
        %6446 = vmatprep.subr.mxu0 0.0
        %6447 = vmatpush1.xpose.msra.mxu0 0.0
        %6448 = vmatprep.subr.mxu0 0.0
        %6449 = vmatpush1.xpose.msra.mxu0 0.0
        %6450 = vmatprep.subr.mxu0 0.0
        %6451 = vmatpush1.xpose.msra.mxu0 0.0
        %6452 = vmatprep.subr.mxu0 0.0
        %6453 = vmatpush1.xpose.msra.mxu0 0.0
        %6454 = vmatprep.subr.mxu0 0.0
        %6455 = vmatpush1.xpose.msra.mxu0 0.0
        %6456 = vmatprep.subr.mxu0 0.0
        %6457 = vmatpush1.xpose.msra.mxu0 0.0
        %6458 = vmatprep.subr.mxu0 0.0
        %6459 = vmatpush1.xpose.msra.mxu0 0.0
        %6460 = vmatprep.subr.mxu0 0.0
        %6461 = vmatpush1.xpose.msra.mxu0 0.0
        %6462 = vmatprep.subr.mxu0 0.0
        %6463 = vmatpush1.xpose.msra.mxu0 0.0
        %6464 = vmatprep.subr.mxu0 0.0
        %6465 = vmatpush1.xpose.msra.mxu0 0.0
        %6466 = vmatprep.subr.mxu0 0.0
        %6467 = vmatpush1.xpose.msra.mxu0 0.0
        %6468 = vmatprep.subr.mxu0 0.0
        %6469 = vmatpush1.xpose.msra.mxu0 0.0
        %6470 = vmatprep.subr.mxu0 0.0
        %6471 = vmatpush1.xpose.msra.mxu0 0.0
        %6472 = vmatprep.subr.mxu0 0.0
        %6473 = vmatpush1.xpose.msra.mxu0 0.0
        %6474 = vmatprep.subr.mxu0 0.0
        %6475 = vmatpush1.xpose.msra.mxu0 0.0
        %6476 = vmatprep.subr.mxu0 0.0
        %6477 = vmatpush1.xpose.msra.mxu0 0.0
        %6478 = vmatprep.subr.mxu0 0.0
        %6479 = vmatpush1.xpose.msra.mxu0 0.0
        %6480 = vmatprep.subr.mxu0 0.0
        %6481 = vmatpush1.xpose.msra.mxu0 0.0
        %6482 = vmatprep.subr.mxu0 0.0
        %6483 = vmatpush1.xpose.msra.mxu0 0.0
        %6484 = vmatprep.mubr.f32.mxu0 0.0
        %6485 = vmatmul.mubr.f32.gmra.mrb[0].mxu0 %v6418
        %v6486 = vpop.f32.mrb[0].mxu0
        %v6487 = vadd.f32 0.0, %v6486
        %v6488 = vpop.f32.mrb[0].mxu0
        %6489 = vdwg.mxu0
        %v6490 = vmul.f32 %v2627, %v6487
        %v6491 = vadd.f32 %v6414, %v6490
        %v6493 = vsel %vm2230, %v6140, 0
        %6495 = vmatprep.subr.mxu0 0.0
        %6496 = vmatpush1.xpose.msra.mxu0 %v6268
        %6497 = vmatprep.subr.mxu0 0.0
        %6498 = vmatpush1.xpose.msra.mxu0 0.0
        %6499 = vmatprep.subr.mxu0 0.0
        %6500 = vmatpush1.xpose.msra.mxu0 0.0
        %6501 = vmatprep.subr.mxu0 0.0
        %6502 = vmatpush1.xpose.msra.mxu0 0.0
        %6503 = vmatprep.subr.mxu0 0.0
        %6504 = vmatpush1.xpose.msra.mxu0 0.0
        %6505 = vmatprep.subr.mxu0 0.0
        %6506 = vmatpush1.xpose.msra.mxu0 0.0
        %6507 = vmatprep.subr.mxu0 0.0
        %6508 = vmatpush1.xpose.msra.mxu0 0.0
        %6509 = vmatprep.subr.mxu0 0.0
        %6510 = vmatpush1.xpose.msra.mxu0 0.0
        %6511 = vmatprep.subr.mxu0 0.0
        %6512 = vmatpush1.xpose.msra.mxu0 0.0
        %6513 = vmatprep.subr.mxu0 0.0
        %6514 = vmatpush1.xpose.msra.mxu0 0.0
        %6515 = vmatprep.subr.mxu0 0.0
        %6516 = vmatpush1.xpose.msra.mxu0 0.0
        %6517 = vmatprep.subr.mxu0 0.0
        %6518 = vmatpush1.xpose.msra.mxu0 0.0
        %6519 = vmatprep.subr.mxu0 0.0
        %6520 = vmatpush1.xpose.msra.mxu0 0.0
        %6521 = vmatprep.subr.mxu0 0.0
        %6522 = vmatpush1.xpose.msra.mxu0 0.0
        %6523 = vmatprep.subr.mxu0 0.0
        %6524 = vmatpush1.xpose.msra.mxu0 0.0
        %6525 = vmatprep.subr.mxu0 0.0
        %6526 = vmatpush1.xpose.msra.mxu0 0.0
        %6527 = vmatprep.subr.mxu0 0.0
        %6528 = vmatpush1.xpose.msra.mxu0 0.0
        %6529 = vmatprep.subr.mxu0 0.0
        %6530 = vmatpush1.xpose.msra.mxu0 0.0
        %6531 = vmatprep.subr.mxu0 0.0
        %6532 = vmatpush1.xpose.msra.mxu0 0.0
        %6533 = vmatprep.subr.mxu0 0.0
        %6534 = vmatpush1.xpose.msra.mxu0 0.0
        %6535 = vmatprep.subr.mxu0 0.0
        %6536 = vmatpush1.xpose.msra.mxu0 0.0
        %6537 = vmatprep.subr.mxu0 0.0
        %6538 = vmatpush1.xpose.msra.mxu0 0.0
        %6539 = vmatprep.subr.mxu0 0.0
        %6540 = vmatpush1.xpose.msra.mxu0 0.0
        %6541 = vmatprep.subr.mxu0 0.0
        %6542 = vmatpush1.xpose.msra.mxu0 0.0
        %6543 = vmatprep.subr.mxu0 0.0
        %6544 = vmatpush1.xpose.msra.mxu0 0.0
        %6545 = vmatprep.subr.mxu0 0.0
        %6546 = vmatpush1.xpose.msra.mxu0 0.0
        %6547 = vmatprep.subr.mxu0 0.0
        %6548 = vmatpush1.xpose.msra.mxu0 0.0
        %6549 = vmatprep.subr.mxu0 0.0
        %6550 = vmatpush1.xpose.msra.mxu0 0.0
        %6551 = vmatprep.subr.mxu0 0.0
        %6552 = vmatpush1.xpose.msra.mxu0 0.0
        %6553 = vmatprep.subr.mxu0 0.0
        %6554 = vmatpush1.xpose.msra.mxu0 0.0
        %6555 = vmatprep.subr.mxu0 0.0
        %6556 = vmatpush1.xpose.msra.mxu0 0.0
        %6557 = vmatprep.subr.mxu0 0.0
        %6558 = vmatpush1.xpose.msra.mxu0 0.0
        %6559 = vmatprep.mubr.f32.mxu0 0.0
        %6560 = vmatmul.mubr.f32.gmra.mrb[0].mxu0 %v6493
        %v6561 = vpop.f32.mrb[0].mxu0
        %v6562 = vadd.f32 0.0, %v6561
        %v6563 = vpop.f32.mrb[0].mxu0
        %6564 = vdwg.mxu0
        %v6565 = vmul.f32 %v2707, %v6562
        %v6566 = vadd.f32 %v6491, %v6565
        %v6568 = vsel %vm2230, %v6218, 0
        %6570 = vmatprep.subr.mxu0 0.0
        %6571 = vmatpush1.xpose.msra.mxu0 %v6568
        %6572 = vmatprep.subr.mxu0 0.0
        %6573 = vmatpush1.xpose.msra.mxu0 0.0
        %6574 = vmatprep.subr.mxu0 0.0
        %6575 = vmatpush1.xpose.msra.mxu0 0.0
        %6576 = vmatprep.subr.mxu0 0.0
        %6577 = vmatpush1.xpose.msra.mxu0 0.0
        %6578 = vmatprep.subr.mxu0 0.0
        %6579 = vmatpush1.xpose.msra.mxu0 0.0
        %6580 = vmatprep.subr.mxu0 0.0
        %6581 = vmatpush1.xpose.msra.mxu0 0.0
        %6582 = vmatprep.subr.mxu0 0.0
        %6583 = vmatpush1.xpose.msra.mxu0 0.0
        %6584 = vmatprep.subr.mxu0 0.0
        %6585 = vmatpush1.xpose.msra.mxu0 0.0
        %6586 = vmatprep.subr.mxu0 0.0
        %6587 = vmatpush1.xpose.msra.mxu0 0.0
        %6588 = vmatprep.subr.mxu0 0.0
        %6589 = vmatpush1.xpose.msra.mxu0 0.0
        %6590 = vmatprep.subr.mxu0 0.0
        %6591 = vmatpush1.xpose.msra.mxu0 0.0
        %6592 = vmatprep.subr.mxu0 0.0
        %6593 = vmatpush1.xpose.msra.mxu0 0.0
        %6594 = vmatprep.subr.mxu0 0.0
        %6595 = vmatpush1.xpose.msra.mxu0 0.0
        %6596 = vmatprep.subr.mxu0 0.0
        %6597 = vmatpush1.xpose.msra.mxu0 0.0
        %6598 = vmatprep.subr.mxu0 0.0
        %6599 = vmatpush1.xpose.msra.mxu0 0.0
        %6600 = vmatprep.subr.mxu0 0.0
        %6601 = vmatpush1.xpose.msra.mxu0 0.0
        %6602 = vmatprep.subr.mxu0 0.0
        %6603 = vmatpush1.xpose.msra.mxu0 0.0
        %6604 = vmatprep.subr.mxu0 0.0
        %6605 = vmatpush1.xpose.msra.mxu0 0.0
        %6606 = vmatprep.subr.mxu0 0.0
        %6607 = vmatpush1.xpose.msra.mxu0 0.0
        %6608 = vmatprep.subr.mxu0 0.0
        %6609 = vmatpush1.xpose.msra.mxu0 0.0
        %6610 = vmatprep.subr.mxu0 0.0
        %6611 = vmatpush1.xpose.msra.mxu0 0.0
        %6612 = vmatprep.subr.mxu0 0.0
        %6613 = vmatpush1.xpose.msra.mxu0 0.0
        %6614 = vmatprep.subr.mxu0 0.0
        %6615 = vmatpush1.xpose.msra.mxu0 0.0
        %6616 = vmatprep.subr.mxu0 0.0
        %6617 = vmatpush1.xpose.msra.mxu0 0.0
        %6618 = vmatprep.subr.mxu0 0.0
        %6619 = vmatpush1.xpose.msra.mxu0 0.0
        %6620 = vmatprep.subr.mxu0 0.0
        %6621 = vmatpush1.xpose.msra.mxu0 0.0
        %6622 = vmatprep.subr.mxu0 0.0
        %6623 = vmatpush1.xpose.msra.mxu0 0.0
        %6624 = vmatprep.subr.mxu0 0.0
        %6625 = vmatpush1.xpose.msra.mxu0 0.0
        %6626 = vmatprep.subr.mxu0 0.0
        %6627 = vmatpush1.xpose.msra.mxu0 0.0
        %6628 = vmatprep.subr.mxu0 0.0
        %6629 = vmatpush1.xpose.msra.mxu0 0.0
        %6630 = vmatprep.subr.mxu0 0.0
        %6631 = vmatpush1.xpose.msra.mxu0 0.0
        %6632 = vmatprep.subr.mxu0 0.0
        %6633 = vmatpush1.xpose.msra.mxu0 0.0
        %6634 = vmatprep.mubr.f32.mxu0 0.0
        %6635 = vmatmul.mubr.f32.gmra.mrb[0].mxu0 %v6265
        %v6636 = vpop.f32.mrb[0].mxu0
        %v6637 = vadd.f32 0.0, %v6636
        %v6638 = vpop.f32.mrb[0].mxu0
        %6639 = vdwg.mxu0
        %v6640 = vmul.f32 %v2783, %v6637
        %v6641 = vadd.f32 %v6566, %v6640
        %6642 = vmatprep.subr.mxu0 0.0
        %6643 = vmatpush1.xpose.msra.mxu0 %v6568
        %6644 = vmatprep.subr.mxu0 0.0
        %6645 = vmatpush1.xpose.msra.mxu0 0.0
        %6646 = vmatprep.subr.mxu0 0.0
        %6647 = vmatpush1.xpose.msra.mxu0 0.0
        %6648 = vmatprep.subr.mxu0 0.0
        %6649 = vmatpush1.xpose.msra.mxu0 0.0
        %6650 = vmatprep.subr.mxu0 0.0
        %6651 = vmatpush1.xpose.msra.mxu0 0.0
        %6652 = vmatprep.subr.mxu0 0.0
        %6653 = vmatpush1.xpose.msra.mxu0 0.0
        %6654 = vmatprep.subr.mxu0 0.0
        %6655 = vmatpush1.xpose.msra.mxu0 0.0
        %6656 = vmatprep.subr.mxu0 0.0
        %6657 = vmatpush1.xpose.msra.mxu0 0.0
        %6658 = vmatprep.subr.mxu0 0.0
        %6659 = vmatpush1.xpose.msra.mxu0 0.0
        %6660 = vmatprep.subr.mxu0 0.0
        %6661 = vmatpush1.xpose.msra.mxu0 0.0
        %6662 = vmatprep.subr.mxu0 0.0
        %6663 = vmatpush1.xpose.msra.mxu0 0.0
        %6664 = vmatprep.subr.mxu0 0.0
        %6665 = vmatpush1.xpose.msra.mxu0 0.0
        %6666 = vmatprep.subr.mxu0 0.0
        %6667 = vmatpush1.xpose.msra.mxu0 0.0
        %6668 = vmatprep.subr.mxu0 0.0
        %6669 = vmatpush1.xpose.msra.mxu0 0.0
        %6670 = vmatprep.subr.mxu0 0.0
        %6671 = vmatpush1.xpose.msra.mxu0 0.0
        %6672 = vmatprep.subr.mxu0 0.0
        %6673 = vmatpush1.xpose.msra.mxu0 0.0
        %6674 = vmatprep.subr.mxu0 0.0
        %6675 = vmatpush1.xpose.msra.mxu0 0.0
        %6676 = vmatprep.subr.mxu0 0.0
        %6677 = vmatpush1.xpose.msra.mxu0 0.0
        %6678 = vmatprep.subr.mxu0 0.0
        %6679 = vmatpush1.xpose.msra.mxu0 0.0
        %6680 = vmatprep.subr.mxu0 0.0
        %6681 = vmatpush1.xpose.msra.mxu0 0.0
        %6682 = vmatprep.subr.mxu0 0.0
        %6683 = vmatpush1.xpose.msra.mxu0 0.0
        %6684 = vmatprep.subr.mxu0 0.0
        %6685 = vmatpush1.xpose.msra.mxu0 0.0
        %6686 = vmatprep.subr.mxu0 0.0
        %6687 = vmatpush1.xpose.msra.mxu0 0.0
        %6688 = vmatprep.subr.mxu0 0.0
        %6689 = vmatpush1.xpose.msra.mxu0 0.0
        %6690 = vmatprep.subr.mxu0 0.0
        %6691 = vmatpush1.xpose.msra.mxu0 0.0
        %6692 = vmatprep.subr.mxu0 0.0
        %6693 = vmatpush1.xpose.msra.mxu0 0.0
        %6694 = vmatprep.subr.mxu0 0.0
        %6695 = vmatpush1.xpose.msra.mxu0 0.0
        %6696 = vmatprep.subr.mxu0 0.0
        %6697 = vmatpush1.xpose.msra.mxu0 0.0
        %6698 = vmatprep.subr.mxu0 0.0
        %6699 = vmatpush1.xpose.msra.mxu0 0.0
        %6700 = vmatprep.subr.mxu0 0.0
        %6701 = vmatpush1.xpose.msra.mxu0 0.0
        %6702 = vmatprep.subr.mxu0 0.0
        %6703 = vmatpush1.xpose.msra.mxu0 0.0
        %6704 = vmatprep.subr.mxu0 0.0
        %6705 = vmatpush1.xpose.msra.mxu0 0.0
        %6706 = vmatprep.mubr.f32.mxu0 0.0
        %6707 = vmatmul.mubr.f32.gmra.mrb[0].mxu0 %v6418
        %v6708 = vpop.f32.mrb[0].mxu0
        %v6709 = vadd.f32 0.0, %v6708
        %v6710 = vpop.f32.mrb[0].mxu0
        %6711 = vdwg.mxu0
        %v6712 = vmul.f32 %v2856, %v6709
        %v6713 = vadd.f32 %v6641, %v6712
        %6714 = vmatprep.subr.mxu0 0.0
        %6715 = vmatpush1.xpose.msra.mxu0 %v6568
        %6716 = vmatprep.subr.mxu0 0.0
        %6717 = vmatpush1.xpose.msra.mxu0 0.0
        %6718 = vmatprep.subr.mxu0 0.0
        %6719 = vmatpush1.xpose.msra.mxu0 0.0
        %6720 = vmatprep.subr.mxu0 0.0
        %6721 = vmatpush1.xpose.msra.mxu0 0.0
        %6722 = vmatprep.subr.mxu0 0.0
        %6723 = vmatpush1.xpose.msra.mxu0 0.0
        %6724 = vmatprep.subr.mxu0 0.0
        %6725 = vmatpush1.xpose.msra.mxu0 0.0
        %6726 = vmatprep.subr.mxu0 0.0
        %6727 = vmatpush1.xpose.msra.mxu0 0.0
        %6728 = vmatprep.subr.mxu0 0.0
        %6729 = vmatpush1.xpose.msra.mxu0 0.0
        %6730 = vmatprep.subr.mxu0 0.0
        %6731 = vmatpush1.xpose.msra.mxu0 0.0
        %6732 = vmatprep.subr.mxu0 0.0
        %6733 = vmatpush1.xpose.msra.mxu0 0.0
        %6734 = vmatprep.subr.mxu0 0.0
        %6735 = vmatpush1.xpose.msra.mxu0 0.0
        %6736 = vmatprep.subr.mxu0 0.0
        %6737 = vmatpush1.xpose.msra.mxu0 0.0
        %6738 = vmatprep.subr.mxu0 0.0
        %6739 = vmatpush1.xpose.msra.mxu0 0.0
        %6740 = vmatprep.subr.mxu0 0.0
        %6741 = vmatpush1.xpose.msra.mxu0 0.0
        %6742 = vmatprep.subr.mxu0 0.0
        %6743 = vmatpush1.xpose.msra.mxu0 0.0
        %6744 = vmatprep.subr.mxu0 0.0
        %6745 = vmatpush1.xpose.msra.mxu0 0.0
        %6746 = vmatprep.subr.mxu0 0.0
        %6747 = vmatpush1.xpose.msra.mxu0 0.0
        %6748 = vmatprep.subr.mxu0 0.0
        %6749 = vmatpush1.xpose.msra.mxu0 0.0
        %6750 = vmatprep.subr.mxu0 0.0
        %6751 = vmatpush1.xpose.msra.mxu0 0.0
        %6752 = vmatprep.subr.mxu0 0.0
        %6753 = vmatpush1.xpose.msra.mxu0 0.0
        %6754 = vmatprep.subr.mxu0 0.0
        %6755 = vmatpush1.xpose.msra.mxu0 0.0
        %6756 = vmatprep.subr.mxu0 0.0
        %6757 = vmatpush1.xpose.msra.mxu0 0.0
        %6758 = vmatprep.subr.mxu0 0.0
        %6759 = vmatpush1.xpose.msra.mxu0 0.0
        %6760 = vmatprep.subr.mxu0 0.0
        %6761 = vmatpush1.xpose.msra.mxu0 0.0
        %6762 = vmatprep.subr.mxu0 0.0
        %6763 = vmatpush1.xpose.msra.mxu0 0.0
        %6764 = vmatprep.subr.mxu0 0.0
        %6765 = vmatpush1.xpose.msra.mxu0 0.0
        %6766 = vmatprep.subr.mxu0 0.0
        %6767 = vmatpush1.xpose.msra.mxu0 0.0
        %6768 = vmatprep.subr.mxu0 0.0
        %6769 = vmatpush1.xpose.msra.mxu0 0.0
        %6770 = vmatprep.subr.mxu0 0.0
        %6771 = vmatpush1.xpose.msra.mxu0 0.0
        %6772 = vmatprep.subr.mxu0 0.0
        %6773 = vmatpush1.xpose.msra.mxu0 0.0
        %6774 = vmatprep.subr.mxu0 0.0
        %6775 = vmatpush1.xpose.msra.mxu0 0.0
        %6776 = vmatprep.subr.mxu0 0.0
        %6777 = vmatpush1.xpose.msra.mxu0 0.0
        %6778 = vmatprep.mubr.f32.mxu0 0.0
        %6779 = vmatmul.mubr.f32.gmra.mrb[0].mxu0 %v6493
        %v6780 = vpop.f32.mrb[0].mxu0
        %v6781 = vadd.f32 0.0, %v6780
        %v6782 = vpop.f32.mrb[0].mxu0
        %6783 = vdwg.mxu0
        %v6784 = vmul.f32 %v2929, %v6781
        %v6785 = vadd.f32 %v6713, %v6784
        %v6787 = vsel %vm2230, %v6255, 0
        %6789 = vmatprep.subr.mxu0 0.0
        %6790 = vmatpush1.xpose.msra.mxu0 %v6787
        %6791 = vmatprep.subr.mxu0 0.0
        %6792 = vmatpush1.xpose.msra.mxu0 0.0
        %6793 = vmatprep.subr.mxu0 0.0
        %6794 = vmatpush1.xpose.msra.mxu0 0.0
        %6795 = vmatprep.subr.mxu0 0.0
        %6796 = vmatpush1.xpose.msra.mxu0 0.0
        %6797 = vmatprep.subr.mxu0 0.0
        %6798 = vmatpush1.xpose.msra.mxu0 0.0
        %6799 = vmatprep.subr.mxu0 0.0
        %6800 = vmatpush1.xpose.msra.mxu0 0.0
        %6801 = vmatprep.subr.mxu0 0.0
        %6802 = vmatpush1.xpose.msra.mxu0 0.0
        %6803 = vmatprep.subr.mxu0 0.0
        %6804 = vmatpush1.xpose.msra.mxu0 0.0
        %6805 = vmatprep.subr.mxu0 0.0
        %6806 = vmatpush1.xpose.msra.mxu0 0.0
        %6807 = vmatprep.subr.mxu0 0.0
        %6808 = vmatpush1.xpose.msra.mxu0 0.0
        %6809 = vmatprep.subr.mxu0 0.0
        %6810 = vmatpush1.xpose.msra.mxu0 0.0
        %6811 = vmatprep.subr.mxu0 0.0
        %6812 = vmatpush1.xpose.msra.mxu0 0.0
        %6813 = vmatprep.subr.mxu0 0.0
        %6814 = vmatpush1.xpose.msra.mxu0 0.0
        %6815 = vmatprep.subr.mxu0 0.0
        %6816 = vmatpush1.xpose.msra.mxu0 0.0
        %6817 = vmatprep.subr.mxu0 0.0
        %6818 = vmatpush1.xpose.msra.mxu0 0.0
        %6819 = vmatprep.subr.mxu0 0.0
        %6820 = vmatpush1.xpose.msra.mxu0 0.0
        %6821 = vmatprep.subr.mxu0 0.0
        %6822 = vmatpush1.xpose.msra.mxu0 0.0
        %6823 = vmatprep.subr.mxu0 0.0
        %6824 = vmatpush1.xpose.msra.mxu0 0.0
        %6825 = vmatprep.subr.mxu0 0.0
        %6826 = vmatpush1.xpose.msra.mxu0 0.0
        %6827 = vmatprep.subr.mxu0 0.0
        %6828 = vmatpush1.xpose.msra.mxu0 0.0
        %6829 = vmatprep.subr.mxu0 0.0
        %6830 = vmatpush1.xpose.msra.mxu0 0.0
        %6831 = vmatprep.subr.mxu0 0.0
        %6832 = vmatpush1.xpose.msra.mxu0 0.0
        %6833 = vmatprep.subr.mxu0 0.0
        %6834 = vmatpush1.xpose.msra.mxu0 0.0
        %6835 = vmatprep.subr.mxu0 0.0
        %6836 = vmatpush1.xpose.msra.mxu0 0.0
        %6837 = vmatprep.subr.mxu0 0.0
        %6838 = vmatpush1.xpose.msra.mxu0 0.0
        %6839 = vmatprep.subr.mxu0 0.0
        %6840 = vmatpush1.xpose.msra.mxu0 0.0
        %6841 = vmatprep.subr.mxu0 0.0
        %6842 = vmatpush1.xpose.msra.mxu0 0.0
        %6843 = vmatprep.subr.mxu0 0.0
        %6844 = vmatpush1.xpose.msra.mxu0 0.0
        %6845 = vmatprep.subr.mxu0 0.0
        %6846 = vmatpush1.xpose.msra.mxu0 0.0
        %6847 = vmatprep.subr.mxu0 0.0
        %6848 = vmatpush1.xpose.msra.mxu0 0.0
        %6849 = vmatprep.subr.mxu0 0.0
        %6850 = vmatpush1.xpose.msra.mxu0 0.0
        %6851 = vmatprep.subr.mxu0 0.0
        %6852 = vmatpush1.xpose.msra.mxu0 0.0
        %6853 = vmatprep.mubr.f32.mxu0 0.0
        %6854 = vmatmul.mubr.f32.gmra.mrb[0].mxu0 %v6265
        %v6855 = vpop.f32.mrb[0].mxu0
        %v6856 = vadd.f32 0.0, %v6855
        %v6857 = vpop.f32.mrb[0].mxu0
        %6858 = vdwg.mxu0
        %v6859 = vmul.f32 %v3005, %v6856
        %v6860 = vadd.f32 %v6785, %v6859
        %6861 = vmatprep.subr.mxu0 0.0
        %6862 = vmatpush1.xpose.msra.mxu0 %v6787
        %6863 = vmatprep.subr.mxu0 0.0
        %6864 = vmatpush1.xpose.msra.mxu0 0.0
        %6865 = vmatprep.subr.mxu0 0.0
        %6866 = vmatpush1.xpose.msra.mxu0 0.0
        %6867 = vmatprep.subr.mxu0 0.0
        %6868 = vmatpush1.xpose.msra.mxu0 0.0
        %6869 = vmatprep.subr.mxu0 0.0
        %6870 = vmatpush1.xpose.msra.mxu0 0.0
        %6871 = vmatprep.subr.mxu0 0.0
        %6872 = vmatpush1.xpose.msra.mxu0 0.0
        %6873 = vmatprep.subr.mxu0 0.0
        %6874 = vmatpush1.xpose.msra.mxu0 0.0
        %6875 = vmatprep.subr.mxu0 0.0
        %6876 = vmatpush1.xpose.msra.mxu0 0.0
        %6877 = vmatprep.subr.mxu0 0.0
        %6878 = vmatpush1.xpose.msra.mxu0 0.0
        %6879 = vmatprep.subr.mxu0 0.0
        %6880 = vmatpush1.xpose.msra.mxu0 0.0
        %6881 = vmatprep.subr.mxu0 0.0
        %6882 = vmatpush1.xpose.msra.mxu0 0.0
        %6883 = vmatprep.subr.mxu0 0.0
        %6884 = vmatpush1.xpose.msra.mxu0 0.0
        %6885 = vmatprep.subr.mxu0 0.0
        %6886 = vmatpush1.xpose.msra.mxu0 0.0
        %6887 = vmatprep.subr.mxu0 0.0
        %6888 = vmatpush1.xpose.msra.mxu0 0.0
        %6889 = vmatprep.subr.mxu0 0.0
        %6890 = vmatpush1.xpose.msra.mxu0 0.0
        %6891 = vmatprep.subr.mxu0 0.0
        %6892 = vmatpush1.xpose.msra.mxu0 0.0
        %6893 = vmatprep.subr.mxu0 0.0
        %6894 = vmatpush1.xpose.msra.mxu0 0.0
        %6895 = vmatprep.subr.mxu0 0.0
        %6896 = vmatpush1.xpose.msra.mxu0 0.0
        %6897 = vmatprep.subr.mxu0 0.0
        %6898 = vmatpush1.xpose.msra.mxu0 0.0
        %6899 = vmatprep.subr.mxu0 0.0
        %6900 = vmatpush1.xpose.msra.mxu0 0.0
        %6901 = vmatprep.subr.mxu0 0.0
        %6902 = vmatpush1.xpose.msra.mxu0 0.0
        %6903 = vmatprep.subr.mxu0 0.0
        %6904 = vmatpush1.xpose.msra.mxu0 0.0
        %6905 = vmatprep.subr.mxu0 0.0
        %6906 = vmatpush1.xpose.msra.mxu0 0.0
        %6907 = vmatprep.subr.mxu0 0.0
        %6908 = vmatpush1.xpose.msra.mxu0 0.0
        %6909 = vmatprep.subr.mxu0 0.0
        %6910 = vmatpush1.xpose.msra.mxu0 0.0
        %6911 = vmatprep.subr.mxu0 0.0
        %6912 = vmatpush1.xpose.msra.mxu0 0.0
        %6913 = vmatprep.subr.mxu0 0.0
        %6914 = vmatpush1.xpose.msra.mxu0 0.0
        %6915 = vmatprep.subr.mxu0 0.0
        %6916 = vmatpush1.xpose.msra.mxu0 0.0
        %6917 = vmatprep.subr.mxu0 0.0
        %6918 = vmatpush1.xpose.msra.mxu0 0.0
        %6919 = vmatprep.subr.mxu0 0.0
        %6920 = vmatpush1.xpose.msra.mxu0 0.0
        %6921 = vmatprep.subr.mxu0 0.0
        %6922 = vmatpush1.xpose.msra.mxu0 0.0
        %6923 = vmatprep.subr.mxu0 0.0
        %6924 = vmatpush1.xpose.msra.mxu0 0.0
        %6925 = vmatprep.mubr.f32.mxu0 0.0
        %6926 = vmatmul.mubr.f32.gmra.mrb[0].mxu0 %v6418
        %v6927 = vpop.f32.mrb[0].mxu0
        %v6928 = vadd.f32 0.0, %v6927
        %v6929 = vpop.f32.mrb[0].mxu0
        %6930 = vdwg.mxu0
        %v6931 = vmul.f32 %v3078, %v6928
        %v6932 = vadd.f32 %v6860, %v6931
        %6933 = vmatprep.subr.mxu0 0.0
        %6934 = vmatpush1.xpose.msra.mxu0 %v6787
        %6935 = vmatprep.subr.mxu0 0.0
        %6936 = vmatpush1.xpose.msra.mxu0 0.0
        %6937 = vmatprep.subr.mxu0 0.0
        %6938 = vmatpush1.xpose.msra.mxu0 0.0
        %6939 = vmatprep.subr.mxu0 0.0
        %6940 = vmatpush1.xpose.msra.mxu0 0.0
        %6941 = vmatprep.subr.mxu0 0.0
        %6942 = vmatpush1.xpose.msra.mxu0 0.0
        %6943 = vmatprep.subr.mxu0 0.0
        %6944 = vmatpush1.xpose.msra.mxu0 0.0
        %6945 = vmatprep.subr.mxu0 0.0
        %6946 = vmatpush1.xpose.msra.mxu0 0.0
        %6947 = vmatprep.subr.mxu0 0.0
        %6948 = vmatpush1.xpose.msra.mxu0 0.0
        %6949 = vmatprep.subr.mxu0 0.0
        %6950 = vmatpush1.xpose.msra.mxu0 0.0
        %6951 = vmatprep.subr.mxu0 0.0
        %6952 = vmatpush1.xpose.msra.mxu0 0.0
        %6953 = vmatprep.subr.mxu0 0.0
        %6954 = vmatpush1.xpose.msra.mxu0 0.0
        %6955 = vmatprep.subr.mxu0 0.0
        %6956 = vmatpush1.xpose.msra.mxu0 0.0
        %6957 = vmatprep.subr.mxu0 0.0
        %6958 = vmatpush1.xpose.msra.mxu0 0.0
        %6959 = vmatprep.subr.mxu0 0.0
        %6960 = vmatpush1.xpose.msra.mxu0 0.0
        %6961 = vmatprep.subr.mxu0 0.0
        %6962 = vmatpush1.xpose.msra.mxu0 0.0
        %6963 = vmatprep.subr.mxu0 0.0
        %6964 = vmatpush1.xpose.msra.mxu0 0.0
        %6965 = vmatprep.subr.mxu0 0.0
        %6966 = vmatpush1.xpose.msra.mxu0 0.0
        %6967 = vmatprep.subr.mxu0 0.0
        %6968 = vmatpush1.xpose.msra.mxu0 0.0
        %6969 = vmatprep.subr.mxu0 0.0
        %6970 = vmatpush1.xpose.msra.mxu0 0.0
        %6971 = vmatprep.subr.mxu0 0.0
        %6972 = vmatpush1.xpose.msra.mxu0 0.0
        %6973 = vmatprep.subr.mxu0 0.0
        %6974 = vmatpush1.xpose.msra.mxu0 0.0
        %6975 = vmatprep.subr.mxu0 0.0
        %6976 = vmatpush1.xpose.msra.mxu0 0.0
        %6977 = vmatprep.subr.mxu0 0.0
        %6978 = vmatpush1.xpose.msra.mxu0 0.0
        %6979 = vmatprep.subr.mxu0 0.0
        %6980 = vmatpush1.xpose.msra.mxu0 0.0
        %6981 = vmatprep.subr.mxu0 0.0
        %6982 = vmatpush1.xpose.msra.mxu0 0.0
        %6983 = vmatprep.subr.mxu0 0.0
        %6984 = vmatpush1.xpose.msra.mxu0 0.0
        %6985 = vmatprep.subr.mxu0 0.0
        %6986 = vmatpush1.xpose.msra.mxu0 0.0
        %6987 = vmatprep.subr.mxu0 0.0
        %6988 = vmatpush1.xpose.msra.mxu0 0.0
        %6989 = vmatprep.subr.mxu0 0.0
        %6990 = vmatpush1.xpose.msra.mxu0 0.0
        %6991 = vmatprep.subr.mxu0 0.0
        %6992 = vmatpush1.xpose.msra.mxu0 0.0
        %6993 = vmatprep.subr.mxu0 0.0
        %6994 = vmatpush1.xpose.msra.mxu0 0.0
        %6995 = vmatprep.subr.mxu0 0.0
        %6996 = vmatpush1.xpose.msra.mxu0 0.0
        %6997 = vmatprep.mubr.f32.mxu0 0.0
        %6998 = vmatmul.mubr.f32.gmra.mrb[0].mxu0 %v6493
        %v6999 = vpop.f32.mrb[0].mxu0
        %v7000 = vadd.f32 0.0, %v6999
        %v7001 = vpop.f32.mrb[0].mxu0
        %7002 = vdwg.mxu0
        %v7003 = vmul.f32 %v3151, %v7000
        %v7004 = vadd.f32 %v6932, %v7003
        %v7005 = vmul.f32 %v7004, -0.35355338
        %v7006 = vsel %vm3155, %v7005, -1e+30
        %v7007 = vsel %vm1977, %v7006, -inf
        %7008 = vmax.xlane.f32.xlu0 %v7007
        %v7009 = vpop.xlane.xlu0 %7008
        %v7010 = vsub.f32 %v7006, %v7009
        %v7011 = vmul.f32 %v7010, 1.442695
        %v7012 = vpow.pop %v7011
        %v7013 = vsel %vm1977, %v7012, 0.0
        %7014 = vadd.xlane.f32.xlu0 %v7013
        %v7015 = vpop.xlane.xlu0 %7014
        %v7016 = vrcp.pop %v7015
        %v7017 = vmul.f32 %v7012, %v7016
        %s7018 = scalar_lea.vmem %s1180, 24 [#allocation17]
        %7019 = vst.msk [vmem:[%s7018] sm:$0xff] %vm1977, %v7017
        %v7020 = vpack.c.bf16 %v7017, %v7017
        %7021 = vrot.lane.b32.xlu0 %v3170, 104
        %v7022 = vpop.permute.xlu0 %7021
        %v7024 = vsel %vm1977, %v7020, 0
        %v7027 = vsel %vm3174, %v7022, 0
        %7029 = vmatprep.subr.bf16.mxu0 0
        %7030 = vmatpush1.bf16.msra.mxu0 %v7027
        %7031 = vmatprep.subr.bf16.mxu0 0
        %7032 = vmatpush1.bf16.msra.mxu0 0
        %7033 = vmatprep.subr.bf16.mxu0 0
        %7034 = vmatpush1.bf16.msra.mxu0 0
        %7035 = vmatprep.subr.bf16.mxu0 0
        %7036 = vmatpush1.bf16.msra.mxu0 0
        %7037 = vmatprep.subr.bf16.mxu0 0
        %7038 = vmatpush1.bf16.msra.mxu0 0
        %7039 = vmatprep.subr.bf16.mxu0 0
        %7040 = vmatpush1.bf16.msra.mxu0 0
        %7041 = vmatprep.subr.bf16.mxu0 0
        %7042 = vmatpush1.bf16.msra.mxu0 0
        %7043 = vmatprep.subr.bf16.mxu0 0
        %7044 = vmatpush1.bf16.msra.mxu0 0
        %7045 = vmatprep.subr.bf16.mxu0 0
        %7046 = vmatpush1.bf16.msra.mxu0 0
        %7047 = vmatprep.subr.bf16.mxu0 0
        %7048 = vmatpush1.bf16.msra.mxu0 0
        %7049 = vmatprep.subr.bf16.mxu0 0
        %7050 = vmatpush1.bf16.msra.mxu0 0
        %7051 = vmatprep.subr.bf16.mxu0 0
        %7052 = vmatpush1.bf16.msra.mxu0 0
        %7053 = vmatprep.subr.bf16.mxu0 0
        %7054 = vmatpush1.bf16.msra.mxu0 0
        %7055 = vmatprep.subr.bf16.mxu0 0
        %7056 = vmatpush1.bf16.msra.mxu0 0
        %7057 = vmatprep.subr.bf16.mxu0 0
        %7058 = vmatpush1.bf16.msra.mxu0 0
        %7059 = vmatprep.subr.bf16.mxu0 0
        %7060 = vmatpush1.bf16.msra.mxu0 0
        %7061 = vmatprep.mubr.bf16.mxu0 0
        %7062 = vmatmul.mubr.bf16.gmra.mrb[0].mxu0 %v7024
        %v7063 = vpop.f32.mrb[0].mxu0
        %v7064 = vadd.f32 0.0, %v7063
        %v7065 = vpop.f32.mrb[0].mxu0
        %v7066 = vpop.f32.mrb[0].mxu0
        %v7067 = vpop.f32.mrb[0].mxu0
        %7068 = vdwg.mxu0
        %v7069 = vmul.f32 %v7017, %v7017
        %v7070 = vpack.c.bf16 %v7069, %v7069
        %7071 = vrot.lane.b32.xlu0 %v3220, 104
        %v7072 = vpop.permute.xlu0 %7071
        %v7074 = vsel %vm1977, %v7070, 0
        %v7077 = vsel %vm3174, %v7072, 0
        %7079 = vmatprep.subr.bf16.mxu0 0
        %7080 = vmatpush1.bf16.msra.mxu0 %v7077
        %7081 = vmatprep.subr.bf16.mxu0 0
        %7082 = vmatpush1.bf16.msra.mxu0 0
        %7083 = vmatprep.subr.bf16.mxu0 0
        %7084 = vmatpush1.bf16.msra.mxu0 0
        %7085 = vmatprep.subr.bf16.mxu0 0
        %7086 = vmatpush1.bf16.msra.mxu0 0
        %7087 = vmatprep.subr.bf16.mxu0 0
        %7088 = vmatpush1.bf16.msra.mxu0 0
        %7089 = vmatprep.subr.bf16.mxu0 0
        %7090 = vmatpush1.bf16.msra.mxu0 0
        %7091 = vmatprep.subr.bf16.mxu0 0
        %7092 = vmatpush1.bf16.msra.mxu0 0
        %7093 = vmatprep.subr.bf16.mxu0 0
        %7094 = vmatpush1.bf16.msra.mxu0 0
        %7095 = vmatprep.subr.bf16.mxu0 0
        %7096 = vmatpush1.bf16.msra.mxu0 0
        %7097 = vmatprep.subr.bf16.mxu0 0
        %7098 = vmatpush1.bf16.msra.mxu0 0
        %7099 = vmatprep.subr.bf16.mxu0 0
        %7100 = vmatpush1.bf16.msra.mxu0 0
        %7101 = vmatprep.subr.bf16.mxu0 0
        %7102 = vmatpush1.bf16.msra.mxu0 0
        %7103 = vmatprep.subr.bf16.mxu0 0
        %7104 = vmatpush1.bf16.msra.mxu0 0
        %7105 = vmatprep.subr.bf16.mxu0 0
        %7106 = vmatpush1.bf16.msra.mxu0 0
        %7107 = vmatprep.subr.bf16.mxu0 0
        %7108 = vmatpush1.bf16.msra.mxu0 0
        %7109 = vmatprep.subr.bf16.mxu0 0
        %7110 = vmatpush1.bf16.msra.mxu0 0
        %7111 = vmatprep.mubr.bf16.mxu0 0
        %7112 = vmatmul.mubr.bf16.gmra.mrb[0].mxu0 %v7074
        %v7113 = vpop.f32.mrb[0].mxu0
        %v7114 = vadd.f32 0.0, %v7113
        %v7115 = vpop.f32.mrb[0].mxu0
        %v7116 = vpop.f32.mrb[0].mxu0
        %v7117 = vpop.f32.mrb[0].mxu0
        %7118 = vdwg.mxu0
        %7120 = vrot.lane.b32.xlu0 %v4486, 8
        %v7121 = vpop.permute.xlu0 %7120
        %7124 = vrot.lane.b32.xlu0 %v5771, 16
        %v7125 = vpop.permute.xlu0 %7124
        %7128 = vrot.lane.b32.xlu0 %v7064, 24
        %v7129 = vpop.permute.xlu0 %7128
        %v7131 = vsel %vm1977, %v3213, %v7121
        %v7132 = vsel %vm2230, %v7131, %v7125
        %vm7133 = vcmask 195584
        %v7134 = vsel %vm7133, %v7132, %v7129
        %7136 = vrot.lane.b32.xlu0 %v4537, 8
        %v7137 = vpop.permute.xlu0 %7136
        %7140 = vrot.lane.b32.xlu0 %v5821, 16
        %v7141 = vpop.permute.xlu0 %7140
        %7144 = vrot.lane.b32.xlu0 %v7114, 24
        %v7145 = vpop.permute.xlu0 %7144
        %v7147 = vsel %vm1977, %v3262, %v7137
        %v7148 = vsel %vm2230, %v7147, %v7141
        %v7149 = vsel %vm7133, %v7148, %v7145
        %v7150 = vpack.c.bf16 %v7134, %v7134
        %v7151 = vld [vmem:[%s20] sm:$0xf]
        %v7152 = vld [vmem:[%s20 + $0x4] sm:$0xf]
        %v7153 = vld [vmem:[%s20 + $0x8] sm:$0xf]
        %v7154 = vld [vmem:[%s20 + $0xc] sm:$0xf]
        %v7155 = vld [vmem:[%s21] sm:$0x1]
        %v7157 = vlaneseq
        %v7158 = vshrl.u32 %v7157, 7
        %v7159 = vsub.s32 0, %v7158
        %v7160 = vrot.slane %v7155, %v7159
        %v7166 = vunpack.c.l.b16 %v7151
        %v7167 = vunpack.c.l.b16 %v7152
        %v7168 = vunpack.c.l.b16 %v7153
        %v7169 = vunpack.c.l.b16 %v7154
        %v7170 = vpack.c.b16 %v7167, %v7166
        %v7171 = vpack.c.b16 %v7169, %v7168
        %v7175 = vsel %vm1246, %v7150, 0
        %7177 = vmatprep.subr.bf16.mxu0 0
        %7178 = vmatpush1.bf16.msra.mxu0 %v7170
        %7179 = vmatprep.subr.bf16.mxu0 0
        %7180 = vmatpush1.bf16.msra.mxu0 %v7171
        %7181 = vmatprep.subr.bf16.mxu0 0
        %7182 = vmatpush1.bf16.msra.mxu0 0
        %7183 = vmatprep.subr.bf16.mxu0 0
        %7184 = vmatpush1.bf16.msra.mxu0 0
        %7185 = vmatprep.subr.bf16.mxu0 0
        %7186 = vmatpush1.bf16.msra.mxu0 0
        %7187 = vmatprep.subr.bf16.mxu0 0
        %7188 = vmatpush1.bf16.msra.mxu0 0
        %7189 = vmatprep.subr.bf16.mxu0 0
        %7190 = vmatpush1.bf16.msra.mxu0 0
        %7191 = vmatprep.subr.bf16.mxu0 0
        %7192 = vmatpush1.bf16.msra.mxu0 0
        %7193 = vmatprep.subr.bf16.mxu0 0
        %7194 = vmatpush1.bf16.msra.mxu0 0
        %7195 = vmatprep.subr.bf16.mxu0 0
        %7196 = vmatpush1.bf16.msra.mxu0 0
        %7197 = vmatprep.subr.bf16.mxu0 0
        %7198 = vmatpush1.bf16.msra.mxu0 0
        %7199 = vmatprep.subr.bf16.mxu0 0
        %7200 = vmatpush1.bf16.msra.mxu0 0
        %7201 = vmatprep.subr.bf16.mxu0 0
        %7202 = vmatpush1.bf16.msra.mxu0 0
        %7203 = vmatprep.subr.bf16.mxu0 0
        %7204 = vmatpush1.bf16.msra.mxu0 0
        %7205 = vmatprep.subr.bf16.mxu0 0
        %7206 = vmatpush1.bf16.msra.mxu0 0
        %7207 = vmatprep.subr.bf16.mxu0 0
        %7208 = vmatpush1.bf16.msra.mxu0 0
        %7209 = vmatprep.mubr.bf16.mxu0 0
        %7210 = vmatmul.mubr.bf16.gmra.mrb[0].mxu0 %v7175
        %v7211 = vpop.f32.mrb[0].mxu0
        %v7212 = vadd.f32 %v7160, %v7211
        %v7213 = vpop.f32.mrb[0].mxu0
        %v7214 = vpop.f32.mrb[0].mxu0
        %v7215 = vpop.f32.mrb[0].mxu0
        %7216 = vdwg.mxu0
        %v7217 = vpack.c.bf16 %v7149, %v7149
        %v7218 = vld [vmem:[%s22] sm:$0xf]
        %v7219 = vld [vmem:[%s22 + $0x4] sm:$0xf]
        %v7220 = vld [vmem:[%s22 + $0x8] sm:$0xf]
        %v7221 = vld [vmem:[%s22 + $0xc] sm:$0xf]
        %v7222 = vld [vmem:[%s23] sm:$0x1]
        %v7224 = vlaneseq
        %v7225 = vshrl.u32 %v7224, 7
        %v7226 = vsub.s32 0, %v7225
        %v7227 = vrot.slane %v7222, %v7226
        %v7233 = vunpack.c.l.b16 %v7218
        %v7234 = vunpack.c.l.b16 %v7219
        %v7235 = vunpack.c.l.b16 %v7220
        %v7236 = vunpack.c.l.b16 %v7221
        %v7237 = vpack.c.b16 %v7234, %v7233
        %v7238 = vpack.c.b16 %v7236, %v7235
        %v7242 = vsel %vm1246, %v7217, 0
        %7244 = vmatprep.subr.bf16.mxu0 0
        %7245 = vmatpush1.bf16.msra.mxu0 %v7237
        %7246 = vmatprep.subr.bf16.mxu0 0
        %7247 = vmatpush1.bf16.msra.mxu0 %v7238
        %7248 = vmatprep.subr.bf16.mxu0 0
        %7249 = vmatpush1.bf16.msra.mxu0 0
        %7250 = vmatprep.subr.bf16.mxu0 0
        %7251 = vmatpush1.bf16.msra.mxu0 0
        %7252 = vmatprep.subr.bf16.mxu0 0
        %7253 = vmatpush1.bf16.msra.mxu0 0
        %7254 = vmatprep.subr.bf16.mxu0 0
        %7255 = vmatpush1.bf16.msra.mxu0 0
        %7256 = vmatprep.subr.bf16.mxu0 0
        %7257 = vmatpush1.bf16.msra.mxu0 0
        %7258 = vmatprep.subr.bf16.mxu0 0
        %7259 = vmatpush1.bf16.msra.mxu0 0
        %7260 = vmatprep.subr.bf16.mxu0 0
        %7261 = vmatpush1.bf16.msra.mxu0 0
        %7262 = vmatprep.subr.bf16.mxu0 0
        %7263 = vmatpush1.bf16.msra.mxu0 0
        %7264 = vmatprep.subr.bf16.mxu0 0
        %7265 = vmatpush1.bf16.msra.mxu0 0
        %7266 = vmatprep.subr.bf16.mxu0 0
        %7267 = vmatpush1.bf16.msra.mxu0 0
        %7268 = vmatprep.subr.bf16.mxu0 0
        %7269 = vmatpush1.bf16.msra.mxu0 0
        %7270 = vmatprep.subr.bf16.mxu0 0
        %7271 = vmatpush1.bf16.msra.mxu0 0
        %7272 = vmatprep.subr.bf16.mxu0 0
        %7273 = vmatpush1.bf16.msra.mxu0 0
        %7274 = vmatprep.subr.bf16.mxu0 0
        %7275 = vmatpush1.bf16.msra.mxu0 0
        %7276 = vmatprep.mubr.bf16.mxu0 0
        %7277 = vmatmul.mubr.bf16.gmra.mrb[0].mxu0 %v7242
        %v7278 = vpop.f32.mrb[0].mxu0
        %v7279 = vadd.f32 %v7227, %v7278
        %v7280 = vpop.f32.mrb[0].mxu0
        %v7281 = vpop.f32.mrb[0].mxu0
        %v7282 = vpop.f32.mrb[0].mxu0
        %7283 = vdwg.mxu0
        %v7284 = vld [vmem:[%s24] sm:$0x1]
        %v7285 = vld [vmem:[%s25] sm:$0x1]
        %v7286 = vadd.f32 %v7212, %v1218
        %v7287 = vsel %vm1246, %v7286, 0.0
        %7288 = vadd.xlane.f32.xlu0 %v7287
        %v7289 = vpop.xlane.xlu0 %7288
        %v7290 = vrcp.pop 32.0
        %v7291 = vmul.f32 %v7289, %v7290
        %v7292 = vsub.f32 %v7286, %v7291
        %v7293 = vmul.f32 %v7292, %v7292
        %v7294 = vsel %vm1246, %v7293, 0.0
        %7295 = vadd.xlane.f32.xlu0 %v7294
        %v7296 = vpop.xlane.xlu0 %7295
        %v7297 = vmul.f32 %v7296, %v7290
        %v7299 = vlaneseq
        %v7300 = vshrl.u32 %v7299, 7
        %v7301 = vsub.s32 0, %v7300
        %v7302 = vrot.slane %v7284, %v7301
        %v7304 = vmul.f32 %v7302, %v7292
        %v7305 = vadd.f32 %v7297, 1e-12
        %v7306 = vrsqrt.pop %v7305
        %v7307 = vmul.f32 %v7305, %v7306
        %vm7308 = vcmp.eq.f32.partialorder %v7305, inf
        %v7309 = vsel %vm7308, %v7305, %v7307
        %vm7310 = vcmp.eq.f32.partialorder %v7305, 0.0
        %v7311 = vand.u32 %v7305, 2147483648
        %v7312 = vsel %vm7310, %v7311, %v7309
        %v7313 = vrcp.pop %v7312
        %v7314 = vmul.f32 %v7304, %v7313
        %v7316 = vlaneseq
        %v7317 = vshrl.u32 %v7316, 7
        %v7318 = vsub.s32 0, %v7317
        %v7319 = vrot.slane %v7285, %v7318
        %v7321 = vadd.f32 %v7314, %v7319
        %7322 = vst.msk [vmem:[%s1166] sm:$0xff] %vm1246, %v7321
        %v7323 = vadd.f32 %v7279, %v1219
        %v7324 = vsel %vm1246, %v7323, 0.0
        %7325 = vadd.xlane.f32.xlu0 %v7324
        %v7326 = vpop.xlane.xlu0 %7325
        %v7327 = vmul.f32 %v7326, %v7290
        %v7328 = vsub.f32 %v7323, %v7327
        %v7329 = vmul.f32 %v7328, %v7328
        %v7330 = vsel %vm1246, %v7329, 0.0
        %7331 = vadd.xlane.f32.xlu0 %v7330
        %v7332 = vpop.xlane.xlu0 %7331
        %v7333 = vmul.f32 %v7332, %v7290
        %v7334 = vmul.f32 %v7302, %v7328
        %v7335 = vadd.f32 %v7333, 1e-12
        %v7336 = vrsqrt.pop %v7335
        %v7337 = vmul.f32 %v7335, %v7336
        %vm7338 = vcmp.eq.f32.partialorder %v7335, inf
        %v7339 = vsel %vm7338, %v7335, %v7337
        %vm7340 = vcmp.eq.f32.partialorder %v7335, 0.0
        %v7341 = vand.u32 %v7335, 2147483648
        %v7342 = vsel %vm7340, %v7341, %v7339
        %v7343 = vrcp.pop %v7342
        %v7344 = vmul.f32 %v7334, %v7343
        %v7345 = vadd.f32 %v7344, %v7319
        %7346 = vst.msk [vmem:[%s1173] sm:$0xff] %vm1246, %v7345
        %s7347 = sand.u32 %s682, 1
        %s7348 = scalar_lea.sflag [#allocation4], %s7347
        %s7349 = sand.u32 %s682, 1
        %s7350 = smul.addr %s7349, 8
        %s7351 = scalar_lea.vmem [#allocation14], %s7350
        %s7352 = sand.u32 %s58, 1
        %s7353 = scalar_lea.sflag [#allocation16], %s7352
        %s7354 = sand.u32 %s708, 1
        %s7355 = smul.addr %s7354, 8
        %s7356 = scalar_lea.vmem [#allocation15], %s7355
        %s7357 = sand.u32 %s58, 1
        %s7358 = scalar_lea.sflag [#allocation16], %s7357
        %s7359 = sand.u32 %s734, 1
        %s7360 = smul.addr %s7359, 32
        %s7361 = scalar_lea.vmem [#allocation17], %s7360
        // Predicated region
        $region153: #{tpu_custom_call.1} parent=123 // pred_check
          %p7362 = pneg %p692
        $region154: #{tpu_custom_call.1} parent=123 // pred_check_branch
          %7364 = sbr.rel (%p7362) target = $region156
        $region155: #{tpu_custom_call.1} parent=123 // pred_region
          %s7366 = ssub.s32 128, 128
          %7367 = vsyncadd %s7348, %s7366
          %s7368 = smul.addr %s58, 128
          %s7369 = scalar_lea.hbm %s26, %s7368
          %s7371 = sshll.u32 %s7351, 4
          %s7372 = int_to_ptr.vmem [resolvable:$true] %s7371
          %7374 = dma.vmem_to_hbm [thread:$0]  %s7372, 128, %s7369, %s7348
        $region156: #{tpu_custom_call.1} parent=123 // pred_fallthru
          _
        // Predicated region
        $region157: #{tpu_custom_call.1} parent=123 // pred_check
          %p7375 = pneg %p718
        $region158: #{tpu_custom_call.1} parent=123 // pred_check_branch
          %7377 = sbr.rel (%p7375) target = $region160
        $region159: #{tpu_custom_call.1} parent=123 // pred_region
          %s7379 = ssub.s32 128, 128
          %7380 = vsyncadd %s7353, %s7379
          %s7381 = smul.addr %s58, 128
          %s7382 = scalar_lea.hbm %s27, %s7381
          %s7384 = sshll.u32 %s7356, 4
          %s7385 = int_to_ptr.vmem [resolvable:$true] %s7384
          %7387 = dma.vmem_to_hbm [thread:$0]  %s7385, 128, %s7382, %s7353
        $region160: #{tpu_custom_call.1} parent=123 // pred_fallthru
          _
        // Predicated region
        $region161: #{tpu_custom_call.1} parent=123 // pred_check
          %p7388 = pneg %p744
        $region162: #{tpu_custom_call.1} parent=123 // pred_check_branch
          %7390 = sbr.rel (%p7388) target = $region164
        $region163: #{tpu_custom_call.1} parent=123 // pred_region
          %s7392 = ssub.s32 512, 512
          %7393 = vsyncadd %s7358, %s7392
          %s7394 = smul.addr %s58, 4
          %s7395 = smul.addr %s7394, 128
          %s7396 = scalar_lea.hbm %s28, %s7395
          %s7397 = sshll.u32 %s7361, 4
          %s7398 = int_to_ptr.vmem [resolvable:$true] %s7397
          %7403 = dma.vmem_to_hbm [thread:$0]  %s7398, 512, %s7396, %s7358, 128, 128, 8
        $region164: #{tpu_custom_call.1} parent=123 // pred_fallthru
          _
      $region124: #{tpu_custom_call.1} parent=5 // pred_fallthru
        _
      %p7404 = scmp.le.s32.totalorder 2, %s53
      // Predicated region
      $region165: #{tpu_custom_call.1} parent=5 // pred_check
        %p7405 = pneg %p7404
      $region166: #{tpu_custom_call.1} parent=5 // pred_check_branch
        %7407 = sbr.rel (%p7405) target = $region168
      $region167: #{tpu_custom_call.1} parent=5 // pred_region
        %s7408 = ssub.s32 %s53, 2
        // Predicated region
        $region169: #{tpu_custom_call.1} parent=167 // pred_check
          %p7409 = pneg %p698
        $region170: #{tpu_custom_call.1} parent=167 // pred_check_branch
          %7411 = sbr.rel (%p7409) target = $region172
        $region171: #{tpu_custom_call.1} parent=167 // pred_region
          %s7412 = sand.u32 %s683, 1
          %s7413 = scalar_lea.sflag [#allocation4], %s7412
          %s7414 = sand.u32 %s683, 1
          %s7415 = smul.addr %s7414, 8
          %s7416 = scalar_lea.vmem [#allocation14], %s7415
          %7417 = dma.done %s7413, 128
        $region172: #{tpu_custom_call.1} parent=167 // pred_fallthru
          _
        // Predicated region
        $region173: #{tpu_custom_call.1} parent=167 // pred_check
          %p7418 = pneg %p724
        $region174: #{tpu_custom_call.1} parent=167 // pred_check_branch
          %7420 = sbr.rel (%p7418) target = $region176
        $region175: #{tpu_custom_call.1} parent=167 // pred_region
          %s7421 = sand.u32 %s59, 1
          %s7422 = scalar_lea.sflag [#allocation16], %s7421
          %s7423 = sand.u32 %s709, 1
          %s7424 = smul.addr %s7423, 8
          %s7425 = scalar_lea.vmem [#allocation15], %s7424
          %7426 = dma.done %s7422, 128
        $region176: #{tpu_custom_call.1} parent=167 // pred_fallthru
          _
        // Predicated region
        $region177: #{tpu_custom_call.1} parent=167 // pred_check
          %p7427 = pneg %p750
        $region178: #{tpu_custom_call.1} parent=167 // pred_check_branch
          %7429 = sbr.rel (%p7427) target = $region180
        $region179: #{tpu_custom_call.1} parent=167 // pred_region
          %s7430 = sand.u32 %s59, 1
          %s7431 = scalar_lea.sflag [#allocation16], %s7430
          %s7432 = sand.u32 %s735, 1
          %s7433 = smul.addr %s7432, 32
          %s7434 = scalar_lea.vmem [#allocation17], %s7433
          %7435 = dma.done %s7431, 512
        $region180: #{tpu_custom_call.1} parent=167 // pred_fallthru
          _
      $region168: #{tpu_custom_call.1} parent=5 // pred_fallthru
        _
    $region6: #{tpu_custom_call.1} parent=1 // loop_footer
      %s57 = sadd.s32 1, %s53
    $region7: #{tpu_custom_call.1} parent=1 // loop_footer_branch
      %52 = sbr.rel target = $region3
    $region8: #{tpu_custom_call.1} parent=1 // loop_exit
      _
    %7436 = vsyncpa [#allocation3], 1
    %s7437 = scalar_lea.sflag [#allocation3], 1
    %7438 = vsyncpa %s7437, 1
    %7439 = vsyncpa [#allocation6], 1
    %s7440 = scalar_lea.sflag [#allocation6], 1
    %7441 = vsyncpa %s7440, 1
    %7442 = vsyncpa [#allocation9], 1
    %s7443 = scalar_lea.sflag [#allocation9], 1
    %7444 = vsyncpa %s7443, 1
    %7445 = vsyncpa [#allocation12], 1
    %s7446 = scalar_lea.sflag [#allocation12], 1
    %7447 = vsyncpa %s7446, 1
    %7448 = vsyncpa [#allocation4], 1
    %s7449 = scalar_lea.sflag [#allocation4], 1
    %7450 = vsyncpa %s7449, 1
    %7451 = vsyncpa [#allocation16], 1
    %s7452 = scalar_lea.sflag [#allocation16], 1
    %7453 = vsyncpa %s7452, 1

</llo_original>
